<compile_context>
chip_gen: v7x
topology: tpu7x:2x2x1
jax: 0.10.0
libtpu: 0.0.40
codegen_flags: <defaults>
</compile_context>

<pallas_src>
import functools
import math

import jax
import jax.numpy as jnp
from jax.experimental import pallas as pl
from jax.experimental.pallas import tpu as pltpu

_LANES = 128


def _round_up(x, m):
    return ((x + m - 1) // m) * m


def _conv_block_kernel(H, W, Cin, Cout, CP1, CP2, eps, slope,
                       x_ref, w1_ref, w2_ref, o_ref,
                       pad1, pad2, patch1, patch2):
    """Fused [3x3 conv -> instance-norm -> leaky-relu] x 2 for one image.

    x_ref  : (1, H, W, Cin)        NHWC input block
    w1_ref : (9*CP1, Cout)         packed conv1 weight (zero rows in lane pad)
    w2_ref : (9*CP2, Cout)         packed conv2 weight
    o_ref  : (1, H, W, Cout)       NHWC output block
    pad1   : (H+2, W+2, Cin)  f32  zero-padded stage-1 input    (VMEM scratch)
    pad2   : (H+2, W+2, Cout) f32  zero-padded stage-1 output   (VMEM scratch)
    patch1 : (H*W, 9*CP1)     f32  im2col operand for conv1     (VMEM scratch)
    patch2 : (H*W, 9*CP2)     f32  im2col operand for conv2     (VMEM scratch)
    """

    def conv_in_lrelu(pad_ref, patch_ref, w_ref, cin, cpad):
        # Lane-padding columns must be zero (they meet zero weight rows, but
        # uninitialized VMEM could hold NaN bit patterns).  Data strips are
        # fully overwritten below, so this is only needed when cpad > cin.
        if cpad != cin:
            patch_ref[...] = jnp.zeros_like(patch_ref)
        # Pack the 9 taps into 128-lane-aligned strips:
        #   tap t = kh*3 + kw occupies lanes [t*cpad, t*cpad + cin).
        for kh in range(3):
            for kw in range(3):
                t = kh * 3 + kw
                tap = pad_ref[kh:kh + H, kw:kw + W, :].reshape(H * W, cin)
                patch_ref[:, t * cpad:t * cpad + cin] = tap
        # Single MXU matmul, K = 9*cpad, f32 accumulation.
        y = jnp.dot(patch_ref[...], w_ref[...],
                    preferred_element_type=jnp.float32)           # (H*W, Cout)
        # InstanceNorm2d (affine=False): per-channel stats over the spatial
        # dim of this image, biased variance, eps as in PyTorch.
        mean = jnp.mean(y, axis=0, keepdims=True)
        var = jnp.mean(jnp.square(y - mean), axis=0, keepdims=True)
        y = (y - mean) * jax.lax.rsqrt(var + eps)
        # LeakyReLU(negative_slope=slope).
        y = jnp.where(y >= 0.0, y, slope * y)
        # Dropout2d: identity in eval mode.
        # TODO(synk): training-mode channel dropout via pltpu.prng_random_bits.
        return y                                                   # (H*W, Cout)

    # ---- stage 1: pad input in VMEM, conv + IN + LeakyReLU ----
    pad1[...] = jnp.zeros_like(pad1)
    pad1[1:H + 1, 1:W + 1, :] = x_ref[0].astype(pad1.dtype)
    y1 = conv_in_lrelu(pad1, patch1, w1_ref, Cin, CP1)

    # ---- stage 2: stage-1 activations never leave VMEM ----
    pad2[...] = jnp.zeros_like(pad2)
    pad2[1:H + 1, 1:W + 1, :] = y1.reshape(H, W, Cout)
    y2 = conv_in_lrelu(pad2, patch2, w2_ref, Cout, CP2)

    o_ref[0] = y2.reshape(H, W, Cout).astype(o_ref.dtype)


def _pack_weight(w_oihw, cpad):
    """(O, I, 3, 3) -> (9*cpad, O); rows [t*cpad, t*cpad+I) hold tap t=kh*3+kw."""
    O, I, KH, KW = w_oihw.shape
    assert (KH, KW) == (3, 3)
    w = jnp.transpose(w_oihw, (2, 3, 1, 0)).reshape(9, I, O)   # (tap, I, O)
    w = jnp.pad(w, ((0, 0), (0, cpad - I), (0, 0)))            # zero lane-pad rows
    return w.reshape(9 * cpad, O)


def conv_block_forward(x_nchw, w1_oihw, w2_oihw, *, eps=1e-5, slope=0.2):
    N, Cin, H, W = x_nchw.shape
    Cout = w1_oihw.shape[0]
    assert w1_oihw.shape == (Cout, Cin, 3, 3)
    assert w2_oihw.shape == (Cout, Cout, 3, 3)
    assert H % 8 == 0 and W % 8 == 0, "H, W assumed sublane-tile aligned"

    CP1 = _round_up(Cin, _LANES)
    CP2 = _round_up(Cout, _LANES)

    # NCHW -> NHWC (channels on the lane axis for the channel contraction).
    # TODO(synk): keep NHWC end-to-end inside a larger network to avoid these
    # two HBM-roundtrip transposes.
    x = jnp.transpose(x_nchw, (0, 2, 3, 1))

    w1p = _pack_weight(w1_oihw, CP1)    # (9*CP1, Cout), resident in VMEM
    w2p = _pack_weight(w2_oihw, CP2)    # (9*CP2, Cout), resident in VMEM

    kernel = functools.partial(_conv_block_kernel, H, W, Cin, Cout, CP1, CP2,
                               float(eps), float(slope))

    out = pl.pallas_call(
        kernel,
        out_shape=jax.ShapeDtypeStruct((N, H, W, Cout), x.dtype),
        grid=(N,),
        in_specs=[
            pl.BlockSpec((1, H, W, Cin), lambda n: (n, 0, 0, 0)),
            pl.BlockSpec((9 * CP1, Cout), lambda n: (0, 0)),
            pl.BlockSpec((9 * CP2, Cout), lambda n: (0, 0)),
        ],
        out_specs=pl.BlockSpec((1, H, W, Cout), lambda n: (n, 0, 0, 0)),
        scratch_shapes=[
            pltpu.VMEM((H + 2, W + 2, Cin), jnp.float32),
            pltpu.VMEM((H + 2, W + 2, Cout), jnp.float32),
            pltpu.VMEM((H * W, 9 * CP1), jnp.float32),
            pltpu.VMEM((H * W, 9 * CP2), jnp.float32),
        ],
        compiler_params=pltpu.CompilerParams(
            dimension_semantics=("parallel",),     # batch across TCs on v7x
            vmem_limit_bytes=48 * 1024 * 1024,     # headroom under v7x 64 MiB
        ),
    )(x, w1p, w2p)

    return jnp.transpose(out, (0, 3, 1, 2))        # back to NCHW


class ConvBlock:
    """JAX/Pallas port of the PyTorch ConvBlock (eval-mode forward)."""

    def __init__(self, in_chans, out_chans, drop_prob, *, key):
        self.in_chans = in_chans
        self.out_chans = out_chans
        self.drop_prob = drop_prob          # Dropout2d is identity in eval mode
        k1, k2 = jax.random.split(key)
        # nn.Conv2d default init: uniform(+-1/sqrt(fan_in)); bias=False in spec.
        b1 = 1.0 / math.sqrt(in_chans * 9)
        b2 = 1.0 / math.sqrt(out_chans * 9)
        self.w1 = jax.random.uniform(k1, (out_chans, in_chans, 3, 3),
                                     jnp.float32, -b1, b1)
        self.w2 = jax.random.uniform(k2, (out_chans, out_chans, 3, 3),
                                     jnp.float32, -b2, b2)

    def __call__(self, image):
        assert image.ndim == 4 and image.shape[1] == self.in_chans
        return conv_block_forward(image, self.w1, self.w2)


def _reference_conv_block(x, w1, w2, *, eps=1e-5, slope=0.2):
    def stage(z, w):
        y = jax.lax.conv_general_dilated(
            z, w, window_strides=(1, 1), padding=((1, 1), (1, 1)),
            dimension_numbers=("NCHW", "OIHW", "NCHW"))
        mean = y.mean(axis=(2, 3), keepdims=True)
        var = y.var(axis=(2, 3), keepdims=True)    # biased, like InstanceNorm2d
        y = (y - mean) / jnp.sqrt(var + eps)
        return jnp.where(y >= 0, y, slope * y)
    return stage(stage(x, w1), w2)


if __name__ == "__main__":
    key = jax.random.PRNGKey(0)
    kx, kw = jax.random.split(key)

    N, Cin, Cout, H, W = 2, 4, 8, 16, 16
    x = jax.random.normal(kx, (N, Cin, H, W), dtype=jnp.float32)

    block = ConvBlock(Cin, Cout, drop_prob=0.1, key=kw)
    y = jax.block_until_ready(block(x))
    assert y.shape == (N, Cout, H, W)

    y_ref = _reference_conv_block(x, block.w1, block.w2)
    err = float(jnp.max(jnp.abs(y - y_ref)))
    assert jnp.allclose(y, y_ref, atol=1e-3, rtol=1e-3), f"max abs err {err}"

    print("KERNEL_OK")
</pallas_src>

<mosaic_0001>
module attributes {stable_mosaic.version = 11 : i64} {
  func.func @_conv_block_kernel(%arg0: i32, %arg1: memref<1x16x16x4xf32, #tpu.memory_space<vmem>>, %arg2: memref<1152x8xf32, #tpu.memory_space<vmem>>, %arg3: memref<1152x8xf32, #tpu.memory_space<vmem>>, %arg4: memref<1x16x16x8xf32, #tpu.memory_space<vmem>>, %arg5: memref<18x18x4xf32, #tpu.memory_space<vmem>>, %arg6: memref<18x18x8xf32, #tpu.memory_space<vmem>>, %arg7: memref<256x1152xf32, #tpu.memory_space<vmem>>, %arg8: memref<256x1152xf32, #tpu.memory_space<vmem>>) attributes {dimension_semantics = [#tpu.dimension_semantics<parallel>], iteration_bounds = array<i64: 2>, scalar_prefetch = 0 : i64, scratch_operands = 4 : i64, tpu.core_type = #tpu.core_type<tc>, window_params = [{transform_indices = @transform_0, window_bounds = array<i64: 1, 16, 16, 4>}, {pipeline_mode = #tpu.pipeline_mode<synchronous>, transform_indices = @transform_1, window_bounds = array<i64: 1152, 8>}, {pipeline_mode = #tpu.pipeline_mode<synchronous>, transform_indices = @transform_2, window_bounds = array<i64: 1152, 8>}, {transform_indices = @transform_3, window_bounds = array<i64: 1, 16, 16, 8>}]} {
    %cst = arith.constant 0.000000e+00 : f32
    %0 = vector.broadcast %cst : f32 to vector<18x18x4xf32>
    %c0 = arith.constant 0 : index
    %c0_0 = arith.constant 0 : index
    %c0_1 = arith.constant 0 : index
    %1 = vector.load %arg5[%c0, %c0_0, %c0_1] : memref<18x18x4xf32, #tpu.memory_space<vmem>>, vector<18x18x4xf32>
    tpu.vector_store %arg5[%c0, %c0_0, %c0_1], %0 {strides = array<i32>} : memref<18x18x4xf32, #tpu.memory_space<vmem>>, vector<18x18x4xf32>,
    %c0_2 = arith.constant 0 : index
    %c0_3 = arith.constant 0 : index
    %c0_4 = arith.constant 0 : index
    %c0_5 = arith.constant 0 : index
    %2 = vector.load %arg1[%c0_2, %c0_3, %c0_4, %c0_5] : memref<1x16x16x4xf32, #tpu.memory_space<vmem>>, vector<1x16x16x4xf32>
    %3 = vector.shape_cast %2 : vector<1x16x16x4xf32> to vector<16x16x4xf32>
    %c1 = arith.constant 1 : index
    %c1_6 = arith.constant 1 : index
    %c0_7 = arith.constant 0 : index
    %4 = vector.load %arg5[%c1, %c1_6, %c0_7] : memref<18x18x4xf32, #tpu.memory_space<vmem>>, vector<16x16x4xf32>
    tpu.vector_store %arg5[%c1, %c1_6, %c0_7], %3 {strides = array<i32>} : memref<18x18x4xf32, #tpu.memory_space<vmem>>, vector<16x16x4xf32>,
    %cst_8 = arith.constant 0.000000e+00 : f32
    %5 = vector.broadcast %cst_8 : f32 to vector<256x1152xf32>
    %c0_9 = arith.constant 0 : index
    %c0_10 = arith.constant 0 : index
    %6 = vector.load %arg7[%c0_9, %c0_10] : memref<256x1152xf32, #tpu.memory_space<vmem>>, vector<256x1152xf32>
    tpu.vector_store %arg7[%c0_9, %c0_10], %5 {strides = array<i32>} : memref<256x1152xf32, #tpu.memory_space<vmem>>, vector<256x1152xf32>,
    %c0_11 = arith.constant 0 : index
    %c0_12 = arith.constant 0 : index
    %c0_13 = arith.constant 0 : index
    %7 = vector.load %arg5[%c0_11, %c0_12, %c0_13] : memref<18x18x4xf32, #tpu.memory_space<vmem>>, vector<16x16x4xf32>
    %8 = vector.shape_cast %7 : vector<16x16x4xf32> to vector<256x4xf32>
    %c0_14 = arith.constant 0 : index
    %c0_15 = arith.constant 0 : index
    %9 = vector.load %arg7[%c0_14, %c0_15] : memref<256x1152xf32, #tpu.memory_space<vmem>>, vector<256x4xf32>
    tpu.vector_store %arg7[%c0_14, %c0_15], %8 {strides = array<i32>} : memref<256x1152xf32, #tpu.memory_space<vmem>>, vector<256x4xf32>,
    %c0_16 = arith.constant 0 : index
    %c1_17 = arith.constant 1 : index
    %c0_18 = arith.constant 0 : index
    %10 = vector.load %arg5[%c0_16, %c1_17, %c0_18] : memref<18x18x4xf32, #tpu.memory_space<vmem>>, vector<16x16x4xf32>
    %11 = vector.shape_cast %10 : vector<16x16x4xf32> to vector<256x4xf32>
    %c0_19 = arith.constant 0 : index
    %c128 = arith.constant 128 : index
    %12 = vector.load %arg7[%c0_19, %c128] : memref<256x1152xf32, #tpu.memory_space<vmem>>, vector<256x4xf32>
    tpu.vector_store %arg7[%c0_19, %c128], %11 {strides = array<i32>} : memref<256x1152xf32, #tpu.memory_space<vmem>>, vector<256x4xf32>,
    %c0_20 = arith.constant 0 : index
    %c2 = arith.constant 2 : index
    %c0_21 = arith.constant 0 : index
    %13 = vector.load %arg5[%c0_20, %c2, %c0_21] : memref<18x18x4xf32, #tpu.memory_space<vmem>>, vector<16x16x4xf32>
    %14 = vector.shape_cast %13 : vector<16x16x4xf32> to vector<256x4xf32>
    %c0_22 = arith.constant 0 : index
    %c256 = arith.constant 256 : index
    %15 = vector.load %arg7[%c0_22, %c256] : memref<256x1152xf32, #tpu.memory_space<vmem>>, vector<256x4xf32>
    tpu.vector_store %arg7[%c0_22, %c256], %14 {strides = array<i32>} : memref<256x1152xf32, #tpu.memory_space<vmem>>, vector<256x4xf32>,
    %c1_23 = arith.constant 1 : index
    %c0_24 = arith.constant 0 : index
    %c0_25 = arith.constant 0 : index
    %16 = vector.load %arg5[%c1_23, %c0_24, %c0_25] : memref<18x18x4xf32, #tpu.memory_space<vmem>>, vector<16x16x4xf32>
    %17 = vector.shape_cast %16 : vector<16x16x4xf32> to vector<256x4xf32>
    %c0_26 = arith.constant 0 : index
    %c384 = arith.constant 384 : index
    %18 = vector.load %arg7[%c0_26, %c384] : memref<256x1152xf32, #tpu.memory_space<vmem>>, vector<256x4xf32>
    tpu.vector_store %arg7[%c0_26, %c384], %17 {strides = array<i32>} : memref<256x1152xf32, #tpu.memory_space<vmem>>, vector<256x4xf32>,
    %c1_27 = arith.constant 1 : index
    %c1_28 = arith.constant 1 : index
    %c0_29 = arith.constant 0 : index
    %19 = vector.load %arg5[%c1_27, %c1_28, %c0_29] : memref<18x18x4xf32, #tpu.memory_space<vmem>>, vector<16x16x4xf32>
    %20 = vector.shape_cast %19 : vector<16x16x4xf32> to vector<256x4xf32>
    %c0_30 = arith.constant 0 : index
    %c512 = arith.constant 512 : index
    %21 = vector.load %arg7[%c0_30, %c512] : memref<256x1152xf32, #tpu.memory_space<vmem>>, vector<256x4xf32>
    tpu.vector_store %arg7[%c0_30, %c512], %20 {strides = array<i32>} : memref<256x1152xf32, #tpu.memory_space<vmem>>, vector<256x4xf32>,
    %c1_31 = arith.constant 1 : index
    %c2_32 = arith.constant 2 : index
    %c0_33 = arith.constant 0 : index
    %22 = vector.load %arg5[%c1_31, %c2_32, %c0_33] : memref<18x18x4xf32, #tpu.memory_space<vmem>>, vector<16x16x4xf32>
    %23 = vector.shape_cast %22 : vector<16x16x4xf32> to vector<256x4xf32>
    %c0_34 = arith.constant 0 : index
    %c640 = arith.constant 640 : index
    %24 = vector.load %arg7[%c0_34, %c640] : memref<256x1152xf32, #tpu.memory_space<vmem>>, vector<256x4xf32>
    tpu.vector_store %arg7[%c0_34, %c640], %23 {strides = array<i32>} : memref<256x1152xf32, #tpu.memory_space<vmem>>, vector<256x4xf32>,
    %c2_35 = arith.constant 2 : index
    %c0_36 = arith.constant 0 : index
    %c0_37 = arith.constant 0 : index
    %25 = vector.load %arg5[%c2_35, %c0_36, %c0_37] : memref<18x18x4xf32, #tpu.memory_space<vmem>>, vector<16x16x4xf32>
    %26 = vector.shape_cast %25 : vector<16x16x4xf32> to vector<256x4xf32>
    %c0_38 = arith.constant 0 : index
    %c768 = arith.constant 768 : index
    %27 = vector.load %arg7[%c0_38, %c768] : memref<256x1152xf32, #tpu.memory_space<vmem>>, vector<256x4xf32>
    tpu.vector_store %arg7[%c0_38, %c768], %26 {strides = array<i32>} : memref<256x1152xf32, #tpu.memory_space<vmem>>, vector<256x4xf32>,
    %c2_39 = arith.constant 2 : index
    %c1_40 = arith.constant 1 : index
    %c0_41 = arith.constant 0 : index
    %28 = vector.load %arg5[%c2_39, %c1_40, %c0_41] : memref<18x18x4xf32, #tpu.memory_space<vmem>>, vector<16x16x4xf32>
    %29 = vector.shape_cast %28 : vector<16x16x4xf32> to vector<256x4xf32>
    %c0_42 = arith.constant 0 : index
    %c896 = arith.constant 896 : index
    %30 = vector.load %arg7[%c0_42, %c896] : memref<256x1152xf32, #tpu.memory_space<vmem>>, vector<256x4xf32>
    tpu.vector_store %arg7[%c0_42, %c896], %29 {strides = array<i32>} : memref<256x1152xf32, #tpu.memory_space<vmem>>, vector<256x4xf32>,
    %c2_43 = arith.constant 2 : index
    %c2_44 = arith.constant 2 : index
    %c0_45 = arith.constant 0 : index
    %31 = vector.load %arg5[%c2_43, %c2_44, %c0_45] : memref<18x18x4xf32, #tpu.memory_space<vmem>>, vector<16x16x4xf32>
    %32 = vector.shape_cast %31 : vector<16x16x4xf32> to vector<256x4xf32>
    %c0_46 = arith.constant 0 : index
    %c1024 = arith.constant 1024 : index
    %33 = vector.load %arg7[%c0_46, %c1024] : memref<256x1152xf32, #tpu.memory_space<vmem>>, vector<256x4xf32>
    tpu.vector_store %arg7[%c0_46, %c1024], %32 {strides = array<i32>} : memref<256x1152xf32, #tpu.memory_space<vmem>>, vector<256x4xf32>,
    %c0_47 = arith.constant 0 : index
    %c0_48 = arith.constant 0 : index
    %34 = vector.load %arg7[%c0_47, %c0_48] : memref<256x1152xf32, #tpu.memory_space<vmem>>, vector<256x1152xf32>
    %c0_49 = arith.constant 0 : index
    %c0_50 = arith.constant 0 : index
    %35 = vector.load %arg2[%c0_49, %c0_50] : memref<1152x8xf32, #tpu.memory_space<vmem>>, vector<1152x8xf32>
    %cst_51 = arith.constant dense<0.000000e+00> : vector<256x8xf32>
    %36 = tpu.matmul %34, %35, %cst_51 {dimension_numbers = #tpu.dot_dimension_numbers<[1], [0], [0], [1], [0, 0, 1, 1], [], []>} : vector<256x1152xf32>, vector<1152x8xf32>, vector<256x8xf32> -> vector<256x8xf32>
    %cst_52 = arith.constant dense<0.000000e+00> : vector<8xf32>
    %37 = vector.multi_reduction <add>, %36, %cst_52 [0] : vector<256x8xf32> to vector<8xf32>
    %38 = vector.shape_cast %37 : vector<8xf32> to vector<1x8xf32>
    %cst_53 = arith.constant 2.560000e+02 : f32
    %39 = vector.broadcast %cst_53 : f32 to vector<1x8xf32>
    %40 = arith.divf %38, %39 : vector<1x8xf32>
    %41 = vector.broadcast %40 : vector<1x8xf32> to vector<256x8xf32>
    %42 = arith.subf %36, %41 : vector<256x8xf32>
    %43 = arith.mulf %42, %42 : vector<256x8xf32>
    %cst_54 = arith.constant dense<0.000000e+00> : vector<8xf32>
    %44 = vector.multi_reduction <add>, %43, %cst_54 [0] : vector<256x8xf32> to vector<8xf32>
    %45 = vector.shape_cast %44 : vector<8xf32> to vector<1x8xf32>
    %cst_55 = arith.constant 2.560000e+02 : f32
    %46 = vector.broadcast %cst_55 : f32 to vector<1x8xf32>
    %47 = arith.divf %45, %46 : vector<1x8xf32>
    %48 = vector.broadcast %40 : vector<1x8xf32> to vector<256x8xf32>
    %49 = arith.subf %36, %48 : vector<256x8xf32>
    %cst_56 = arith.constant 9.99999974E-6 : f32
    %50 = vector.broadcast %cst_56 : f32 to vector<1x8xf32>
    %51 = arith.addf %47, %50 : vector<1x8xf32>
    %52 = math.rsqrt %51 : vector<1x8xf32>
    %53 = vector.broadcast %52 : vector<1x8xf32> to vector<256x8xf32>
    %54 = arith.mulf %49, %53 : vector<256x8xf32>
    %cst_57 = arith.constant 0.000000e+00 : f32
    %55 = vector.broadcast %cst_57 : f32 to vector<256x8xf32>
    %56 = arith.cmpf oge, %54, %55 : vector<256x8xf32>
    %cst_58 = arith.constant 2.000000e-01 : f32
    %57 = vector.broadcast %cst_58 : f32 to vector<256x8xf32>
    %58 = arith.mulf %57, %54 : vector<256x8xf32>
    %59 = arith.select %56, %54, %58 : vector<256x8xi1>, vector<256x8xf32>
    %cst_59 = arith.constant 0.000000e+00 : f32
    %60 = vector.broadcast %cst_59 : f32 to vector<18x18x8xf32>
    %c0_60 = arith.constant 0 : index
    %c0_61 = arith.constant 0 : index
    %c0_62 = arith.constant 0 : index
    %61 = vector.load %arg6[%c0_60, %c0_61, %c0_62] : memref<18x18x8xf32, #tpu.memory_space<vmem>>, vector<18x18x8xf32>
    tpu.vector_store %arg6[%c0_60, %c0_61, %c0_62], %60 {strides = array<i32>} : memref<18x18x8xf32, #tpu.memory_space<vmem>>, vector<18x18x8xf32>,
    %62 = vector.shape_cast %59 : vector<256x8xf32> to vector<16x16x8xf32>
    %c1_63 = arith.constant 1 : index
    %c1_64 = arith.constant 1 : index
    %c0_65 = arith.constant 0 : index
    %63 = vector.load %arg6[%c1_63, %c1_64, %c0_65] : memref<18x18x8xf32, #tpu.memory_space<vmem>>, vector<16x16x8xf32>
    tpu.vector_store %arg6[%c1_63, %c1_64, %c0_65], %62 {strides = array<i32>} : memref<18x18x8xf32, #tpu.memory_space<vmem>>, vector<16x16x8xf32>,
    %cst_66 = arith.constant 0.000000e+00 : f32
    %64 = vector.broadcast %cst_66 : f32 to vector<256x1152xf32>
    %c0_67 = arith.constant 0 : index
    %c0_68 = arith.constant 0 : index
    %65 = vector.load %arg8[%c0_67, %c0_68] : memref<256x1152xf32, #tpu.memory_space<vmem>>, vector<256x1152xf32>
    tpu.vector_store %arg8[%c0_67, %c0_68], %64 {strides = array<i32>} : memref<256x1152xf32, #tpu.memory_space<vmem>>, vector<256x1152xf32>,
    %c0_69 = arith.constant 0 : index
    %c0_70 = arith.constant 0 : index
    %c0_71 = arith.constant 0 : index
    %66 = vector.load %arg6[%c0_69, %c0_70, %c0_71] : memref<18x18x8xf32, #tpu.memory_space<vmem>>, vector<16x16x8xf32>
    %67 = vector.shape_cast %66 : vector<16x16x8xf32> to vector<256x8xf32>
    %c0_72 = arith.constant 0 : index
    %c0_73 = arith.constant 0 : index
    %68 = vector.load %arg8[%c0_72, %c0_73] : memref<256x1152xf32, #tpu.memory_space<vmem>>, vector<256x8xf32>
    tpu.vector_store %arg8[%c0_72, %c0_73], %67 {strides = array<i32>} : memref<256x1152xf32, #tpu.memory_space<vmem>>, vector<256x8xf32>,
    %c0_74 = arith.constant 0 : index
    %c1_75 = arith.constant 1 : index
    %c0_76 = arith.constant 0 : index
    %69 = vector.load %arg6[%c0_74, %c1_75, %c0_76] : memref<18x18x8xf32, #tpu.memory_space<vmem>>, vector<16x16x8xf32>
    %70 = vector.shape_cast %69 : vector<16x16x8xf32> to vector<256x8xf32>
    %c0_77 = arith.constant 0 : index
    %c128_78 = arith.constant 128 : index
    %71 = vector.load %arg8[%c0_77, %c128_78] : memref<256x1152xf32, #tpu.memory_space<vmem>>, vector<256x8xf32>
    tpu.vector_store %arg8[%c0_77, %c128_78], %70 {strides = array<i32>} : memref<256x1152xf32, #tpu.memory_space<vmem>>, vector<256x8xf32>,
    %c0_79 = arith.constant 0 : index
    %c2_80 = arith.constant 2 : index
    %c0_81 = arith.constant 0 : index
    %72 = vector.load %arg6[%c0_79, %c2_80, %c0_81] : memref<18x18x8xf32, #tpu.memory_space<vmem>>, vector<16x16x8xf32>
    %73 = vector.shape_cast %72 : vector<16x16x8xf32> to vector<256x8xf32>
    %c0_82 = arith.constant 0 : index
    %c256_83 = arith.constant 256 : index
    %74 = vector.load %arg8[%c0_82, %c256_83] : memref<256x1152xf32, #tpu.memory_space<vmem>>, vector<256x8xf32>
    tpu.vector_store %arg8[%c0_82, %c256_83], %73 {strides = array<i32>} : memref<256x1152xf32, #tpu.memory_space<vmem>>, vector<256x8xf32>,
    %c1_84 = arith.constant 1 : index
    %c0_85 = arith.constant 0 : index
    %c0_86 = arith.constant 0 : index
    %75 = vector.load %arg6[%c1_84, %c0_85, %c0_86] : memref<18x18x8xf32, #tpu.memory_space<vmem>>, vector<16x16x8xf32>
    %76 = vector.shape_cast %75 : vector<16x16x8xf32> to vector<256x8xf32>
    %c0_87 = arith.constant 0 : index
    %c384_88 = arith.constant 384 : index
    %77 = vector.load %arg8[%c0_87, %c384_88] : memref<256x1152xf32, #tpu.memory_space<vmem>>, vector<256x8xf32>
    tpu.vector_store %arg8[%c0_87, %c384_88], %76 {strides = array<i32>} : memref<256x1152xf32, #tpu.memory_space<vmem>>, vector<256x8xf32>,
    %c1_89 = arith.constant 1 : index
    %c1_90 = arith.constant 1 : index
    %c0_91 = arith.constant 0 : index
    %78 = vector.load %arg6[%c1_89, %c1_90, %c0_91] : memref<18x18x8xf32, #tpu.memory_space<vmem>>, vector<16x16x8xf32>
    %79 = vector.shape_cast %78 : vector<16x16x8xf32> to vector<256x8xf32>
    %c0_92 = arith.constant 0 : index
    %c512_93 = arith.constant 512 : index
    %80 = vector.load %arg8[%c0_92, %c512_93] : memref<256x1152xf32, #tpu.memory_space<vmem>>, vector<256x8xf32>
    tpu.vector_store %arg8[%c0_92, %c512_93], %79 {strides = array<i32>} : memref<256x1152xf32, #tpu.memory_space<vmem>>, vector<256x8xf32>,
    %c1_94 = arith.constant 1 : index
    %c2_95 = arith.constant 2 : index
    %c0_96 = arith.constant 0 : index
    %81 = vector.load %arg6[%c1_94, %c2_95, %c0_96] : memref<18x18x8xf32, #tpu.memory_space<vmem>>, vector<16x16x8xf32>
    %82 = vector.shape_cast %81 : vector<16x16x8xf32> to vector<256x8xf32>
    %c0_97 = arith.constant 0 : index
    %c640_98 = arith.constant 640 : index
    %83 = vector.load %arg8[%c0_97, %c640_98] : memref<256x1152xf32, #tpu.memory_space<vmem>>, vector<256x8xf32>
    tpu.vector_store %arg8[%c0_97, %c640_98], %82 {strides = array<i32>} : memref<256x1152xf32, #tpu.memory_space<vmem>>, vector<256x8xf32>,
    %c2_99 = arith.constant 2 : index
    %c0_100 = arith.constant 0 : index
    %c0_101 = arith.constant 0 : index
    %84 = vector.load %arg6[%c2_99, %c0_100, %c0_101] : memref<18x18x8xf32, #tpu.memory_space<vmem>>, vector<16x16x8xf32>
    %85 = vector.shape_cast %84 : vector<16x16x8xf32> to vector<256x8xf32>
    %c0_102 = arith.constant 0 : index
    %c768_103 = arith.constant 768 : index
    %86 = vector.load %arg8[%c0_102, %c768_103] : memref<256x1152xf32, #tpu.memory_space<vmem>>, vector<256x8xf32>
    tpu.vector_store %arg8[%c0_102, %c768_103], %85 {strides = array<i32>} : memref<256x1152xf32, #tpu.memory_space<vmem>>, vector<256x8xf32>,
    %c2_104 = arith.constant 2 : index
    %c1_105 = arith.constant 1 : index
    %c0_106 = arith.constant 0 : index
    %87 = vector.load %arg6[%c2_104, %c1_105, %c0_106] : memref<18x18x8xf32, #tpu.memory_space<vmem>>, vector<16x16x8xf32>
    %88 = vector.shape_cast %87 : vector<16x16x8xf32> to vector<256x8xf32>
    %c0_107 = arith.constant 0 : index
    %c896_108 = arith.constant 896 : index
    %89 = vector.load %arg8[%c0_107, %c896_108] : memref<256x1152xf32, #tpu.memory_space<vmem>>, vector<256x8xf32>
    tpu.vector_store %arg8[%c0_107, %c896_108], %88 {strides = array<i32>} : memref<256x1152xf32, #tpu.memory_space<vmem>>, vector<256x8xf32>,
    %c2_109 = arith.constant 2 : index
    %c2_110 = arith.constant 2 : index
    %c0_111 = arith.constant 0 : index
    %90 = vector.load %arg6[%c2_109, %c2_110, %c0_111] : memref<18x18x8xf32, #tpu.memory_space<vmem>>, vector<16x16x8xf32>
    %91 = vector.shape_cast %90 : vector<16x16x8xf32> to vector<256x8xf32>
    %c0_112 = arith.constant 0 : index
    %c1024_113 = arith.constant 1024 : index
    %92 = vector.load %arg8[%c0_112, %c1024_113] : memref<256x1152xf32, #tpu.memory_space<vmem>>, vector<256x8xf32>
    tpu.vector_store %arg8[%c0_112, %c1024_113], %91 {strides = array<i32>} : memref<256x1152xf32, #tpu.memory_space<vmem>>, vector<256x8xf32>,
    %c0_114 = arith.constant 0 : index
    %c0_115 = arith.constant 0 : index
    %93 = vector.load %arg8[%c0_114, %c0_115] : memref<256x1152xf32, #tpu.memory_space<vmem>>, vector<256x1152xf32>
    %c0_116 = arith.constant 0 : index
    %c0_117 = arith.constant 0 : index
    %94 = vector.load %arg3[%c0_116, %c0_117] : memref<1152x8xf32, #tpu.memory_space<vmem>>, vector<1152x8xf32>
    %cst_118 = arith.constant dense<0.000000e+00> : vector<256x8xf32>
    %95 = tpu.matmul %93, %94, %cst_118 {dimension_numbers = #tpu.dot_dimension_numbers<[1], [0], [0], [1], [0, 0, 1, 1], [], []>} : vector<256x1152xf32>, vector<1152x8xf32>, vector<256x8xf32> -> vector<256x8xf32>
    %cst_119 = arith.constant dense<0.000000e+00> : vector<8xf32>
    %96 = vector.multi_reduction <add>, %95, %cst_119 [0] : vector<256x8xf32> to vector<8xf32>
    %97 = vector.shape_cast %96 : vector<8xf32> to vector<1x8xf32>
    %cst_120 = arith.constant 2.560000e+02 : f32
    %98 = vector.broadcast %cst_120 : f32 to vector<1x8xf32>
    %99 = arith.divf %97, %98 : vector<1x8xf32>
    %100 = vector.broadcast %99 : vector<1x8xf32> to vector<256x8xf32>
    %101 = arith.subf %95, %100 : vector<256x8xf32>
    %102 = arith.mulf %101, %101 : vector<256x8xf32>
    %cst_121 = arith.constant dense<0.000000e+00> : vector<8xf32>
    %103 = vector.multi_reduction <add>, %102, %cst_121 [0] : vector<256x8xf32> to vector<8xf32>
    %104 = vector.shape_cast %103 : vector<8xf32> to vector<1x8xf32>
    %cst_122 = arith.constant 2.560000e+02 : f32
    %105 = vector.broadcast %cst_122 : f32 to vector<1x8xf32>
    %106 = arith.divf %104, %105 : vector<1x8xf32>
    %107 = vector.broadcast %99 : vector<1x8xf32> to vector<256x8xf32>
    %108 = arith.subf %95, %107 : vector<256x8xf32>
    %cst_123 = arith.constant 9.99999974E-6 : f32
    %109 = vector.broadcast %cst_123 : f32 to vector<1x8xf32>
    %110 = arith.addf %106, %109 : vector<1x8xf32>
    %111 = math.rsqrt %110 : vector<1x8xf32>
    %112 = vector.broadcast %111 : vector<1x8xf32> to vector<256x8xf32>
    %113 = arith.mulf %108, %112 : vector<256x8xf32>
    %cst_124 = arith.constant 0.000000e+00 : f32
    %114 = vector.broadcast %cst_124 : f32 to vector<256x8xf32>
    %115 = arith.cmpf oge, %113, %114 : vector<256x8xf32>
    %cst_125 = arith.constant 2.000000e-01 : f32
    %116 = vector.broadcast %cst_125 : f32 to vector<256x8xf32>
    %117 = arith.mulf %116, %113 : vector<256x8xf32>
    %118 = arith.select %115, %113, %117 : vector<256x8xi1>, vector<256x8xf32>
    %119 = vector.shape_cast %118 : vector<256x8xf32> to vector<16x16x8xf32>
    %c0_126 = arith.constant 0 : index
    %c0_127 = arith.constant 0 : index
    %c0_128 = arith.constant 0 : index
    %c0_129 = arith.constant 0 : index
    %120 = vector.load %arg4[%c0_126, %c0_127, %c0_128, %c0_129] : memref<1x16x16x8xf32, #tpu.memory_space<vmem>>, vector<1x16x16x8xf32>
    %121 = vector.shape_cast %120 : vector<1x16x16x8xf32> to vector<16x16x8xf32>
    %122 = vector.shape_cast %119 : vector<16x16x8xf32> to vector<1x16x16x8xf32>
    tpu.vector_store %arg4[%c0_126, %c0_127, %c0_128, %c0_129], %122 {strides = array<i32>} : memref<1x16x16x8xf32, #tpu.memory_space<vmem>>, vector<1x16x16x8xf32>,
    return
  }
  func.func @transform_0(%arg0: i32) -> (i32, i32, i32, i32) {
    %c0_i32 = arith.constant 0 : i32
    %c0_i32_0 = arith.constant 0 : i32
    %c0_i32_1 = arith.constant 0 : i32
    %c0_i32_2 = arith.constant 0 : i32
    return %arg0, %c0_i32, %c0_i32_0, %c0_i32_1 : i32, i32, i32, i32
  }
  func.func @transform_1(%arg0: i32) -> (i32, i32) {
    %c0_i32 = arith.constant 0 : i32
    %c0_i32_0 = arith.constant 0 : i32
    %c0_i32_1 = arith.constant 0 : i32
    return %c0_i32, %c0_i32_0 : i32, i32
  }
  func.func @transform_2(%arg0: i32) -> (i32, i32) {
    %c0_i32 = arith.constant 0 : i32
    %c0_i32_0 = arith.constant 0 : i32
    %c0_i32_1 = arith.constant 0 : i32
    return %c0_i32, %c0_i32_0 : i32, i32
  }
  func.func @transform_3(%arg0: i32) -> (i32, i32, i32, i32) {
    %c0_i32 = arith.constant 0 : i32
    %c0_i32_0 = arith.constant 0 : i32
    %c0_i32_1 = arith.constant 0 : i32
    %c0_i32_2 = arith.constant 0 : i32
    return %arg0, %c0_i32, %c0_i32_0, %c0_i32_1 : i32, i32, i32, i32
  }
}

</mosaic_0001>

<llo_original>
// kernel: tpu_custom_call.1
$region0: #{tpu_custom_call.1}
  #allocation0 [shape = 'u32[]', space=smem, size = 0x4, offset = 0x4, fixed_abs, tag = 'smem constant byte address 0x4 - core index']
  #allocation1 [shape = 'u32[144,128]{1,0:T(1,128)}', space=vmem, size = 0x12000, scoped, tag = 'internal scratch']
  #allocation2 [shape = 'f32[18,18,4]{2,1,0:T(8,128)}', space=vmem, size = 0x36000, scoped, tag = 'scratch operand']
  #allocation3 [shape = 'f32[18,18,8]{2,1,0:T(8,128)}', space=vmem, size = 0x36000, scoped, tag = 'scratch operand']
  #allocation4 [shape = 'f32[256,1152]{1,0:T(8,128)}', space=vmem, size = 0x120000, scoped, tag = 'scratch operand']
  #allocation5 [shape = 'f32[256,1152]{1,0:T(8,128)}', space=vmem, size = 0x120000, scoped, tag = 'scratch operand']
  %s0 = inlined_call_operand.vmem [shape: f32[2,16,16,4], index: 0, kind: input, shape index: {}]
  %s1 = inlined_call_operand.vmem [shape: f32[1152,8], index: 1, kind: input, shape index: {}]
  %s2 = inlined_call_operand.vmem [shape: f32[1152,8], index: 2, kind: input, shape index: {}]
  %s3 = inlined_call_operand.vmem [shape: f32[2,16,16,8], index: 3, kind: output, shape index: {}]
  %s4 = sld [smem:[#allocation0]]
  $region45: #{tpu_custom_call.1} parent=0
    _
  %s6 = ssub.s32 1, %s4
  %s7 = scalar_select 0, %s6, %s4
  loop: start=0, step=1, limit=4
  $region2: #{tpu_custom_call.1} parent=0 // loop_pre_header
    _
  $region3: #{tpu_custom_call.1} parent=0 // loop_header
    %s9 = sphi 0, %s13
    %p10 = scmp.ge.s32.totalorder %s9, 4
    %s19 = sphi 0, %s21
    %s22 = sphi 0, %s19
    %s23 = sphi 0, %s22
    %s39 = sphi 0, %s23
    %s43 = sphi 0, %s43
    %s45 = sphi 0, %s43
    %s46 = sphi 0, %s45
    %s60 = sphi 0, %s46
    %s64 = sphi 0, %s64
    %s66 = sphi 0, %s64
    %s67 = sphi 0, %s66
    %s81 = sphi 0, %s67
    %s87 = sphi 0, %s89
    %s90 = sphi 0, %s87
    %s91 = sphi 0, %s90
    %s107 = sphi 0, %s91
  $region4: #{tpu_custom_call.1} parent=0 // loop_header_branch
    %12 = sbr.rel (%p10) target = $region8
  $region5: #{tpu_custom_call.1} parent=0 // loop_body
    %s14 = ssub.s32 %s9, 1
    %s15 = ssub.s32 %s9, 2
    %s16 = sadd.s32 %s9, 1
    %s17 = ssub.s32 %s9, %s16
    %p18 = scmp.eq.s32.totalorder %s17, 0
    %s20 = sadd.s32 %s19, 1
    %s21 = scalar_select %p18, %s19, %s20
    %p24 = pneg %p18
    %p25 = scmp.eq.s32.totalorder %s9, 1
    %p26 = por %p24, %p25
    %p27 = scmp.ne.s32.totalorder %s19, %s22
    %p28 = scmp.eq.s32.totalorder %s9, 0
    %p29 = por %p27, %p28
    %p30 = scmp.ne.s32.totalorder %s19, %s22
    %p31 = scmp.eq.s32.totalorder %s14, 1
    %p32 = por %p30, %p31
    %p33 = scmp.ne.s32.totalorder %s22, %s23
    %p34 = scmp.eq.s32.totalorder %s14, 0
    %p35 = por %p33, %p34
    %p36 = scmp.ne.s32.totalorder %s22, %s23
    %p37 = scmp.eq.s32.totalorder %s15, 1
    %p38 = por %p36, %p37
    %p40 = scmp.ne.s32.totalorder %s23, %s39
    %p41 = scmp.eq.s32.totalorder %s15, 0
    %p42 = por %p40, %p41
    %s44 = sadd.s32 %s43, 1
    %p47 = scmp.eq.s32.totalorder %s9, 1
    %p48 = scmp.ne.s32.totalorder %s43, %s45
    %p49 = scmp.eq.s32.totalorder %s9, 0
    %p50 = por %p48, %p49
    %p51 = scmp.ne.s32.totalorder %s43, %s45
    %p52 = scmp.eq.s32.totalorder %s14, 1
    %p53 = por %p51, %p52
    %p54 = scmp.ne.s32.totalorder %s45, %s46
    %p55 = scmp.eq.s32.totalorder %s14, 0
    %p56 = por %p54, %p55
    %p57 = scmp.ne.s32.totalorder %s45, %s46
    %p58 = scmp.eq.s32.totalorder %s15, 1
    %p59 = por %p57, %p58
    %p61 = scmp.ne.s32.totalorder %s46, %s60
    %p62 = scmp.eq.s32.totalorder %s15, 0
    %p63 = por %p61, %p62
    %s65 = sadd.s32 %s64, 1
    %p68 = scmp.eq.s32.totalorder %s9, 1
    %p69 = scmp.ne.s32.totalorder %s64, %s66
    %p70 = scmp.eq.s32.totalorder %s9, 0
    %p71 = por %p69, %p70
    %p72 = scmp.ne.s32.totalorder %s64, %s66
    %p73 = scmp.eq.s32.totalorder %s14, 1
    %p74 = por %p72, %p73
    %p75 = scmp.ne.s32.totalorder %s66, %s67
    %p76 = scmp.eq.s32.totalorder %s14, 0
    %p77 = por %p75, %p76
    %p78 = scmp.ne.s32.totalorder %s66, %s67
    %p79 = scmp.eq.s32.totalorder %s15, 1
    %p80 = por %p78, %p79
    %p82 = scmp.ne.s32.totalorder %s67, %s81
    %p83 = scmp.eq.s32.totalorder %s15, 0
    %p84 = por %p82, %p83
    %s85 = ssub.s32 %s9, %s16
    %p86 = scmp.eq.s32.totalorder %s85, 0
    %s88 = sadd.s32 %s87, 1
    %s89 = scalar_select %p86, %s87, %s88
    %p92 = pneg %p86
    %p93 = scmp.eq.s32.totalorder %s9, 1
    %p94 = por %p92, %p93
    %p95 = scmp.ne.s32.totalorder %s87, %s90
    %p96 = scmp.eq.s32.totalorder %s9, 0
    %p97 = por %p95, %p96
    %p98 = scmp.ne.s32.totalorder %s87, %s90
    %p99 = scmp.eq.s32.totalorder %s14, 1
    %p100 = por %p98, %p99
    %p101 = scmp.ne.s32.totalorder %s90, %s91
    %p102 = scmp.eq.s32.totalorder %s14, 0
    %p103 = por %p101, %p102
    %p104 = scmp.ne.s32.totalorder %s90, %s91
    %p105 = scmp.eq.s32.totalorder %s15, 1
    %p106 = por %p104, %p105
    %p108 = scmp.ne.s32.totalorder %s91, %s107
    %p109 = scmp.eq.s32.totalorder %s15, 0
    %p110 = por %p108, %p109
    %p111 = scmp.le.s32.totalorder 1, %s9
    %p112 = scmp.lt.s32.totalorder %s9, 3
    %p113 = pnand %p111, %p112
    %p114 = pneg %p113
    // Predicated region
    $region9: #{tpu_custom_call.1} parent=5 // pred_check
      _
    $region10: #{tpu_custom_call.1} parent=5 // pred_check_branch
      %116 = sbr.rel (%p113) target = $region12
    $region11: #{tpu_custom_call.1} parent=5 // pred_region
      %s117 = ssub.s32 %s9, 1
      // Predicated region
      $region13: #{tpu_custom_call.1} parent=11 // pred_check
        %p118 = pneg %p56
      $region14: #{tpu_custom_call.1} parent=11 // pred_check_branch
        %120 = sbr.rel (%p118) target = $region16
      $region15: #{tpu_custom_call.1} parent=11 // pred_region
        _
      $region16: #{tpu_custom_call.1} parent=11 // pred_fallthru
        _
      // Predicated region
      $region17: #{tpu_custom_call.1} parent=11 // pred_check
        %p121 = pneg %p77
      $region18: #{tpu_custom_call.1} parent=11 // pred_check_branch
        %123 = sbr.rel (%p121) target = $region20
      $region19: #{tpu_custom_call.1} parent=11 // pred_region
        _
      $region20: #{tpu_custom_call.1} parent=11 // pred_fallthru
        _
    $region12: #{tpu_custom_call.1} parent=5 // pred_fallthru
      _
    %p124 = scmp.lt.s32.totalorder %s9, 2
    // Predicated region
    $region21: #{tpu_custom_call.1} parent=5 // pred_check
      %p125 = pneg %p124
    $region22: #{tpu_custom_call.1} parent=5 // pred_check_branch
      %127 = sbr.rel (%p125) target = $region24
    $region23: #{tpu_custom_call.1} parent=5 // pred_region
      // Predicated region
      $region25: #{tpu_custom_call.1} parent=23 // pred_check
        %p128 = pneg %p29
      $region26: #{tpu_custom_call.1} parent=23 // pred_check_branch
        %130 = sbr.rel (%p128) target = $region28
      $region27: #{tpu_custom_call.1} parent=23 // pred_region
        %p131 = scmp.lt.s32.totalorder %s9, 1
        %s132 = scalar_select %p131, %s9, 1
        %s133 = smul.addr %s132, 32
        %s134 = smul.addr %s133, 8
        %s135 = scalar_lea.vmem %s0, %s134
      $region28: #{tpu_custom_call.1} parent=23 // pred_fallthru
        _
    $region24: #{tpu_custom_call.1} parent=5 // pred_fallthru
      _
    %p136 = scmp.le.s32.totalorder 1, %s9
    %p137 = scmp.lt.s32.totalorder %s9, 3
    %p138 = pnand %p136, %p137
    %p139 = pneg %p138
    // Predicated region
    $region29: #{tpu_custom_call.1} parent=5 // pred_check
      _
    $region30: #{tpu_custom_call.1} parent=5 // pred_check_branch
      %141 = sbr.rel (%p138) target = $region32
    $region31: #{tpu_custom_call.1} parent=5 // pred_region
      %s142 = ssub.s32 %s9, 1
      %p143 = scmp.lt.s32.totalorder %s14, 1
      %s144 = scalar_select %p143, %s14, 1
      %s145 = smul.addr %s144, 32
      %s146 = smul.addr %s145, 8
      %s147 = scalar_lea.vmem %s0, %s146
      %p148 = pneg %p35
      %p149 = pneg %p32
      %p150 = pneg %p56
      %p151 = pneg %p53
      %p152 = pneg %p77
      %p153 = pneg %p74
      %p154 = pneg %p103
      %p155 = pneg %p100
      %p156 = scmp.lt.s32.totalorder %s14, 1
      %s157 = scalar_select %p156, %s14, 1
      %s158 = smul.addr %s157, 32
      %s159 = smul.addr %s158, 8
      %s160 = scalar_lea.vmem %s3, %s159
      %p161 = scmp.lt.s32.totalorder %s14, 1
      %s162 = scalar_select %p161, %s14, 1
      %s163 = smul.addr %s162, 32
      %s164 = smul.addr %s163, 8
      %s165 = scalar_lea.vmem %s0, %s164
      %p166 = scmp.lt.s32.totalorder %s14, 1
      %s167 = scalar_select %p166, %s14, 1
      %s168 = smul.addr %s167, 32
      %s169 = smul.addr %s168, 8
      %s170 = scalar_lea.vmem %s3, %s169
      %vm171 = vcmask 31744
      %172 = vst.msk [vmem:[#allocation2] sm:$0xff] %vm171, 0.0
      %173 = vst.msk [vmem:[#allocation2 + $0x8] sm:$0xff] %vm171, 0.0
      %vm174 = vcmask 25600
      %175 = vst.msk [vmem:[#allocation2 + $0x10] sm:$0x3] %vm174, 0.0
      %176 = vst.msk [vmem:[#allocation2 + $0x18] sm:$0xff] %vm171, 0.0
      %177 = vst.msk [vmem:[#allocation2 + $0x20] sm:$0xff] %vm171, 0.0
      %178 = vst.msk [vmem:[#allocation2 + $0x28] sm:$0x3] %vm174, 0.0
      %179 = vst.msk [vmem:[#allocation2 + $0x30] sm:$0xff] %vm171, 0.0
      %180 = vst.msk [vmem:[#allocation2 + $0x38] sm:$0xff] %vm171, 0.0
      %181 = vst.msk [vmem:[#allocation2 + $0x40] sm:$0x3] %vm174, 0.0
      %182 = vst.msk [vmem:[#allocation2 + $0x48] sm:$0xff] %vm171, 0.0
      %183 = vst.msk [vmem:[#allocation2 + $0x50] sm:$0xff] %vm171, 0.0
      %184 = vst.msk [vmem:[#allocation2 + $0x58] sm:$0x3] %vm174, 0.0
      %185 = vst.msk [vmem:[#allocation2 + $0x60] sm:$0xff] %vm171, 0.0
      %186 = vst.msk [vmem:[#allocation2 + $0x68] sm:$0xff] %vm171, 0.0
      %187 = vst.msk [vmem:[#allocation2 + $0x70] sm:$0x3] %vm174, 0.0
      %188 = vst.msk [vmem:[#allocation2 + $0x78] sm:$0xff] %vm171, 0.0
      %189 = vst.msk [vmem:[#allocation2 + $0x80] sm:$0xff] %vm171, 0.0
      %190 = vst.msk [vmem:[#allocation2 + $0x88] sm:$0x3] %vm174, 0.0
      %191 = vst.msk [vmem:[#allocation2 + $0x90] sm:$0xff] %vm171, 0.0
      %192 = vst.msk [vmem:[#allocation2 + $0x98] sm:$0xff] %vm171, 0.0
      %193 = vst.msk [vmem:[#allocation2 + $0xa0] sm:$0x3] %vm174, 0.0
      %194 = vst.msk [vmem:[#allocation2 + $0xa8] sm:$0xff] %vm171, 0.0
      %195 = vst.msk [vmem:[#allocation2 + $0xb0] sm:$0xff] %vm171, 0.0
      %196 = vst.msk [vmem:[#allocation2 + $0xb8] sm:$0x3] %vm174, 0.0
      %197 = vst.msk [vmem:[#allocation2 + $0xc0] sm:$0xff] %vm171, 0.0
      %198 = vst.msk [vmem:[#allocation2 + $0xc8] sm:$0xff] %vm171, 0.0
      %199 = vst.msk [vmem:[#allocation2 + $0xd0] sm:$0x3] %vm174, 0.0
      %200 = vst.msk [vmem:[#allocation2 + $0xd8] sm:$0xff] %vm171, 0.0
      %201 = vst.msk [vmem:[#allocation2 + $0xe0] sm:$0xff] %vm171, 0.0
      %202 = vst.msk [vmem:[#allocation2 + $0xe8] sm:$0x3] %vm174, 0.0
      %203 = vst.msk [vmem:[#allocation2 + $0xf0] sm:$0xff] %vm171, 0.0
      %204 = vst.msk [vmem:[#allocation2 + $0xf8] sm:$0xff] %vm171, 0.0
      %205 = vst.msk [vmem:[#allocation2 + $0x100] sm:$0x3] %vm174, 0.0
      %206 = vst.msk [vmem:[#allocation2 + $0x108] sm:$0xff] %vm171, 0.0
      %207 = vst.msk [vmem:[#allocation2 + $0x110] sm:$0xff] %vm171, 0.0
      %208 = vst.msk [vmem:[#allocation2 + $0x118] sm:$0x3] %vm174, 0.0
      %209 = vst.msk [vmem:[#allocation2 + $0x120] sm:$0xff] %vm171, 0.0
      %210 = vst.msk [vmem:[#allocation2 + $0x128] sm:$0xff] %vm171, 0.0
      %211 = vst.msk [vmem:[#allocation2 + $0x130] sm:$0x3] %vm174, 0.0
      %212 = vst.msk [vmem:[#allocation2 + $0x138] sm:$0xff] %vm171, 0.0
      %213 = vst.msk [vmem:[#allocation2 + $0x140] sm:$0xff] %vm171, 0.0
      %214 = vst.msk [vmem:[#allocation2 + $0x148] sm:$0x3] %vm174, 0.0
      %215 = vst.msk [vmem:[#allocation2 + $0x150] sm:$0xff] %vm171, 0.0
      %216 = vst.msk [vmem:[#allocation2 + $0x158] sm:$0xff] %vm171, 0.0
      %217 = vst.msk [vmem:[#allocation2 + $0x160] sm:$0x3] %vm174, 0.0
      %218 = vst.msk [vmem:[#allocation2 + $0x168] sm:$0xff] %vm171, 0.0
      %219 = vst.msk [vmem:[#allocation2 + $0x170] sm:$0xff] %vm171, 0.0
      %220 = vst.msk [vmem:[#allocation2 + $0x178] sm:$0x3] %vm174, 0.0
      %221 = vst.msk [vmem:[#allocation2 + $0x180] sm:$0xff] %vm171, 0.0
      %222 = vst.msk [vmem:[#allocation2 + $0x188] sm:$0xff] %vm171, 0.0
      %223 = vst.msk [vmem:[#allocation2 + $0x190] sm:$0x3] %vm174, 0.0
      %224 = vst.msk [vmem:[#allocation2 + $0x198] sm:$0xff] %vm171, 0.0
      %225 = vst.msk [vmem:[#allocation2 + $0x1a0] sm:$0xff] %vm171, 0.0
      %226 = vst.msk [vmem:[#allocation2 + $0x1a8] sm:$0x3] %vm174, 0.0
      %v227 = vld [vmem:[%s165] sm:$0xff]
      %v228 = vld [vmem:[%s165 + $0x8] sm:$0xff]
      %v229 = vld [vmem:[%s165 + $0x10] sm:$0xff]
      %v230 = vld [vmem:[%s165 + $0x18] sm:$0xff]
      %v231 = vld [vmem:[%s165 + $0x20] sm:$0xff]
      %v232 = vld [vmem:[%s165 + $0x28] sm:$0xff]
      %v233 = vld [vmem:[%s165 + $0x30] sm:$0xff]
      %v234 = vld [vmem:[%s165 + $0x38] sm:$0xff]
      %v235 = vld [vmem:[%s165 + $0x40] sm:$0xff]
      %v236 = vld [vmem:[%s165 + $0x48] sm:$0xff]
      %v237 = vld [vmem:[%s165 + $0x50] sm:$0xff]
      %v238 = vld [vmem:[%s165 + $0x58] sm:$0xff]
      %v239 = vld [vmem:[%s165 + $0x60] sm:$0xff]
      %v240 = vld [vmem:[%s165 + $0x68] sm:$0xff]
      %v241 = vld [vmem:[%s165 + $0x70] sm:$0xff]
      %v242 = vld [vmem:[%s165 + $0x78] sm:$0xff]
      %v243 = vld [vmem:[%s165 + $0x80] sm:$0xff]
      %v244 = vld [vmem:[%s165 + $0x88] sm:$0xff]
      %v245 = vld [vmem:[%s165 + $0x90] sm:$0xff]
      %v246 = vld [vmem:[%s165 + $0x98] sm:$0xff]
      %v247 = vld [vmem:[%s165 + $0xa0] sm:$0xff]
      %v248 = vld [vmem:[%s165 + $0xa8] sm:$0xff]
      %v249 = vld [vmem:[%s165 + $0xb0] sm:$0xff]
      %v250 = vld [vmem:[%s165 + $0xb8] sm:$0xff]
      %v251 = vld [vmem:[%s165 + $0xc0] sm:$0xff]
      %v252 = vld [vmem:[%s165 + $0xc8] sm:$0xff]
      %v253 = vld [vmem:[%s165 + $0xd0] sm:$0xff]
      %v254 = vld [vmem:[%s165 + $0xd8] sm:$0xff]
      %v255 = vld [vmem:[%s165 + $0xe0] sm:$0xff]
      %v256 = vld [vmem:[%s165 + $0xe8] sm:$0xff]
      %v257 = vld [vmem:[%s165 + $0xf0] sm:$0xff]
      %v258 = vld [vmem:[%s165 + $0xf8] sm:$0xff]
      %s259 = scalar_lea.vmem [#allocation2], 24
      %260 = vst.msk [vmem:[%s259 + $0x1] sm:$0xff] %vm171, %v227
      %261 = vst.msk [vmem:[%s259 + $0x9] sm:$0xff] %vm171, %v228
      %262 = vst.msk [vmem:[%s259 + $0x19] sm:$0xff] %vm171, %v229
      %263 = vst.msk [vmem:[%s259 + $0x21] sm:$0xff] %vm171, %v230
      %264 = vst.msk [vmem:[%s259 + $0x31] sm:$0xff] %vm171, %v231
      %265 = vst.msk [vmem:[%s259 + $0x39] sm:$0xff] %vm171, %v232
      %266 = vst.msk [vmem:[%s259 + $0x49] sm:$0xff] %vm171, %v233
      %267 = vst.msk [vmem:[%s259 + $0x51] sm:$0xff] %vm171, %v234
      %268 = vst.msk [vmem:[%s259 + $0x61] sm:$0xff] %vm171, %v235
      %269 = vst.msk [vmem:[%s259 + $0x69] sm:$0xff] %vm171, %v236
      %270 = vst.msk [vmem:[%s259 + $0x79] sm:$0xff] %vm171, %v237
      %271 = vst.msk [vmem:[%s259 + $0x81] sm:$0xff] %vm171, %v238
      %272 = vst.msk [vmem:[%s259 + $0x91] sm:$0xff] %vm171, %v239
      %273 = vst.msk [vmem:[%s259 + $0x99] sm:$0xff] %vm171, %v240
      %274 = vst.msk [vmem:[%s259 + $0xa9] sm:$0xff] %vm171, %v241
      %275 = vst.msk [vmem:[%s259 + $0xb1] sm:$0xff] %vm171, %v242
      %276 = vst.msk [vmem:[%s259 + $0xc1] sm:$0xff] %vm171, %v243
      %277 = vst.msk [vmem:[%s259 + $0xc9] sm:$0xff] %vm171, %v244
      %278 = vst.msk [vmem:[%s259 + $0xd9] sm:$0xff] %vm171, %v245
      %279 = vst.msk [vmem:[%s259 + $0xe1] sm:$0xff] %vm171, %v246
      %280 = vst.msk [vmem:[%s259 + $0xf1] sm:$0xff] %vm171, %v247
      %281 = vst.msk [vmem:[%s259 + $0xf9] sm:$0xff] %vm171, %v248
      %282 = vst.msk [vmem:[%s259 + $0x109] sm:$0xff] %vm171, %v249
      %283 = vst.msk [vmem:[%s259 + $0x111] sm:$0xff] %vm171, %v250
      %284 = vst.msk [vmem:[%s259 + $0x121] sm:$0xff] %vm171, %v251
      %285 = vst.msk [vmem:[%s259 + $0x129] sm:$0xff] %vm171, %v252
      %286 = vst.msk [vmem:[%s259 + $0x139] sm:$0xff] %vm171, %v253
      %287 = vst.msk [vmem:[%s259 + $0x141] sm:$0xff] %vm171, %v254
      %288 = vst.msk [vmem:[%s259 + $0x151] sm:$0xff] %vm171, %v255
      %289 = vst.msk [vmem:[%s259 + $0x159] sm:$0xff] %vm171, %v256
      %290 = vst.msk [vmem:[%s259 + $0x169] sm:$0xff] %vm171, %v257
      %291 = vst.msk [vmem:[%s259 + $0x171] sm:$0xff] %vm171, %v258
      %292 = vst [vmem:[#allocation4] sm:$0xff] 0.0
      %293 = vst [vmem:[#allocation4 + $0x8] sm:$0xff] 0.0
      %294 = vst [vmem:[#allocation4 + $0x10] sm:$0xff] 0.0
      %295 = vst [vmem:[#allocation4 + $0x18] sm:$0xff] 0.0
      %296 = vst [vmem:[#allocation4 + $0x20] sm:$0xff] 0.0
      %297 = vst [vmem:[#allocation4 + $0x28] sm:$0xff] 0.0
      %298 = vst [vmem:[#allocation4 + $0x30] sm:$0xff] 0.0
      %299 = vst [vmem:[#allocation4 + $0x38] sm:$0xff] 0.0
      %300 = vst [vmem:[#allocation4 + $0x40] sm:$0xff] 0.0
      %301 = vst [vmem:[#allocation4 + $0x48] sm:$0xff] 0.0
      %302 = vst [vmem:[#allocation4 + $0x50] sm:$0xff] 0.0
      %303 = vst [vmem:[#allocation4 + $0x58] sm:$0xff] 0.0
      %304 = vst [vmem:[#allocation4 + $0x60] sm:$0xff] 0.0
      %305 = vst [vmem:[#allocation4 + $0x68] sm:$0xff] 0.0
      %306 = vst [vmem:[#allocation4 + $0x70] sm:$0xff] 0.0
      %307 = vst [vmem:[#allocation4 + $0x78] sm:$0xff] 0.0
      %308 = vst [vmem:[#allocation4 + $0x80] sm:$0xff] 0.0
      %309 = vst [vmem:[#allocation4 + $0x88] sm:$0xff] 0.0
      %310 = vst [vmem:[#allocation4 + $0x90] sm:$0xff] 0.0
      %311 = vst [vmem:[#allocation4 + $0x98] sm:$0xff] 0.0
      %312 = vst [vmem:[#allocation4 + $0xa0] sm:$0xff] 0.0
      %313 = vst [vmem:[#allocation4 + $0xa8] sm:$0xff] 0.0
      %314 = vst [vmem:[#allocation4 + $0xb0] sm:$0xff] 0.0
      %315 = vst [vmem:[#allocation4 + $0xb8] sm:$0xff] 0.0
      %316 = vst [vmem:[#allocation4 + $0xc0] sm:$0xff] 0.0
      %317 = vst [vmem:[#allocation4 + $0xc8] sm:$0xff] 0.0
      %318 = vst [vmem:[#allocation4 + $0xd0] sm:$0xff] 0.0
      %319 = vst [vmem:[#allocation4 + $0xd8] sm:$0xff] 0.0
      %320 = vst [vmem:[#allocation4 + $0xe0] sm:$0xff] 0.0
      %321 = vst [vmem:[#allocation4 + $0xe8] sm:$0xff] 0.0
      %322 = vst [vmem:[#allocation4 + $0xf0] sm:$0xff] 0.0
      %323 = vst [vmem:[#allocation4 + $0xf8] sm:$0xff] 0.0
      %324 = vst [vmem:[#allocation4 + $0x100] sm:$0xff] 0.0
      %325 = vst [vmem:[#allocation4 + $0x108] sm:$0xff] 0.0
      %326 = vst [vmem:[#allocation4 + $0x110] sm:$0xff] 0.0
      %327 = vst [vmem:[#allocation4 + $0x118] sm:$0xff] 0.0
      %328 = vst [vmem:[#allocation4 + $0x120] sm:$0xff] 0.0
      %329 = vst [vmem:[#allocation4 + $0x128] sm:$0xff] 0.0
      %330 = vst [vmem:[#allocation4 + $0x130] sm:$0xff] 0.0
      %331 = vst [vmem:[#allocation4 + $0x138] sm:$0xff] 0.0
      %332 = vst [vmem:[#allocation4 + $0x140] sm:$0xff] 0.0
      %333 = vst [vmem:[#allocation4 + $0x148] sm:$0xff] 0.0
      %334 = vst [vmem:[#allocation4 + $0x150] sm:$0xff] 0.0
      %335 = vst [vmem:[#allocation4 + $0x158] sm:$0xff] 0.0
      %336 = vst [vmem:[#allocation4 + $0x160] sm:$0xff] 0.0
      %337 = vst [vmem:[#allocation4 + $0x168] sm:$0xff] 0.0
      %338 = vst [vmem:[#allocation4 + $0x170] sm:$0xff] 0.0
      %339 = vst [vmem:[#allocation4 + $0x178] sm:$0xff] 0.0
      %340 = vst [vmem:[#allocation4 + $0x180] sm:$0xff] 0.0
      %341 = vst [vmem:[#allocation4 + $0x188] sm:$0xff] 0.0
      %342 = vst [vmem:[#allocation4 + $0x190] sm:$0xff] 0.0
      %343 = vst [vmem:[#allocation4 + $0x198] sm:$0xff] 0.0
      %344 = vst [vmem:[#allocation4 + $0x1a0] sm:$0xff] 0.0
      %345 = vst [vmem:[#allocation4 + $0x1a8] sm:$0xff] 0.0
      %346 = vst [vmem:[#allocation4 + $0x1b0] sm:$0xff] 0.0
      %347 = vst [vmem:[#allocation4 + $0x1b8] sm:$0xff] 0.0
      %348 = vst [vmem:[#allocation4 + $0x1c0] sm:$0xff] 0.0
      %349 = vst [vmem:[#allocation4 + $0x1c8] sm:$0xff] 0.0
      %350 = vst [vmem:[#allocation4 + $0x1d0] sm:$0xff] 0.0
      %351 = vst [vmem:[#allocation4 + $0x1d8] sm:$0xff] 0.0
      %352 = vst [vmem:[#allocation4 + $0x1e0] sm:$0xff] 0.0
      %353 = vst [vmem:[#allocation4 + $0x1e8] sm:$0xff] 0.0
      %354 = vst [vmem:[#allocation4 + $0x1f0] sm:$0xff] 0.0
      %355 = vst [vmem:[#allocation4 + $0x1f8] sm:$0xff] 0.0
      %356 = vst [vmem:[#allocation4 + $0x200] sm:$0xff] 0.0
      %357 = vst [vmem:[#allocation4 + $0x208] sm:$0xff] 0.0
      %358 = vst [vmem:[#allocation4 + $0x210] sm:$0xff] 0.0
      %359 = vst [vmem:[#allocation4 + $0x218] sm:$0xff] 0.0
      %360 = vst [vmem:[#allocation4 + $0x220] sm:$0xff] 0.0
      %361 = vst [vmem:[#allocation4 + $0x228] sm:$0xff] 0.0
      %362 = vst [vmem:[#allocation4 + $0x230] sm:$0xff] 0.0
      %363 = vst [vmem:[#allocation4 + $0x238] sm:$0xff] 0.0
      %364 = vst [vmem:[#allocation4 + $0x240] sm:$0xff] 0.0
      %365 = vst [vmem:[#allocation4 + $0x248] sm:$0xff] 0.0
      %366 = vst [vmem:[#allocation4 + $0x250] sm:$0xff] 0.0
      %367 = vst [vmem:[#allocation4 + $0x258] sm:$0xff] 0.0
      %368 = vst [vmem:[#allocation4 + $0x260] sm:$0xff] 0.0
      %369 = vst [vmem:[#allocation4 + $0x268] sm:$0xff] 0.0
      %370 = vst [vmem:[#allocation4 + $0x270] sm:$0xff] 0.0
      %371 = vst [vmem:[#allocation4 + $0x278] sm:$0xff] 0.0
      %372 = vst [vmem:[#allocation4 + $0x280] sm:$0xff] 0.0
      %373 = vst [vmem:[#allocation4 + $0x288] sm:$0xff] 0.0
      %374 = vst [vmem:[#allocation4 + $0x290] sm:$0xff] 0.0
      %375 = vst [vmem:[#allocation4 + $0x298] sm:$0xff] 0.0
      %376 = vst [vmem:[#allocation4 + $0x2a0] sm:$0xff] 0.0
      %377 = vst [vmem:[#allocation4 + $0x2a8] sm:$0xff] 0.0
      %378 = vst [vmem:[#allocation4 + $0x2b0] sm:$0xff] 0.0
      %379 = vst [vmem:[#allocation4 + $0x2b8] sm:$0xff] 0.0
      %380 = vst [vmem:[#allocation4 + $0x2c0] sm:$0xff] 0.0
      %381 = vst [vmem:[#allocation4 + $0x2c8] sm:$0xff] 0.0
      %382 = vst [vmem:[#allocation4 + $0x2d0] sm:$0xff] 0.0
      %383 = vst [vmem:[#allocation4 + $0x2d8] sm:$0xff] 0.0
      %384 = vst [vmem:[#allocation4 + $0x2e0] sm:$0xff] 0.0
      %385 = vst [vmem:[#allocation4 + $0x2e8] sm:$0xff] 0.0
      %386 = vst [vmem:[#allocation4 + $0x2f0] sm:$0xff] 0.0
      %387 = vst [vmem:[#allocation4 + $0x2f8] sm:$0xff] 0.0
      %388 = vst [vmem:[#allocation4 + $0x300] sm:$0xff] 0.0
      %389 = vst [vmem:[#allocation4 + $0x308] sm:$0xff] 0.0
      %390 = vst [vmem:[#allocation4 + $0x310] sm:$0xff] 0.0
      %391 = vst [vmem:[#allocation4 + $0x318] sm:$0xff] 0.0
      %392 = vst [vmem:[#allocation4 + $0x320] sm:$0xff] 0.0
      %393 = vst [vmem:[#allocation4 + $0x328] sm:$0xff] 0.0
      %394 = vst [vmem:[#allocation4 + $0x330] sm:$0xff] 0.0
      %395 = vst [vmem:[#allocation4 + $0x338] sm:$0xff] 0.0
      %396 = vst [vmem:[#allocation4 + $0x340] sm:$0xff] 0.0
      %397 = vst [vmem:[#allocation4 + $0x348] sm:$0xff] 0.0
      %398 = vst [vmem:[#allocation4 + $0x350] sm:$0xff] 0.0
      %399 = vst [vmem:[#allocation4 + $0x358] sm:$0xff] 0.0
      %400 = vst [vmem:[#allocation4 + $0x360] sm:$0xff] 0.0
      %401 = vst [vmem:[#allocation4 + $0x368] sm:$0xff] 0.0
      %402 = vst [vmem:[#allocation4 + $0x370] sm:$0xff] 0.0
      %403 = vst [vmem:[#allocation4 + $0x378] sm:$0xff] 0.0
      %404 = vst [vmem:[#allocation4 + $0x380] sm:$0xff] 0.0
      %405 = vst [vmem:[#allocation4 + $0x388] sm:$0xff] 0.0
      %406 = vst [vmem:[#allocation4 + $0x390] sm:$0xff] 0.0
      %407 = vst [vmem:[#allocation4 + $0x398] sm:$0xff] 0.0
      %408 = vst [vmem:[#allocation4 + $0x3a0] sm:$0xff] 0.0
      %409 = vst [vmem:[#allocation4 + $0x3a8] sm:$0xff] 0.0
      %410 = vst [vmem:[#allocation4 + $0x3b0] sm:$0xff] 0.0
      %411 = vst [vmem:[#allocation4 + $0x3b8] sm:$0xff] 0.0
      %412 = vst [vmem:[#allocation4 + $0x3c0] sm:$0xff] 0.0
      %413 = vst [vmem:[#allocation4 + $0x3c8] sm:$0xff] 0.0
      %414 = vst [vmem:[#allocation4 + $0x3d0] sm:$0xff] 0.0
      %415 = vst [vmem:[#allocation4 + $0x3d8] sm:$0xff] 0.0
      %416 = vst [vmem:[#allocation4 + $0x3e0] sm:$0xff] 0.0
      %417 = vst [vmem:[#allocation4 + $0x3e8] sm:$0xff] 0.0
      %418 = vst [vmem:[#allocation4 + $0x3f0] sm:$0xff] 0.0
      %419 = vst [vmem:[#allocation4 + $0x3f8] sm:$0xff] 0.0
      %420 = vst [vmem:[#allocation4 + $0x400] sm:$0xff] 0.0
      %421 = vst [vmem:[#allocation4 + $0x408] sm:$0xff] 0.0
      %422 = vst [vmem:[#allocation4 + $0x410] sm:$0xff] 0.0
      %423 = vst [vmem:[#allocation4 + $0x418] sm:$0xff] 0.0
      %424 = vst [vmem:[#allocation4 + $0x420] sm:$0xff] 0.0
      %425 = vst [vmem:[#allocation4 + $0x428] sm:$0xff] 0.0
      %426 = vst [vmem:[#allocation4 + $0x430] sm:$0xff] 0.0
      %427 = vst [vmem:[#allocation4 + $0x438] sm:$0xff] 0.0
      %428 = vst [vmem:[#allocation4 + $0x440] sm:$0xff] 0.0
      %429 = vst [vmem:[#allocation4 + $0x448] sm:$0xff] 0.0
      %430 = vst [vmem:[#allocation4 + $0x450] sm:$0xff] 0.0
      %431 = vst [vmem:[#allocation4 + $0x458] sm:$0xff] 0.0
      %432 = vst [vmem:[#allocation4 + $0x460] sm:$0xff] 0.0
      %433 = vst [vmem:[#allocation4 + $0x468] sm:$0xff] 0.0
      %434 = vst [vmem:[#allocation4 + $0x470] sm:$0xff] 0.0
      %435 = vst [vmem:[#allocation4 + $0x478] sm:$0xff] 0.0
      %436 = vst [vmem:[#allocation4 + $0x480] sm:$0xff] 0.0
      %437 = vst [vmem:[#allocation4 + $0x488] sm:$0xff] 0.0
      %438 = vst [vmem:[#allocation4 + $0x490] sm:$0xff] 0.0
      %439 = vst [vmem:[#allocation4 + $0x498] sm:$0xff] 0.0
      %440 = vst [vmem:[#allocation4 + $0x4a0] sm:$0xff] 0.0
      %441 = vst [vmem:[#allocation4 + $0x4a8] sm:$0xff] 0.0
      %442 = vst [vmem:[#allocation4 + $0x4b0] sm:$0xff] 0.0
      %443 = vst [vmem:[#allocation4 + $0x4b8] sm:$0xff] 0.0
      %444 = vst [vmem:[#allocation4 + $0x4c0] sm:$0xff] 0.0
      %445 = vst [vmem:[#allocation4 + $0x4c8] sm:$0xff] 0.0
      %446 = vst [vmem:[#allocation4 + $0x4d0] sm:$0xff] 0.0
      %447 = vst [vmem:[#allocation4 + $0x4d8] sm:$0xff] 0.0
      %448 = vst [vmem:[#allocation4 + $0x4e0] sm:$0xff] 0.0
      %449 = vst [vmem:[#allocation4 + $0x4e8] sm:$0xff] 0.0
      %450 = vst [vmem:[#allocation4 + $0x4f0] sm:$0xff] 0.0
      %451 = vst [vmem:[#allocation4 + $0x4f8] sm:$0xff] 0.0
      %452 = vst [vmem:[#allocation4 + $0x500] sm:$0xff] 0.0
      %453 = vst [vmem:[#allocation4 + $0x508] sm:$0xff] 0.0
      %454 = vst [vmem:[#allocation4 + $0x510] sm:$0xff] 0.0
      %455 = vst [vmem:[#allocation4 + $0x518] sm:$0xff] 0.0
      %456 = vst [vmem:[#allocation4 + $0x520] sm:$0xff] 0.0
      %457 = vst [vmem:[#allocation4 + $0x528] sm:$0xff] 0.0
      %458 = vst [vmem:[#allocation4 + $0x530] sm:$0xff] 0.0
      %459 = vst [vmem:[#allocation4 + $0x538] sm:$0xff] 0.0
      %460 = vst [vmem:[#allocation4 + $0x540] sm:$0xff] 0.0
      %461 = vst [vmem:[#allocation4 + $0x548] sm:$0xff] 0.0
      %462 = vst [vmem:[#allocation4 + $0x550] sm:$0xff] 0.0
      %463 = vst [vmem:[#allocation4 + $0x558] sm:$0xff] 0.0
      %464 = vst [vmem:[#allocation4 + $0x560] sm:$0xff] 0.0
      %465 = vst [vmem:[#allocation4 + $0x568] sm:$0xff] 0.0
      %466 = vst [vmem:[#allocation4 + $0x570] sm:$0xff] 0.0
      %467 = vst [vmem:[#allocation4 + $0x578] sm:$0xff] 0.0
      %468 = vst [vmem:[#allocation4 + $0x580] sm:$0xff] 0.0
      %469 = vst [vmem:[#allocation4 + $0x588] sm:$0xff] 0.0
      %470 = vst [vmem:[#allocation4 + $0x590] sm:$0xff] 0.0
      %471 = vst [vmem:[#allocation4 + $0x598] sm:$0xff] 0.0
      %472 = vst [vmem:[#allocation4 + $0x5a0] sm:$0xff] 0.0
      %473 = vst [vmem:[#allocation4 + $0x5a8] sm:$0xff] 0.0
      %474 = vst [vmem:[#allocation4 + $0x5b0] sm:$0xff] 0.0
      %475 = vst [vmem:[#allocation4 + $0x5b8] sm:$0xff] 0.0
      %476 = vst [vmem:[#allocation4 + $0x5c0] sm:$0xff] 0.0
      %477 = vst [vmem:[#allocation4 + $0x5c8] sm:$0xff] 0.0
      %478 = vst [vmem:[#allocation4 + $0x5d0] sm:$0xff] 0.0
      %479 = vst [vmem:[#allocation4 + $0x5d8] sm:$0xff] 0.0
      %480 = vst [vmem:[#allocation4 + $0x5e0] sm:$0xff] 0.0
      %481 = vst [vmem:[#allocation4 + $0x5e8] sm:$0xff] 0.0
      %482 = vst [vmem:[#allocation4 + $0x5f0] sm:$0xff] 0.0
      %483 = vst [vmem:[#allocation4 + $0x5f8] sm:$0xff] 0.0
      %484 = vst [vmem:[#allocation4 + $0x600] sm:$0xff] 0.0
      %485 = vst [vmem:[#allocation4 + $0x608] sm:$0xff] 0.0
      %486 = vst [vmem:[#allocation4 + $0x610] sm:$0xff] 0.0
      %487 = vst [vmem:[#allocation4 + $0x618] sm:$0xff] 0.0
      %488 = vst [vmem:[#allocation4 + $0x620] sm:$0xff] 0.0
      %489 = vst [vmem:[#allocation4 + $0x628] sm:$0xff] 0.0
      %490 = vst [vmem:[#allocation4 + $0x630] sm:$0xff] 0.0
      %491 = vst [vmem:[#allocation4 + $0x638] sm:$0xff] 0.0
      %492 = vst [vmem:[#allocation4 + $0x640] sm:$0xff] 0.0
      %493 = vst [vmem:[#allocation4 + $0x648] sm:$0xff] 0.0
      %494 = vst [vmem:[#allocation4 + $0x650] sm:$0xff] 0.0
      %495 = vst [vmem:[#allocation4 + $0x658] sm:$0xff] 0.0
      %496 = vst [vmem:[#allocation4 + $0x660] sm:$0xff] 0.0
      %497 = vst [vmem:[#allocation4 + $0x668] sm:$0xff] 0.0
      %498 = vst [vmem:[#allocation4 + $0x670] sm:$0xff] 0.0
      %499 = vst [vmem:[#allocation4 + $0x678] sm:$0xff] 0.0
      %500 = vst [vmem:[#allocation4 + $0x680] sm:$0xff] 0.0
      %501 = vst [vmem:[#allocation4 + $0x688] sm:$0xff] 0.0
      %502 = vst [vmem:[#allocation4 + $0x690] sm:$0xff] 0.0
      %503 = vst [vmem:[#allocation4 + $0x698] sm:$0xff] 0.0
      %504 = vst [vmem:[#allocation4 + $0x6a0] sm:$0xff] 0.0
      %505 = vst [vmem:[#allocation4 + $0x6a8] sm:$0xff] 0.0
      %506 = vst [vmem:[#allocation4 + $0x6b0] sm:$0xff] 0.0
      %507 = vst [vmem:[#allocation4 + $0x6b8] sm:$0xff] 0.0
      %508 = vst [vmem:[#allocation4 + $0x6c0] sm:$0xff] 0.0
      %509 = vst [vmem:[#allocation4 + $0x6c8] sm:$0xff] 0.0
      %510 = vst [vmem:[#allocation4 + $0x6d0] sm:$0xff] 0.0
      %511 = vst [vmem:[#allocation4 + $0x6d8] sm:$0xff] 0.0
      %512 = vst [vmem:[#allocation4 + $0x6e0] sm:$0xff] 0.0
      %513 = vst [vmem:[#allocation4 + $0x6e8] sm:$0xff] 0.0
      %514 = vst [vmem:[#allocation4 + $0x6f0] sm:$0xff] 0.0
      %515 = vst [vmem:[#allocation4 + $0x6f8] sm:$0xff] 0.0
      %516 = vst [vmem:[#allocation4 + $0x700] sm:$0xff] 0.0
      %517 = vst [vmem:[#allocation4 + $0x708] sm:$0xff] 0.0
      %518 = vst [vmem:[#allocation4 + $0x710] sm:$0xff] 0.0
      %519 = vst [vmem:[#allocation4 + $0x718] sm:$0xff] 0.0
      %520 = vst [vmem:[#allocation4 + $0x720] sm:$0xff] 0.0
      %521 = vst [vmem:[#allocation4 + $0x728] sm:$0xff] 0.0
      %522 = vst [vmem:[#allocation4 + $0x730] sm:$0xff] 0.0
      %523 = vst [vmem:[#allocation4 + $0x738] sm:$0xff] 0.0
      %524 = vst [vmem:[#allocation4 + $0x740] sm:$0xff] 0.0
      %525 = vst [vmem:[#allocation4 + $0x748] sm:$0xff] 0.0
      %526 = vst [vmem:[#allocation4 + $0x750] sm:$0xff] 0.0
      %527 = vst [vmem:[#allocation4 + $0x758] sm:$0xff] 0.0
      %528 = vst [vmem:[#allocation4 + $0x760] sm:$0xff] 0.0
      %529 = vst [vmem:[#allocation4 + $0x768] sm:$0xff] 0.0
      %530 = vst [vmem:[#allocation4 + $0x770] sm:$0xff] 0.0
      %531 = vst [vmem:[#allocation4 + $0x778] sm:$0xff] 0.0
      %532 = vst [vmem:[#allocation4 + $0x780] sm:$0xff] 0.0
      %533 = vst [vmem:[#allocation4 + $0x788] sm:$0xff] 0.0
      %534 = vst [vmem:[#allocation4 + $0x790] sm:$0xff] 0.0
      %535 = vst [vmem:[#allocation4 + $0x798] sm:$0xff] 0.0
      %536 = vst [vmem:[#allocation4 + $0x7a0] sm:$0xff] 0.0
      %537 = vst [vmem:[#allocation4 + $0x7a8] sm:$0xff] 0.0
      %538 = vst [vmem:[#allocation4 + $0x7b0] sm:$0xff] 0.0
      %539 = vst [vmem:[#allocation4 + $0x7b8] sm:$0xff] 0.0
      %540 = vst [vmem:[#allocation4 + $0x7c0] sm:$0xff] 0.0
      %541 = vst [vmem:[#allocation4 + $0x7c8] sm:$0xff] 0.0
      %542 = vst [vmem:[#allocation4 + $0x7d0] sm:$0xff] 0.0
      %543 = vst [vmem:[#allocation4 + $0x7d8] sm:$0xff] 0.0
      %544 = vst [vmem:[#allocation4 + $0x7e0] sm:$0xff] 0.0
      %545 = vst [vmem:[#allocation4 + $0x7e8] sm:$0xff] 0.0
      %546 = vst [vmem:[#allocation4 + $0x7f0] sm:$0xff] 0.0
      %547 = vst [vmem:[#allocation4 + $0x7f8] sm:$0xff] 0.0
      %548 = vst [vmem:[#allocation4 + $0x800] sm:$0xff] 0.0
      %549 = vst [vmem:[#allocation4 + $0x808] sm:$0xff] 0.0
      %550 = vst [vmem:[#allocation4 + $0x810] sm:$0xff] 0.0
      %551 = vst [vmem:[#allocation4 + $0x818] sm:$0xff] 0.0
      %552 = vst [vmem:[#allocation4 + $0x820] sm:$0xff] 0.0
      %553 = vst [vmem:[#allocation4 + $0x828] sm:$0xff] 0.0
      %554 = vst [vmem:[#allocation4 + $0x830] sm:$0xff] 0.0
      %555 = vst [vmem:[#allocation4 + $0x838] sm:$0xff] 0.0
      %556 = vst [vmem:[#allocation4 + $0x840] sm:$0xff] 0.0
      %557 = vst [vmem:[#allocation4 + $0x848] sm:$0xff] 0.0
      %558 = vst [vmem:[#allocation4 + $0x850] sm:$0xff] 0.0
      %559 = vst [vmem:[#allocation4 + $0x858] sm:$0xff] 0.0
      %560 = vst [vmem:[#allocation4 + $0x860] sm:$0xff] 0.0
      %561 = vst [vmem:[#allocation4 + $0x868] sm:$0xff] 0.0
      %562 = vst [vmem:[#allocation4 + $0x870] sm:$0xff] 0.0
      %563 = vst [vmem:[#allocation4 + $0x878] sm:$0xff] 0.0
      %564 = vst [vmem:[#allocation4 + $0x880] sm:$0xff] 0.0
      %565 = vst [vmem:[#allocation4 + $0x888] sm:$0xff] 0.0
      %566 = vst [vmem:[#allocation4 + $0x890] sm:$0xff] 0.0
      %567 = vst [vmem:[#allocation4 + $0x898] sm:$0xff] 0.0
      %568 = vst [vmem:[#allocation4 + $0x8a0] sm:$0xff] 0.0
      %569 = vst [vmem:[#allocation4 + $0x8a8] sm:$0xff] 0.0
      %570 = vst [vmem:[#allocation4 + $0x8b0] sm:$0xff] 0.0
      %571 = vst [vmem:[#allocation4 + $0x8b8] sm:$0xff] 0.0
      %572 = vst [vmem:[#allocation4 + $0x8c0] sm:$0xff] 0.0
      %573 = vst [vmem:[#allocation4 + $0x8c8] sm:$0xff] 0.0
      %574 = vst [vmem:[#allocation4 + $0x8d0] sm:$0xff] 0.0
      %575 = vst [vmem:[#allocation4 + $0x8d8] sm:$0xff] 0.0
      %576 = vst [vmem:[#allocation4 + $0x8e0] sm:$0xff] 0.0
      %577 = vst [vmem:[#allocation4 + $0x8e8] sm:$0xff] 0.0
      %578 = vst [vmem:[#allocation4 + $0x8f0] sm:$0xff] 0.0
      %579 = vst [vmem:[#allocation4 + $0x8f8] sm:$0xff] 0.0
      %v580 = vld [vmem:[#allocation2] sm:$0xff]
      %v581 = vld [vmem:[#allocation2 + $0x8] sm:$0xff]
      %v582 = vld [vmem:[#allocation2 + $0x18] sm:$0xff]
      %v583 = vld [vmem:[#allocation2 + $0x20] sm:$0xff]
      %v584 = vld [vmem:[#allocation2 + $0x30] sm:$0xff]
      %v585 = vld [vmem:[#allocation2 + $0x38] sm:$0xff]
      %v586 = vld [vmem:[#allocation2 + $0x48] sm:$0xff]
      %v587 = vld [vmem:[#allocation2 + $0x50] sm:$0xff]
      %v588 = vld [vmem:[#allocation2 + $0x60] sm:$0xff]
      %v589 = vld [vmem:[#allocation2 + $0x68] sm:$0xff]
      %v590 = vld [vmem:[#allocation2 + $0x78] sm:$0xff]
      %v591 = vld [vmem:[#allocation2 + $0x80] sm:$0xff]
      %v592 = vld [vmem:[#allocation2 + $0x90] sm:$0xff]
      %v593 = vld [vmem:[#allocation2 + $0x98] sm:$0xff]
      %v594 = vld [vmem:[#allocation2 + $0xa8] sm:$0xff]
      %v595 = vld [vmem:[#allocation2 + $0xb0] sm:$0xff]
      %v596 = vld [vmem:[#allocation2 + $0xc0] sm:$0xff]
      %v597 = vld [vmem:[#allocation2 + $0xc8] sm:$0xff]
      %v598 = vld [vmem:[#allocation2 + $0xd8] sm:$0xff]
      %v599 = vld [vmem:[#allocation2 + $0xe0] sm:$0xff]
      %v600 = vld [vmem:[#allocation2 + $0xf0] sm:$0xff]
      %v601 = vld [vmem:[#allocation2 + $0xf8] sm:$0xff]
      %v602 = vld [vmem:[#allocation2 + $0x108] sm:$0xff]
      %v603 = vld [vmem:[#allocation2 + $0x110] sm:$0xff]
      %v604 = vld [vmem:[#allocation2 + $0x120] sm:$0xff]
      %v605 = vld [vmem:[#allocation2 + $0x128] sm:$0xff]
      %v606 = vld [vmem:[#allocation2 + $0x138] sm:$0xff]
      %v607 = vld [vmem:[#allocation2 + $0x140] sm:$0xff]
      %v608 = vld [vmem:[#allocation2 + $0x150] sm:$0xff]
      %v609 = vld [vmem:[#allocation2 + $0x158] sm:$0xff]
      %v610 = vld [vmem:[#allocation2 + $0x168] sm:$0xff]
      %v611 = vld [vmem:[#allocation2 + $0x170] sm:$0xff]
      %612 = vst.msk [vmem:[#allocation4] sm:$0xff] %vm171, %v580
      %613 = vst.msk [vmem:[#allocation4 + $0x48] sm:$0xff] %vm171, %v581
      %614 = vst.msk [vmem:[#allocation4 + $0x90] sm:$0xff] %vm171, %v582
      %615 = vst.msk [vmem:[#allocation4 + $0xd8] sm:$0xff] %vm171, %v583
      %616 = vst.msk [vmem:[#allocation4 + $0x120] sm:$0xff] %vm171, %v584
      %617 = vst.msk [vmem:[#allocation4 + $0x168] sm:$0xff] %vm171, %v585
      %618 = vst.msk [vmem:[#allocation4 + $0x1b0] sm:$0xff] %vm171, %v586
      %619 = vst.msk [vmem:[#allocation4 + $0x1f8] sm:$0xff] %vm171, %v587
      %620 = vst.msk [vmem:[#allocation4 + $0x240] sm:$0xff] %vm171, %v588
      %621 = vst.msk [vmem:[#allocation4 + $0x288] sm:$0xff] %vm171, %v589
      %622 = vst.msk [vmem:[#allocation4 + $0x2d0] sm:$0xff] %vm171, %v590
      %623 = vst.msk [vmem:[#allocation4 + $0x318] sm:$0xff] %vm171, %v591
      %624 = vst.msk [vmem:[#allocation4 + $0x360] sm:$0xff] %vm171, %v592
      %625 = vst.msk [vmem:[#allocation4 + $0x3a8] sm:$0xff] %vm171, %v593
      %626 = vst.msk [vmem:[#allocation4 + $0x3f0] sm:$0xff] %vm171, %v594
      %627 = vst.msk [vmem:[#allocation4 + $0x438] sm:$0xff] %vm171, %v595
      %628 = vst.msk [vmem:[#allocation4 + $0x480] sm:$0xff] %vm171, %v596
      %629 = vst.msk [vmem:[#allocation4 + $0x4c8] sm:$0xff] %vm171, %v597
      %630 = vst.msk [vmem:[#allocation4 + $0x510] sm:$0xff] %vm171, %v598
      %631 = vst.msk [vmem:[#allocation4 + $0x558] sm:$0xff] %vm171, %v599
      %632 = vst.msk [vmem:[#allocation4 + $0x5a0] sm:$0xff] %vm171, %v600
      %633 = vst.msk [vmem:[#allocation4 + $0x5e8] sm:$0xff] %vm171, %v601
      %634 = vst.msk [vmem:[#allocation4 + $0x630] sm:$0xff] %vm171, %v602
      %635 = vst.msk [vmem:[#allocation4 + $0x678] sm:$0xff] %vm171, %v603
      %636 = vst.msk [vmem:[#allocation4 + $0x6c0] sm:$0xff] %vm171, %v604
      %637 = vst.msk [vmem:[#allocation4 + $0x708] sm:$0xff] %vm171, %v605
      %638 = vst.msk [vmem:[#allocation4 + $0x750] sm:$0xff] %vm171, %v606
      %639 = vst.msk [vmem:[#allocation4 + $0x798] sm:$0xff] %vm171, %v607
      %640 = vst.msk [vmem:[#allocation4 + $0x7e0] sm:$0xff] %vm171, %v608
      %641 = vst.msk [vmem:[#allocation4 + $0x828] sm:$0xff] %vm171, %v609
      %642 = vst.msk [vmem:[#allocation4 + $0x870] sm:$0xff] %vm171, %v610
      %643 = vst.msk [vmem:[#allocation4 + $0x8b8] sm:$0xff] %vm171, %v611
      %v644 = vld [vmem:[#allocation2 + $0x1] sm:$0xff]
      %v645 = vld [vmem:[#allocation2 + $0x9] sm:$0xff]
      %v646 = vld [vmem:[#allocation2 + $0x19] sm:$0xff]
      %v647 = vld [vmem:[#allocation2 + $0x21] sm:$0xff]
      %v648 = vld [vmem:[#allocation2 + $0x31] sm:$0xff]
      %v649 = vld [vmem:[#allocation2 + $0x39] sm:$0xff]
      %v650 = vld [vmem:[#allocation2 + $0x49] sm:$0xff]
      %v651 = vld [vmem:[#allocation2 + $0x51] sm:$0xff]
      %v652 = vld [vmem:[#allocation2 + $0x61] sm:$0xff]
      %v653 = vld [vmem:[#allocation2 + $0x69] sm:$0xff]
      %v654 = vld [vmem:[#allocation2 + $0x79] sm:$0xff]
      %v655 = vld [vmem:[#allocation2 + $0x81] sm:$0xff]
      %v656 = vld [vmem:[#allocation2 + $0x91] sm:$0xff]
      %v657 = vld [vmem:[#allocation2 + $0x99] sm:$0xff]
      %v658 = vld [vmem:[#allocation2 + $0xa9] sm:$0xff]
      %v659 = vld [vmem:[#allocation2 + $0xb1] sm:$0xff]
      %v660 = vld [vmem:[#allocation2 + $0xc1] sm:$0xff]
      %v661 = vld [vmem:[#allocation2 + $0xc9] sm:$0xff]
      %v662 = vld [vmem:[#allocation2 + $0xd9] sm:$0xff]
      %v663 = vld [vmem:[#allocation2 + $0xe1] sm:$0xff]
      %v664 = vld [vmem:[#allocation2 + $0xf1] sm:$0xff]
      %v665 = vld [vmem:[#allocation2 + $0xf9] sm:$0xff]
      %v666 = vld [vmem:[#allocation2 + $0x109] sm:$0xff]
      %v667 = vld [vmem:[#allocation2 + $0x111] sm:$0xff]
      %v668 = vld [vmem:[#allocation2 + $0x121] sm:$0xff]
      %v669 = vld [vmem:[#allocation2 + $0x129] sm:$0xff]
      %v670 = vld [vmem:[#allocation2 + $0x139] sm:$0xff]
      %v671 = vld [vmem:[#allocation2 + $0x141] sm:$0xff]
      %v672 = vld [vmem:[#allocation2 + $0x151] sm:$0xff]
      %v673 = vld [vmem:[#allocation2 + $0x159] sm:$0xff]
      %v674 = vld [vmem:[#allocation2 + $0x169] sm:$0xff]
      %v675 = vld [vmem:[#allocation2 + $0x171] sm:$0xff]
      %676 = vst.msk [vmem:[#allocation4 + $0x8] sm:$0xff] %vm171, %v644
      %677 = vst.msk [vmem:[#allocation4 + $0x50] sm:$0xff] %vm171, %v645
      %678 = vst.msk [vmem:[#allocation4 + $0x98] sm:$0xff] %vm171, %v646
      %679 = vst.msk [vmem:[#allocation4 + $0xe0] sm:$0xff] %vm171, %v647
      %680 = vst.msk [vmem:[#allocation4 + $0x128] sm:$0xff] %vm171, %v648
      %681 = vst.msk [vmem:[#allocation4 + $0x170] sm:$0xff] %vm171, %v649
      %682 = vst.msk [vmem:[#allocation4 + $0x1b8] sm:$0xff] %vm171, %v650
      %683 = vst.msk [vmem:[#allocation4 + $0x200] sm:$0xff] %vm171, %v651
      %684 = vst.msk [vmem:[#allocation4 + $0x248] sm:$0xff] %vm171, %v652
      %685 = vst.msk [vmem:[#allocation4 + $0x290] sm:$0xff] %vm171, %v653
      %686 = vst.msk [vmem:[#allocation4 + $0x2d8] sm:$0xff] %vm171, %v654
      %687 = vst.msk [vmem:[#allocation4 + $0x320] sm:$0xff] %vm171, %v655
      %688 = vst.msk [vmem:[#allocation4 + $0x368] sm:$0xff] %vm171, %v656
      %689 = vst.msk [vmem:[#allocation4 + $0x3b0] sm:$0xff] %vm171, %v657
      %690 = vst.msk [vmem:[#allocation4 + $0x3f8] sm:$0xff] %vm171, %v658
      %691 = vst.msk [vmem:[#allocation4 + $0x440] sm:$0xff] %vm171, %v659
      %692 = vst.msk [vmem:[#allocation4 + $0x488] sm:$0xff] %vm171, %v660
      %693 = vst.msk [vmem:[#allocation4 + $0x4d0] sm:$0xff] %vm171, %v661
      %694 = vst.msk [vmem:[#allocation4 + $0x518] sm:$0xff] %vm171, %v662
      %695 = vst.msk [vmem:[#allocation4 + $0x560] sm:$0xff] %vm171, %v663
      %696 = vst.msk [vmem:[#allocation4 + $0x5a8] sm:$0xff] %vm171, %v664
      %697 = vst.msk [vmem:[#allocation4 + $0x5f0] sm:$0xff] %vm171, %v665
      %698 = vst.msk [vmem:[#allocation4 + $0x638] sm:$0xff] %vm171, %v666
      %699 = vst.msk [vmem:[#allocation4 + $0x680] sm:$0xff] %vm171, %v667
      %700 = vst.msk [vmem:[#allocation4 + $0x6c8] sm:$0xff] %vm171, %v668
      %701 = vst.msk [vmem:[#allocation4 + $0x710] sm:$0xff] %vm171, %v669
      %702 = vst.msk [vmem:[#allocation4 + $0x758] sm:$0xff] %vm171, %v670
      %703 = vst.msk [vmem:[#allocation4 + $0x7a0] sm:$0xff] %vm171, %v671
      %704 = vst.msk [vmem:[#allocation4 + $0x7e8] sm:$0xff] %vm171, %v672
      %705 = vst.msk [vmem:[#allocation4 + $0x830] sm:$0xff] %vm171, %v673
      %706 = vst.msk [vmem:[#allocation4 + $0x878] sm:$0xff] %vm171, %v674
      %707 = vst.msk [vmem:[#allocation4 + $0x8c0] sm:$0xff] %vm171, %v675
      %v708 = vld [vmem:[#allocation2 + $0x2] sm:$0xff]
      %v709 = vld [vmem:[#allocation2 + $0xa] sm:$0xff]
      %v710 = vld [vmem:[#allocation2 + $0x1a] sm:$0xff]
      %v711 = vld [vmem:[#allocation2 + $0x22] sm:$0xff]
      %v712 = vld [vmem:[#allocation2 + $0x32] sm:$0xff]
      %v713 = vld [vmem:[#allocation2 + $0x3a] sm:$0xff]
      %v714 = vld [vmem:[#allocation2 + $0x4a] sm:$0xff]
      %v715 = vld [vmem:[#allocation2 + $0x52] sm:$0xff]
      %v716 = vld [vmem:[#allocation2 + $0x62] sm:$0xff]
      %v717 = vld [vmem:[#allocation2 + $0x6a] sm:$0xff]
      %v718 = vld [vmem:[#allocation2 + $0x7a] sm:$0xff]
      %v719 = vld [vmem:[#allocation2 + $0x82] sm:$0xff]
      %v720 = vld [vmem:[#allocation2 + $0x92] sm:$0xff]
      %v721 = vld [vmem:[#allocation2 + $0x9a] sm:$0xff]
      %v722 = vld [vmem:[#allocation2 + $0xaa] sm:$0xff]
      %v723 = vld [vmem:[#allocation2 + $0xb2] sm:$0xff]
      %v724 = vld [vmem:[#allocation2 + $0xc2] sm:$0xff]
      %v725 = vld [vmem:[#allocation2 + $0xca] sm:$0xff]
      %v726 = vld [vmem:[#allocation2 + $0xda] sm:$0xff]
      %v727 = vld [vmem:[#allocation2 + $0xe2] sm:$0xff]
      %v728 = vld [vmem:[#allocation2 + $0xf2] sm:$0xff]
      %v729 = vld [vmem:[#allocation2 + $0xfa] sm:$0xff]
      %v730 = vld [vmem:[#allocation2 + $0x10a] sm:$0xff]
      %v731 = vld [vmem:[#allocation2 + $0x112] sm:$0xff]
      %v732 = vld [vmem:[#allocation2 + $0x122] sm:$0xff]
      %v733 = vld [vmem:[#allocation2 + $0x12a] sm:$0xff]
      %v734 = vld [vmem:[#allocation2 + $0x13a] sm:$0xff]
      %v735 = vld [vmem:[#allocation2 + $0x142] sm:$0xff]
      %v736 = vld [vmem:[#allocation2 + $0x152] sm:$0xff]
      %v737 = vld [vmem:[#allocation2 + $0x15a] sm:$0xff]
      %v738 = vld [vmem:[#allocation2 + $0x16a] sm:$0xff]
      %v739 = vld [vmem:[#allocation2 + $0x172] sm:$0xff]
      %740 = vst.msk [vmem:[#allocation4 + $0x10] sm:$0xff] %vm171, %v708
      %741 = vst.msk [vmem:[#allocation4 + $0x58] sm:$0xff] %vm171, %v709
      %742 = vst.msk [vmem:[#allocation4 + $0xa0] sm:$0xff] %vm171, %v710
      %743 = vst.msk [vmem:[#allocation4 + $0xe8] sm:$0xff] %vm171, %v711
      %744 = vst.msk [vmem:[#allocation4 + $0x130] sm:$0xff] %vm171, %v712
      %745 = vst.msk [vmem:[#allocation4 + $0x178] sm:$0xff] %vm171, %v713
      %746 = vst.msk [vmem:[#allocation4 + $0x1c0] sm:$0xff] %vm171, %v714
      %747 = vst.msk [vmem:[#allocation4 + $0x208] sm:$0xff] %vm171, %v715
      %748 = vst.msk [vmem:[#allocation4 + $0x250] sm:$0xff] %vm171, %v716
      %749 = vst.msk [vmem:[#allocation4 + $0x298] sm:$0xff] %vm171, %v717
      %750 = vst.msk [vmem:[#allocation4 + $0x2e0] sm:$0xff] %vm171, %v718
      %751 = vst.msk [vmem:[#allocation4 + $0x328] sm:$0xff] %vm171, %v719
      %752 = vst.msk [vmem:[#allocation4 + $0x370] sm:$0xff] %vm171, %v720
      %753 = vst.msk [vmem:[#allocation4 + $0x3b8] sm:$0xff] %vm171, %v721
      %754 = vst.msk [vmem:[#allocation4 + $0x400] sm:$0xff] %vm171, %v722
      %755 = vst.msk [vmem:[#allocation4 + $0x448] sm:$0xff] %vm171, %v723
      %756 = vst.msk [vmem:[#allocation4 + $0x490] sm:$0xff] %vm171, %v724
      %757 = vst.msk [vmem:[#allocation4 + $0x4d8] sm:$0xff] %vm171, %v725
      %758 = vst.msk [vmem:[#allocation4 + $0x520] sm:$0xff] %vm171, %v726
      %759 = vst.msk [vmem:[#allocation4 + $0x568] sm:$0xff] %vm171, %v727
      %760 = vst.msk [vmem:[#allocation4 + $0x5b0] sm:$0xff] %vm171, %v728
      %761 = vst.msk [vmem:[#allocation4 + $0x5f8] sm:$0xff] %vm171, %v729
      %762 = vst.msk [vmem:[#allocation4 + $0x640] sm:$0xff] %vm171, %v730
      %763 = vst.msk [vmem:[#allocation4 + $0x688] sm:$0xff] %vm171, %v731
      %764 = vst.msk [vmem:[#allocation4 + $0x6d0] sm:$0xff] %vm171, %v732
      %765 = vst.msk [vmem:[#allocation4 + $0x718] sm:$0xff] %vm171, %v733
      %766 = vst.msk [vmem:[#allocation4 + $0x760] sm:$0xff] %vm171, %v734
      %767 = vst.msk [vmem:[#allocation4 + $0x7a8] sm:$0xff] %vm171, %v735
      %768 = vst.msk [vmem:[#allocation4 + $0x7f0] sm:$0xff] %vm171, %v736
      %769 = vst.msk [vmem:[#allocation4 + $0x838] sm:$0xff] %vm171, %v737
      %770 = vst.msk [vmem:[#allocation4 + $0x880] sm:$0xff] %vm171, %v738
      %771 = vst.msk [vmem:[#allocation4 + $0x8c8] sm:$0xff] %vm171, %v739
      %v772 = vld [vmem:[%s259] sm:$0xff]
      %v773 = vld [vmem:[%s259 + $0x8] sm:$0xff]
      %v774 = vld [vmem:[%s259 + $0x18] sm:$0xff]
      %v775 = vld [vmem:[%s259 + $0x20] sm:$0xff]
      %v776 = vld [vmem:[%s259 + $0x30] sm:$0xff]
      %v777 = vld [vmem:[%s259 + $0x38] sm:$0xff]
      %v778 = vld [vmem:[%s259 + $0x48] sm:$0xff]
      %v779 = vld [vmem:[%s259 + $0x50] sm:$0xff]
      %v780 = vld [vmem:[%s259 + $0x60] sm:$0xff]
      %v781 = vld [vmem:[%s259 + $0x68] sm:$0xff]
      %v782 = vld [vmem:[%s259 + $0x78] sm:$0xff]
      %v783 = vld [vmem:[%s259 + $0x80] sm:$0xff]
      %v784 = vld [vmem:[%s259 + $0x90] sm:$0xff]
      %v785 = vld [vmem:[%s259 + $0x98] sm:$0xff]
      %v786 = vld [vmem:[%s259 + $0xa8] sm:$0xff]
      %v787 = vld [vmem:[%s259 + $0xb0] sm:$0xff]
      %v788 = vld [vmem:[%s259 + $0xc0] sm:$0xff]
      %v789 = vld [vmem:[%s259 + $0xc8] sm:$0xff]
      %v790 = vld [vmem:[%s259 + $0xd8] sm:$0xff]
      %v791 = vld [vmem:[%s259 + $0xe0] sm:$0xff]
      %v792 = vld [vmem:[%s259 + $0xf0] sm:$0xff]
      %v793 = vld [vmem:[%s259 + $0xf8] sm:$0xff]
      %v794 = vld [vmem:[%s259 + $0x108] sm:$0xff]
      %v795 = vld [vmem:[%s259 + $0x110] sm:$0xff]
      %v796 = vld [vmem:[%s259 + $0x120] sm:$0xff]
      %v797 = vld [vmem:[%s259 + $0x128] sm:$0xff]
      %v798 = vld [vmem:[%s259 + $0x138] sm:$0xff]
      %v799 = vld [vmem:[%s259 + $0x140] sm:$0xff]
      %v800 = vld [vmem:[%s259 + $0x150] sm:$0xff]
      %v801 = vld [vmem:[%s259 + $0x158] sm:$0xff]
      %v802 = vld [vmem:[%s259 + $0x168] sm:$0xff]
      %v803 = vld [vmem:[%s259 + $0x170] sm:$0xff]
      %804 = vst.msk [vmem:[#allocation4 + $0x18] sm:$0xff] %vm171, %v772
      %805 = vst.msk [vmem:[#allocation4 + $0x60] sm:$0xff] %vm171, %v773
      %806 = vst.msk [vmem:[#allocation4 + $0xa8] sm:$0xff] %vm171, %v774
      %807 = vst.msk [vmem:[#allocation4 + $0xf0] sm:$0xff] %vm171, %v775
      %808 = vst.msk [vmem:[#allocation4 + $0x138] sm:$0xff] %vm171, %v776
      %809 = vst.msk [vmem:[#allocation4 + $0x180] sm:$0xff] %vm171, %v777
      %810 = vst.msk [vmem:[#allocation4 + $0x1c8] sm:$0xff] %vm171, %v778
      %811 = vst.msk [vmem:[#allocation4 + $0x210] sm:$0xff] %vm171, %v779
      %812 = vst.msk [vmem:[#allocation4 + $0x258] sm:$0xff] %vm171, %v780
      %813 = vst.msk [vmem:[#allocation4 + $0x2a0] sm:$0xff] %vm171, %v781
      %814 = vst.msk [vmem:[#allocation4 + $0x2e8] sm:$0xff] %vm171, %v782
      %815 = vst.msk [vmem:[#allocation4 + $0x330] sm:$0xff] %vm171, %v783
      %816 = vst.msk [vmem:[#allocation4 + $0x378] sm:$0xff] %vm171, %v784
      %817 = vst.msk [vmem:[#allocation4 + $0x3c0] sm:$0xff] %vm171, %v785
      %818 = vst.msk [vmem:[#allocation4 + $0x408] sm:$0xff] %vm171, %v786
      %819 = vst.msk [vmem:[#allocation4 + $0x450] sm:$0xff] %vm171, %v787
      %820 = vst.msk [vmem:[#allocation4 + $0x498] sm:$0xff] %vm171, %v788
      %821 = vst.msk [vmem:[#allocation4 + $0x4e0] sm:$0xff] %vm171, %v789
      %822 = vst.msk [vmem:[#allocation4 + $0x528] sm:$0xff] %vm171, %v790
      %823 = vst.msk [vmem:[#allocation4 + $0x570] sm:$0xff] %vm171, %v791
      %824 = vst.msk [vmem:[#allocation4 + $0x5b8] sm:$0xff] %vm171, %v792
      %825 = vst.msk [vmem:[#allocation4 + $0x600] sm:$0xff] %vm171, %v793
      %826 = vst.msk [vmem:[#allocation4 + $0x648] sm:$0xff] %vm171, %v794
      %827 = vst.msk [vmem:[#allocation4 + $0x690] sm:$0xff] %vm171, %v795
      %828 = vst.msk [vmem:[#allocation4 + $0x6d8] sm:$0xff] %vm171, %v796
      %829 = vst.msk [vmem:[#allocation4 + $0x720] sm:$0xff] %vm171, %v797
      %830 = vst.msk [vmem:[#allocation4 + $0x768] sm:$0xff] %vm171, %v798
      %831 = vst.msk [vmem:[#allocation4 + $0x7b0] sm:$0xff] %vm171, %v799
      %832 = vst.msk [vmem:[#allocation4 + $0x7f8] sm:$0xff] %vm171, %v800
      %833 = vst.msk [vmem:[#allocation4 + $0x840] sm:$0xff] %vm171, %v801
      %834 = vst.msk [vmem:[#allocation4 + $0x888] sm:$0xff] %vm171, %v802
      %835 = vst.msk [vmem:[#allocation4 + $0x8d0] sm:$0xff] %vm171, %v803
      %v836 = vld [vmem:[%s259 + $0x1] sm:$0xff]
      %v837 = vld [vmem:[%s259 + $0x9] sm:$0xff]
      %v838 = vld [vmem:[%s259 + $0x19] sm:$0xff]
      %v839 = vld [vmem:[%s259 + $0x21] sm:$0xff]
      %v840 = vld [vmem:[%s259 + $0x31] sm:$0xff]
      %v841 = vld [vmem:[%s259 + $0x39] sm:$0xff]
      %v842 = vld [vmem:[%s259 + $0x49] sm:$0xff]
      %v843 = vld [vmem:[%s259 + $0x51] sm:$0xff]
      %v844 = vld [vmem:[%s259 + $0x61] sm:$0xff]
      %v845 = vld [vmem:[%s259 + $0x69] sm:$0xff]
      %v846 = vld [vmem:[%s259 + $0x79] sm:$0xff]
      %v847 = vld [vmem:[%s259 + $0x81] sm:$0xff]
      %v848 = vld [vmem:[%s259 + $0x91] sm:$0xff]
      %v849 = vld [vmem:[%s259 + $0x99] sm:$0xff]
      %v850 = vld [vmem:[%s259 + $0xa9] sm:$0xff]
      %v851 = vld [vmem:[%s259 + $0xb1] sm:$0xff]
      %v852 = vld [vmem:[%s259 + $0xc1] sm:$0xff]
      %v853 = vld [vmem:[%s259 + $0xc9] sm:$0xff]
      %v854 = vld [vmem:[%s259 + $0xd9] sm:$0xff]
      %v855 = vld [vmem:[%s259 + $0xe1] sm:$0xff]
      %v856 = vld [vmem:[%s259 + $0xf1] sm:$0xff]
      %v857 = vld [vmem:[%s259 + $0xf9] sm:$0xff]
      %v858 = vld [vmem:[%s259 + $0x109] sm:$0xff]
      %v859 = vld [vmem:[%s259 + $0x111] sm:$0xff]
      %v860 = vld [vmem:[%s259 + $0x121] sm:$0xff]
      %v861 = vld [vmem:[%s259 + $0x129] sm:$0xff]
      %v862 = vld [vmem:[%s259 + $0x139] sm:$0xff]
      %v863 = vld [vmem:[%s259 + $0x141] sm:$0xff]
      %v864 = vld [vmem:[%s259 + $0x151] sm:$0xff]
      %v865 = vld [vmem:[%s259 + $0x159] sm:$0xff]
      %v866 = vld [vmem:[%s259 + $0x169] sm:$0xff]
      %v867 = vld [vmem:[%s259 + $0x171] sm:$0xff]
      %868 = vst.msk [vmem:[#allocation4 + $0x20] sm:$0xff] %vm171, %v836
      %869 = vst.msk [vmem:[#allocation4 + $0x68] sm:$0xff] %vm171, %v837
      %870 = vst.msk [vmem:[#allocation4 + $0xb0] sm:$0xff] %vm171, %v838
      %871 = vst.msk [vmem:[#allocation4 + $0xf8] sm:$0xff] %vm171, %v839
      %872 = vst.msk [vmem:[#allocation4 + $0x140] sm:$0xff] %vm171, %v840
      %873 = vst.msk [vmem:[#allocation4 + $0x188] sm:$0xff] %vm171, %v841
      %874 = vst.msk [vmem:[#allocation4 + $0x1d0] sm:$0xff] %vm171, %v842
      %875 = vst.msk [vmem:[#allocation4 + $0x218] sm:$0xff] %vm171, %v843
      %876 = vst.msk [vmem:[#allocation4 + $0x260] sm:$0xff] %vm171, %v844
      %877 = vst.msk [vmem:[#allocation4 + $0x2a8] sm:$0xff] %vm171, %v845
      %878 = vst.msk [vmem:[#allocation4 + $0x2f0] sm:$0xff] %vm171, %v846
      %879 = vst.msk [vmem:[#allocation4 + $0x338] sm:$0xff] %vm171, %v847
      %880 = vst.msk [vmem:[#allocation4 + $0x380] sm:$0xff] %vm171, %v848
      %881 = vst.msk [vmem:[#allocation4 + $0x3c8] sm:$0xff] %vm171, %v849
      %882 = vst.msk [vmem:[#allocation4 + $0x410] sm:$0xff] %vm171, %v850
      %883 = vst.msk [vmem:[#allocation4 + $0x458] sm:$0xff] %vm171, %v851
      %884 = vst.msk [vmem:[#allocation4 + $0x4a0] sm:$0xff] %vm171, %v852
      %885 = vst.msk [vmem:[#allocation4 + $0x4e8] sm:$0xff] %vm171, %v853
      %886 = vst.msk [vmem:[#allocation4 + $0x530] sm:$0xff] %vm171, %v854
      %887 = vst.msk [vmem:[#allocation4 + $0x578] sm:$0xff] %vm171, %v855
      %888 = vst.msk [vmem:[#allocation4 + $0x5c0] sm:$0xff] %vm171, %v856
      %889 = vst.msk [vmem:[#allocation4 + $0x608] sm:$0xff] %vm171, %v857
      %890 = vst.msk [vmem:[#allocation4 + $0x650] sm:$0xff] %vm171, %v858
      %891 = vst.msk [vmem:[#allocation4 + $0x698] sm:$0xff] %vm171, %v859
      %892 = vst.msk [vmem:[#allocation4 + $0x6e0] sm:$0xff] %vm171, %v860
      %893 = vst.msk [vmem:[#allocation4 + $0x728] sm:$0xff] %vm171, %v861
      %894 = vst.msk [vmem:[#allocation4 + $0x770] sm:$0xff] %vm171, %v862
      %895 = vst.msk [vmem:[#allocation4 + $0x7b8] sm:$0xff] %vm171, %v863
      %896 = vst.msk [vmem:[#allocation4 + $0x800] sm:$0xff] %vm171, %v864
      %897 = vst.msk [vmem:[#allocation4 + $0x848] sm:$0xff] %vm171, %v865
      %898 = vst.msk [vmem:[#allocation4 + $0x890] sm:$0xff] %vm171, %v866
      %899 = vst.msk [vmem:[#allocation4 + $0x8d8] sm:$0xff] %vm171, %v867
      %v900 = vld [vmem:[%s259 + $0x2] sm:$0xff]
      %v901 = vld [vmem:[%s259 + $0xa] sm:$0xff]
      %v902 = vld [vmem:[%s259 + $0x1a] sm:$0xff]
      %v903 = vld [vmem:[%s259 + $0x22] sm:$0xff]
      %v904 = vld [vmem:[%s259 + $0x32] sm:$0xff]
      %v905 = vld [vmem:[%s259 + $0x3a] sm:$0xff]
      %v906 = vld [vmem:[%s259 + $0x4a] sm:$0xff]
      %v907 = vld [vmem:[%s259 + $0x52] sm:$0xff]
      %v908 = vld [vmem:[%s259 + $0x62] sm:$0xff]
      %v909 = vld [vmem:[%s259 + $0x6a] sm:$0xff]
      %v910 = vld [vmem:[%s259 + $0x7a] sm:$0xff]
      %v911 = vld [vmem:[%s259 + $0x82] sm:$0xff]
      %v912 = vld [vmem:[%s259 + $0x92] sm:$0xff]
      %v913 = vld [vmem:[%s259 + $0x9a] sm:$0xff]
      %v914 = vld [vmem:[%s259 + $0xaa] sm:$0xff]
      %v915 = vld [vmem:[%s259 + $0xb2] sm:$0xff]
      %v916 = vld [vmem:[%s259 + $0xc2] sm:$0xff]
      %v917 = vld [vmem:[%s259 + $0xca] sm:$0xff]
      %v918 = vld [vmem:[%s259 + $0xda] sm:$0xff]
      %v919 = vld [vmem:[%s259 + $0xe2] sm:$0xff]
      %v920 = vld [vmem:[%s259 + $0xf2] sm:$0xff]
      %v921 = vld [vmem:[%s259 + $0xfa] sm:$0xff]
      %v922 = vld [vmem:[%s259 + $0x10a] sm:$0xff]
      %v923 = vld [vmem:[%s259 + $0x112] sm:$0xff]
      %v924 = vld [vmem:[%s259 + $0x122] sm:$0xff]
      %v925 = vld [vmem:[%s259 + $0x12a] sm:$0xff]
      %v926 = vld [vmem:[%s259 + $0x13a] sm:$0xff]
      %v927 = vld [vmem:[%s259 + $0x142] sm:$0xff]
      %v928 = vld [vmem:[%s259 + $0x152] sm:$0xff]
      %v929 = vld [vmem:[%s259 + $0x15a] sm:$0xff]
      %v930 = vld [vmem:[%s259 + $0x16a] sm:$0xff]
      %v931 = vld [vmem:[%s259 + $0x172] sm:$0xff]
      %932 = vst.msk [vmem:[#allocation4 + $0x28] sm:$0xff] %vm171, %v900
      %933 = vst.msk [vmem:[#allocation4 + $0x70] sm:$0xff] %vm171, %v901
      %934 = vst.msk [vmem:[#allocation4 + $0xb8] sm:$0xff] %vm171, %v902
      %935 = vst.msk [vmem:[#allocation4 + $0x100] sm:$0xff] %vm171, %v903
      %936 = vst.msk [vmem:[#allocation4 + $0x148] sm:$0xff] %vm171, %v904
      %937 = vst.msk [vmem:[#allocation4 + $0x190] sm:$0xff] %vm171, %v905
      %938 = vst.msk [vmem:[#allocation4 + $0x1d8] sm:$0xff] %vm171, %v906
      %939 = vst.msk [vmem:[#allocation4 + $0x220] sm:$0xff] %vm171, %v907
      %940 = vst.msk [vmem:[#allocation4 + $0x268] sm:$0xff] %vm171, %v908
      %941 = vst.msk [vmem:[#allocation4 + $0x2b0] sm:$0xff] %vm171, %v909
      %942 = vst.msk [vmem:[#allocation4 + $0x2f8] sm:$0xff] %vm171, %v910
      %943 = vst.msk [vmem:[#allocation4 + $0x340] sm:$0xff] %vm171, %v911
      %944 = vst.msk [vmem:[#allocation4 + $0x388] sm:$0xff] %vm171, %v912
      %945 = vst.msk [vmem:[#allocation4 + $0x3d0] sm:$0xff] %vm171, %v913
      %946 = vst.msk [vmem:[#allocation4 + $0x418] sm:$0xff] %vm171, %v914
      %947 = vst.msk [vmem:[#allocation4 + $0x460] sm:$0xff] %vm171, %v915
      %948 = vst.msk [vmem:[#allocation4 + $0x4a8] sm:$0xff] %vm171, %v916
      %949 = vst.msk [vmem:[#allocation4 + $0x4f0] sm:$0xff] %vm171, %v917
      %950 = vst.msk [vmem:[#allocation4 + $0x538] sm:$0xff] %vm171, %v918
      %951 = vst.msk [vmem:[#allocation4 + $0x580] sm:$0xff] %vm171, %v919
      %952 = vst.msk [vmem:[#allocation4 + $0x5c8] sm:$0xff] %vm171, %v920
      %953 = vst.msk [vmem:[#allocation4 + $0x610] sm:$0xff] %vm171, %v921
      %954 = vst.msk [vmem:[#allocation4 + $0x658] sm:$0xff] %vm171, %v922
      %955 = vst.msk [vmem:[#allocation4 + $0x6a0] sm:$0xff] %vm171, %v923
      %956 = vst.msk [vmem:[#allocation4 + $0x6e8] sm:$0xff] %vm171, %v924
      %957 = vst.msk [vmem:[#allocation4 + $0x730] sm:$0xff] %vm171, %v925
      %958 = vst.msk [vmem:[#allocation4 + $0x778] sm:$0xff] %vm171, %v926
      %959 = vst.msk [vmem:[#allocation4 + $0x7c0] sm:$0xff] %vm171, %v927
      %960 = vst.msk [vmem:[#allocation4 + $0x808] sm:$0xff] %vm171, %v928
      %961 = vst.msk [vmem:[#allocation4 + $0x850] sm:$0xff] %vm171, %v929
      %962 = vst.msk [vmem:[#allocation4 + $0x898] sm:$0xff] %vm171, %v930
      %963 = vst.msk [vmem:[#allocation4 + $0x8e0] sm:$0xff] %vm171, %v931
      %s964 = scalar_lea.vmem [#allocation2], 48
      %v965 = vld [vmem:[%s964] sm:$0xff]
      %v966 = vld [vmem:[%s964 + $0x8] sm:$0xff]
      %v967 = vld [vmem:[%s964 + $0x18] sm:$0xff]
      %v968 = vld [vmem:[%s964 + $0x20] sm:$0xff]
      %v969 = vld [vmem:[%s964 + $0x30] sm:$0xff]
      %v970 = vld [vmem:[%s964 + $0x38] sm:$0xff]
      %v971 = vld [vmem:[%s964 + $0x48] sm:$0xff]
      %v972 = vld [vmem:[%s964 + $0x50] sm:$0xff]
      %v973 = vld [vmem:[%s964 + $0x60] sm:$0xff]
      %v974 = vld [vmem:[%s964 + $0x68] sm:$0xff]
      %v975 = vld [vmem:[%s964 + $0x78] sm:$0xff]
      %v976 = vld [vmem:[%s964 + $0x80] sm:$0xff]
      %v977 = vld [vmem:[%s964 + $0x90] sm:$0xff]
      %v978 = vld [vmem:[%s964 + $0x98] sm:$0xff]
      %v979 = vld [vmem:[%s964 + $0xa8] sm:$0xff]
      %v980 = vld [vmem:[%s964 + $0xb0] sm:$0xff]
      %v981 = vld [vmem:[%s964 + $0xc0] sm:$0xff]
      %v982 = vld [vmem:[%s964 + $0xc8] sm:$0xff]
      %v983 = vld [vmem:[%s964 + $0xd8] sm:$0xff]
      %v984 = vld [vmem:[%s964 + $0xe0] sm:$0xff]
      %v985 = vld [vmem:[%s964 + $0xf0] sm:$0xff]
      %v986 = vld [vmem:[%s964 + $0xf8] sm:$0xff]
      %v987 = vld [vmem:[%s964 + $0x108] sm:$0xff]
      %v988 = vld [vmem:[%s964 + $0x110] sm:$0xff]
      %v989 = vld [vmem:[%s964 + $0x120] sm:$0xff]
      %v990 = vld [vmem:[%s964 + $0x128] sm:$0xff]
      %v991 = vld [vmem:[%s964 + $0x138] sm:$0xff]
      %v992 = vld [vmem:[%s964 + $0x140] sm:$0xff]
      %v993 = vld [vmem:[%s964 + $0x150] sm:$0xff]
      %v994 = vld [vmem:[%s964 + $0x158] sm:$0xff]
      %v995 = vld [vmem:[%s964 + $0x168] sm:$0xff]
      %v996 = vld [vmem:[%s964 + $0x170] sm:$0xff]
      %997 = vst.msk [vmem:[#allocation4 + $0x30] sm:$0xff] %vm171, %v965
      %998 = vst.msk [vmem:[#allocation4 + $0x78] sm:$0xff] %vm171, %v966
      %999 = vst.msk [vmem:[#allocation4 + $0xc0] sm:$0xff] %vm171, %v967
      %1000 = vst.msk [vmem:[#allocation4 + $0x108] sm:$0xff] %vm171, %v968
      %1001 = vst.msk [vmem:[#allocation4 + $0x150] sm:$0xff] %vm171, %v969
      %1002 = vst.msk [vmem:[#allocation4 + $0x198] sm:$0xff] %vm171, %v970
      %1003 = vst.msk [vmem:[#allocation4 + $0x1e0] sm:$0xff] %vm171, %v971
      %1004 = vst.msk [vmem:[#allocation4 + $0x228] sm:$0xff] %vm171, %v972
      %1005 = vst.msk [vmem:[#allocation4 + $0x270] sm:$0xff] %vm171, %v973
      %1006 = vst.msk [vmem:[#allocation4 + $0x2b8] sm:$0xff] %vm171, %v974
      %1007 = vst.msk [vmem:[#allocation4 + $0x300] sm:$0xff] %vm171, %v975
      %1008 = vst.msk [vmem:[#allocation4 + $0x348] sm:$0xff] %vm171, %v976
      %1009 = vst.msk [vmem:[#allocation4 + $0x390] sm:$0xff] %vm171, %v977
      %1010 = vst.msk [vmem:[#allocation4 + $0x3d8] sm:$0xff] %vm171, %v978
      %1011 = vst.msk [vmem:[#allocation4 + $0x420] sm:$0xff] %vm171, %v979
      %1012 = vst.msk [vmem:[#allocation4 + $0x468] sm:$0xff] %vm171, %v980
      %1013 = vst.msk [vmem:[#allocation4 + $0x4b0] sm:$0xff] %vm171, %v981
      %1014 = vst.msk [vmem:[#allocation4 + $0x4f8] sm:$0xff] %vm171, %v982
      %1015 = vst.msk [vmem:[#allocation4 + $0x540] sm:$0xff] %vm171, %v983
      %1016 = vst.msk [vmem:[#allocation4 + $0x588] sm:$0xff] %vm171, %v984
      %1017 = vst.msk [vmem:[#allocation4 + $0x5d0] sm:$0xff] %vm171, %v985
      %1018 = vst.msk [vmem:[#allocation4 + $0x618] sm:$0xff] %vm171, %v986
      %1019 = vst.msk [vmem:[#allocation4 + $0x660] sm:$0xff] %vm171, %v987
      %1020 = vst.msk [vmem:[#allocation4 + $0x6a8] sm:$0xff] %vm171, %v988
      %1021 = vst.msk [vmem:[#allocation4 + $0x6f0] sm:$0xff] %vm171, %v989
      %1022 = vst.msk [vmem:[#allocation4 + $0x738] sm:$0xff] %vm171, %v990
      %1023 = vst.msk [vmem:[#allocation4 + $0x780] sm:$0xff] %vm171, %v991
      %1024 = vst.msk [vmem:[#allocation4 + $0x7c8] sm:$0xff] %vm171, %v992
      %1025 = vst.msk [vmem:[#allocation4 + $0x810] sm:$0xff] %vm171, %v993
      %1026 = vst.msk [vmem:[#allocation4 + $0x858] sm:$0xff] %vm171, %v994
      %1027 = vst.msk [vmem:[#allocation4 + $0x8a0] sm:$0xff] %vm171, %v995
      %1028 = vst.msk [vmem:[#allocation4 + $0x8e8] sm:$0xff] %vm171, %v996
      %v1029 = vld [vmem:[%s964 + $0x1] sm:$0xff]
      %v1030 = vld [vmem:[%s964 + $0x9] sm:$0xff]
      %v1031 = vld [vmem:[%s964 + $0x19] sm:$0xff]
      %v1032 = vld [vmem:[%s964 + $0x21] sm:$0xff]
      %v1033 = vld [vmem:[%s964 + $0x31] sm:$0xff]
      %v1034 = vld [vmem:[%s964 + $0x39] sm:$0xff]
      %v1035 = vld [vmem:[%s964 + $0x49] sm:$0xff]
      %v1036 = vld [vmem:[%s964 + $0x51] sm:$0xff]
      %v1037 = vld [vmem:[%s964 + $0x61] sm:$0xff]
      %v1038 = vld [vmem:[%s964 + $0x69] sm:$0xff]
      %v1039 = vld [vmem:[%s964 + $0x79] sm:$0xff]
      %v1040 = vld [vmem:[%s964 + $0x81] sm:$0xff]
      %v1041 = vld [vmem:[%s964 + $0x91] sm:$0xff]
      %v1042 = vld [vmem:[%s964 + $0x99] sm:$0xff]
      %v1043 = vld [vmem:[%s964 + $0xa9] sm:$0xff]
      %v1044 = vld [vmem:[%s964 + $0xb1] sm:$0xff]
      %v1045 = vld [vmem:[%s964 + $0xc1] sm:$0xff]
      %v1046 = vld [vmem:[%s964 + $0xc9] sm:$0xff]
      %v1047 = vld [vmem:[%s964 + $0xd9] sm:$0xff]
      %v1048 = vld [vmem:[%s964 + $0xe1] sm:$0xff]
      %v1049 = vld [vmem:[%s964 + $0xf1] sm:$0xff]
      %v1050 = vld [vmem:[%s964 + $0xf9] sm:$0xff]
      %v1051 = vld [vmem:[%s964 + $0x109] sm:$0xff]
      %v1052 = vld [vmem:[%s964 + $0x111] sm:$0xff]
      %v1053 = vld [vmem:[%s964 + $0x121] sm:$0xff]
      %v1054 = vld [vmem:[%s964 + $0x129] sm:$0xff]
      %v1055 = vld [vmem:[%s964 + $0x139] sm:$0xff]
      %v1056 = vld [vmem:[%s964 + $0x141] sm:$0xff]
      %v1057 = vld [vmem:[%s964 + $0x151] sm:$0xff]
      %v1058 = vld [vmem:[%s964 + $0x159] sm:$0xff]
      %v1059 = vld [vmem:[%s964 + $0x169] sm:$0xff]
      %v1060 = vld [vmem:[%s964 + $0x171] sm:$0xff]
      %1061 = vst.msk [vmem:[#allocation4 + $0x38] sm:$0xff] %vm171, %v1029
      %1062 = vst.msk [vmem:[#allocation4 + $0x80] sm:$0xff] %vm171, %v1030
      %1063 = vst.msk [vmem:[#allocation4 + $0xc8] sm:$0xff] %vm171, %v1031
      %1064 = vst.msk [vmem:[#allocation4 + $0x110] sm:$0xff] %vm171, %v1032
      %1065 = vst.msk [vmem:[#allocation4 + $0x158] sm:$0xff] %vm171, %v1033
      %1066 = vst.msk [vmem:[#allocation4 + $0x1a0] sm:$0xff] %vm171, %v1034
      %1067 = vst.msk [vmem:[#allocation4 + $0x1e8] sm:$0xff] %vm171, %v1035
      %1068 = vst.msk [vmem:[#allocation4 + $0x230] sm:$0xff] %vm171, %v1036
      %1069 = vst.msk [vmem:[#allocation4 + $0x278] sm:$0xff] %vm171, %v1037
      %1070 = vst.msk [vmem:[#allocation4 + $0x2c0] sm:$0xff] %vm171, %v1038
      %1071 = vst.msk [vmem:[#allocation4 + $0x308] sm:$0xff] %vm171, %v1039
      %1072 = vst.msk [vmem:[#allocation4 + $0x350] sm:$0xff] %vm171, %v1040
      %1073 = vst.msk [vmem:[#allocation4 + $0x398] sm:$0xff] %vm171, %v1041
      %1074 = vst.msk [vmem:[#allocation4 + $0x3e0] sm:$0xff] %vm171, %v1042
      %1075 = vst.msk [vmem:[#allocation4 + $0x428] sm:$0xff] %vm171, %v1043
      %1076 = vst.msk [vmem:[#allocation4 + $0x470] sm:$0xff] %vm171, %v1044
      %1077 = vst.msk [vmem:[#allocation4 + $0x4b8] sm:$0xff] %vm171, %v1045
      %1078 = vst.msk [vmem:[#allocation4 + $0x500] sm:$0xff] %vm171, %v1046
      %1079 = vst.msk [vmem:[#allocation4 + $0x548] sm:$0xff] %vm171, %v1047
      %1080 = vst.msk [vmem:[#allocation4 + $0x590] sm:$0xff] %vm171, %v1048
      %1081 = vst.msk [vmem:[#allocation4 + $0x5d8] sm:$0xff] %vm171, %v1049
      %1082 = vst.msk [vmem:[#allocation4 + $0x620] sm:$0xff] %vm171, %v1050
      %1083 = vst.msk [vmem:[#allocation4 + $0x668] sm:$0xff] %vm171, %v1051
      %1084 = vst.msk [vmem:[#allocation4 + $0x6b0] sm:$0xff] %vm171, %v1052
      %1085 = vst.msk [vmem:[#allocation4 + $0x6f8] sm:$0xff] %vm171, %v1053
      %1086 = vst.msk [vmem:[#allocation4 + $0x740] sm:$0xff] %vm171, %v1054
      %1087 = vst.msk [vmem:[#allocation4 + $0x788] sm:$0xff] %vm171, %v1055
      %1088 = vst.msk [vmem:[#allocation4 + $0x7d0] sm:$0xff] %vm171, %v1056
      %1089 = vst.msk [vmem:[#allocation4 + $0x818] sm:$0xff] %vm171, %v1057
      %1090 = vst.msk [vmem:[#allocation4 + $0x860] sm:$0xff] %vm171, %v1058
      %1091 = vst.msk [vmem:[#allocation4 + $0x8a8] sm:$0xff] %vm171, %v1059
      %1092 = vst.msk [vmem:[#allocation4 + $0x8f0] sm:$0xff] %vm171, %v1060
      %v1093 = vld [vmem:[%s964 + $0x2] sm:$0xff]
      %v1094 = vld [vmem:[%s964 + $0xa] sm:$0xff]
      %v1095 = vld [vmem:[%s964 + $0x1a] sm:$0xff]
      %v1096 = vld [vmem:[%s964 + $0x22] sm:$0xff]
      %v1097 = vld [vmem:[%s964 + $0x32] sm:$0xff]
      %v1098 = vld [vmem:[%s964 + $0x3a] sm:$0xff]
      %v1099 = vld [vmem:[%s964 + $0x4a] sm:$0xff]
      %v1100 = vld [vmem:[%s964 + $0x52] sm:$0xff]
      %v1101 = vld [vmem:[%s964 + $0x62] sm:$0xff]
      %v1102 = vld [vmem:[%s964 + $0x6a] sm:$0xff]
      %v1103 = vld [vmem:[%s964 + $0x7a] sm:$0xff]
      %v1104 = vld [vmem:[%s964 + $0x82] sm:$0xff]
      %v1105 = vld [vmem:[%s964 + $0x92] sm:$0xff]
      %v1106 = vld [vmem:[%s964 + $0x9a] sm:$0xff]
      %v1107 = vld [vmem:[%s964 + $0xaa] sm:$0xff]
      %v1108 = vld [vmem:[%s964 + $0xb2] sm:$0xff]
      %v1109 = vld [vmem:[%s964 + $0xc2] sm:$0xff]
      %v1110 = vld [vmem:[%s964 + $0xca] sm:$0xff]
      %v1111 = vld [vmem:[%s964 + $0xda] sm:$0xff]
      %v1112 = vld [vmem:[%s964 + $0xe2] sm:$0xff]
      %v1113 = vld [vmem:[%s964 + $0xf2] sm:$0xff]
      %v1114 = vld [vmem:[%s964 + $0xfa] sm:$0xff]
      %v1115 = vld [vmem:[%s964 + $0x10a] sm:$0xff]
      %v1116 = vld [vmem:[%s964 + $0x112] sm:$0xff]
      %v1117 = vld [vmem:[%s964 + $0x122] sm:$0xff]
      %v1118 = vld [vmem:[%s964 + $0x12a] sm:$0xff]
      %v1119 = vld [vmem:[%s964 + $0x13a] sm:$0xff]
      %v1120 = vld [vmem:[%s964 + $0x142] sm:$0xff]
      %v1121 = vld [vmem:[%s964 + $0x152] sm:$0xff]
      %v1122 = vld [vmem:[%s964 + $0x15a] sm:$0xff]
      %v1123 = vld [vmem:[%s964 + $0x16a] sm:$0xff]
      %v1124 = vld [vmem:[%s964 + $0x172] sm:$0xff]
      %1125 = vst.msk [vmem:[#allocation4 + $0x40] sm:$0xff] %vm171, %v1093
      %1126 = vst.msk [vmem:[#allocation4 + $0x88] sm:$0xff] %vm171, %v1094
      %1127 = vst.msk [vmem:[#allocation4 + $0xd0] sm:$0xff] %vm171, %v1095
      %1128 = vst.msk [vmem:[#allocation4 + $0x118] sm:$0xff] %vm171, %v1096
      %1129 = vst.msk [vmem:[#allocation4 + $0x160] sm:$0xff] %vm171, %v1097
      %1130 = vst.msk [vmem:[#allocation4 + $0x1a8] sm:$0xff] %vm171, %v1098
      %1131 = vst.msk [vmem:[#allocation4 + $0x1f0] sm:$0xff] %vm171, %v1099
      %1132 = vst.msk [vmem:[#allocation4 + $0x238] sm:$0xff] %vm171, %v1100
      %1133 = vst.msk [vmem:[#allocation4 + $0x280] sm:$0xff] %vm171, %v1101
      %1134 = vst.msk [vmem:[#allocation4 + $0x2c8] sm:$0xff] %vm171, %v1102
      %1135 = vst.msk [vmem:[#allocation4 + $0x310] sm:$0xff] %vm171, %v1103
      %1136 = vst.msk [vmem:[#allocation4 + $0x358] sm:$0xff] %vm171, %v1104
      %1137 = vst.msk [vmem:[#allocation4 + $0x3a0] sm:$0xff] %vm171, %v1105
      %1138 = vst.msk [vmem:[#allocation4 + $0x3e8] sm:$0xff] %vm171, %v1106
      %1139 = vst.msk [vmem:[#allocation4 + $0x430] sm:$0xff] %vm171, %v1107
      %1140 = vst.msk [vmem:[#allocation4 + $0x478] sm:$0xff] %vm171, %v1108
      %1141 = vst.msk [vmem:[#allocation4 + $0x4c0] sm:$0xff] %vm171, %v1109
      %1142 = vst.msk [vmem:[#allocation4 + $0x508] sm:$0xff] %vm171, %v1110
      %1143 = vst.msk [vmem:[#allocation4 + $0x550] sm:$0xff] %vm171, %v1111
      %1144 = vst.msk [vmem:[#allocation4 + $0x598] sm:$0xff] %vm171, %v1112
      %1145 = vst.msk [vmem:[#allocation4 + $0x5e0] sm:$0xff] %vm171, %v1113
      %1146 = vst.msk [vmem:[#allocation4 + $0x628] sm:$0xff] %vm171, %v1114
      %1147 = vst.msk [vmem:[#allocation4 + $0x670] sm:$0xff] %vm171, %v1115
      %1148 = vst.msk [vmem:[#allocation4 + $0x6b8] sm:$0xff] %vm171, %v1116
      %1149 = vst.msk [vmem:[#allocation4 + $0x700] sm:$0xff] %vm171, %v1117
      %1150 = vst.msk [vmem:[#allocation4 + $0x748] sm:$0xff] %vm171, %v1118
      %1151 = vst.msk [vmem:[#allocation4 + $0x790] sm:$0xff] %vm171, %v1119
      %1152 = vst.msk [vmem:[#allocation4 + $0x7d8] sm:$0xff] %vm171, %v1120
      %1153 = vst.msk [vmem:[#allocation4 + $0x820] sm:$0xff] %vm171, %v1121
      %1154 = vst.msk [vmem:[#allocation4 + $0x868] sm:$0xff] %vm171, %v1122
      %1155 = vst.msk [vmem:[#allocation4 + $0x8b0] sm:$0xff] %vm171, %v1123
      %1156 = vst.msk [vmem:[#allocation4 + $0x8f8] sm:$0xff] %vm171, %v1124
      %v1157 = vld [vmem:[#allocation4] sm:$0xff]
      %v1158 = vld [vmem:[#allocation4 + $0x8] sm:$0xff]
      %v1159 = vld [vmem:[#allocation4 + $0x10] sm:$0xff]
      %v1160 = vld [vmem:[#allocation4 + $0x18] sm:$0xff]
      %v1161 = vld [vmem:[#allocation4 + $0x20] sm:$0xff]
      %v1162 = vld [vmem:[#allocation4 + $0x28] sm:$0xff]
      %v1163 = vld [vmem:[#allocation4 + $0x30] sm:$0xff]
      %v1164 = vld [vmem:[#allocation4 + $0x38] sm:$0xff]
      %v1165 = vld [vmem:[#allocation4 + $0x40] sm:$0xff]
      %v1166 = vld [vmem:[#allocation4 + $0x48] sm:$0xff]
      %v1167 = vld [vmem:[#allocation4 + $0x50] sm:$0xff]
      %v1168 = vld [vmem:[#allocation4 + $0x58] sm:$0xff]
      %v1169 = vld [vmem:[#allocation4 + $0x60] sm:$0xff]
      %v1170 = vld [vmem:[#allocation4 + $0x68] sm:$0xff]
      %v1171 = vld [vmem:[#allocation4 + $0x70] sm:$0xff]
      %v1172 = vld [vmem:[#allocation4 + $0x78] sm:$0xff]
      %v1173 = vld [vmem:[#allocation4 + $0x80] sm:$0xff]
      %v1174 = vld [vmem:[#allocation4 + $0x88] sm:$0xff]
      %v1175 = vld [vmem:[#allocation4 + $0x90] sm:$0xff]
      %v1176 = vld [vmem:[#allocation4 + $0x98] sm:$0xff]
      %v1177 = vld [vmem:[#allocation4 + $0xa0] sm:$0xff]
      %v1178 = vld [vmem:[#allocation4 + $0xa8] sm:$0xff]
      %v1179 = vld [vmem:[#allocation4 + $0xb0] sm:$0xff]
      %v1180 = vld [vmem:[#allocation4 + $0xb8] sm:$0xff]
      %v1181 = vld [vmem:[#allocation4 + $0xc0] sm:$0xff]
      %v1182 = vld [vmem:[#allocation4 + $0xc8] sm:$0xff]
      %v1183 = vld [vmem:[#allocation4 + $0xd0] sm:$0xff]
      %v1184 = vld [vmem:[#allocation4 + $0xd8] sm:$0xff]
      %v1185 = vld [vmem:[#allocation4 + $0xe0] sm:$0xff]
      %v1186 = vld [vmem:[#allocation4 + $0xe8] sm:$0xff]
      %v1187 = vld [vmem:[#allocation4 + $0xf0] sm:$0xff]
      %v1188 = vld [vmem:[#allocation4 + $0xf8] sm:$0xff]
      %v1189 = vld [vmem:[#allocation4 + $0x100] sm:$0xff]
      %v1190 = vld [vmem:[#allocation4 + $0x108] sm:$0xff]
      %v1191 = vld [vmem:[#allocation4 + $0x110] sm:$0xff]
      %v1192 = vld [vmem:[#allocation4 + $0x118] sm:$0xff]
      %v1193 = vld [vmem:[#allocation4 + $0x120] sm:$0xff]
      %v1194 = vld [vmem:[#allocation4 + $0x128] sm:$0xff]
      %v1195 = vld [vmem:[#allocation4 + $0x130] sm:$0xff]
      %v1196 = vld [vmem:[#allocation4 + $0x138] sm:$0xff]
      %v1197 = vld [vmem:[#allocation4 + $0x140] sm:$0xff]
      %v1198 = vld [vmem:[#allocation4 + $0x148] sm:$0xff]
      %v1199 = vld [vmem:[#allocation4 + $0x150] sm:$0xff]
      %v1200 = vld [vmem:[#allocation4 + $0x158] sm:$0xff]
      %v1201 = vld [vmem:[#allocation4 + $0x160] sm:$0xff]
      %v1202 = vld [vmem:[#allocation4 + $0x168] sm:$0xff]
      %v1203 = vld [vmem:[#allocation4 + $0x170] sm:$0xff]
      %v1204 = vld [vmem:[#allocation4 + $0x178] sm:$0xff]
      %v1205 = vld [vmem:[#allocation4 + $0x180] sm:$0xff]
      %v1206 = vld [vmem:[#allocation4 + $0x188] sm:$0xff]
      %v1207 = vld [vmem:[#allocation4 + $0x190] sm:$0xff]
      %v1208 = vld [vmem:[#allocation4 + $0x198] sm:$0xff]
      %v1209 = vld [vmem:[#allocation4 + $0x1a0] sm:$0xff]
      %v1210 = vld [vmem:[#allocation4 + $0x1a8] sm:$0xff]
      %v1211 = vld [vmem:[#allocation4 + $0x1b0] sm:$0xff]
      %v1212 = vld [vmem:[#allocation4 + $0x1b8] sm:$0xff]
      %v1213 = vld [vmem:[#allocation4 + $0x1c0] sm:$0xff]
      %v1214 = vld [vmem:[#allocation4 + $0x1c8] sm:$0xff]
      %v1215 = vld [vmem:[#allocation4 + $0x1d0] sm:$0xff]
      %v1216 = vld [vmem:[#allocation4 + $0x1d8] sm:$0xff]
      %v1217 = vld [vmem:[#allocation4 + $0x1e0] sm:$0xff]
      %v1218 = vld [vmem:[#allocation4 + $0x1e8] sm:$0xff]
      %v1219 = vld [vmem:[#allocation4 + $0x1f0] sm:$0xff]
      %v1220 = vld [vmem:[#allocation4 + $0x1f8] sm:$0xff]
      %v1221 = vld [vmem:[#allocation4 + $0x200] sm:$0xff]
      %v1222 = vld [vmem:[#allocation4 + $0x208] sm:$0xff]
      %v1223 = vld [vmem:[#allocation4 + $0x210] sm:$0xff]
      %v1224 = vld [vmem:[#allocation4 + $0x218] sm:$0xff]
      %v1225 = vld [vmem:[#allocation4 + $0x220] sm:$0xff]
      %v1226 = vld [vmem:[#allocation4 + $0x228] sm:$0xff]
      %v1227 = vld [vmem:[#allocation4 + $0x230] sm:$0xff]
      %v1228 = vld [vmem:[#allocation4 + $0x238] sm:$0xff]
      %v1229 = vld [vmem:[#allocation4 + $0x240] sm:$0xff]
      %v1230 = vld [vmem:[#allocation4 + $0x248] sm:$0xff]
      %v1231 = vld [vmem:[#allocation4 + $0x250] sm:$0xff]
      %v1232 = vld [vmem:[#allocation4 + $0x258] sm:$0xff]
      %v1233 = vld [vmem:[#allocation4 + $0x260] sm:$0xff]
      %v1234 = vld [vmem:[#allocation4 + $0x268] sm:$0xff]
      %v1235 = vld [vmem:[#allocation4 + $0x270] sm:$0xff]
      %v1236 = vld [vmem:[#allocation4 + $0x278] sm:$0xff]
      %v1237 = vld [vmem:[#allocation4 + $0x280] sm:$0xff]
      %v1238 = vld [vmem:[#allocation4 + $0x288] sm:$0xff]
      %v1239 = vld [vmem:[#allocation4 + $0x290] sm:$0xff]
      %v1240 = vld [vmem:[#allocation4 + $0x298] sm:$0xff]
      %v1241 = vld [vmem:[#allocation4 + $0x2a0] sm:$0xff]
      %v1242 = vld [vmem:[#allocation4 + $0x2a8] sm:$0xff]
      %v1243 = vld [vmem:[#allocation4 + $0x2b0] sm:$0xff]
      %v1244 = vld [vmem:[#allocation4 + $0x2b8] sm:$0xff]
      %v1245 = vld [vmem:[#allocation4 + $0x2c0] sm:$0xff]
      %v1246 = vld [vmem:[#allocation4 + $0x2c8] sm:$0xff]
      %v1247 = vld [vmem:[#allocation4 + $0x2d0] sm:$0xff]
      %v1248 = vld [vmem:[#allocation4 + $0x2d8] sm:$0xff]
      %v1249 = vld [vmem:[#allocation4 + $0x2e0] sm:$0xff]
      %v1250 = vld [vmem:[#allocation4 + $0x2e8] sm:$0xff]
      %v1251 = vld [vmem:[#allocation4 + $0x2f0] sm:$0xff]
      %v1252 = vld [vmem:[#allocation4 + $0x2f8] sm:$0xff]
      %v1253 = vld [vmem:[#allocation4 + $0x300] sm:$0xff]
      %v1254 = vld [vmem:[#allocation4 + $0x308] sm:$0xff]
      %v1255 = vld [vmem:[#allocation4 + $0x310] sm:$0xff]
      %v1256 = vld [vmem:[#allocation4 + $0x318] sm:$0xff]
      %v1257 = vld [vmem:[#allocation4 + $0x320] sm:$0xff]
      %v1258 = vld [vmem:[#allocation4 + $0x328] sm:$0xff]
      %v1259 = vld [vmem:[#allocation4 + $0x330] sm:$0xff]
      %v1260 = vld [vmem:[#allocation4 + $0x338] sm:$0xff]
      %v1261 = vld [vmem:[#allocation4 + $0x340] sm:$0xff]
      %v1262 = vld [vmem:[#allocation4 + $0x348] sm:$0xff]
      %v1263 = vld [vmem:[#allocation4 + $0x350] sm:$0xff]
      %v1264 = vld [vmem:[#allocation4 + $0x358] sm:$0xff]
      %v1265 = vld [vmem:[#allocation4 + $0x360] sm:$0xff]
      %v1266 = vld [vmem:[#allocation4 + $0x368] sm:$0xff]
      %v1267 = vld [vmem:[#allocation4 + $0x370] sm:$0xff]
      %v1268 = vld [vmem:[#allocation4 + $0x378] sm:$0xff]
      %v1269 = vld [vmem:[#allocation4 + $0x380] sm:$0xff]
      %v1270 = vld [vmem:[#allocation4 + $0x388] sm:$0xff]
      %v1271 = vld [vmem:[#allocation4 + $0x390] sm:$0xff]
      %v1272 = vld [vmem:[#allocation4 + $0x398] sm:$0xff]
      %v1273 = vld [vmem:[#allocation4 + $0x3a0] sm:$0xff]
      %v1274 = vld [vmem:[#allocation4 + $0x3a8] sm:$0xff]
      %v1275 = vld [vmem:[#allocation4 + $0x3b0] sm:$0xff]
      %v1276 = vld [vmem:[#allocation4 + $0x3b8] sm:$0xff]
      %v1277 = vld [vmem:[#allocation4 + $0x3c0] sm:$0xff]
      %v1278 = vld [vmem:[#allocation4 + $0x3c8] sm:$0xff]
      %v1279 = vld [vmem:[#allocation4 + $0x3d0] sm:$0xff]
      %v1280 = vld [vmem:[#allocation4 + $0x3d8] sm:$0xff]
      %v1281 = vld [vmem:[#allocation4 + $0x3e0] sm:$0xff]
      %v1282 = vld [vmem:[#allocation4 + $0x3e8] sm:$0xff]
      %v1283 = vld [vmem:[#allocation4 + $0x3f0] sm:$0xff]
      %v1284 = vld [vmem:[#allocation4 + $0x3f8] sm:$0xff]
      %v1285 = vld [vmem:[#allocation4 + $0x400] sm:$0xff]
      %v1286 = vld [vmem:[#allocation4 + $0x408] sm:$0xff]
      %v1287 = vld [vmem:[#allocation4 + $0x410] sm:$0xff]
      %v1288 = vld [vmem:[#allocation4 + $0x418] sm:$0xff]
      %v1289 = vld [vmem:[#allocation4 + $0x420] sm:$0xff]
      %v1290 = vld [vmem:[#allocation4 + $0x428] sm:$0xff]
      %v1291 = vld [vmem:[#allocation4 + $0x430] sm:$0xff]
      %v1292 = vld [vmem:[#allocation4 + $0x438] sm:$0xff]
      %v1293 = vld [vmem:[#allocation4 + $0x440] sm:$0xff]
      %v1294 = vld [vmem:[#allocation4 + $0x448] sm:$0xff]
      %v1295 = vld [vmem:[#allocation4 + $0x450] sm:$0xff]
      %v1296 = vld [vmem:[#allocation4 + $0x458] sm:$0xff]
      %v1297 = vld [vmem:[#allocation4 + $0x460] sm:$0xff]
      %v1298 = vld [vmem:[#allocation4 + $0x468] sm:$0xff]
      %v1299 = vld [vmem:[#allocation4 + $0x470] sm:$0xff]
      %v1300 = vld [vmem:[#allocation4 + $0x478] sm:$0xff]
      %v1301 = vld [vmem:[#allocation4 + $0x480] sm:$0xff]
      %v1302 = vld [vmem:[#allocation4 + $0x488] sm:$0xff]
      %v1303 = vld [vmem:[#allocation4 + $0x490] sm:$0xff]
      %v1304 = vld [vmem:[#allocation4 + $0x498] sm:$0xff]
      %v1305 = vld [vmem:[#allocation4 + $0x4a0] sm:$0xff]
      %v1306 = vld [vmem:[#allocation4 + $0x4a8] sm:$0xff]
      %v1307 = vld [vmem:[#allocation4 + $0x4b0] sm:$0xff]
      %v1308 = vld [vmem:[#allocation4 + $0x4b8] sm:$0xff]
      %v1309 = vld [vmem:[#allocation4 + $0x4c0] sm:$0xff]
      %v1310 = vld [vmem:[#allocation4 + $0x4c8] sm:$0xff]
      %v1311 = vld [vmem:[#allocation4 + $0x4d0] sm:$0xff]
      %v1312 = vld [vmem:[#allocation4 + $0x4d8] sm:$0xff]
      %v1313 = vld [vmem:[#allocation4 + $0x4e0] sm:$0xff]
      %v1314 = vld [vmem:[#allocation4 + $0x4e8] sm:$0xff]
      %v1315 = vld [vmem:[#allocation4 + $0x4f0] sm:$0xff]
      %v1316 = vld [vmem:[#allocation4 + $0x4f8] sm:$0xff]
      %v1317 = vld [vmem:[#allocation4 + $0x500] sm:$0xff]
      %v1318 = vld [vmem:[#allocation4 + $0x508] sm:$0xff]
      %v1319 = vld [vmem:[#allocation4 + $0x510] sm:$0xff]
      %v1320 = vld [vmem:[#allocation4 + $0x518] sm:$0xff]
      %v1321 = vld [vmem:[#allocation4 + $0x520] sm:$0xff]
      %v1322 = vld [vmem:[#allocation4 + $0x528] sm:$0xff]
      %v1323 = vld [vmem:[#allocation4 + $0x530] sm:$0xff]
      %v1324 = vld [vmem:[#allocation4 + $0x538] sm:$0xff]
      %v1325 = vld [vmem:[#allocation4 + $0x540] sm:$0xff]
      %v1326 = vld [vmem:[#allocation4 + $0x548] sm:$0xff]
      %v1327 = vld [vmem:[#allocation4 + $0x550] sm:$0xff]
      %v1328 = vld [vmem:[#allocation4 + $0x558] sm:$0xff]
      %v1329 = vld [vmem:[#allocation4 + $0x560] sm:$0xff]
      %v1330 = vld [vmem:[#allocation4 + $0x568] sm:$0xff]
      %v1331 = vld [vmem:[#allocation4 + $0x570] sm:$0xff]
      %v1332 = vld [vmem:[#allocation4 + $0x578] sm:$0xff]
      %v1333 = vld [vmem:[#allocation4 + $0x580] sm:$0xff]
      %v1334 = vld [vmem:[#allocation4 + $0x588] sm:$0xff]
      %v1335 = vld [vmem:[#allocation4 + $0x590] sm:$0xff]
      %v1336 = vld [vmem:[#allocation4 + $0x598] sm:$0xff]
      %v1337 = vld [vmem:[#allocation4 + $0x5a0] sm:$0xff]
      %v1338 = vld [vmem:[#allocation4 + $0x5a8] sm:$0xff]
      %v1339 = vld [vmem:[#allocation4 + $0x5b0] sm:$0xff]
      %v1340 = vld [vmem:[#allocation4 + $0x5b8] sm:$0xff]
      %v1341 = vld [vmem:[#allocation4 + $0x5c0] sm:$0xff]
      %v1342 = vld [vmem:[#allocation4 + $0x5c8] sm:$0xff]
      %v1343 = vld [vmem:[#allocation4 + $0x5d0] sm:$0xff]
      %v1344 = vld [vmem:[#allocation4 + $0x5d8] sm:$0xff]
      %v1345 = vld [vmem:[#allocation4 + $0x5e0] sm:$0xff]
      %v1346 = vld [vmem:[#allocation4 + $0x5e8] sm:$0xff]
      %v1347 = vld [vmem:[#allocation4 + $0x5f0] sm:$0xff]
      %v1348 = vld [vmem:[#allocation4 + $0x5f8] sm:$0xff]
      %v1349 = vld [vmem:[#allocation4 + $0x600] sm:$0xff]
      %v1350 = vld [vmem:[#allocation4 + $0x608] sm:$0xff]
      %v1351 = vld [vmem:[#allocation4 + $0x610] sm:$0xff]
      %v1352 = vld [vmem:[#allocation4 + $0x618] sm:$0xff]
      %v1353 = vld [vmem:[#allocation4 + $0x620] sm:$0xff]
      %v1354 = vld [vmem:[#allocation4 + $0x628] sm:$0xff]
      %v1355 = vld [vmem:[#allocation4 + $0x630] sm:$0xff]
      %v1356 = vld [vmem:[#allocation4 + $0x638] sm:$0xff]
      %v1357 = vld [vmem:[#allocation4 + $0x640] sm:$0xff]
      %v1358 = vld [vmem:[#allocation4 + $0x648] sm:$0xff]
      %v1359 = vld [vmem:[#allocation4 + $0x650] sm:$0xff]
      %v1360 = vld [vmem:[#allocation4 + $0x658] sm:$0xff]
      %v1361 = vld [vmem:[#allocation4 + $0x660] sm:$0xff]
      %v1362 = vld [vmem:[#allocation4 + $0x668] sm:$0xff]
      %v1363 = vld [vmem:[#allocation4 + $0x670] sm:$0xff]
      %v1364 = vld [vmem:[#allocation4 + $0x678] sm:$0xff]
      %v1365 = vld [vmem:[#allocation4 + $0x680] sm:$0xff]
      %v1366 = vld [vmem:[#allocation4 + $0x688] sm:$0xff]
      %v1367 = vld [vmem:[#allocation4 + $0x690] sm:$0xff]
      %v1368 = vld [vmem:[#allocation4 + $0x698] sm:$0xff]
      %v1369 = vld [vmem:[#allocation4 + $0x6a0] sm:$0xff]
      %v1370 = vld [vmem:[#allocation4 + $0x6a8] sm:$0xff]
      %v1371 = vld [vmem:[#allocation4 + $0x6b0] sm:$0xff]
      %v1372 = vld [vmem:[#allocation4 + $0x6b8] sm:$0xff]
      %v1373 = vld [vmem:[#allocation4 + $0x6c0] sm:$0xff]
      %v1374 = vld [vmem:[#allocation4 + $0x6c8] sm:$0xff]
      %v1375 = vld [vmem:[#allocation4 + $0x6d0] sm:$0xff]
      %v1376 = vld [vmem:[#allocation4 + $0x6d8] sm:$0xff]
      %v1377 = vld [vmem:[#allocation4 + $0x6e0] sm:$0xff]
      %v1378 = vld [vmem:[#allocation4 + $0x6e8] sm:$0xff]
      %v1379 = vld [vmem:[#allocation4 + $0x6f0] sm:$0xff]
      %v1380 = vld [vmem:[#allocation4 + $0x6f8] sm:$0xff]
      %v1381 = vld [vmem:[#allocation4 + $0x700] sm:$0xff]
      %v1382 = vld [vmem:[#allocation4 + $0x708] sm:$0xff]
      %v1383 = vld [vmem:[#allocation4 + $0x710] sm:$0xff]
      %v1384 = vld [vmem:[#allocation4 + $0x718] sm:$0xff]
      %v1385 = vld [vmem:[#allocation4 + $0x720] sm:$0xff]
      %v1386 = vld [vmem:[#allocation4 + $0x728] sm:$0xff]
      %v1387 = vld [vmem:[#allocation4 + $0x730] sm:$0xff]
      %v1388 = vld [vmem:[#allocation4 + $0x738] sm:$0xff]
      %v1389 = vld [vmem:[#allocation4 + $0x740] sm:$0xff]
      %v1390 = vld [vmem:[#allocation4 + $0x748] sm:$0xff]
      %v1391 = vld [vmem:[#allocation4 + $0x750] sm:$0xff]
      %v1392 = vld [vmem:[#allocation4 + $0x758] sm:$0xff]
      %v1393 = vld [vmem:[#allocation4 + $0x760] sm:$0xff]
      %v1394 = vld [vmem:[#allocation4 + $0x768] sm:$0xff]
      %v1395 = vld [vmem:[#allocation4 + $0x770] sm:$0xff]
      %v1396 = vld [vmem:[#allocation4 + $0x778] sm:$0xff]
      %v1397 = vld [vmem:[#allocation4 + $0x780] sm:$0xff]
      %v1398 = vld [vmem:[#allocation4 + $0x788] sm:$0xff]
      %v1399 = vld [vmem:[#allocation4 + $0x790] sm:$0xff]
      %v1400 = vld [vmem:[#allocation4 + $0x798] sm:$0xff]
      %v1401 = vld [vmem:[#allocation4 + $0x7a0] sm:$0xff]
      %v1402 = vld [vmem:[#allocation4 + $0x7a8] sm:$0xff]
      %v1403 = vld [vmem:[#allocation4 + $0x7b0] sm:$0xff]
      %v1404 = vld [vmem:[#allocation4 + $0x7b8] sm:$0xff]
      %v1405 = vld [vmem:[#allocation4 + $0x7c0] sm:$0xff]
      %v1406 = vld [vmem:[#allocation4 + $0x7c8] sm:$0xff]
      %v1407 = vld [vmem:[#allocation4 + $0x7d0] sm:$0xff]
      %v1408 = vld [vmem:[#allocation4 + $0x7d8] sm:$0xff]
      %v1409 = vld [vmem:[#allocation4 + $0x7e0] sm:$0xff]
      %v1410 = vld [vmem:[#allocation4 + $0x7e8] sm:$0xff]
      %v1411 = vld [vmem:[#allocation4 + $0x7f0] sm:$0xff]
      %v1412 = vld [vmem:[#allocation4 + $0x7f8] sm:$0xff]
      %v1413 = vld [vmem:[#allocation4 + $0x800] sm:$0xff]
      %v1414 = vld [vmem:[#allocation4 + $0x808] sm:$0xff]
      %v1415 = vld [vmem:[#allocation4 + $0x810] sm:$0xff]
      %v1416 = vld [vmem:[#allocation4 + $0x818] sm:$0xff]
      %v1417 = vld [vmem:[#allocation4 + $0x820] sm:$0xff]
      %v1418 = vld [vmem:[#allocation4 + $0x828] sm:$0xff]
      %v1419 = vld [vmem:[#allocation4 + $0x830] sm:$0xff]
      %v1420 = vld [vmem:[#allocation4 + $0x838] sm:$0xff]
      %v1421 = vld [vmem:[#allocation4 + $0x840] sm:$0xff]
      %v1422 = vld [vmem:[#allocation4 + $0x848] sm:$0xff]
      %v1423 = vld [vmem:[#allocation4 + $0x850] sm:$0xff]
      %v1424 = vld [vmem:[#allocation4 + $0x858] sm:$0xff]
      %v1425 = vld [vmem:[#allocation4 + $0x860] sm:$0xff]
      %v1426 = vld [vmem:[#allocation4 + $0x868] sm:$0xff]
      %v1427 = vld [vmem:[#allocation4 + $0x870] sm:$0xff]
      %v1428 = vld [vmem:[#allocation4 + $0x878] sm:$0xff]
      %v1429 = vld [vmem:[#allocation4 + $0x880] sm:$0xff]
      %v1430 = vld [vmem:[#allocation4 + $0x888] sm:$0xff]
      %v1431 = vld [vmem:[#allocation4 + $0x890] sm:$0xff]
      %v1432 = vld [vmem:[#allocation4 + $0x898] sm:$0xff]
      %v1433 = vld [vmem:[#allocation4 + $0x8a0] sm:$0xff]
      %v1434 = vld [vmem:[#allocation4 + $0x8a8] sm:$0xff]
      %v1435 = vld [vmem:[#allocation4 + $0x8b0] sm:$0xff]
      %v1436 = vld [vmem:[#allocation4 + $0x8b8] sm:$0xff]
      %v1437 = vld [vmem:[#allocation4 + $0x8c0] sm:$0xff]
      %v1438 = vld [vmem:[#allocation4 + $0x8c8] sm:$0xff]
      %v1439 = vld [vmem:[#allocation4 + $0x8d0] sm:$0xff]
      %v1440 = vld [vmem:[#allocation4 + $0x8d8] sm:$0xff]
      %v1441 = vld [vmem:[#allocation4 + $0x8e0] sm:$0xff]
      %v1442 = vld [vmem:[#allocation4 + $0x8e8] sm:$0xff]
      %v1443 = vld [vmem:[#allocation4 + $0x8f0] sm:$0xff]
      %v1444 = vld [vmem:[#allocation4 + $0x8f8] sm:$0xff]
      %v1445 = vld [vmem:[%s1] sm:$0xff]
      %v1446 = vld [vmem:[%s1 + $0x8] sm:$0xff]
      %v1447 = vld [vmem:[%s1 + $0x10] sm:$0xff]
      %v1448 = vld [vmem:[%s1 + $0x18] sm:$0xff]
      %v1449 = vld [vmem:[%s1 + $0x20] sm:$0xff]
      %v1450 = vld [vmem:[%s1 + $0x28] sm:$0xff]
      %v1451 = vld [vmem:[%s1 + $0x30] sm:$0xff]
      %v1452 = vld [vmem:[%s1 + $0x38] sm:$0xff]
      %v1453 = vld [vmem:[%s1 + $0x40] sm:$0xff]
      %v1454 = vld [vmem:[%s1 + $0x48] sm:$0xff]
      %v1455 = vld [vmem:[%s1 + $0x50] sm:$0xff]
      %v1456 = vld [vmem:[%s1 + $0x58] sm:$0xff]
      %v1457 = vld [vmem:[%s1 + $0x60] sm:$0xff]
      %v1458 = vld [vmem:[%s1 + $0x68] sm:$0xff]
      %v1459 = vld [vmem:[%s1 + $0x70] sm:$0xff]
      %v1460 = vld [vmem:[%s1 + $0x78] sm:$0xff]
      %v1461 = vld [vmem:[%s1 + $0x80] sm:$0xff]
      %v1462 = vld [vmem:[%s1 + $0x88] sm:$0xff]
      %v1463 = vld [vmem:[%s1 + $0x90] sm:$0xff]
      %v1464 = vld [vmem:[%s1 + $0x98] sm:$0xff]
      %v1465 = vld [vmem:[%s1 + $0xa0] sm:$0xff]
      %v1466 = vld [vmem:[%s1 + $0xa8] sm:$0xff]
      %v1467 = vld [vmem:[%s1 + $0xb0] sm:$0xff]
      %v1468 = vld [vmem:[%s1 + $0xb8] sm:$0xff]
      %v1469 = vld [vmem:[%s1 + $0xc0] sm:$0xff]
      %v1470 = vld [vmem:[%s1 + $0xc8] sm:$0xff]
      %v1471 = vld [vmem:[%s1 + $0xd0] sm:$0xff]
      %v1472 = vld [vmem:[%s1 + $0xd8] sm:$0xff]
      %v1473 = vld [vmem:[%s1 + $0xe0] sm:$0xff]
      %v1474 = vld [vmem:[%s1 + $0xe8] sm:$0xff]
      %v1475 = vld [vmem:[%s1 + $0xf0] sm:$0xff]
      %v1476 = vld [vmem:[%s1 + $0xf8] sm:$0xff]
      %v1477 = vld [vmem:[%s1 + $0x100] sm:$0xff]
      %v1478 = vld [vmem:[%s1 + $0x108] sm:$0xff]
      %v1479 = vld [vmem:[%s1 + $0x110] sm:$0xff]
      %v1480 = vld [vmem:[%s1 + $0x118] sm:$0xff]
      %v1481 = vld [vmem:[%s1 + $0x120] sm:$0xff]
      %v1482 = vld [vmem:[%s1 + $0x128] sm:$0xff]
      %v1483 = vld [vmem:[%s1 + $0x130] sm:$0xff]
      %v1484 = vld [vmem:[%s1 + $0x138] sm:$0xff]
      %v1485 = vld [vmem:[%s1 + $0x140] sm:$0xff]
      %v1486 = vld [vmem:[%s1 + $0x148] sm:$0xff]
      %v1487 = vld [vmem:[%s1 + $0x150] sm:$0xff]
      %v1488 = vld [vmem:[%s1 + $0x158] sm:$0xff]
      %v1489 = vld [vmem:[%s1 + $0x160] sm:$0xff]
      %v1490 = vld [vmem:[%s1 + $0x168] sm:$0xff]
      %v1491 = vld [vmem:[%s1 + $0x170] sm:$0xff]
      %v1492 = vld [vmem:[%s1 + $0x178] sm:$0xff]
      %v1493 = vld [vmem:[%s1 + $0x180] sm:$0xff]
      %v1494 = vld [vmem:[%s1 + $0x188] sm:$0xff]
      %v1495 = vld [vmem:[%s1 + $0x190] sm:$0xff]
      %v1496 = vld [vmem:[%s1 + $0x198] sm:$0xff]
      %v1497 = vld [vmem:[%s1 + $0x1a0] sm:$0xff]
      %v1498 = vld [vmem:[%s1 + $0x1a8] sm:$0xff]
      %v1499 = vld [vmem:[%s1 + $0x1b0] sm:$0xff]
      %v1500 = vld [vmem:[%s1 + $0x1b8] sm:$0xff]
      %v1501 = vld [vmem:[%s1 + $0x1c0] sm:$0xff]
      %v1502 = vld [vmem:[%s1 + $0x1c8] sm:$0xff]
      %v1503 = vld [vmem:[%s1 + $0x1d0] sm:$0xff]
      %v1504 = vld [vmem:[%s1 + $0x1d8] sm:$0xff]
      %v1505 = vld [vmem:[%s1 + $0x1e0] sm:$0xff]
      %v1506 = vld [vmem:[%s1 + $0x1e8] sm:$0xff]
      %v1507 = vld [vmem:[%s1 + $0x1f0] sm:$0xff]
      %v1508 = vld [vmem:[%s1 + $0x1f8] sm:$0xff]
      %v1509 = vld [vmem:[%s1 + $0x200] sm:$0xff]
      %v1510 = vld [vmem:[%s1 + $0x208] sm:$0xff]
      %v1511 = vld [vmem:[%s1 + $0x210] sm:$0xff]
      %v1512 = vld [vmem:[%s1 + $0x218] sm:$0xff]
      %v1513 = vld [vmem:[%s1 + $0x220] sm:$0xff]
      %v1514 = vld [vmem:[%s1 + $0x228] sm:$0xff]
      %v1515 = vld [vmem:[%s1 + $0x230] sm:$0xff]
      %v1516 = vld [vmem:[%s1 + $0x238] sm:$0xff]
      %v1517 = vld [vmem:[%s1 + $0x240] sm:$0xff]
      %v1518 = vld [vmem:[%s1 + $0x248] sm:$0xff]
      %v1519 = vld [vmem:[%s1 + $0x250] sm:$0xff]
      %v1520 = vld [vmem:[%s1 + $0x258] sm:$0xff]
      %v1521 = vld [vmem:[%s1 + $0x260] sm:$0xff]
      %v1522 = vld [vmem:[%s1 + $0x268] sm:$0xff]
      %v1523 = vld [vmem:[%s1 + $0x270] sm:$0xff]
      %v1524 = vld [vmem:[%s1 + $0x278] sm:$0xff]
      %v1525 = vld [vmem:[%s1 + $0x280] sm:$0xff]
      %v1526 = vld [vmem:[%s1 + $0x288] sm:$0xff]
      %v1527 = vld [vmem:[%s1 + $0x290] sm:$0xff]
      %v1528 = vld [vmem:[%s1 + $0x298] sm:$0xff]
      %v1529 = vld [vmem:[%s1 + $0x2a0] sm:$0xff]
      %v1530 = vld [vmem:[%s1 + $0x2a8] sm:$0xff]
      %v1531 = vld [vmem:[%s1 + $0x2b0] sm:$0xff]
      %v1532 = vld [vmem:[%s1 + $0x2b8] sm:$0xff]
      %v1533 = vld [vmem:[%s1 + $0x2c0] sm:$0xff]
      %v1534 = vld [vmem:[%s1 + $0x2c8] sm:$0xff]
      %v1535 = vld [vmem:[%s1 + $0x2d0] sm:$0xff]
      %v1536 = vld [vmem:[%s1 + $0x2d8] sm:$0xff]
      %v1537 = vld [vmem:[%s1 + $0x2e0] sm:$0xff]
      %v1538 = vld [vmem:[%s1 + $0x2e8] sm:$0xff]
      %v1539 = vld [vmem:[%s1 + $0x2f0] sm:$0xff]
      %v1540 = vld [vmem:[%s1 + $0x2f8] sm:$0xff]
      %v1541 = vld [vmem:[%s1 + $0x300] sm:$0xff]
      %v1542 = vld [vmem:[%s1 + $0x308] sm:$0xff]
      %v1543 = vld [vmem:[%s1 + $0x310] sm:$0xff]
      %v1544 = vld [vmem:[%s1 + $0x318] sm:$0xff]
      %v1545 = vld [vmem:[%s1 + $0x320] sm:$0xff]
      %v1546 = vld [vmem:[%s1 + $0x328] sm:$0xff]
      %v1547 = vld [vmem:[%s1 + $0x330] sm:$0xff]
      %v1548 = vld [vmem:[%s1 + $0x338] sm:$0xff]
      %v1549 = vld [vmem:[%s1 + $0x340] sm:$0xff]
      %v1550 = vld [vmem:[%s1 + $0x348] sm:$0xff]
      %v1551 = vld [vmem:[%s1 + $0x350] sm:$0xff]
      %v1552 = vld [vmem:[%s1 + $0x358] sm:$0xff]
      %v1553 = vld [vmem:[%s1 + $0x360] sm:$0xff]
      %v1554 = vld [vmem:[%s1 + $0x368] sm:$0xff]
      %v1555 = vld [vmem:[%s1 + $0x370] sm:$0xff]
      %v1556 = vld [vmem:[%s1 + $0x378] sm:$0xff]
      %v1557 = vld [vmem:[%s1 + $0x380] sm:$0xff]
      %v1558 = vld [vmem:[%s1 + $0x388] sm:$0xff]
      %v1559 = vld [vmem:[%s1 + $0x390] sm:$0xff]
      %v1560 = vld [vmem:[%s1 + $0x398] sm:$0xff]
      %v1561 = vld [vmem:[%s1 + $0x3a0] sm:$0xff]
      %v1562 = vld [vmem:[%s1 + $0x3a8] sm:$0xff]
      %v1563 = vld [vmem:[%s1 + $0x3b0] sm:$0xff]
      %v1564 = vld [vmem:[%s1 + $0x3b8] sm:$0xff]
      %v1565 = vld [vmem:[%s1 + $0x3c0] sm:$0xff]
      %v1566 = vld [vmem:[%s1 + $0x3c8] sm:$0xff]
      %v1567 = vld [vmem:[%s1 + $0x3d0] sm:$0xff]
      %v1568 = vld [vmem:[%s1 + $0x3d8] sm:$0xff]
      %v1569 = vld [vmem:[%s1 + $0x3e0] sm:$0xff]
      %v1570 = vld [vmem:[%s1 + $0x3e8] sm:$0xff]
      %v1571 = vld [vmem:[%s1 + $0x3f0] sm:$0xff]
      %v1572 = vld [vmem:[%s1 + $0x3f8] sm:$0xff]
      %v1573 = vld [vmem:[%s1 + $0x400] sm:$0xff]
      %v1574 = vld [vmem:[%s1 + $0x408] sm:$0xff]
      %v1575 = vld [vmem:[%s1 + $0x410] sm:$0xff]
      %v1576 = vld [vmem:[%s1 + $0x418] sm:$0xff]
      %v1577 = vld [vmem:[%s1 + $0x420] sm:$0xff]
      %v1578 = vld [vmem:[%s1 + $0x428] sm:$0xff]
      %v1579 = vld [vmem:[%s1 + $0x430] sm:$0xff]
      %v1580 = vld [vmem:[%s1 + $0x438] sm:$0xff]
      %v1581 = vld [vmem:[%s1 + $0x440] sm:$0xff]
      %v1582 = vld [vmem:[%s1 + $0x448] sm:$0xff]
      %v1583 = vld [vmem:[%s1 + $0x450] sm:$0xff]
      %v1584 = vld [vmem:[%s1 + $0x458] sm:$0xff]
      %v1585 = vld [vmem:[%s1 + $0x460] sm:$0xff]
      %v1586 = vld [vmem:[%s1 + $0x468] sm:$0xff]
      %v1587 = vld [vmem:[%s1 + $0x470] sm:$0xff]
      %v1588 = vld [vmem:[%s1 + $0x478] sm:$0xff]
      %1589 = vmatprep.subr.mxu0 0.0
      %1590 = vmatpush1.msra.mxu0 %v1445
      %1591 = vmatprep.subr.mxu0 0.0
      %1592 = vmatpush1.msra.mxu0 %v1446
      %1593 = vmatprep.subr.mxu0 0.0
      %1594 = vmatpush1.msra.mxu0 %v1447
      %1595 = vmatprep.subr.mxu0 0.0
      %1596 = vmatpush1.msra.mxu0 %v1448
      %1597 = vmatprep.subr.mxu0 0.0
      %1598 = vmatpush1.msra.mxu0 %v1449
      %1599 = vmatprep.subr.mxu0 0.0
      %1600 = vmatpush1.msra.mxu0 %v1450
      %1601 = vmatprep.subr.mxu0 0.0
      %1602 = vmatpush1.msra.mxu0 %v1451
      %1603 = vmatprep.subr.mxu0 0.0
      %1604 = vmatpush1.msra.mxu0 %v1452
      %1605 = vmatprep.subr.mxu0 0.0
      %1606 = vmatpush1.msra.mxu0 %v1453
      %1607 = vmatprep.subr.mxu0 0.0
      %1608 = vmatpush1.msra.mxu0 %v1454
      %1609 = vmatprep.subr.mxu0 0.0
      %1610 = vmatpush1.msra.mxu0 %v1455
      %1611 = vmatprep.subr.mxu0 0.0
      %1612 = vmatpush1.msra.mxu0 %v1456
      %1613 = vmatprep.subr.mxu0 0.0
      %1614 = vmatpush1.msra.mxu0 %v1457
      %1615 = vmatprep.subr.mxu0 0.0
      %1616 = vmatpush1.msra.mxu0 %v1458
      %1617 = vmatprep.subr.mxu0 0.0
      %1618 = vmatpush1.msra.mxu0 %v1459
      %1619 = vmatprep.subr.mxu0 0.0
      %1620 = vmatpush1.msra.mxu0 %v1460
      %1621 = vmatprep.subr.mxu0 0.0
      %1622 = vmatpush1.msra.mxu0 %v1461
      %1623 = vmatprep.subr.mxu0 0.0
      %1624 = vmatpush1.msra.mxu0 %v1462
      %1625 = vmatprep.subr.mxu0 0.0
      %1626 = vmatpush1.msra.mxu0 %v1463
      %1627 = vmatprep.subr.mxu0 0.0
      %1628 = vmatpush1.msra.mxu0 %v1464
      %1629 = vmatprep.subr.mxu0 0.0
      %1630 = vmatpush1.msra.mxu0 %v1465
      %1631 = vmatprep.subr.mxu0 0.0
      %1632 = vmatpush1.msra.mxu0 %v1466
      %1633 = vmatprep.subr.mxu0 0.0
      %1634 = vmatpush1.msra.mxu0 %v1467
      %1635 = vmatprep.subr.mxu0 0.0
      %1636 = vmatpush1.msra.mxu0 %v1468
      %1637 = vmatprep.subr.mxu0 0.0
      %1638 = vmatpush1.msra.mxu0 %v1469
      %1639 = vmatprep.subr.mxu0 0.0
      %1640 = vmatpush1.msra.mxu0 %v1470
      %1641 = vmatprep.subr.mxu0 0.0
      %1642 = vmatpush1.msra.mxu0 %v1471
      %1643 = vmatprep.subr.mxu0 0.0
      %1644 = vmatpush1.msra.mxu0 %v1472
      %1645 = vmatprep.subr.mxu0 0.0
      %1646 = vmatpush1.msra.mxu0 %v1473
      %1647 = vmatprep.subr.mxu0 0.0
      %1648 = vmatpush1.msra.mxu0 %v1474
      %1649 = vmatprep.subr.mxu0 0.0
      %1650 = vmatpush1.msra.mxu0 %v1475
      %1651 = vmatprep.subr.mxu0 0.0
      %1652 = vmatpush1.msra.mxu0 %v1476
      %1653 = vmatprep.mubr.f32.mxu0 %v1158
      %1654 = vmatmul.mubr.f32.gmra.mrb[0].mxu0 %v1157
      %v1655 = vpop.f32.mrb[0].mxu0
      %v1656 = vadd.f32 0.0, %v1655
      %v1657 = vpop.f32.mrb[0].mxu0
      %1658 = vmatprep.mubr.f32.mxu0 %v1167
      %1659 = vmatmul.mubr.f32.gmra.mrb[0].mxu0 %v1166
      %v1660 = vpop.f32.mrb[0].mxu0
      %v1661 = vadd.f32 0.0, %v1660
      %v1662 = vpop.f32.mrb[0].mxu0
      %1663 = vmatprep.mubr.f32.mxu0 %v1176
      %1664 = vmatmul.mubr.f32.gmra.mrb[0].mxu0 %v1175
      %v1665 = vpop.f32.mrb[0].mxu0
      %v1666 = vadd.f32 0.0, %v1665
      %v1667 = vpop.f32.mrb[0].mxu0
      %1668 = vmatprep.mubr.f32.mxu0 %v1185
      %1669 = vmatmul.mubr.f32.gmra.mrb[0].mxu0 %v1184
      %v1670 = vpop.f32.mrb[0].mxu0
      %v1671 = vadd.f32 0.0, %v1670
      %v1672 = vpop.f32.mrb[0].mxu0
      %1673 = vmatprep.mubr.f32.mxu0 %v1194
      %1674 = vmatmul.mubr.f32.gmra.mrb[0].mxu0 %v1193
      %v1675 = vpop.f32.mrb[0].mxu0
      %v1676 = vadd.f32 0.0, %v1675
      %v1677 = vpop.f32.mrb[0].mxu0
      %1678 = vmatprep.mubr.f32.mxu0 %v1203
      %1679 = vmatmul.mubr.f32.gmra.mrb[0].mxu0 %v1202
      %v1680 = vpop.f32.mrb[0].mxu0
      %v1681 = vadd.f32 0.0, %v1680
      %v1682 = vpop.f32.mrb[0].mxu0
      %1683 = vmatprep.mubr.f32.mxu0 %v1212
      %1684 = vmatmul.mubr.f32.gmra.mrb[0].mxu0 %v1211
      %v1685 = vpop.f32.mrb[0].mxu0
      %v1686 = vadd.f32 0.0, %v1685
      %v1687 = vpop.f32.mrb[0].mxu0
      %1688 = vmatprep.mubr.f32.mxu0 %v1221
      %1689 = vmatmul.mubr.f32.gmra.mrb[0].mxu0 %v1220
      %v1690 = vpop.f32.mrb[0].mxu0
      %v1691 = vadd.f32 0.0, %v1690
      %v1692 = vpop.f32.mrb[0].mxu0
      %1693 = vmatprep.mubr.f32.mxu0 %v1230
      %1694 = vmatmul.mubr.f32.gmra.mrb[0].mxu0 %v1229
      %v1695 = vpop.f32.mrb[0].mxu0
      %v1696 = vadd.f32 0.0, %v1695
      %v1697 = vpop.f32.mrb[0].mxu0
      %1698 = vmatprep.mubr.f32.mxu0 %v1239
      %1699 = vmatmul.mubr.f32.gmra.mrb[0].mxu0 %v1238
      %v1700 = vpop.f32.mrb[0].mxu0
      %v1701 = vadd.f32 0.0, %v1700
      %v1702 = vpop.f32.mrb[0].mxu0
      %1703 = vmatprep.mubr.f32.mxu0 %v1248
      %1704 = vmatmul.mubr.f32.gmra.mrb[0].mxu0 %v1247
      %v1705 = vpop.f32.mrb[0].mxu0
      %v1706 = vadd.f32 0.0, %v1705
      %v1707 = vpop.f32.mrb[0].mxu0
      %1708 = vmatprep.mubr.f32.mxu0 %v1257
      %1709 = vmatmul.mubr.f32.gmra.mrb[0].mxu0 %v1256
      %v1710 = vpop.f32.mrb[0].mxu0
      %v1711 = vadd.f32 0.0, %v1710
      %v1712 = vpop.f32.mrb[0].mxu0
      %1713 = vmatprep.mubr.f32.mxu0 %v1266
      %1714 = vmatmul.mubr.f32.gmra.mrb[0].mxu0 %v1265
      %v1715 = vpop.f32.mrb[0].mxu0
      %v1716 = vadd.f32 0.0, %v1715
      %v1717 = vpop.f32.mrb[0].mxu0
      %1718 = vmatprep.mubr.f32.mxu0 %v1275
      %1719 = vmatmul.mubr.f32.gmra.mrb[0].mxu0 %v1274
      %v1720 = vpop.f32.mrb[0].mxu0
      %v1721 = vadd.f32 0.0, %v1720
      %v1722 = vpop.f32.mrb[0].mxu0
      %1723 = vmatprep.mubr.f32.mxu0 %v1284
      %1724 = vmatmul.mubr.f32.gmra.mrb[0].mxu0 %v1283
      %v1725 = vpop.f32.mrb[0].mxu0
      %v1726 = vadd.f32 0.0, %v1725
      %v1727 = vpop.f32.mrb[0].mxu0
      %1728 = vmatprep.mubr.f32.mxu0 %v1293
      %1729 = vmatmul.mubr.f32.gmra.mrb[0].mxu0 %v1292
      %v1730 = vpop.f32.mrb[0].mxu0
      %v1731 = vadd.f32 0.0, %v1730
      %v1732 = vpop.f32.mrb[0].mxu0
      %1733 = vmatprep.mubr.f32.mxu0 %v1302
      %1734 = vmatmul.mubr.f32.gmra.mrb[0].mxu0 %v1301
      %v1735 = vpop.f32.mrb[0].mxu0
      %v1736 = vadd.f32 0.0, %v1735
      %v1737 = vpop.f32.mrb[0].mxu0
      %1738 = vmatprep.mubr.f32.mxu0 %v1311
      %1739 = vmatmul.mubr.f32.gmra.mrb[0].mxu0 %v1310
      %v1740 = vpop.f32.mrb[0].mxu0
      %v1741 = vadd.f32 0.0, %v1740
      %v1742 = vpop.f32.mrb[0].mxu0
      %1743 = vmatprep.mubr.f32.mxu0 %v1320
      %1744 = vmatmul.mubr.f32.gmra.mrb[0].mxu0 %v1319
      %v1745 = vpop.f32.mrb[0].mxu0
      %v1746 = vadd.f32 0.0, %v1745
      %v1747 = vpop.f32.mrb[0].mxu0
      %1748 = vmatprep.mubr.f32.mxu0 %v1329
      %1749 = vmatmul.mubr.f32.gmra.mrb[0].mxu0 %v1328
      %v1750 = vpop.f32.mrb[0].mxu0
      %v1751 = vadd.f32 0.0, %v1750
      %v1752 = vpop.f32.mrb[0].mxu0
      %1753 = vmatprep.mubr.f32.mxu0 %v1338
      %1754 = vmatmul.mubr.f32.gmra.mrb[0].mxu0 %v1337
      %v1755 = vpop.f32.mrb[0].mxu0
      %v1756 = vadd.f32 0.0, %v1755
      %v1757 = vpop.f32.mrb[0].mxu0
      %1758 = vmatprep.mubr.f32.mxu0 %v1347
      %1759 = vmatmul.mubr.f32.gmra.mrb[0].mxu0 %v1346
      %v1760 = vpop.f32.mrb[0].mxu0
      %v1761 = vadd.f32 0.0, %v1760
      %v1762 = vpop.f32.mrb[0].mxu0
      %1763 = vmatprep.mubr.f32.mxu0 %v1356
      %1764 = vmatmul.mubr.f32.gmra.mrb[0].mxu0 %v1355
      %v1765 = vpop.f32.mrb[0].mxu0
      %v1766 = vadd.f32 0.0, %v1765
      %v1767 = vpop.f32.mrb[0].mxu0
      %1768 = vmatprep.mubr.f32.mxu0 %v1365
      %1769 = vmatmul.mubr.f32.gmra.mrb[0].mxu0 %v1364
      %v1770 = vpop.f32.mrb[0].mxu0
      %v1771 = vadd.f32 0.0, %v1770
      %v1772 = vpop.f32.mrb[0].mxu0
      %1773 = vmatprep.mubr.f32.mxu0 %v1374
      %1774 = vmatmul.mubr.f32.gmra.mrb[0].mxu0 %v1373
      %v1775 = vpop.f32.mrb[0].mxu0
      %v1776 = vadd.f32 0.0, %v1775
      %v1777 = vpop.f32.mrb[0].mxu0
      %1778 = vmatprep.mubr.f32.mxu0 %v1383
      %1779 = vmatmul.mubr.f32.gmra.mrb[0].mxu0 %v1382
      %v1780 = vpop.f32.mrb[0].mxu0
      %v1781 = vadd.f32 0.0, %v1780
      %v1782 = vpop.f32.mrb[0].mxu0
      %1783 = vmatprep.mubr.f32.mxu0 %v1392
      %1784 = vmatmul.mubr.f32.gmra.mrb[0].mxu0 %v1391
      %v1785 = vpop.f32.mrb[0].mxu0
      %v1786 = vadd.f32 0.0, %v1785
      %v1787 = vpop.f32.mrb[0].mxu0
      %1788 = vmatprep.mubr.f32.mxu0 %v1401
      %1789 = vmatmul.mubr.f32.gmra.mrb[0].mxu0 %v1400
      %v1790 = vpop.f32.mrb[0].mxu0
      %v1791 = vadd.f32 0.0, %v1790
      %v1792 = vpop.f32.mrb[0].mxu0
      %1793 = vmatprep.mubr.f32.mxu0 %v1410
      %1794 = vmatmul.mubr.f32.gmra.mrb[0].mxu0 %v1409
      %v1795 = vpop.f32.mrb[0].mxu0
      %v1796 = vadd.f32 0.0, %v1795
      %v1797 = vpop.f32.mrb[0].mxu0
      %1798 = vmatprep.mubr.f32.mxu0 %v1419
      %1799 = vmatmul.mubr.f32.gmra.mrb[0].mxu0 %v1418
      %v1800 = vpop.f32.mrb[0].mxu0
      %v1801 = vadd.f32 0.0, %v1800
      %v1802 = vpop.f32.mrb[0].mxu0
      %1803 = vmatprep.mubr.f32.mxu0 %v1428
      %1804 = vmatmul.mubr.f32.gmra.mrb[0].mxu0 %v1427
      %v1805 = vpop.f32.mrb[0].mxu0
      %v1806 = vadd.f32 0.0, %v1805
      %v1807 = vpop.f32.mrb[0].mxu0
      %1808 = vmatprep.mubr.f32.mxu0 %v1437
      %1809 = vmatmul.mubr.f32.gmra.mrb[0].mxu0 %v1436
      %v1810 = vpop.f32.mrb[0].mxu0
      %v1811 = vadd.f32 0.0, %v1810
      %v1812 = vpop.f32.mrb[0].mxu0
      %1813 = vdwg.mxu0
      %1814 = vmatprep.subr.mxu0 0.0
      %1815 = vmatpush1.msra.mxu0 %v1477
      %1816 = vmatprep.subr.mxu0 0.0
      %1817 = vmatpush1.msra.mxu0 %v1478
      %1818 = vmatprep.subr.mxu0 0.0
      %1819 = vmatpush1.msra.mxu0 %v1479
      %1820 = vmatprep.subr.mxu0 0.0
      %1821 = vmatpush1.msra.mxu0 %v1480
      %1822 = vmatprep.subr.mxu0 0.0
      %1823 = vmatpush1.msra.mxu0 %v1481
      %1824 = vmatprep.subr.mxu0 0.0
      %1825 = vmatpush1.msra.mxu0 %v1482
      %1826 = vmatprep.subr.mxu0 0.0
      %1827 = vmatpush1.msra.mxu0 %v1483
      %1828 = vmatprep.subr.mxu0 0.0
      %1829 = vmatpush1.msra.mxu0 %v1484
      %1830 = vmatprep.subr.mxu0 0.0
      %1831 = vmatpush1.msra.mxu0 %v1485
      %1832 = vmatprep.subr.mxu0 0.0
      %1833 = vmatpush1.msra.mxu0 %v1486
      %1834 = vmatprep.subr.mxu0 0.0
      %1835 = vmatpush1.msra.mxu0 %v1487
      %1836 = vmatprep.subr.mxu0 0.0
      %1837 = vmatpush1.msra.mxu0 %v1488
      %1838 = vmatprep.subr.mxu0 0.0
      %1839 = vmatpush1.msra.mxu0 %v1489
      %1840 = vmatprep.subr.mxu0 0.0
      %1841 = vmatpush1.msra.mxu0 %v1490
      %1842 = vmatprep.subr.mxu0 0.0
      %1843 = vmatpush1.msra.mxu0 %v1491
      %1844 = vmatprep.subr.mxu0 0.0
      %1845 = vmatpush1.msra.mxu0 %v1492
      %1846 = vmatprep.subr.mxu0 0.0
      %1847 = vmatpush1.msra.mxu0 %v1493
      %1848 = vmatprep.subr.mxu0 0.0
      %1849 = vmatpush1.msra.mxu0 %v1494
      %1850 = vmatprep.subr.mxu0 0.0
      %1851 = vmatpush1.msra.mxu0 %v1495
      %1852 = vmatprep.subr.mxu0 0.0
      %1853 = vmatpush1.msra.mxu0 %v1496
      %1854 = vmatprep.subr.mxu0 0.0
      %1855 = vmatpush1.msra.mxu0 %v1497
      %1856 = vmatprep.subr.mxu0 0.0
      %1857 = vmatpush1.msra.mxu0 %v1498
      %1858 = vmatprep.subr.mxu0 0.0
      %1859 = vmatpush1.msra.mxu0 %v1499
      %1860 = vmatprep.subr.mxu0 0.0
      %1861 = vmatpush1.msra.mxu0 %v1500
      %1862 = vmatprep.subr.mxu0 0.0
      %1863 = vmatpush1.msra.mxu0 %v1501
      %1864 = vmatprep.subr.mxu0 0.0
      %1865 = vmatpush1.msra.mxu0 %v1502
      %1866 = vmatprep.subr.mxu0 0.0
      %1867 = vmatpush1.msra.mxu0 %v1503
      %1868 = vmatprep.subr.mxu0 0.0
      %1869 = vmatpush1.msra.mxu0 %v1504
      %1870 = vmatprep.subr.mxu0 0.0
      %1871 = vmatpush1.msra.mxu0 %v1505
      %1872 = vmatprep.subr.mxu0 0.0
      %1873 = vmatpush1.msra.mxu0 %v1506
      %1874 = vmatprep.subr.mxu0 0.0
      %1875 = vmatpush1.msra.mxu0 %v1507
      %1876 = vmatprep.subr.mxu0 0.0
      %1877 = vmatpush1.msra.mxu0 %v1508
      %1878 = vmatprep.mubr.f32.mxu0 %v1160
      %1879 = vmatmul.mubr.f32.gmra.mrb[0].mxu0 %v1159
      %v1880 = vpop.f32.mrb[0].mxu0
      %v1881 = vadd.f32 %v1656, %v1880
      %v1882 = vpop.f32.mrb[0].mxu0
      %1883 = vmatprep.mubr.f32.mxu0 %v1169
      %1884 = vmatmul.mubr.f32.gmra.mrb[0].mxu0 %v1168
      %v1885 = vpop.f32.mrb[0].mxu0
      %v1886 = vadd.f32 %v1661, %v1885
      %v1887 = vpop.f32.mrb[0].mxu0
      %1888 = vmatprep.mubr.f32.mxu0 %v1178
      %1889 = vmatmul.mubr.f32.gmra.mrb[0].mxu0 %v1177
      %v1890 = vpop.f32.mrb[0].mxu0
      %v1891 = vadd.f32 %v1666, %v1890
      %v1892 = vpop.f32.mrb[0].mxu0
      %1893 = vmatprep.mubr.f32.mxu0 %v1187
      %1894 = vmatmul.mubr.f32.gmra.mrb[0].mxu0 %v1186
      %v1895 = vpop.f32.mrb[0].mxu0
      %v1896 = vadd.f32 %v1671, %v1895
      %v1897 = vpop.f32.mrb[0].mxu0
      %1898 = vmatprep.mubr.f32.mxu0 %v1196
      %1899 = vmatmul.mubr.f32.gmra.mrb[0].mxu0 %v1195
      %v1900 = vpop.f32.mrb[0].mxu0
      %v1901 = vadd.f32 %v1676, %v1900
      %v1902 = vpop.f32.mrb[0].mxu0
      %1903 = vmatprep.mubr.f32.mxu0 %v1205
      %1904 = vmatmul.mubr.f32.gmra.mrb[0].mxu0 %v1204
      %v1905 = vpop.f32.mrb[0].mxu0
      %v1906 = vadd.f32 %v1681, %v1905
      %v1907 = vpop.f32.mrb[0].mxu0
      %1908 = vmatprep.mubr.f32.mxu0 %v1214
      %1909 = vmatmul.mubr.f32.gmra.mrb[0].mxu0 %v1213
      %v1910 = vpop.f32.mrb[0].mxu0
      %v1911 = vadd.f32 %v1686, %v1910
      %v1912 = vpop.f32.mrb[0].mxu0
      %1913 = vmatprep.mubr.f32.mxu0 %v1223
      %1914 = vmatmul.mubr.f32.gmra.mrb[0].mxu0 %v1222
      %v1915 = vpop.f32.mrb[0].mxu0
      %v1916 = vadd.f32 %v1691, %v1915
      %v1917 = vpop.f32.mrb[0].mxu0
      %1918 = vmatprep.mubr.f32.mxu0 %v1232
      %1919 = vmatmul.mubr.f32.gmra.mrb[0].mxu0 %v1231
      %v1920 = vpop.f32.mrb[0].mxu0
      %v1921 = vadd.f32 %v1696, %v1920
      %v1922 = vpop.f32.mrb[0].mxu0
      %1923 = vmatprep.mubr.f32.mxu0 %v1241
      %1924 = vmatmul.mubr.f32.gmra.mrb[0].mxu0 %v1240
      %v1925 = vpop.f32.mrb[0].mxu0
      %v1926 = vadd.f32 %v1701, %v1925
      %v1927 = vpop.f32.mrb[0].mxu0
      %1928 = vmatprep.mubr.f32.mxu0 %v1250
      %1929 = vmatmul.mubr.f32.gmra.mrb[0].mxu0 %v1249
      %v1930 = vpop.f32.mrb[0].mxu0
      %v1931 = vadd.f32 %v1706, %v1930
      %v1932 = vpop.f32.mrb[0].mxu0
      %1933 = vmatprep.mubr.f32.mxu0 %v1259
      %1934 = vmatmul.mubr.f32.gmra.mrb[0].mxu0 %v1258
      %v1935 = vpop.f32.mrb[0].mxu0
      %v1936 = vadd.f32 %v1711, %v1935
      %v1937 = vpop.f32.mrb[0].mxu0
      %1938 = vmatprep.mubr.f32.mxu0 %v1268
      %1939 = vmatmul.mubr.f32.gmra.mrb[0].mxu0 %v1267
      %v1940 = vpop.f32.mrb[0].mxu0
      %v1941 = vadd.f32 %v1716, %v1940
      %v1942 = vpop.f32.mrb[0].mxu0
      %1943 = vmatprep.mubr.f32.mxu0 %v1277
      %1944 = vmatmul.mubr.f32.gmra.mrb[0].mxu0 %v1276
      %v1945 = vpop.f32.mrb[0].mxu0
      %v1946 = vadd.f32 %v1721, %v1945
      %v1947 = vpop.f32.mrb[0].mxu0
      %1948 = vmatprep.mubr.f32.mxu0 %v1286
      %1949 = vmatmul.mubr.f32.gmra.mrb[0].mxu0 %v1285
      %v1950 = vpop.f32.mrb[0].mxu0
      %v1951 = vadd.f32 %v1726, %v1950
      %v1952 = vpop.f32.mrb[0].mxu0
      %1953 = vmatprep.mubr.f32.mxu0 %v1295
      %1954 = vmatmul.mubr.f32.gmra.mrb[0].mxu0 %v1294
      %v1955 = vpop.f32.mrb[0].mxu0
      %v1956 = vadd.f32 %v1731, %v1955
      %v1957 = vpop.f32.mrb[0].mxu0
      %1958 = vmatprep.mubr.f32.mxu0 %v1304
      %1959 = vmatmul.mubr.f32.gmra.mrb[0].mxu0 %v1303
      %v1960 = vpop.f32.mrb[0].mxu0
      %v1961 = vadd.f32 %v1736, %v1960
      %v1962 = vpop.f32.mrb[0].mxu0
      %1963 = vmatprep.mubr.f32.mxu0 %v1313
      %1964 = vmatmul.mubr.f32.gmra.mrb[0].mxu0 %v1312
      %v1965 = vpop.f32.mrb[0].mxu0
      %v1966 = vadd.f32 %v1741, %v1965
      %v1967 = vpop.f32.mrb[0].mxu0
      %1968 = vmatprep.mubr.f32.mxu0 %v1322
      %1969 = vmatmul.mubr.f32.gmra.mrb[0].mxu0 %v1321
      %v1970 = vpop.f32.mrb[0].mxu0
      %v1971 = vadd.f32 %v1746, %v1970
      %v1972 = vpop.f32.mrb[0].mxu0
      %1973 = vmatprep.mubr.f32.mxu0 %v1331
      %1974 = vmatmul.mubr.f32.gmra.mrb[0].mxu0 %v1330
      %v1975 = vpop.f32.mrb[0].mxu0
      %v1976 = vadd.f32 %v1751, %v1975
      %v1977 = vpop.f32.mrb[0].mxu0
      %1978 = vmatprep.mubr.f32.mxu0 %v1340
      %1979 = vmatmul.mubr.f32.gmra.mrb[0].mxu0 %v1339
      %v1980 = vpop.f32.mrb[0].mxu0
      %v1981 = vadd.f32 %v1756, %v1980
      %v1982 = vpop.f32.mrb[0].mxu0
      %1983 = vmatprep.mubr.f32.mxu0 %v1349
      %1984 = vmatmul.mubr.f32.gmra.mrb[0].mxu0 %v1348
      %v1985 = vpop.f32.mrb[0].mxu0
      %v1986 = vadd.f32 %v1761, %v1985
      %v1987 = vpop.f32.mrb[0].mxu0
      %1988 = vmatprep.mubr.f32.mxu0 %v1358
      %1989 = vmatmul.mubr.f32.gmra.mrb[0].mxu0 %v1357
      %v1990 = vpop.f32.mrb[0].mxu0
      %v1991 = vadd.f32 %v1766, %v1990
      %v1992 = vpop.f32.mrb[0].mxu0
      %1993 = vmatprep.mubr.f32.mxu0 %v1367
      %1994 = vmatmul.mubr.f32.gmra.mrb[0].mxu0 %v1366
      %v1995 = vpop.f32.mrb[0].mxu0
      %v1996 = vadd.f32 %v1771, %v1995
      %v1997 = vpop.f32.mrb[0].mxu0
      %1998 = vmatprep.mubr.f32.mxu0 %v1376
      %1999 = vmatmul.mubr.f32.gmra.mrb[0].mxu0 %v1375
      %v2000 = vpop.f32.mrb[0].mxu0
      %v2001 = vadd.f32 %v1776, %v2000
      %v2002 = vpop.f32.mrb[0].mxu0
      %2003 = vmatprep.mubr.f32.mxu0 %v1385
      %2004 = vmatmul.mubr.f32.gmra.mrb[0].mxu0 %v1384
      %v2005 = vpop.f32.mrb[0].mxu0
      %v2006 = vadd.f32 %v1781, %v2005
      %v2007 = vpop.f32.mrb[0].mxu0
      %2008 = vmatprep.mubr.f32.mxu0 %v1394
      %2009 = vmatmul.mubr.f32.gmra.mrb[0].mxu0 %v1393
      %v2010 = vpop.f32.mrb[0].mxu0
      %v2011 = vadd.f32 %v1786, %v2010
      %v2012 = vpop.f32.mrb[0].mxu0
      %2013 = vmatprep.mubr.f32.mxu0 %v1403
      %2014 = vmatmul.mubr.f32.gmra.mrb[0].mxu0 %v1402
      %v2015 = vpop.f32.mrb[0].mxu0
      %v2016 = vadd.f32 %v1791, %v2015
      %v2017 = vpop.f32.mrb[0].mxu0
      %2018 = vmatprep.mubr.f32.mxu0 %v1412
      %2019 = vmatmul.mubr.f32.gmra.mrb[0].mxu0 %v1411
      %v2020 = vpop.f32.mrb[0].mxu0
      %v2021 = vadd.f32 %v1796, %v2020
      %v2022 = vpop.f32.mrb[0].mxu0
      %2023 = vmatprep.mubr.f32.mxu0 %v1421
      %2024 = vmatmul.mubr.f32.gmra.mrb[0].mxu0 %v1420
      %v2025 = vpop.f32.mrb[0].mxu0
      %v2026 = vadd.f32 %v1801, %v2025
      %v2027 = vpop.f32.mrb[0].mxu0
      %2028 = vmatprep.mubr.f32.mxu0 %v1430
      %2029 = vmatmul.mubr.f32.gmra.mrb[0].mxu0 %v1429
      %v2030 = vpop.f32.mrb[0].mxu0
      %v2031 = vadd.f32 %v1806, %v2030
      %v2032 = vpop.f32.mrb[0].mxu0
      %2033 = vmatprep.mubr.f32.mxu0 %v1439
      %2034 = vmatmul.mubr.f32.gmra.mrb[0].mxu0 %v1438
      %v2035 = vpop.f32.mrb[0].mxu0
      %v2036 = vadd.f32 %v1811, %v2035
      %v2037 = vpop.f32.mrb[0].mxu0
      %2038 = vdwg.mxu0
      %2039 = vmatprep.subr.mxu0 0.0
      %2040 = vmatpush1.msra.mxu0 %v1509
      %2041 = vmatprep.subr.mxu0 0.0
      %2042 = vmatpush1.msra.mxu0 %v1510
      %2043 = vmatprep.subr.mxu0 0.0
      %2044 = vmatpush1.msra.mxu0 %v1511
      %2045 = vmatprep.subr.mxu0 0.0
      %2046 = vmatpush1.msra.mxu0 %v1512
      %2047 = vmatprep.subr.mxu0 0.0
      %2048 = vmatpush1.msra.mxu0 %v1513
      %2049 = vmatprep.subr.mxu0 0.0
      %2050 = vmatpush1.msra.mxu0 %v1514
      %2051 = vmatprep.subr.mxu0 0.0
      %2052 = vmatpush1.msra.mxu0 %v1515
      %2053 = vmatprep.subr.mxu0 0.0
      %2054 = vmatpush1.msra.mxu0 %v1516
      %2055 = vmatprep.subr.mxu0 0.0
      %2056 = vmatpush1.msra.mxu0 %v1517
      %2057 = vmatprep.subr.mxu0 0.0
      %2058 = vmatpush1.msra.mxu0 %v1518
      %2059 = vmatprep.subr.mxu0 0.0
      %2060 = vmatpush1.msra.mxu0 %v1519
      %2061 = vmatprep.subr.mxu0 0.0
      %2062 = vmatpush1.msra.mxu0 %v1520
      %2063 = vmatprep.subr.mxu0 0.0
      %2064 = vmatpush1.msra.mxu0 %v1521
      %2065 = vmatprep.subr.mxu0 0.0
      %2066 = vmatpush1.msra.mxu0 %v1522
      %2067 = vmatprep.subr.mxu0 0.0
      %2068 = vmatpush1.msra.mxu0 %v1523
      %2069 = vmatprep.subr.mxu0 0.0
      %2070 = vmatpush1.msra.mxu0 %v1524
      %2071 = vmatprep.subr.mxu0 0.0
      %2072 = vmatpush1.msra.mxu0 %v1525
      %2073 = vmatprep.subr.mxu0 0.0
      %2074 = vmatpush1.msra.mxu0 %v1526
      %2075 = vmatprep.subr.mxu0 0.0
      %2076 = vmatpush1.msra.mxu0 %v1527
      %2077 = vmatprep.subr.mxu0 0.0
      %2078 = vmatpush1.msra.mxu0 %v1528
      %2079 = vmatprep.subr.mxu0 0.0
      %2080 = vmatpush1.msra.mxu0 %v1529
      %2081 = vmatprep.subr.mxu0 0.0
      %2082 = vmatpush1.msra.mxu0 %v1530
      %2083 = vmatprep.subr.mxu0 0.0
      %2084 = vmatpush1.msra.mxu0 %v1531
      %2085 = vmatprep.subr.mxu0 0.0
      %2086 = vmatpush1.msra.mxu0 %v1532
      %2087 = vmatprep.subr.mxu0 0.0
      %2088 = vmatpush1.msra.mxu0 %v1533
      %2089 = vmatprep.subr.mxu0 0.0
      %2090 = vmatpush1.msra.mxu0 %v1534
      %2091 = vmatprep.subr.mxu0 0.0
      %2092 = vmatpush1.msra.mxu0 %v1535
      %2093 = vmatprep.subr.mxu0 0.0
      %2094 = vmatpush1.msra.mxu0 %v1536
      %2095 = vmatprep.subr.mxu0 0.0
      %2096 = vmatpush1.msra.mxu0 %v1537
      %2097 = vmatprep.subr.mxu0 0.0
      %2098 = vmatpush1.msra.mxu0 %v1538
      %2099 = vmatprep.subr.mxu0 0.0
      %2100 = vmatpush1.msra.mxu0 %v1539
      %2101 = vmatprep.subr.mxu0 0.0
      %2102 = vmatpush1.msra.mxu0 %v1540
      %2103 = vmatprep.mubr.f32.mxu0 %v1162
      %2104 = vmatmul.mubr.f32.gmra.mrb[0].mxu0 %v1161
      %v2105 = vpop.f32.mrb[0].mxu0
      %v2106 = vadd.f32 %v1881, %v2105
      %v2107 = vpop.f32.mrb[0].mxu0
      %2108 = vmatprep.mubr.f32.mxu0 %v1171
      %2109 = vmatmul.mubr.f32.gmra.mrb[0].mxu0 %v1170
      %v2110 = vpop.f32.mrb[0].mxu0
      %v2111 = vadd.f32 %v1886, %v2110
      %v2112 = vpop.f32.mrb[0].mxu0
      %2113 = vmatprep.mubr.f32.mxu0 %v1180
      %2114 = vmatmul.mubr.f32.gmra.mrb[0].mxu0 %v1179
      %v2115 = vpop.f32.mrb[0].mxu0
      %v2116 = vadd.f32 %v1891, %v2115
      %v2117 = vpop.f32.mrb[0].mxu0
      %2118 = vmatprep.mubr.f32.mxu0 %v1189
      %2119 = vmatmul.mubr.f32.gmra.mrb[0].mxu0 %v1188
      %v2120 = vpop.f32.mrb[0].mxu0
      %v2121 = vadd.f32 %v1896, %v2120
      %v2122 = vpop.f32.mrb[0].mxu0
      %2123 = vmatprep.mubr.f32.mxu0 %v1198
      %2124 = vmatmul.mubr.f32.gmra.mrb[0].mxu0 %v1197
      %v2125 = vpop.f32.mrb[0].mxu0
      %v2126 = vadd.f32 %v1901, %v2125
      %v2127 = vpop.f32.mrb[0].mxu0
      %2128 = vmatprep.mubr.f32.mxu0 %v1207
      %2129 = vmatmul.mubr.f32.gmra.mrb[0].mxu0 %v1206
      %v2130 = vpop.f32.mrb[0].mxu0
      %v2131 = vadd.f32 %v1906, %v2130
      %v2132 = vpop.f32.mrb[0].mxu0
      %2133 = vmatprep.mubr.f32.mxu0 %v1216
      %2134 = vmatmul.mubr.f32.gmra.mrb[0].mxu0 %v1215
      %v2135 = vpop.f32.mrb[0].mxu0
      %v2136 = vadd.f32 %v1911, %v2135
      %v2137 = vpop.f32.mrb[0].mxu0
      %2138 = vmatprep.mubr.f32.mxu0 %v1225
      %2139 = vmatmul.mubr.f32.gmra.mrb[0].mxu0 %v1224
      %v2140 = vpop.f32.mrb[0].mxu0
      %v2141 = vadd.f32 %v1916, %v2140
      %v2142 = vpop.f32.mrb[0].mxu0
      %2143 = vmatprep.mubr.f32.mxu0 %v1234
      %2144 = vmatmul.mubr.f32.gmra.mrb[0].mxu0 %v1233
      %v2145 = vpop.f32.mrb[0].mxu0
      %v2146 = vadd.f32 %v1921, %v2145
      %v2147 = vpop.f32.mrb[0].mxu0
      %2148 = vmatprep.mubr.f32.mxu0 %v1243
      %2149 = vmatmul.mubr.f32.gmra.mrb[0].mxu0 %v1242
      %v2150 = vpop.f32.mrb[0].mxu0
      %v2151 = vadd.f32 %v1926, %v2150
      %v2152 = vpop.f32.mrb[0].mxu0
      %2153 = vmatprep.mubr.f32.mxu0 %v1252
      %2154 = vmatmul.mubr.f32.gmra.mrb[0].mxu0 %v1251
      %v2155 = vpop.f32.mrb[0].mxu0
      %v2156 = vadd.f32 %v1931, %v2155
      %v2157 = vpop.f32.mrb[0].mxu0
      %2158 = vmatprep.mubr.f32.mxu0 %v1261
      %2159 = vmatmul.mubr.f32.gmra.mrb[0].mxu0 %v1260
      %v2160 = vpop.f32.mrb[0].mxu0
      %v2161 = vadd.f32 %v1936, %v2160
      %v2162 = vpop.f32.mrb[0].mxu0
      %2163 = vmatprep.mubr.f32.mxu0 %v1270
      %2164 = vmatmul.mubr.f32.gmra.mrb[0].mxu0 %v1269
      %v2165 = vpop.f32.mrb[0].mxu0
      %v2166 = vadd.f32 %v1941, %v2165
      %v2167 = vpop.f32.mrb[0].mxu0
      %2168 = vmatprep.mubr.f32.mxu0 %v1279
      %2169 = vmatmul.mubr.f32.gmra.mrb[0].mxu0 %v1278
      %v2170 = vpop.f32.mrb[0].mxu0
      %v2171 = vadd.f32 %v1946, %v2170
      %v2172 = vpop.f32.mrb[0].mxu0
      %2173 = vmatprep.mubr.f32.mxu0 %v1288
      %2174 = vmatmul.mubr.f32.gmra.mrb[0].mxu0 %v1287
      %v2175 = vpop.f32.mrb[0].mxu0
      %v2176 = vadd.f32 %v1951, %v2175
      %v2177 = vpop.f32.mrb[0].mxu0
      %2178 = vmatprep.mubr.f32.mxu0 %v1297
      %2179 = vmatmul.mubr.f32.gmra.mrb[0].mxu0 %v1296
      %v2180 = vpop.f32.mrb[0].mxu0
      %v2181 = vadd.f32 %v1956, %v2180
      %v2182 = vpop.f32.mrb[0].mxu0
      %2183 = vmatprep.mubr.f32.mxu0 %v1306
      %2184 = vmatmul.mubr.f32.gmra.mrb[0].mxu0 %v1305
      %v2185 = vpop.f32.mrb[0].mxu0
      %v2186 = vadd.f32 %v1961, %v2185
      %v2187 = vpop.f32.mrb[0].mxu0
      %2188 = vmatprep.mubr.f32.mxu0 %v1315
      %2189 = vmatmul.mubr.f32.gmra.mrb[0].mxu0 %v1314
      %v2190 = vpop.f32.mrb[0].mxu0
      %v2191 = vadd.f32 %v1966, %v2190
      %v2192 = vpop.f32.mrb[0].mxu0
      %2193 = vmatprep.mubr.f32.mxu0 %v1324
      %2194 = vmatmul.mubr.f32.gmra.mrb[0].mxu0 %v1323
      %v2195 = vpop.f32.mrb[0].mxu0
      %v2196 = vadd.f32 %v1971, %v2195
      %v2197 = vpop.f32.mrb[0].mxu0
      %2198 = vmatprep.mubr.f32.mxu0 %v1333
      %2199 = vmatmul.mubr.f32.gmra.mrb[0].mxu0 %v1332
      %v2200 = vpop.f32.mrb[0].mxu0
      %v2201 = vadd.f32 %v1976, %v2200
      %v2202 = vpop.f32.mrb[0].mxu0
      %2203 = vmatprep.mubr.f32.mxu0 %v1342
      %2204 = vmatmul.mubr.f32.gmra.mrb[0].mxu0 %v1341
      %v2205 = vpop.f32.mrb[0].mxu0
      %v2206 = vadd.f32 %v1981, %v2205
      %v2207 = vpop.f32.mrb[0].mxu0
      %2208 = vmatprep.mubr.f32.mxu0 %v1351
      %2209 = vmatmul.mubr.f32.gmra.mrb[0].mxu0 %v1350
      %v2210 = vpop.f32.mrb[0].mxu0
      %v2211 = vadd.f32 %v1986, %v2210
      %v2212 = vpop.f32.mrb[0].mxu0
      %2213 = vmatprep.mubr.f32.mxu0 %v1360
      %2214 = vmatmul.mubr.f32.gmra.mrb[0].mxu0 %v1359
      %v2215 = vpop.f32.mrb[0].mxu0
      %v2216 = vadd.f32 %v1991, %v2215
      %v2217 = vpop.f32.mrb[0].mxu0
      %2218 = vmatprep.mubr.f32.mxu0 %v1369
      %2219 = vmatmul.mubr.f32.gmra.mrb[0].mxu0 %v1368
      %v2220 = vpop.f32.mrb[0].mxu0
      %v2221 = vadd.f32 %v1996, %v2220
      %v2222 = vpop.f32.mrb[0].mxu0
      %2223 = vmatprep.mubr.f32.mxu0 %v1378
      %2224 = vmatmul.mubr.f32.gmra.mrb[0].mxu0 %v1377
      %v2225 = vpop.f32.mrb[0].mxu0
      %v2226 = vadd.f32 %v2001, %v2225
      %v2227 = vpop.f32.mrb[0].mxu0
      %2228 = vmatprep.mubr.f32.mxu0 %v1387
      %2229 = vmatmul.mubr.f32.gmra.mrb[0].mxu0 %v1386
      %v2230 = vpop.f32.mrb[0].mxu0
      %v2231 = vadd.f32 %v2006, %v2230
      %v2232 = vpop.f32.mrb[0].mxu0
      %2233 = vmatprep.mubr.f32.mxu0 %v1396
      %2234 = vmatmul.mubr.f32.gmra.mrb[0].mxu0 %v1395
      %v2235 = vpop.f32.mrb[0].mxu0
      %v2236 = vadd.f32 %v2011, %v2235
      %v2237 = vpop.f32.mrb[0].mxu0
      %2238 = vmatprep.mubr.f32.mxu0 %v1405
      %2239 = vmatmul.mubr.f32.gmra.mrb[0].mxu0 %v1404
      %v2240 = vpop.f32.mrb[0].mxu0
      %v2241 = vadd.f32 %v2016, %v2240
      %v2242 = vpop.f32.mrb[0].mxu0
      %2243 = vmatprep.mubr.f32.mxu0 %v1414
      %2244 = vmatmul.mubr.f32.gmra.mrb[0].mxu0 %v1413
      %v2245 = vpop.f32.mrb[0].mxu0
      %v2246 = vadd.f32 %v2021, %v2245
      %v2247 = vpop.f32.mrb[0].mxu0
      %2248 = vmatprep.mubr.f32.mxu0 %v1423
      %2249 = vmatmul.mubr.f32.gmra.mrb[0].mxu0 %v1422
      %v2250 = vpop.f32.mrb[0].mxu0
      %v2251 = vadd.f32 %v2026, %v2250
      %v2252 = vpop.f32.mrb[0].mxu0
      %2253 = vmatprep.mubr.f32.mxu0 %v1432
      %2254 = vmatmul.mubr.f32.gmra.mrb[0].mxu0 %v1431
      %v2255 = vpop.f32.mrb[0].mxu0
      %v2256 = vadd.f32 %v2031, %v2255
      %v2257 = vpop.f32.mrb[0].mxu0
      %2258 = vmatprep.mubr.f32.mxu0 %v1441
      %2259 = vmatmul.mubr.f32.gmra.mrb[0].mxu0 %v1440
      %v2260 = vpop.f32.mrb[0].mxu0
      %v2261 = vadd.f32 %v2036, %v2260
      %v2262 = vpop.f32.mrb[0].mxu0
      %2263 = vdwg.mxu0
      %2264 = vmatprep.subr.mxu0 0.0
      %2265 = vmatpush1.msra.mxu0 %v1541
      %2266 = vmatprep.subr.mxu0 0.0
      %2267 = vmatpush1.msra.mxu0 %v1542
      %2268 = vmatprep.subr.mxu0 0.0
      %2269 = vmatpush1.msra.mxu0 %v1543
      %2270 = vmatprep.subr.mxu0 0.0
      %2271 = vmatpush1.msra.mxu0 %v1544
      %2272 = vmatprep.subr.mxu0 0.0
      %2273 = vmatpush1.msra.mxu0 %v1545
      %2274 = vmatprep.subr.mxu0 0.0
      %2275 = vmatpush1.msra.mxu0 %v1546
      %2276 = vmatprep.subr.mxu0 0.0
      %2277 = vmatpush1.msra.mxu0 %v1547
      %2278 = vmatprep.subr.mxu0 0.0
      %2279 = vmatpush1.msra.mxu0 %v1548
      %2280 = vmatprep.subr.mxu0 0.0
      %2281 = vmatpush1.msra.mxu0 %v1549
      %2282 = vmatprep.subr.mxu0 0.0
      %2283 = vmatpush1.msra.mxu0 %v1550
      %2284 = vmatprep.subr.mxu0 0.0
      %2285 = vmatpush1.msra.mxu0 %v1551
      %2286 = vmatprep.subr.mxu0 0.0
      %2287 = vmatpush1.msra.mxu0 %v1552
      %2288 = vmatprep.subr.mxu0 0.0
      %2289 = vmatpush1.msra.mxu0 %v1553
      %2290 = vmatprep.subr.mxu0 0.0
      %2291 = vmatpush1.msra.mxu0 %v1554
      %2292 = vmatprep.subr.mxu0 0.0
      %2293 = vmatpush1.msra.mxu0 %v1555
      %2294 = vmatprep.subr.mxu0 0.0
      %2295 = vmatpush1.msra.mxu0 %v1556
      %2296 = vmatprep.subr.mxu0 0.0
      %2297 = vmatpush1.msra.mxu0 %v1557
      %2298 = vmatprep.subr.mxu0 0.0
      %2299 = vmatpush1.msra.mxu0 %v1558
      %2300 = vmatprep.subr.mxu0 0.0
      %2301 = vmatpush1.msra.mxu0 %v1559
      %2302 = vmatprep.subr.mxu0 0.0
      %2303 = vmatpush1.msra.mxu0 %v1560
      %2304 = vmatprep.subr.mxu0 0.0
      %2305 = vmatpush1.msra.mxu0 %v1561
      %2306 = vmatprep.subr.mxu0 0.0
      %2307 = vmatpush1.msra.mxu0 %v1562
      %2308 = vmatprep.subr.mxu0 0.0
      %2309 = vmatpush1.msra.mxu0 %v1563
      %2310 = vmatprep.subr.mxu0 0.0
      %2311 = vmatpush1.msra.mxu0 %v1564
      %2312 = vmatprep.subr.mxu0 0.0
      %2313 = vmatpush1.msra.mxu0 %v1565
      %2314 = vmatprep.subr.mxu0 0.0
      %2315 = vmatpush1.msra.mxu0 %v1566
      %2316 = vmatprep.subr.mxu0 0.0
      %2317 = vmatpush1.msra.mxu0 %v1567
      %2318 = vmatprep.subr.mxu0 0.0
      %2319 = vmatpush1.msra.mxu0 %v1568
      %2320 = vmatprep.subr.mxu0 0.0
      %2321 = vmatpush1.msra.mxu0 %v1569
      %2322 = vmatprep.subr.mxu0 0.0
      %2323 = vmatpush1.msra.mxu0 %v1570
      %2324 = vmatprep.subr.mxu0 0.0
      %2325 = vmatpush1.msra.mxu0 %v1571
      %2326 = vmatprep.subr.mxu0 0.0
      %2327 = vmatpush1.msra.mxu0 %v1572
      %2328 = vmatprep.mubr.f32.mxu0 %v1164
      %2329 = vmatmul.mubr.f32.gmra.mrb[0].mxu0 %v1163
      %v2330 = vpop.f32.mrb[0].mxu0
      %v2331 = vadd.f32 %v2106, %v2330
      %v2332 = vpop.f32.mrb[0].mxu0
      %2333 = vmatprep.mubr.f32.mxu0 %v1173
      %2334 = vmatmul.mubr.f32.gmra.mrb[0].mxu0 %v1172
      %v2335 = vpop.f32.mrb[0].mxu0
      %v2336 = vadd.f32 %v2111, %v2335
      %v2337 = vpop.f32.mrb[0].mxu0
      %2338 = vmatprep.mubr.f32.mxu0 %v1182
      %2339 = vmatmul.mubr.f32.gmra.mrb[0].mxu0 %v1181
      %v2340 = vpop.f32.mrb[0].mxu0
      %v2341 = vadd.f32 %v2116, %v2340
      %v2342 = vpop.f32.mrb[0].mxu0
      %2343 = vmatprep.mubr.f32.mxu0 %v1191
      %2344 = vmatmul.mubr.f32.gmra.mrb[0].mxu0 %v1190
      %v2345 = vpop.f32.mrb[0].mxu0
      %v2346 = vadd.f32 %v2121, %v2345
      %v2347 = vpop.f32.mrb[0].mxu0
      %2348 = vmatprep.mubr.f32.mxu0 %v1200
      %2349 = vmatmul.mubr.f32.gmra.mrb[0].mxu0 %v1199
      %v2350 = vpop.f32.mrb[0].mxu0
      %v2351 = vadd.f32 %v2126, %v2350
      %v2352 = vpop.f32.mrb[0].mxu0
      %2353 = vmatprep.mubr.f32.mxu0 %v1209
      %2354 = vmatmul.mubr.f32.gmra.mrb[0].mxu0 %v1208
      %v2355 = vpop.f32.mrb[0].mxu0
      %v2356 = vadd.f32 %v2131, %v2355
      %v2357 = vpop.f32.mrb[0].mxu0
      %2358 = vmatprep.mubr.f32.mxu0 %v1218
      %2359 = vmatmul.mubr.f32.gmra.mrb[0].mxu0 %v1217
      %v2360 = vpop.f32.mrb[0].mxu0
      %v2361 = vadd.f32 %v2136, %v2360
      %v2362 = vpop.f32.mrb[0].mxu0
      %2363 = vmatprep.mubr.f32.mxu0 %v1227
      %2364 = vmatmul.mubr.f32.gmra.mrb[0].mxu0 %v1226
      %v2365 = vpop.f32.mrb[0].mxu0
      %v2366 = vadd.f32 %v2141, %v2365
      %v2367 = vpop.f32.mrb[0].mxu0
      %2368 = vmatprep.mubr.f32.mxu0 %v1236
      %2369 = vmatmul.mubr.f32.gmra.mrb[0].mxu0 %v1235
      %v2370 = vpop.f32.mrb[0].mxu0
      %v2371 = vadd.f32 %v2146, %v2370
      %v2372 = vpop.f32.mrb[0].mxu0
      %2373 = vmatprep.mubr.f32.mxu0 %v1245
      %2374 = vmatmul.mubr.f32.gmra.mrb[0].mxu0 %v1244
      %v2375 = vpop.f32.mrb[0].mxu0
      %v2376 = vadd.f32 %v2151, %v2375
      %v2377 = vpop.f32.mrb[0].mxu0
      %2378 = vmatprep.mubr.f32.mxu0 %v1254
      %2379 = vmatmul.mubr.f32.gmra.mrb[0].mxu0 %v1253
      %v2380 = vpop.f32.mrb[0].mxu0
      %v2381 = vadd.f32 %v2156, %v2380
      %v2382 = vpop.f32.mrb[0].mxu0
      %2383 = vmatprep.mubr.f32.mxu0 %v1263
      %2384 = vmatmul.mubr.f32.gmra.mrb[0].mxu0 %v1262
      %v2385 = vpop.f32.mrb[0].mxu0
      %v2386 = vadd.f32 %v2161, %v2385
      %v2387 = vpop.f32.mrb[0].mxu0
      %2388 = vmatprep.mubr.f32.mxu0 %v1272
      %2389 = vmatmul.mubr.f32.gmra.mrb[0].mxu0 %v1271
      %v2390 = vpop.f32.mrb[0].mxu0
      %v2391 = vadd.f32 %v2166, %v2390
      %v2392 = vpop.f32.mrb[0].mxu0
      %2393 = vmatprep.mubr.f32.mxu0 %v1281
      %2394 = vmatmul.mubr.f32.gmra.mrb[0].mxu0 %v1280
      %v2395 = vpop.f32.mrb[0].mxu0
      %v2396 = vadd.f32 %v2171, %v2395
      %v2397 = vpop.f32.mrb[0].mxu0
      %2398 = vmatprep.mubr.f32.mxu0 %v1290
      %2399 = vmatmul.mubr.f32.gmra.mrb[0].mxu0 %v1289
      %v2400 = vpop.f32.mrb[0].mxu0
      %v2401 = vadd.f32 %v2176, %v2400
      %v2402 = vpop.f32.mrb[0].mxu0
      %2403 = vmatprep.mubr.f32.mxu0 %v1299
      %2404 = vmatmul.mubr.f32.gmra.mrb[0].mxu0 %v1298
      %v2405 = vpop.f32.mrb[0].mxu0
      %v2406 = vadd.f32 %v2181, %v2405
      %v2407 = vpop.f32.mrb[0].mxu0
      %2408 = vmatprep.mubr.f32.mxu0 %v1308
      %2409 = vmatmul.mubr.f32.gmra.mrb[0].mxu0 %v1307
      %v2410 = vpop.f32.mrb[0].mxu0
      %v2411 = vadd.f32 %v2186, %v2410
      %v2412 = vpop.f32.mrb[0].mxu0
      %2413 = vmatprep.mubr.f32.mxu0 %v1317
      %2414 = vmatmul.mubr.f32.gmra.mrb[0].mxu0 %v1316
      %v2415 = vpop.f32.mrb[0].mxu0
      %v2416 = vadd.f32 %v2191, %v2415
      %v2417 = vpop.f32.mrb[0].mxu0
      %2418 = vmatprep.mubr.f32.mxu0 %v1326
      %2419 = vmatmul.mubr.f32.gmra.mrb[0].mxu0 %v1325
      %v2420 = vpop.f32.mrb[0].mxu0
      %v2421 = vadd.f32 %v2196, %v2420
      %v2422 = vpop.f32.mrb[0].mxu0
      %2423 = vmatprep.mubr.f32.mxu0 %v1335
      %2424 = vmatmul.mubr.f32.gmra.mrb[0].mxu0 %v1334
      %v2425 = vpop.f32.mrb[0].mxu0
      %v2426 = vadd.f32 %v2201, %v2425
      %v2427 = vpop.f32.mrb[0].mxu0
      %2428 = vmatprep.mubr.f32.mxu0 %v1344
      %2429 = vmatmul.mubr.f32.gmra.mrb[0].mxu0 %v1343
      %v2430 = vpop.f32.mrb[0].mxu0
      %v2431 = vadd.f32 %v2206, %v2430
      %v2432 = vpop.f32.mrb[0].mxu0
      %2433 = vmatprep.mubr.f32.mxu0 %v1353
      %2434 = vmatmul.mubr.f32.gmra.mrb[0].mxu0 %v1352
      %v2435 = vpop.f32.mrb[0].mxu0
      %v2436 = vadd.f32 %v2211, %v2435
      %v2437 = vpop.f32.mrb[0].mxu0
      %2438 = vmatprep.mubr.f32.mxu0 %v1362
      %2439 = vmatmul.mubr.f32.gmra.mrb[0].mxu0 %v1361
      %v2440 = vpop.f32.mrb[0].mxu0
      %v2441 = vadd.f32 %v2216, %v2440
      %v2442 = vpop.f32.mrb[0].mxu0
      %2443 = vmatprep.mubr.f32.mxu0 %v1371
      %2444 = vmatmul.mubr.f32.gmra.mrb[0].mxu0 %v1370
      %v2445 = vpop.f32.mrb[0].mxu0
      %v2446 = vadd.f32 %v2221, %v2445
      %v2447 = vpop.f32.mrb[0].mxu0
      %2448 = vmatprep.mubr.f32.mxu0 %v1380
      %2449 = vmatmul.mubr.f32.gmra.mrb[0].mxu0 %v1379
      %v2450 = vpop.f32.mrb[0].mxu0
      %v2451 = vadd.f32 %v2226, %v2450
      %v2452 = vpop.f32.mrb[0].mxu0
      %2453 = vmatprep.mubr.f32.mxu0 %v1389
      %2454 = vmatmul.mubr.f32.gmra.mrb[0].mxu0 %v1388
      %v2455 = vpop.f32.mrb[0].mxu0
      %v2456 = vadd.f32 %v2231, %v2455
      %v2457 = vpop.f32.mrb[0].mxu0
      %2458 = vmatprep.mubr.f32.mxu0 %v1398
      %2459 = vmatmul.mubr.f32.gmra.mrb[0].mxu0 %v1397
      %v2460 = vpop.f32.mrb[0].mxu0
      %v2461 = vadd.f32 %v2236, %v2460
      %v2462 = vpop.f32.mrb[0].mxu0
      %2463 = vmatprep.mubr.f32.mxu0 %v1407
      %2464 = vmatmul.mubr.f32.gmra.mrb[0].mxu0 %v1406
      %v2465 = vpop.f32.mrb[0].mxu0
      %v2466 = vadd.f32 %v2241, %v2465
      %v2467 = vpop.f32.mrb[0].mxu0
      %2468 = vmatprep.mubr.f32.mxu0 %v1416
      %2469 = vmatmul.mubr.f32.gmra.mrb[0].mxu0 %v1415
      %v2470 = vpop.f32.mrb[0].mxu0
      %v2471 = vadd.f32 %v2246, %v2470
      %v2472 = vpop.f32.mrb[0].mxu0
      %2473 = vmatprep.mubr.f32.mxu0 %v1425
      %2474 = vmatmul.mubr.f32.gmra.mrb[0].mxu0 %v1424
      %v2475 = vpop.f32.mrb[0].mxu0
      %v2476 = vadd.f32 %v2251, %v2475
      %v2477 = vpop.f32.mrb[0].mxu0
      %2478 = vmatprep.mubr.f32.mxu0 %v1434
      %2479 = vmatmul.mubr.f32.gmra.mrb[0].mxu0 %v1433
      %v2480 = vpop.f32.mrb[0].mxu0
      %v2481 = vadd.f32 %v2256, %v2480
      %v2482 = vpop.f32.mrb[0].mxu0
      %2483 = vmatprep.mubr.f32.mxu0 %v1443
      %2484 = vmatmul.mubr.f32.gmra.mrb[0].mxu0 %v1442
      %v2485 = vpop.f32.mrb[0].mxu0
      %v2486 = vadd.f32 %v2261, %v2485
      %v2487 = vpop.f32.mrb[0].mxu0
      %2488 = vdwg.mxu0
      %2489 = vmatprep.subr.mxu0 0.0
      %2490 = vmatpush1.msra.mxu0 %v1573
      %2491 = vmatprep.subr.mxu0 0.0
      %2492 = vmatpush1.msra.mxu0 %v1574
      %2493 = vmatprep.subr.mxu0 0.0
      %2494 = vmatpush1.msra.mxu0 %v1575
      %2495 = vmatprep.subr.mxu0 0.0
      %2496 = vmatpush1.msra.mxu0 %v1576
      %2497 = vmatprep.subr.mxu0 0.0
      %2498 = vmatpush1.msra.mxu0 %v1577
      %2499 = vmatprep.subr.mxu0 0.0
      %2500 = vmatpush1.msra.mxu0 %v1578
      %2501 = vmatprep.subr.mxu0 0.0
      %2502 = vmatpush1.msra.mxu0 %v1579
      %2503 = vmatprep.subr.mxu0 0.0
      %2504 = vmatpush1.msra.mxu0 %v1580
      %2505 = vmatprep.subr.mxu0 0.0
      %2506 = vmatpush1.msra.mxu0 %v1581
      %2507 = vmatprep.subr.mxu0 0.0
      %2508 = vmatpush1.msra.mxu0 %v1582
      %2509 = vmatprep.subr.mxu0 0.0
      %2510 = vmatpush1.msra.mxu0 %v1583
      %2511 = vmatprep.subr.mxu0 0.0
      %2512 = vmatpush1.msra.mxu0 %v1584
      %2513 = vmatprep.subr.mxu0 0.0
      %2514 = vmatpush1.msra.mxu0 %v1585
      %2515 = vmatprep.subr.mxu0 0.0
      %2516 = vmatpush1.msra.mxu0 %v1586
      %2517 = vmatprep.subr.mxu0 0.0
      %2518 = vmatpush1.msra.mxu0 %v1587
      %2519 = vmatprep.subr.mxu0 0.0
      %2520 = vmatpush1.msra.mxu0 %v1588
      %2521 = vmatprep.subr.mxu0 0.0
      %2522 = vmatpush1.msra.mxu0 0.0
      %2523 = vmatprep.subr.mxu0 0.0
      %2524 = vmatpush1.msra.mxu0 0.0
      %2525 = vmatprep.subr.mxu0 0.0
      %2526 = vmatpush1.msra.mxu0 0.0
      %2527 = vmatprep.subr.mxu0 0.0
      %2528 = vmatpush1.msra.mxu0 0.0
      %2529 = vmatprep.subr.mxu0 0.0
      %2530 = vmatpush1.msra.mxu0 0.0
      %2531 = vmatprep.subr.mxu0 0.0
      %2532 = vmatpush1.msra.mxu0 0.0
      %2533 = vmatprep.subr.mxu0 0.0
      %2534 = vmatpush1.msra.mxu0 0.0
      %2535 = vmatprep.subr.mxu0 0.0
      %2536 = vmatpush1.msra.mxu0 0.0
      %2537 = vmatprep.subr.mxu0 0.0
      %2538 = vmatpush1.msra.mxu0 0.0
      %2539 = vmatprep.subr.mxu0 0.0
      %2540 = vmatpush1.msra.mxu0 0.0
      %2541 = vmatprep.subr.mxu0 0.0
      %2542 = vmatpush1.msra.mxu0 0.0
      %2543 = vmatprep.subr.mxu0 0.0
      %2544 = vmatpush1.msra.mxu0 0.0
      %2545 = vmatprep.subr.mxu0 0.0
      %2546 = vmatpush1.msra.mxu0 0.0
      %2547 = vmatprep.subr.mxu0 0.0
      %2548 = vmatpush1.msra.mxu0 0.0
      %2549 = vmatprep.subr.mxu0 0.0
      %2550 = vmatpush1.msra.mxu0 0.0
      %2551 = vmatprep.subr.mxu0 0.0
      %2552 = vmatpush1.msra.mxu0 0.0
      %2553 = vmatprep.mubr.f32.mxu0 0.0
      %2554 = vmatmul.mubr.f32.gmra.mrb[0].mxu0 %v1165
      %v2555 = vpop.f32.mrb[0].mxu0
      %v2556 = vadd.f32 %v2331, %v2555
      %v2557 = vpop.f32.mrb[0].mxu0
      %2558 = vmatprep.mubr.f32.mxu0 0.0
      %2559 = vmatmul.mubr.f32.gmra.mrb[0].mxu0 %v1174
      %v2560 = vpop.f32.mrb[0].mxu0
      %v2561 = vadd.f32 %v2336, %v2560
      %v2562 = vpop.f32.mrb[0].mxu0
      %2563 = vmatprep.mubr.f32.mxu0 0.0
      %2564 = vmatmul.mubr.f32.gmra.mrb[0].mxu0 %v1183
      %v2565 = vpop.f32.mrb[0].mxu0
      %v2566 = vadd.f32 %v2341, %v2565
      %v2567 = vpop.f32.mrb[0].mxu0
      %2568 = vmatprep.mubr.f32.mxu0 0.0
      %2569 = vmatmul.mubr.f32.gmra.mrb[0].mxu0 %v1192
      %v2570 = vpop.f32.mrb[0].mxu0
      %v2571 = vadd.f32 %v2346, %v2570
      %v2572 = vpop.f32.mrb[0].mxu0
      %2573 = vmatprep.mubr.f32.mxu0 0.0
      %2574 = vmatmul.mubr.f32.gmra.mrb[0].mxu0 %v1201
      %v2575 = vpop.f32.mrb[0].mxu0
      %v2576 = vadd.f32 %v2351, %v2575
      %v2577 = vpop.f32.mrb[0].mxu0
      %2578 = vmatprep.mubr.f32.mxu0 0.0
      %2579 = vmatmul.mubr.f32.gmra.mrb[0].mxu0 %v1210
      %v2580 = vpop.f32.mrb[0].mxu0
      %v2581 = vadd.f32 %v2356, %v2580
      %v2582 = vpop.f32.mrb[0].mxu0
      %2583 = vmatprep.mubr.f32.mxu0 0.0
      %2584 = vmatmul.mubr.f32.gmra.mrb[0].mxu0 %v1219
      %v2585 = vpop.f32.mrb[0].mxu0
      %v2586 = vadd.f32 %v2361, %v2585
      %v2587 = vpop.f32.mrb[0].mxu0
      %2588 = vmatprep.mubr.f32.mxu0 0.0
      %2589 = vmatmul.mubr.f32.gmra.mrb[0].mxu0 %v1228
      %v2590 = vpop.f32.mrb[0].mxu0
      %v2591 = vadd.f32 %v2366, %v2590
      %v2592 = vpop.f32.mrb[0].mxu0
      %2593 = vmatprep.mubr.f32.mxu0 0.0
      %2594 = vmatmul.mubr.f32.gmra.mrb[0].mxu0 %v1237
      %v2595 = vpop.f32.mrb[0].mxu0
      %v2596 = vadd.f32 %v2371, %v2595
      %v2597 = vpop.f32.mrb[0].mxu0
      %2598 = vmatprep.mubr.f32.mxu0 0.0
      %2599 = vmatmul.mubr.f32.gmra.mrb[0].mxu0 %v1246
      %v2600 = vpop.f32.mrb[0].mxu0
      %v2601 = vadd.f32 %v2376, %v2600
      %v2602 = vpop.f32.mrb[0].mxu0
      %2603 = vmatprep.mubr.f32.mxu0 0.0
      %2604 = vmatmul.mubr.f32.gmra.mrb[0].mxu0 %v1255
      %v2605 = vpop.f32.mrb[0].mxu0
      %v2606 = vadd.f32 %v2381, %v2605
      %v2607 = vpop.f32.mrb[0].mxu0
      %2608 = vmatprep.mubr.f32.mxu0 0.0
      %2609 = vmatmul.mubr.f32.gmra.mrb[0].mxu0 %v1264
      %v2610 = vpop.f32.mrb[0].mxu0
      %v2611 = vadd.f32 %v2386, %v2610
      %v2612 = vpop.f32.mrb[0].mxu0
      %2613 = vmatprep.mubr.f32.mxu0 0.0
      %2614 = vmatmul.mubr.f32.gmra.mrb[0].mxu0 %v1273
      %v2615 = vpop.f32.mrb[0].mxu0
      %v2616 = vadd.f32 %v2391, %v2615
      %v2617 = vpop.f32.mrb[0].mxu0
      %2618 = vmatprep.mubr.f32.mxu0 0.0
      %2619 = vmatmul.mubr.f32.gmra.mrb[0].mxu0 %v1282
      %v2620 = vpop.f32.mrb[0].mxu0
      %v2621 = vadd.f32 %v2396, %v2620
      %v2622 = vpop.f32.mrb[0].mxu0
      %2623 = vmatprep.mubr.f32.mxu0 0.0
      %2624 = vmatmul.mubr.f32.gmra.mrb[0].mxu0 %v1291
      %v2625 = vpop.f32.mrb[0].mxu0
      %v2626 = vadd.f32 %v2401, %v2625
      %v2627 = vpop.f32.mrb[0].mxu0
      %2628 = vmatprep.mubr.f32.mxu0 0.0
      %2629 = vmatmul.mubr.f32.gmra.mrb[0].mxu0 %v1300
      %v2630 = vpop.f32.mrb[0].mxu0
      %v2631 = vadd.f32 %v2406, %v2630
      %v2632 = vpop.f32.mrb[0].mxu0
      %2633 = vmatprep.mubr.f32.mxu0 0.0
      %2634 = vmatmul.mubr.f32.gmra.mrb[0].mxu0 %v1309
      %v2635 = vpop.f32.mrb[0].mxu0
      %v2636 = vadd.f32 %v2411, %v2635
      %v2637 = vpop.f32.mrb[0].mxu0
      %2638 = vmatprep.mubr.f32.mxu0 0.0
      %2639 = vmatmul.mubr.f32.gmra.mrb[0].mxu0 %v1318
      %v2640 = vpop.f32.mrb[0].mxu0
      %v2641 = vadd.f32 %v2416, %v2640
      %v2642 = vpop.f32.mrb[0].mxu0
      %2643 = vmatprep.mubr.f32.mxu0 0.0
      %2644 = vmatmul.mubr.f32.gmra.mrb[0].mxu0 %v1327
      %v2645 = vpop.f32.mrb[0].mxu0
      %v2646 = vadd.f32 %v2421, %v2645
      %v2647 = vpop.f32.mrb[0].mxu0
      %2648 = vmatprep.mubr.f32.mxu0 0.0
      %2649 = vmatmul.mubr.f32.gmra.mrb[0].mxu0 %v1336
      %v2650 = vpop.f32.mrb[0].mxu0
      %v2651 = vadd.f32 %v2426, %v2650
      %v2652 = vpop.f32.mrb[0].mxu0
      %2653 = vmatprep.mubr.f32.mxu0 0.0
      %2654 = vmatmul.mubr.f32.gmra.mrb[0].mxu0 %v1345
      %v2655 = vpop.f32.mrb[0].mxu0
      %v2656 = vadd.f32 %v2431, %v2655
      %v2657 = vpop.f32.mrb[0].mxu0
      %2658 = vmatprep.mubr.f32.mxu0 0.0
      %2659 = vmatmul.mubr.f32.gmra.mrb[0].mxu0 %v1354
      %v2660 = vpop.f32.mrb[0].mxu0
      %v2661 = vadd.f32 %v2436, %v2660
      %v2662 = vpop.f32.mrb[0].mxu0
      %2663 = vmatprep.mubr.f32.mxu0 0.0
      %2664 = vmatmul.mubr.f32.gmra.mrb[0].mxu0 %v1363
      %v2665 = vpop.f32.mrb[0].mxu0
      %v2666 = vadd.f32 %v2441, %v2665
      %v2667 = vpop.f32.mrb[0].mxu0
      %2668 = vmatprep.mubr.f32.mxu0 0.0
      %2669 = vmatmul.mubr.f32.gmra.mrb[0].mxu0 %v1372
      %v2670 = vpop.f32.mrb[0].mxu0
      %v2671 = vadd.f32 %v2446, %v2670
      %v2672 = vpop.f32.mrb[0].mxu0
      %2673 = vmatprep.mubr.f32.mxu0 0.0
      %2674 = vmatmul.mubr.f32.gmra.mrb[0].mxu0 %v1381
      %v2675 = vpop.f32.mrb[0].mxu0
      %v2676 = vadd.f32 %v2451, %v2675
      %v2677 = vpop.f32.mrb[0].mxu0
      %2678 = vmatprep.mubr.f32.mxu0 0.0
      %2679 = vmatmul.mubr.f32.gmra.mrb[0].mxu0 %v1390
      %v2680 = vpop.f32.mrb[0].mxu0
      %v2681 = vadd.f32 %v2456, %v2680
      %v2682 = vpop.f32.mrb[0].mxu0
      %2683 = vmatprep.mubr.f32.mxu0 0.0
      %2684 = vmatmul.mubr.f32.gmra.mrb[0].mxu0 %v1399
      %v2685 = vpop.f32.mrb[0].mxu0
      %v2686 = vadd.f32 %v2461, %v2685
      %v2687 = vpop.f32.mrb[0].mxu0
      %2688 = vmatprep.mubr.f32.mxu0 0.0
      %2689 = vmatmul.mubr.f32.gmra.mrb[0].mxu0 %v1408
      %v2690 = vpop.f32.mrb[0].mxu0
      %v2691 = vadd.f32 %v2466, %v2690
      %v2692 = vpop.f32.mrb[0].mxu0
      %2693 = vmatprep.mubr.f32.mxu0 0.0
      %2694 = vmatmul.mubr.f32.gmra.mrb[0].mxu0 %v1417
      %v2695 = vpop.f32.mrb[0].mxu0
      %v2696 = vadd.f32 %v2471, %v2695
      %v2697 = vpop.f32.mrb[0].mxu0
      %2698 = vmatprep.mubr.f32.mxu0 0.0
      %2699 = vmatmul.mubr.f32.gmra.mrb[0].mxu0 %v1426
      %v2700 = vpop.f32.mrb[0].mxu0
      %v2701 = vadd.f32 %v2476, %v2700
      %v2702 = vpop.f32.mrb[0].mxu0
      %2703 = vmatprep.mubr.f32.mxu0 0.0
      %2704 = vmatmul.mubr.f32.gmra.mrb[0].mxu0 %v1435
      %v2705 = vpop.f32.mrb[0].mxu0
      %v2706 = vadd.f32 %v2481, %v2705
      %v2707 = vpop.f32.mrb[0].mxu0
      %2708 = vmatprep.mubr.f32.mxu0 0.0
      %2709 = vmatmul.mubr.f32.gmra.mrb[0].mxu0 %v1444
      %v2710 = vpop.f32.mrb[0].mxu0
      %v2711 = vadd.f32 %v2486, %v2710
      %v2712 = vpop.f32.mrb[0].mxu0
      %2713 = vdwg.mxu0
      %vm2714 = vcmask 64512
      %v2715 = vsel %vm2714, %v2556, 0.0
      %v2716 = vsel %vm2714, %v2561, 0.0
      %v2717 = vadd.f32 %v2715, %v2716
      %v2718 = vsel %vm2714, %v2566, 0.0
      %v2719 = vadd.f32 %v2717, %v2718
      %v2720 = vsel %vm2714, %v2571, 0.0
      %v2721 = vadd.f32 %v2719, %v2720
      %v2722 = vsel %vm2714, %v2576, 0.0
      %v2723 = vadd.f32 %v2721, %v2722
      %v2724 = vsel %vm2714, %v2581, 0.0
      %v2725 = vadd.f32 %v2723, %v2724
      %v2726 = vsel %vm2714, %v2586, 0.0
      %v2727 = vadd.f32 %v2725, %v2726
      %v2728 = vsel %vm2714, %v2591, 0.0
      %v2729 = vadd.f32 %v2727, %v2728
      %v2730 = vsel %vm2714, %v2596, 0.0
      %v2731 = vadd.f32 %v2729, %v2730
      %v2732 = vsel %vm2714, %v2601, 0.0
      %v2733 = vadd.f32 %v2731, %v2732
      %v2734 = vsel %vm2714, %v2606, 0.0
      %v2735 = vadd.f32 %v2733, %v2734
      %v2736 = vsel %vm2714, %v2611, 0.0
      %v2737 = vadd.f32 %v2735, %v2736
      %v2738 = vsel %vm2714, %v2616, 0.0
      %v2739 = vadd.f32 %v2737, %v2738
      %v2740 = vsel %vm2714, %v2621, 0.0
      %v2741 = vadd.f32 %v2739, %v2740
      %v2742 = vsel %vm2714, %v2626, 0.0
      %v2743 = vadd.f32 %v2741, %v2742
      %v2744 = vsel %vm2714, %v2631, 0.0
      %v2745 = vadd.f32 %v2743, %v2744
      %v2746 = vsel %vm2714, %v2636, 0.0
      %v2747 = vadd.f32 %v2745, %v2746
      %v2748 = vsel %vm2714, %v2641, 0.0
      %v2749 = vadd.f32 %v2747, %v2748
      %v2750 = vsel %vm2714, %v2646, 0.0
      %v2751 = vadd.f32 %v2749, %v2750
      %v2752 = vsel %vm2714, %v2651, 0.0
      %v2753 = vadd.f32 %v2751, %v2752
      %v2754 = vsel %vm2714, %v2656, 0.0
      %v2755 = vadd.f32 %v2753, %v2754
      %v2756 = vsel %vm2714, %v2661, 0.0
      %v2757 = vadd.f32 %v2755, %v2756
      %v2758 = vsel %vm2714, %v2666, 0.0
      %v2759 = vadd.f32 %v2757, %v2758
      %v2760 = vsel %vm2714, %v2671, 0.0
      %v2761 = vadd.f32 %v2759, %v2760
      %v2762 = vsel %vm2714, %v2676, 0.0
      %v2763 = vadd.f32 %v2761, %v2762
      %v2764 = vsel %vm2714, %v2681, 0.0
      %v2765 = vadd.f32 %v2763, %v2764
      %v2766 = vsel %vm2714, %v2686, 0.0
      %v2767 = vadd.f32 %v2765, %v2766
      %v2768 = vsel %vm2714, %v2691, 0.0
      %v2769 = vadd.f32 %v2767, %v2768
      %v2770 = vsel %vm2714, %v2696, 0.0
      %v2771 = vadd.f32 %v2769, %v2770
      %v2772 = vsel %vm2714, %v2701, 0.0
      %v2773 = vadd.f32 %v2771, %v2772
      %v2774 = vsel %vm2714, %v2706, 0.0
      %v2775 = vadd.f32 %v2773, %v2774
      %v2776 = vsel %vm2714, %v2711, 0.0
      %v2777 = vadd.f32 %v2775, %v2776
      %v2778 = vrot.slane %v2777, 4
      %v2779 = vadd.f32 %v2777, %v2778
      %v2780 = vrot.slane %v2779, 2
      %v2781 = vadd.f32 %v2779, %v2780
      %v2782 = vrot.slane %v2781, 1
      %v2783 = vadd.f32 %v2781, %v2782
      %v2784 = vrcp.pop 256.0
      %v2785 = vmul.f32 %v2783, %v2784
      %v2786 = vsub.f32 %v2556, %v2785
      %v2787 = vsub.f32 %v2561, %v2785
      %v2788 = vsub.f32 %v2566, %v2785
      %v2789 = vsub.f32 %v2571, %v2785
      %v2790 = vsub.f32 %v2576, %v2785
      %v2791 = vsub.f32 %v2581, %v2785
      %v2792 = vsub.f32 %v2586, %v2785
      %v2793 = vsub.f32 %v2591, %v2785
      %v2794 = vsub.f32 %v2596, %v2785
      %v2795 = vsub.f32 %v2601, %v2785
      %v2796 = vsub.f32 %v2606, %v2785
      %v2797 = vsub.f32 %v2611, %v2785
      %v2798 = vsub.f32 %v2616, %v2785
      %v2799 = vsub.f32 %v2621, %v2785
      %v2800 = vsub.f32 %v2626, %v2785
      %v2801 = vsub.f32 %v2631, %v2785
      %v2802 = vsub.f32 %v2636, %v2785
      %v2803 = vsub.f32 %v2641, %v2785
      %v2804 = vsub.f32 %v2646, %v2785
      %v2805 = vsub.f32 %v2651, %v2785
      %v2806 = vsub.f32 %v2656, %v2785
      %v2807 = vsub.f32 %v2661, %v2785
      %v2808 = vsub.f32 %v2666, %v2785
      %v2809 = vsub.f32 %v2671, %v2785
      %v2810 = vsub.f32 %v2676, %v2785
      %v2811 = vsub.f32 %v2681, %v2785
      %v2812 = vsub.f32 %v2686, %v2785
      %v2813 = vsub.f32 %v2691, %v2785
      %v2814 = vsub.f32 %v2696, %v2785
      %v2815 = vsub.f32 %v2701, %v2785
      %v2816 = vsub.f32 %v2706, %v2785
      %v2817 = vsub.f32 %v2711, %v2785
      %v2818 = vmul.f32 %v2786, %v2786
      %v2819 = vmul.f32 %v2787, %v2787
      %v2820 = vmul.f32 %v2788, %v2788
      %v2821 = vmul.f32 %v2789, %v2789
      %v2822 = vmul.f32 %v2790, %v2790
      %v2823 = vmul.f32 %v2791, %v2791
      %v2824 = vmul.f32 %v2792, %v2792
      %v2825 = vmul.f32 %v2793, %v2793
      %v2826 = vmul.f32 %v2794, %v2794
      %v2827 = vmul.f32 %v2795, %v2795
      %v2828 = vmul.f32 %v2796, %v2796
      %v2829 = vmul.f32 %v2797, %v2797
      %v2830 = vmul.f32 %v2798, %v2798
      %v2831 = vmul.f32 %v2799, %v2799
      %v2832 = vmul.f32 %v2800, %v2800
      %v2833 = vmul.f32 %v2801, %v2801
      %v2834 = vmul.f32 %v2802, %v2802
      %v2835 = vmul.f32 %v2803, %v2803
      %v2836 = vmul.f32 %v2804, %v2804
      %v2837 = vmul.f32 %v2805, %v2805
      %v2838 = vmul.f32 %v2806, %v2806
      %v2839 = vmul.f32 %v2807, %v2807
      %v2840 = vmul.f32 %v2808, %v2808
      %v2841 = vmul.f32 %v2809, %v2809
      %v2842 = vmul.f32 %v2810, %v2810
      %v2843 = vmul.f32 %v2811, %v2811
      %v2844 = vmul.f32 %v2812, %v2812
      %v2845 = vmul.f32 %v2813, %v2813
      %v2846 = vmul.f32 %v2814, %v2814
      %v2847 = vmul.f32 %v2815, %v2815
      %v2848 = vmul.f32 %v2816, %v2816
      %v2849 = vmul.f32 %v2817, %v2817
      %v2850 = vsel %vm2714, %v2818, 0.0
      %v2851 = vsel %vm2714, %v2819, 0.0
      %v2852 = vadd.f32 %v2850, %v2851
      %v2853 = vsel %vm2714, %v2820, 0.0
      %v2854 = vadd.f32 %v2852, %v2853
      %v2855 = vsel %vm2714, %v2821, 0.0
      %v2856 = vadd.f32 %v2854, %v2855
      %v2857 = vsel %vm2714, %v2822, 0.0
      %v2858 = vadd.f32 %v2856, %v2857
      %v2859 = vsel %vm2714, %v2823, 0.0
      %v2860 = vadd.f32 %v2858, %v2859
      %v2861 = vsel %vm2714, %v2824, 0.0
      %v2862 = vadd.f32 %v2860, %v2861
      %v2863 = vsel %vm2714, %v2825, 0.0
      %v2864 = vadd.f32 %v2862, %v2863
      %v2865 = vsel %vm2714, %v2826, 0.0
      %v2866 = vadd.f32 %v2864, %v2865
      %v2867 = vsel %vm2714, %v2827, 0.0
      %v2868 = vadd.f32 %v2866, %v2867
      %v2869 = vsel %vm2714, %v2828, 0.0
      %v2870 = vadd.f32 %v2868, %v2869
      %v2871 = vsel %vm2714, %v2829, 0.0
      %v2872 = vadd.f32 %v2870, %v2871
      %v2873 = vsel %vm2714, %v2830, 0.0
      %v2874 = vadd.f32 %v2872, %v2873
      %v2875 = vsel %vm2714, %v2831, 0.0
      %v2876 = vadd.f32 %v2874, %v2875
      %v2877 = vsel %vm2714, %v2832, 0.0
      %v2878 = vadd.f32 %v2876, %v2877
      %v2879 = vsel %vm2714, %v2833, 0.0
      %v2880 = vadd.f32 %v2878, %v2879
      %v2881 = vsel %vm2714, %v2834, 0.0
      %v2882 = vadd.f32 %v2880, %v2881
      %v2883 = vsel %vm2714, %v2835, 0.0
      %v2884 = vadd.f32 %v2882, %v2883
      %v2885 = vsel %vm2714, %v2836, 0.0
      %v2886 = vadd.f32 %v2884, %v2885
      %v2887 = vsel %vm2714, %v2837, 0.0
      %v2888 = vadd.f32 %v2886, %v2887
      %v2889 = vsel %vm2714, %v2838, 0.0
      %v2890 = vadd.f32 %v2888, %v2889
      %v2891 = vsel %vm2714, %v2839, 0.0
      %v2892 = vadd.f32 %v2890, %v2891
      %v2893 = vsel %vm2714, %v2840, 0.0
      %v2894 = vadd.f32 %v2892, %v2893
      %v2895 = vsel %vm2714, %v2841, 0.0
      %v2896 = vadd.f32 %v2894, %v2895
      %v2897 = vsel %vm2714, %v2842, 0.0
      %v2898 = vadd.f32 %v2896, %v2897
      %v2899 = vsel %vm2714, %v2843, 0.0
      %v2900 = vadd.f32 %v2898, %v2899
      %v2901 = vsel %vm2714, %v2844, 0.0
      %v2902 = vadd.f32 %v2900, %v2901
      %v2903 = vsel %vm2714, %v2845, 0.0
      %v2904 = vadd.f32 %v2902, %v2903
      %v2905 = vsel %vm2714, %v2846, 0.0
      %v2906 = vadd.f32 %v2904, %v2905
      %v2907 = vsel %vm2714, %v2847, 0.0
      %v2908 = vadd.f32 %v2906, %v2907
      %v2909 = vsel %vm2714, %v2848, 0.0
      %v2910 = vadd.f32 %v2908, %v2909
      %v2911 = vsel %vm2714, %v2849, 0.0
      %v2912 = vadd.f32 %v2910, %v2911
      %v2913 = vrot.slane %v2912, 4
      %v2914 = vadd.f32 %v2912, %v2913
      %v2915 = vrot.slane %v2914, 2
      %v2916 = vadd.f32 %v2914, %v2915
      %v2917 = vrot.slane %v2916, 1
      %v2918 = vadd.f32 %v2916, %v2917
      %v2919 = vmul.f32 %v2918, %v2784
      %v2920 = vadd.f32 %v2919, 1e-05
      %v2921 = vrsqrt.pop %v2920
      %v2922 = vmul.f32 %v2786, %v2921
      %v2923 = vmul.f32 %v2787, %v2921
      %v2924 = vmul.f32 %v2788, %v2921
      %v2925 = vmul.f32 %v2789, %v2921
      %v2926 = vmul.f32 %v2790, %v2921
      %v2927 = vmul.f32 %v2791, %v2921
      %v2928 = vmul.f32 %v2792, %v2921
      %v2929 = vmul.f32 %v2793, %v2921
      %v2930 = vmul.f32 %v2794, %v2921
      %v2931 = vmul.f32 %v2795, %v2921
      %v2932 = vmul.f32 %v2796, %v2921
      %v2933 = vmul.f32 %v2797, %v2921
      %v2934 = vmul.f32 %v2798, %v2921
      %v2935 = vmul.f32 %v2799, %v2921
      %v2936 = vmul.f32 %v2800, %v2921
      %v2937 = vmul.f32 %v2801, %v2921
      %v2938 = vmul.f32 %v2802, %v2921
      %v2939 = vmul.f32 %v2803, %v2921
      %v2940 = vmul.f32 %v2804, %v2921
      %v2941 = vmul.f32 %v2805, %v2921
      %v2942 = vmul.f32 %v2806, %v2921
      %v2943 = vmul.f32 %v2807, %v2921
      %v2944 = vmul.f32 %v2808, %v2921
      %v2945 = vmul.f32 %v2809, %v2921
      %v2946 = vmul.f32 %v2810, %v2921
      %v2947 = vmul.f32 %v2811, %v2921
      %v2948 = vmul.f32 %v2812, %v2921
      %v2949 = vmul.f32 %v2813, %v2921
      %v2950 = vmul.f32 %v2814, %v2921
      %v2951 = vmul.f32 %v2815, %v2921
      %v2952 = vmul.f32 %v2816, %v2921
      %v2953 = vmul.f32 %v2817, %v2921
      %vm2954 = vcmp.ge.f32.partialorder %v2922, 0.0
      %vm2955 = vcmp.ge.f32.partialorder %v2923, 0.0
      %vm2956 = vcmp.ge.f32.partialorder %v2924, 0.0
      %vm2957 = vcmp.ge.f32.partialorder %v2925, 0.0
      %vm2958 = vcmp.ge.f32.partialorder %v2926, 0.0
      %vm2959 = vcmp.ge.f32.partialorder %v2927, 0.0
      %vm2960 = vcmp.ge.f32.partialorder %v2928, 0.0
      %vm2961 = vcmp.ge.f32.partialorder %v2929, 0.0
      %vm2962 = vcmp.ge.f32.partialorder %v2930, 0.0
      %vm2963 = vcmp.ge.f32.partialorder %v2931, 0.0
      %vm2964 = vcmp.ge.f32.partialorder %v2932, 0.0
      %vm2965 = vcmp.ge.f32.partialorder %v2933, 0.0
      %vm2966 = vcmp.ge.f32.partialorder %v2934, 0.0
      %vm2967 = vcmp.ge.f32.partialorder %v2935, 0.0
      %vm2968 = vcmp.ge.f32.partialorder %v2936, 0.0
      %vm2969 = vcmp.ge.f32.partialorder %v2937, 0.0
      %vm2970 = vcmp.ge.f32.partialorder %v2938, 0.0
      %vm2971 = vcmp.ge.f32.partialorder %v2939, 0.0
      %vm2972 = vcmp.ge.f32.partialorder %v2940, 0.0
      %vm2973 = vcmp.ge.f32.partialorder %v2941, 0.0
      %vm2974 = vcmp.ge.f32.partialorder %v2942, 0.0
      %vm2975 = vcmp.ge.f32.partialorder %v2943, 0.0
      %vm2976 = vcmp.ge.f32.partialorder %v2944, 0.0
      %vm2977 = vcmp.ge.f32.partialorder %v2945, 0.0
      %vm2978 = vcmp.ge.f32.partialorder %v2946, 0.0
      %vm2979 = vcmp.ge.f32.partialorder %v2947, 0.0
      %vm2980 = vcmp.ge.f32.partialorder %v2948, 0.0
      %vm2981 = vcmp.ge.f32.partialorder %v2949, 0.0
      %vm2982 = vcmp.ge.f32.partialorder %v2950, 0.0
      %vm2983 = vcmp.ge.f32.partialorder %v2951, 0.0
      %vm2984 = vcmp.ge.f32.partialorder %v2952, 0.0
      %vm2985 = vcmp.ge.f32.partialorder %v2953, 0.0
      %v2986 = vmul.f32 %v2922, 0.2
      %v2987 = vmul.f32 %v2923, 0.2
      %v2988 = vmul.f32 %v2924, 0.2
      %v2989 = vmul.f32 %v2925, 0.2
      %v2990 = vmul.f32 %v2926, 0.2
      %v2991 = vmul.f32 %v2927, 0.2
      %v2992 = vmul.f32 %v2928, 0.2
      %v2993 = vmul.f32 %v2929, 0.2
      %v2994 = vmul.f32 %v2930, 0.2
      %v2995 = vmul.f32 %v2931, 0.2
      %v2996 = vmul.f32 %v2932, 0.2
      %v2997 = vmul.f32 %v2933, 0.2
      %v2998 = vmul.f32 %v2934, 0.2
      %v2999 = vmul.f32 %v2935, 0.2
      %v3000 = vmul.f32 %v2936, 0.2
      %v3001 = vmul.f32 %v2937, 0.2
      %v3002 = vmul.f32 %v2938, 0.2
      %v3003 = vmul.f32 %v2939, 0.2
      %v3004 = vmul.f32 %v2940, 0.2
      %v3005 = vmul.f32 %v2941, 0.2
      %v3006 = vmul.f32 %v2942, 0.2
      %v3007 = vmul.f32 %v2943, 0.2
      %v3008 = vmul.f32 %v2944, 0.2
      %v3009 = vmul.f32 %v2945, 0.2
      %v3010 = vmul.f32 %v2946, 0.2
      %v3011 = vmul.f32 %v2947, 0.2
      %v3012 = vmul.f32 %v2948, 0.2
      %v3013 = vmul.f32 %v2949, 0.2
      %v3014 = vmul.f32 %v2950, 0.2
      %v3015 = vmul.f32 %v2951, 0.2
      %v3016 = vmul.f32 %v2952, 0.2
      %v3017 = vmul.f32 %v2953, 0.2
      %v3018 = vsel %vm2954, %v2922, %v2986
      %v3019 = vsel %vm2955, %v2923, %v2987
      %v3020 = vsel %vm2956, %v2924, %v2988
      %v3021 = vsel %vm2957, %v2925, %v2989
      %v3022 = vsel %vm2958, %v2926, %v2990
      %v3023 = vsel %vm2959, %v2927, %v2991
      %v3024 = vsel %vm2960, %v2928, %v2992
      %v3025 = vsel %vm2961, %v2929, %v2993
      %v3026 = vsel %vm2962, %v2930, %v2994
      %v3027 = vsel %vm2963, %v2931, %v2995
      %v3028 = vsel %vm2964, %v2932, %v2996
      %v3029 = vsel %vm2965, %v2933, %v2997
      %v3030 = vsel %vm2966, %v2934, %v2998
      %v3031 = vsel %vm2967, %v2935, %v2999
      %v3032 = vsel %vm2968, %v2936, %v3000
      %v3033 = vsel %vm2969, %v2937, %v3001
      %v3034 = vsel %vm2970, %v2938, %v3002
      %v3035 = vsel %vm2971, %v2939, %v3003
      %v3036 = vsel %vm2972, %v2940, %v3004
      %v3037 = vsel %vm2973, %v2941, %v3005
      %v3038 = vsel %vm2974, %v2942, %v3006
      %v3039 = vsel %vm2975, %v2943, %v3007
      %v3040 = vsel %vm2976, %v2944, %v3008
      %v3041 = vsel %vm2977, %v2945, %v3009
      %v3042 = vsel %vm2978, %v2946, %v3010
      %v3043 = vsel %vm2979, %v2947, %v3011
      %v3044 = vsel %vm2980, %v2948, %v3012
      %v3045 = vsel %vm2981, %v2949, %v3013
      %v3046 = vsel %vm2982, %v2950, %v3014
      %v3047 = vsel %vm2983, %v2951, %v3015
      %v3048 = vsel %vm2984, %v2952, %v3016
      %v3049 = vsel %vm2985, %v2953, %v3017
      %3050 = vst.msk [vmem:[#allocation3] sm:$0xff] %vm2714, 0.0
      %3051 = vst.msk [vmem:[#allocation3 + $0x8] sm:$0xff] %vm2714, 0.0
      %vm3052 = vcmask 58368
      %3053 = vst.msk [vmem:[#allocation3 + $0x10] sm:$0x3] %vm3052, 0.0
      %3054 = vst.msk [vmem:[#allocation3 + $0x18] sm:$0xff] %vm2714, 0.0
      %3055 = vst.msk [vmem:[#allocation3 + $0x20] sm:$0xff] %vm2714, 0.0
      %3056 = vst.msk [vmem:[#allocation3 + $0x28] sm:$0x3] %vm3052, 0.0
      %3057 = vst.msk [vmem:[#allocation3 + $0x30] sm:$0xff] %vm2714, 0.0
      %3058 = vst.msk [vmem:[#allocation3 + $0x38] sm:$0xff] %vm2714, 0.0
      %3059 = vst.msk [vmem:[#allocation3 + $0x40] sm:$0x3] %vm3052, 0.0
      %3060 = vst.msk [vmem:[#allocation3 + $0x48] sm:$0xff] %vm2714, 0.0
      %3061 = vst.msk [vmem:[#allocation3 + $0x50] sm:$0xff] %vm2714, 0.0
      %3062 = vst.msk [vmem:[#allocation3 + $0x58] sm:$0x3] %vm3052, 0.0
      %3063 = vst.msk [vmem:[#allocation3 + $0x60] sm:$0xff] %vm2714, 0.0
      %3064 = vst.msk [vmem:[#allocation3 + $0x68] sm:$0xff] %vm2714, 0.0
      %3065 = vst.msk [vmem:[#allocation3 + $0x70] sm:$0x3] %vm3052, 0.0
      %3066 = vst.msk [vmem:[#allocation3 + $0x78] sm:$0xff] %vm2714, 0.0
      %3067 = vst.msk [vmem:[#allocation3 + $0x80] sm:$0xff] %vm2714, 0.0
      %3068 = vst.msk [vmem:[#allocation3 + $0x88] sm:$0x3] %vm3052, 0.0
      %3069 = vst.msk [vmem:[#allocation3 + $0x90] sm:$0xff] %vm2714, 0.0
      %3070 = vst.msk [vmem:[#allocation3 + $0x98] sm:$0xff] %vm2714, 0.0
      %3071 = vst.msk [vmem:[#allocation3 + $0xa0] sm:$0x3] %vm3052, 0.0
      %3072 = vst.msk [vmem:[#allocation3 + $0xa8] sm:$0xff] %vm2714, 0.0
      %3073 = vst.msk [vmem:[#allocation3 + $0xb0] sm:$0xff] %vm2714, 0.0
      %3074 = vst.msk [vmem:[#allocation3 + $0xb8] sm:$0x3] %vm3052, 0.0
      %3075 = vst.msk [vmem:[#allocation3 + $0xc0] sm:$0xff] %vm2714, 0.0
      %3076 = vst.msk [vmem:[#allocation3 + $0xc8] sm:$0xff] %vm2714, 0.0
      %3077 = vst.msk [vmem:[#allocation3 + $0xd0] sm:$0x3] %vm3052, 0.0
      %3078 = vst.msk [vmem:[#allocation3 + $0xd8] sm:$0xff] %vm2714, 0.0
      %3079 = vst.msk [vmem:[#allocation3 + $0xe0] sm:$0xff] %vm2714, 0.0
      %3080 = vst.msk [vmem:[#allocation3 + $0xe8] sm:$0x3] %vm3052, 0.0
      %3081 = vst.msk [vmem:[#allocation3 + $0xf0] sm:$0xff] %vm2714, 0.0
      %3082 = vst.msk [vmem:[#allocation3 + $0xf8] sm:$0xff] %vm2714, 0.0
      %3083 = vst.msk [vmem:[#allocation3 + $0x100] sm:$0x3] %vm3052, 0.0
      %3084 = vst.msk [vmem:[#allocation3 + $0x108] sm:$0xff] %vm2714, 0.0
      %3085 = vst.msk [vmem:[#allocation3 + $0x110] sm:$0xff] %vm2714, 0.0
      %3086 = vst.msk [vmem:[#allocation3 + $0x118] sm:$0x3] %vm3052, 0.0
      %3087 = vst.msk [vmem:[#allocation3 + $0x120] sm:$0xff] %vm2714, 0.0
      %3088 = vst.msk [vmem:[#allocation3 + $0x128] sm:$0xff] %vm2714, 0.0
      %3089 = vst.msk [vmem:[#allocation3 + $0x130] sm:$0x3] %vm3052, 0.0
      %3090 = vst.msk [vmem:[#allocation3 + $0x138] sm:$0xff] %vm2714, 0.0
      %3091 = vst.msk [vmem:[#allocation3 + $0x140] sm:$0xff] %vm2714, 0.0
      %3092 = vst.msk [vmem:[#allocation3 + $0x148] sm:$0x3] %vm3052, 0.0
      %3093 = vst.msk [vmem:[#allocation3 + $0x150] sm:$0xff] %vm2714, 0.0
      %3094 = vst.msk [vmem:[#allocation3 + $0x158] sm:$0xff] %vm2714, 0.0
      %3095 = vst.msk [vmem:[#allocation3 + $0x160] sm:$0x3] %vm3052, 0.0
      %3096 = vst.msk [vmem:[#allocation3 + $0x168] sm:$0xff] %vm2714, 0.0
      %3097 = vst.msk [vmem:[#allocation3 + $0x170] sm:$0xff] %vm2714, 0.0
      %3098 = vst.msk [vmem:[#allocation3 + $0x178] sm:$0x3] %vm3052, 0.0
      %3099 = vst.msk [vmem:[#allocation3 + $0x180] sm:$0xff] %vm2714, 0.0
      %3100 = vst.msk [vmem:[#allocation3 + $0x188] sm:$0xff] %vm2714, 0.0
      %3101 = vst.msk [vmem:[#allocation3 + $0x190] sm:$0x3] %vm3052, 0.0
      %3102 = vst.msk [vmem:[#allocation3 + $0x198] sm:$0xff] %vm2714, 0.0
      %3103 = vst.msk [vmem:[#allocation3 + $0x1a0] sm:$0xff] %vm2714, 0.0
      %3104 = vst.msk [vmem:[#allocation3 + $0x1a8] sm:$0x3] %vm3052, 0.0
      %s3105 = scalar_lea.vmem [#allocation3], 24
      %3106 = vst.msk [vmem:[%s3105 + $0x1] sm:$0xff] %vm2714, %v3018
      %3107 = vst.msk [vmem:[%s3105 + $0x9] sm:$0xff] %vm2714, %v3019
      %3108 = vst.msk [vmem:[%s3105 + $0x19] sm:$0xff] %vm2714, %v3020
      %3109 = vst.msk [vmem:[%s3105 + $0x21] sm:$0xff] %vm2714, %v3021
      %3110 = vst.msk [vmem:[%s3105 + $0x31] sm:$0xff] %vm2714, %v3022
      %3111 = vst.msk [vmem:[%s3105 + $0x39] sm:$0xff] %vm2714, %v3023
      %3112 = vst.msk [vmem:[%s3105 + $0x49] sm:$0xff] %vm2714, %v3024
      %3113 = vst.msk [vmem:[%s3105 + $0x51] sm:$0xff] %vm2714, %v3025
      %3114 = vst.msk [vmem:[%s3105 + $0x61] sm:$0xff] %vm2714, %v3026
      %3115 = vst.msk [vmem:[%s3105 + $0x69] sm:$0xff] %vm2714, %v3027
      %3116 = vst.msk [vmem:[%s3105 + $0x79] sm:$0xff] %vm2714, %v3028
      %3117 = vst.msk [vmem:[%s3105 + $0x81] sm:$0xff] %vm2714, %v3029
      %3118 = vst.msk [vmem:[%s3105 + $0x91] sm:$0xff] %vm2714, %v3030
      %3119 = vst.msk [vmem:[%s3105 + $0x99] sm:$0xff] %vm2714, %v3031
      %3120 = vst.msk [vmem:[%s3105 + $0xa9] sm:$0xff] %vm2714, %v3032
      %3121 = vst.msk [vmem:[%s3105 + $0xb1] sm:$0xff] %vm2714, %v3033
      %3122 = vst.msk [vmem:[%s3105 + $0xc1] sm:$0xff] %vm2714, %v3034
      %3123 = vst.msk [vmem:[%s3105 + $0xc9] sm:$0xff] %vm2714, %v3035
      %3124 = vst.msk [vmem:[%s3105 + $0xd9] sm:$0xff] %vm2714, %v3036
      %3125 = vst.msk [vmem:[%s3105 + $0xe1] sm:$0xff] %vm2714, %v3037
      %3126 = vst.msk [vmem:[%s3105 + $0xf1] sm:$0xff] %vm2714, %v3038
      %3127 = vst.msk [vmem:[%s3105 + $0xf9] sm:$0xff] %vm2714, %v3039
      %3128 = vst.msk [vmem:[%s3105 + $0x109] sm:$0xff] %vm2714, %v3040
      %3129 = vst.msk [vmem:[%s3105 + $0x111] sm:$0xff] %vm2714, %v3041
      %3130 = vst.msk [vmem:[%s3105 + $0x121] sm:$0xff] %vm2714, %v3042
      %3131 = vst.msk [vmem:[%s3105 + $0x129] sm:$0xff] %vm2714, %v3043
      %3132 = vst.msk [vmem:[%s3105 + $0x139] sm:$0xff] %vm2714, %v3044
      %3133 = vst.msk [vmem:[%s3105 + $0x141] sm:$0xff] %vm2714, %v3045
      %3134 = vst.msk [vmem:[%s3105 + $0x151] sm:$0xff] %vm2714, %v3046
      %3135 = vst.msk [vmem:[%s3105 + $0x159] sm:$0xff] %vm2714, %v3047
      %3136 = vst.msk [vmem:[%s3105 + $0x169] sm:$0xff] %vm2714, %v3048
      %3137 = vst.msk [vmem:[%s3105 + $0x171] sm:$0xff] %vm2714, %v3049
      %3138 = vst [vmem:[#allocation5] sm:$0xff] 0.0
      %3139 = vst [vmem:[#allocation5 + $0x8] sm:$0xff] 0.0
      %3140 = vst [vmem:[#allocation5 + $0x10] sm:$0xff] 0.0
      %3141 = vst [vmem:[#allocation5 + $0x18] sm:$0xff] 0.0
      %3142 = vst [vmem:[#allocation5 + $0x20] sm:$0xff] 0.0
      %3143 = vst [vmem:[#allocation5 + $0x28] sm:$0xff] 0.0
      %3144 = vst [vmem:[#allocation5 + $0x30] sm:$0xff] 0.0
      %3145 = vst [vmem:[#allocation5 + $0x38] sm:$0xff] 0.0
      %3146 = vst [vmem:[#allocation5 + $0x40] sm:$0xff] 0.0
      %3147 = vst [vmem:[#allocation5 + $0x48] sm:$0xff] 0.0
      %3148 = vst [vmem:[#allocation5 + $0x50] sm:$0xff] 0.0
      %3149 = vst [vmem:[#allocation5 + $0x58] sm:$0xff] 0.0
      %3150 = vst [vmem:[#allocation5 + $0x60] sm:$0xff] 0.0
      %3151 = vst [vmem:[#allocation5 + $0x68] sm:$0xff] 0.0
      %3152 = vst [vmem:[#allocation5 + $0x70] sm:$0xff] 0.0
      %3153 = vst [vmem:[#allocation5 + $0x78] sm:$0xff] 0.0
      %3154 = vst [vmem:[#allocation5 + $0x80] sm:$0xff] 0.0
      %3155 = vst [vmem:[#allocation5 + $0x88] sm:$0xff] 0.0
      %3156 = vst [vmem:[#allocation5 + $0x90] sm:$0xff] 0.0
      %3157 = vst [vmem:[#allocation5 + $0x98] sm:$0xff] 0.0
      %3158 = vst [vmem:[#allocation5 + $0xa0] sm:$0xff] 0.0
      %3159 = vst [vmem:[#allocation5 + $0xa8] sm:$0xff] 0.0
      %3160 = vst [vmem:[#allocation5 + $0xb0] sm:$0xff] 0.0
      %3161 = vst [vmem:[#allocation5 + $0xb8] sm:$0xff] 0.0
      %3162 = vst [vmem:[#allocation5 + $0xc0] sm:$0xff] 0.0
      %3163 = vst [vmem:[#allocation5 + $0xc8] sm:$0xff] 0.0
      %3164 = vst [vmem:[#allocation5 + $0xd0] sm:$0xff] 0.0
      %3165 = vst [vmem:[#allocation5 + $0xd8] sm:$0xff] 0.0
      %3166 = vst [vmem:[#allocation5 + $0xe0] sm:$0xff] 0.0
      %3167 = vst [vmem:[#allocation5 + $0xe8] sm:$0xff] 0.0
      %3168 = vst [vmem:[#allocation5 + $0xf0] sm:$0xff] 0.0
      %3169 = vst [vmem:[#allocation5 + $0xf8] sm:$0xff] 0.0
      %3170 = vst [vmem:[#allocation5 + $0x100] sm:$0xff] 0.0
      %3171 = vst [vmem:[#allocation5 + $0x108] sm:$0xff] 0.0
      %3172 = vst [vmem:[#allocation5 + $0x110] sm:$0xff] 0.0
      %3173 = vst [vmem:[#allocation5 + $0x118] sm:$0xff] 0.0
      %3174 = vst [vmem:[#allocation5 + $0x120] sm:$0xff] 0.0
      %3175 = vst [vmem:[#allocation5 + $0x128] sm:$0xff] 0.0
      %3176 = vst [vmem:[#allocation5 + $0x130] sm:$0xff] 0.0
      %3177 = vst [vmem:[#allocation5 + $0x138] sm:$0xff] 0.0
      %3178 = vst [vmem:[#allocation5 + $0x140] sm:$0xff] 0.0
      %3179 = vst [vmem:[#allocation5 + $0x148] sm:$0xff] 0.0
      %3180 = vst [vmem:[#allocation5 + $0x150] sm:$0xff] 0.0
      %3181 = vst [vmem:[#allocation5 + $0x158] sm:$0xff] 0.0
      %3182 = vst [vmem:[#allocation5 + $0x160] sm:$0xff] 0.0
      %3183 = vst [vmem:[#allocation5 + $0x168] sm:$0xff] 0.0
      %3184 = vst [vmem:[#allocation5 + $0x170] sm:$0xff] 0.0
      %3185 = vst [vmem:[#allocation5 + $0x178] sm:$0xff] 0.0
      %3186 = vst [vmem:[#allocation5 + $0x180] sm:$0xff] 0.0
      %3187 = vst [vmem:[#allocation5 + $0x188] sm:$0xff] 0.0
      %3188 = vst [vmem:[#allocation5 + $0x190] sm:$0xff] 0.0
      %3189 = vst [vmem:[#allocation5 + $0x198] sm:$0xff] 0.0
      %3190 = vst [vmem:[#allocation5 + $0x1a0] sm:$0xff] 0.0
      %3191 = vst [vmem:[#allocation5 + $0x1a8] sm:$0xff] 0.0
      %3192 = vst [vmem:[#allocation5 + $0x1b0] sm:$0xff] 0.0
      %3193 = vst [vmem:[#allocation5 + $0x1b8] sm:$0xff] 0.0
      %3194 = vst [vmem:[#allocation5 + $0x1c0] sm:$0xff] 0.0
      %3195 = vst [vmem:[#allocation5 + $0x1c8] sm:$0xff] 0.0
      %3196 = vst [vmem:[#allocation5 + $0x1d0] sm:$0xff] 0.0
      %3197 = vst [vmem:[#allocation5 + $0x1d8] sm:$0xff] 0.0
      %3198 = vst [vmem:[#allocation5 + $0x1e0] sm:$0xff] 0.0
      %3199 = vst [vmem:[#allocation5 + $0x1e8] sm:$0xff] 0.0
      %3200 = vst [vmem:[#allocation5 + $0x1f0] sm:$0xff] 0.0
      %3201 = vst [vmem:[#allocation5 + $0x1f8] sm:$0xff] 0.0
      %3202 = vst [vmem:[#allocation5 + $0x200] sm:$0xff] 0.0
      %3203 = vst [vmem:[#allocation5 + $0x208] sm:$0xff] 0.0
      %3204 = vst [vmem:[#allocation5 + $0x210] sm:$0xff] 0.0
      %3205 = vst [vmem:[#allocation5 + $0x218] sm:$0xff] 0.0
      %3206 = vst [vmem:[#allocation5 + $0x220] sm:$0xff] 0.0
      %3207 = vst [vmem:[#allocation5 + $0x228] sm:$0xff] 0.0
      %3208 = vst [vmem:[#allocation5 + $0x230] sm:$0xff] 0.0
      %3209 = vst [vmem:[#allocation5 + $0x238] sm:$0xff] 0.0
      %3210 = vst [vmem:[#allocation5 + $0x240] sm:$0xff] 0.0
      %3211 = vst [vmem:[#allocation5 + $0x248] sm:$0xff] 0.0
      %3212 = vst [vmem:[#allocation5 + $0x250] sm:$0xff] 0.0
      %3213 = vst [vmem:[#allocation5 + $0x258] sm:$0xff] 0.0
      %3214 = vst [vmem:[#allocation5 + $0x260] sm:$0xff] 0.0
      %3215 = vst [vmem:[#allocation5 + $0x268] sm:$0xff] 0.0
      %3216 = vst [vmem:[#allocation5 + $0x270] sm:$0xff] 0.0
      %3217 = vst [vmem:[#allocation5 + $0x278] sm:$0xff] 0.0
      %3218 = vst [vmem:[#allocation5 + $0x280] sm:$0xff] 0.0
      %3219 = vst [vmem:[#allocation5 + $0x288] sm:$0xff] 0.0
      %3220 = vst [vmem:[#allocation5 + $0x290] sm:$0xff] 0.0
      %3221 = vst [vmem:[#allocation5 + $0x298] sm:$0xff] 0.0
      %3222 = vst [vmem:[#allocation5 + $0x2a0] sm:$0xff] 0.0
      %3223 = vst [vmem:[#allocation5 + $0x2a8] sm:$0xff] 0.0
      %3224 = vst [vmem:[#allocation5 + $0x2b0] sm:$0xff] 0.0
      %3225 = vst [vmem:[#allocation5 + $0x2b8] sm:$0xff] 0.0
      %3226 = vst [vmem:[#allocation5 + $0x2c0] sm:$0xff] 0.0
      %3227 = vst [vmem:[#allocation5 + $0x2c8] sm:$0xff] 0.0
      %3228 = vst [vmem:[#allocation5 + $0x2d0] sm:$0xff] 0.0
      %3229 = vst [vmem:[#allocation5 + $0x2d8] sm:$0xff] 0.0
      %3230 = vst [vmem:[#allocation5 + $0x2e0] sm:$0xff] 0.0
      %3231 = vst [vmem:[#allocation5 + $0x2e8] sm:$0xff] 0.0
      %3232 = vst [vmem:[#allocation5 + $0x2f0] sm:$0xff] 0.0
      %3233 = vst [vmem:[#allocation5 + $0x2f8] sm:$0xff] 0.0
      %3234 = vst [vmem:[#allocation5 + $0x300] sm:$0xff] 0.0
      %3235 = vst [vmem:[#allocation5 + $0x308] sm:$0xff] 0.0
      %3236 = vst [vmem:[#allocation5 + $0x310] sm:$0xff] 0.0
      %3237 = vst [vmem:[#allocation5 + $0x318] sm:$0xff] 0.0
      %3238 = vst [vmem:[#allocation5 + $0x320] sm:$0xff] 0.0
      %3239 = vst [vmem:[#allocation5 + $0x328] sm:$0xff] 0.0
      %3240 = vst [vmem:[#allocation5 + $0x330] sm:$0xff] 0.0
      %3241 = vst [vmem:[#allocation5 + $0x338] sm:$0xff] 0.0
      %3242 = vst [vmem:[#allocation5 + $0x340] sm:$0xff] 0.0
      %3243 = vst [vmem:[#allocation5 + $0x348] sm:$0xff] 0.0
      %3244 = vst [vmem:[#allocation5 + $0x350] sm:$0xff] 0.0
      %3245 = vst [vmem:[#allocation5 + $0x358] sm:$0xff] 0.0
      %3246 = vst [vmem:[#allocation5 + $0x360] sm:$0xff] 0.0
      %3247 = vst [vmem:[#allocation5 + $0x368] sm:$0xff] 0.0
      %3248 = vst [vmem:[#allocation5 + $0x370] sm:$0xff] 0.0
      %3249 = vst [vmem:[#allocation5 + $0x378] sm:$0xff] 0.0
      %3250 = vst [vmem:[#allocation5 + $0x380] sm:$0xff] 0.0
      %3251 = vst [vmem:[#allocation5 + $0x388] sm:$0xff] 0.0
      %3252 = vst [vmem:[#allocation5 + $0x390] sm:$0xff] 0.0
      %3253 = vst [vmem:[#allocation5 + $0x398] sm:$0xff] 0.0
      %3254 = vst [vmem:[#allocation5 + $0x3a0] sm:$0xff] 0.0
      %3255 = vst [vmem:[#allocation5 + $0x3a8] sm:$0xff] 0.0
      %3256 = vst [vmem:[#allocation5 + $0x3b0] sm:$0xff] 0.0
      %3257 = vst [vmem:[#allocation5 + $0x3b8] sm:$0xff] 0.0
      %3258 = vst [vmem:[#allocation5 + $0x3c0] sm:$0xff] 0.0
      %3259 = vst [vmem:[#allocation5 + $0x3c8] sm:$0xff] 0.0
      %3260 = vst [vmem:[#allocation5 + $0x3d0] sm:$0xff] 0.0
      %3261 = vst [vmem:[#allocation5 + $0x3d8] sm:$0xff] 0.0
      %3262 = vst [vmem:[#allocation5 + $0x3e0] sm:$0xff] 0.0
      %3263 = vst [vmem:[#allocation5 + $0x3e8] sm:$0xff] 0.0
      %3264 = vst [vmem:[#allocation5 + $0x3f0] sm:$0xff] 0.0
      %3265 = vst [vmem:[#allocation5 + $0x3f8] sm:$0xff] 0.0
      %3266 = vst [vmem:[#allocation5 + $0x400] sm:$0xff] 0.0
      %3267 = vst [vmem:[#allocation5 + $0x408] sm:$0xff] 0.0
      %3268 = vst [vmem:[#allocation5 + $0x410] sm:$0xff] 0.0
      %3269 = vst [vmem:[#allocation5 + $0x418] sm:$0xff] 0.0
      %3270 = vst [vmem:[#allocation5 + $0x420] sm:$0xff] 0.0
      %3271 = vst [vmem:[#allocation5 + $0x428] sm:$0xff] 0.0
      %3272 = vst [vmem:[#allocation5 + $0x430] sm:$0xff] 0.0
      %3273 = vst [vmem:[#allocation5 + $0x438] sm:$0xff] 0.0
      %3274 = vst [vmem:[#allocation5 + $0x440] sm:$0xff] 0.0
      %3275 = vst [vmem:[#allocation5 + $0x448] sm:$0xff] 0.0
      %3276 = vst [vmem:[#allocation5 + $0x450] sm:$0xff] 0.0
      %3277 = vst [vmem:[#allocation5 + $0x458] sm:$0xff] 0.0
      %3278 = vst [vmem:[#allocation5 + $0x460] sm:$0xff] 0.0
      %3279 = vst [vmem:[#allocation5 + $0x468] sm:$0xff] 0.0
      %3280 = vst [vmem:[#allocation5 + $0x470] sm:$0xff] 0.0
      %3281 = vst [vmem:[#allocation5 + $0x478] sm:$0xff] 0.0
      %3282 = vst [vmem:[#allocation5 + $0x480] sm:$0xff] 0.0
      %3283 = vst [vmem:[#allocation5 + $0x488] sm:$0xff] 0.0
      %3284 = vst [vmem:[#allocation5 + $0x490] sm:$0xff] 0.0
      %3285 = vst [vmem:[#allocation5 + $0x498] sm:$0xff] 0.0
      %3286 = vst [vmem:[#allocation5 + $0x4a0] sm:$0xff] 0.0
      %3287 = vst [vmem:[#allocation5 + $0x4a8] sm:$0xff] 0.0
      %3288 = vst [vmem:[#allocation5 + $0x4b0] sm:$0xff] 0.0
      %3289 = vst [vmem:[#allocation5 + $0x4b8] sm:$0xff] 0.0
      %3290 = vst [vmem:[#allocation5 + $0x4c0] sm:$0xff] 0.0
      %3291 = vst [vmem:[#allocation5 + $0x4c8] sm:$0xff] 0.0
      %3292 = vst [vmem:[#allocation5 + $0x4d0] sm:$0xff] 0.0
      %3293 = vst [vmem:[#allocation5 + $0x4d8] sm:$0xff] 0.0
      %3294 = vst [vmem:[#allocation5 + $0x4e0] sm:$0xff] 0.0
      %3295 = vst [vmem:[#allocation5 + $0x4e8] sm:$0xff] 0.0
      %3296 = vst [vmem:[#allocation5 + $0x4f0] sm:$0xff] 0.0
      %3297 = vst [vmem:[#allocation5 + $0x4f8] sm:$0xff] 0.0
      %3298 = vst [vmem:[#allocation5 + $0x500] sm:$0xff] 0.0
      %3299 = vst [vmem:[#allocation5 + $0x508] sm:$0xff] 0.0
      %3300 = vst [vmem:[#allocation5 + $0x510] sm:$0xff] 0.0
      %3301 = vst [vmem:[#allocation5 + $0x518] sm:$0xff] 0.0
      %3302 = vst [vmem:[#allocation5 + $0x520] sm:$0xff] 0.0
      %3303 = vst [vmem:[#allocation5 + $0x528] sm:$0xff] 0.0
      %3304 = vst [vmem:[#allocation5 + $0x530] sm:$0xff] 0.0
      %3305 = vst [vmem:[#allocation5 + $0x538] sm:$0xff] 0.0
      %3306 = vst [vmem:[#allocation5 + $0x540] sm:$0xff] 0.0
      %3307 = vst [vmem:[#allocation5 + $0x548] sm:$0xff] 0.0
      %3308 = vst [vmem:[#allocation5 + $0x550] sm:$0xff] 0.0
      %3309 = vst [vmem:[#allocation5 + $0x558] sm:$0xff] 0.0
      %3310 = vst [vmem:[#allocation5 + $0x560] sm:$0xff] 0.0
      %3311 = vst [vmem:[#allocation5 + $0x568] sm:$0xff] 0.0
      %3312 = vst [vmem:[#allocation5 + $0x570] sm:$0xff] 0.0
      %3313 = vst [vmem:[#allocation5 + $0x578] sm:$0xff] 0.0
      %3314 = vst [vmem:[#allocation5 + $0x580] sm:$0xff] 0.0
      %3315 = vst [vmem:[#allocation5 + $0x588] sm:$0xff] 0.0
      %3316 = vst [vmem:[#allocation5 + $0x590] sm:$0xff] 0.0
      %3317 = vst [vmem:[#allocation5 + $0x598] sm:$0xff] 0.0
      %3318 = vst [vmem:[#allocation5 + $0x5a0] sm:$0xff] 0.0
      %3319 = vst [vmem:[#allocation5 + $0x5a8] sm:$0xff] 0.0
      %3320 = vst [vmem:[#allocation5 + $0x5b0] sm:$0xff] 0.0
      %3321 = vst [vmem:[#allocation5 + $0x5b8] sm:$0xff] 0.0
      %3322 = vst [vmem:[#allocation5 + $0x5c0] sm:$0xff] 0.0
      %3323 = vst [vmem:[#allocation5 + $0x5c8] sm:$0xff] 0.0
      %3324 = vst [vmem:[#allocation5 + $0x5d0] sm:$0xff] 0.0
      %3325 = vst [vmem:[#allocation5 + $0x5d8] sm:$0xff] 0.0
      %3326 = vst [vmem:[#allocation5 + $0x5e0] sm:$0xff] 0.0
      %3327 = vst [vmem:[#allocation5 + $0x5e8] sm:$0xff] 0.0
      %3328 = vst [vmem:[#allocation5 + $0x5f0] sm:$0xff] 0.0
      %3329 = vst [vmem:[#allocation5 + $0x5f8] sm:$0xff] 0.0
      %3330 = vst [vmem:[#allocation5 + $0x600] sm:$0xff] 0.0
      %3331 = vst [vmem:[#allocation5 + $0x608] sm:$0xff] 0.0
      %3332 = vst [vmem:[#allocation5 + $0x610] sm:$0xff] 0.0
      %3333 = vst [vmem:[#allocation5 + $0x618] sm:$0xff] 0.0
      %3334 = vst [vmem:[#allocation5 + $0x620] sm:$0xff] 0.0
      %3335 = vst [vmem:[#allocation5 + $0x628] sm:$0xff] 0.0
      %3336 = vst [vmem:[#allocation5 + $0x630] sm:$0xff] 0.0
      %3337 = vst [vmem:[#allocation5 + $0x638] sm:$0xff] 0.0
      %3338 = vst [vmem:[#allocation5 + $0x640] sm:$0xff] 0.0
      %3339 = vst [vmem:[#allocation5 + $0x648] sm:$0xff] 0.0
      %3340 = vst [vmem:[#allocation5 + $0x650] sm:$0xff] 0.0
      %3341 = vst [vmem:[#allocation5 + $0x658] sm:$0xff] 0.0
      %3342 = vst [vmem:[#allocation5 + $0x660] sm:$0xff] 0.0
      %3343 = vst [vmem:[#allocation5 + $0x668] sm:$0xff] 0.0
      %3344 = vst [vmem:[#allocation5 + $0x670] sm:$0xff] 0.0
      %3345 = vst [vmem:[#allocation5 + $0x678] sm:$0xff] 0.0
      %3346 = vst [vmem:[#allocation5 + $0x680] sm:$0xff] 0.0
      %3347 = vst [vmem:[#allocation5 + $0x688] sm:$0xff] 0.0
      %3348 = vst [vmem:[#allocation5 + $0x690] sm:$0xff] 0.0
      %3349 = vst [vmem:[#allocation5 + $0x698] sm:$0xff] 0.0
      %3350 = vst [vmem:[#allocation5 + $0x6a0] sm:$0xff] 0.0
      %3351 = vst [vmem:[#allocation5 + $0x6a8] sm:$0xff] 0.0
      %3352 = vst [vmem:[#allocation5 + $0x6b0] sm:$0xff] 0.0
      %3353 = vst [vmem:[#allocation5 + $0x6b8] sm:$0xff] 0.0
      %3354 = vst [vmem:[#allocation5 + $0x6c0] sm:$0xff] 0.0
      %3355 = vst [vmem:[#allocation5 + $0x6c8] sm:$0xff] 0.0
      %3356 = vst [vmem:[#allocation5 + $0x6d0] sm:$0xff] 0.0
      %3357 = vst [vmem:[#allocation5 + $0x6d8] sm:$0xff] 0.0
      %3358 = vst [vmem:[#allocation5 + $0x6e0] sm:$0xff] 0.0
      %3359 = vst [vmem:[#allocation5 + $0x6e8] sm:$0xff] 0.0
      %3360 = vst [vmem:[#allocation5 + $0x6f0] sm:$0xff] 0.0
      %3361 = vst [vmem:[#allocation5 + $0x6f8] sm:$0xff] 0.0
      %3362 = vst [vmem:[#allocation5 + $0x700] sm:$0xff] 0.0
      %3363 = vst [vmem:[#allocation5 + $0x708] sm:$0xff] 0.0
      %3364 = vst [vmem:[#allocation5 + $0x710] sm:$0xff] 0.0
      %3365 = vst [vmem:[#allocation5 + $0x718] sm:$0xff] 0.0
      %3366 = vst [vmem:[#allocation5 + $0x720] sm:$0xff] 0.0
      %3367 = vst [vmem:[#allocation5 + $0x728] sm:$0xff] 0.0
      %3368 = vst [vmem:[#allocation5 + $0x730] sm:$0xff] 0.0
      %3369 = vst [vmem:[#allocation5 + $0x738] sm:$0xff] 0.0
      %3370 = vst [vmem:[#allocation5 + $0x740] sm:$0xff] 0.0
      %3371 = vst [vmem:[#allocation5 + $0x748] sm:$0xff] 0.0
      %3372 = vst [vmem:[#allocation5 + $0x750] sm:$0xff] 0.0
      %3373 = vst [vmem:[#allocation5 + $0x758] sm:$0xff] 0.0
      %3374 = vst [vmem:[#allocation5 + $0x760] sm:$0xff] 0.0
      %3375 = vst [vmem:[#allocation5 + $0x768] sm:$0xff] 0.0
      %3376 = vst [vmem:[#allocation5 + $0x770] sm:$0xff] 0.0
      %3377 = vst [vmem:[#allocation5 + $0x778] sm:$0xff] 0.0
      %3378 = vst [vmem:[#allocation5 + $0x780] sm:$0xff] 0.0
      %3379 = vst [vmem:[#allocation5 + $0x788] sm:$0xff] 0.0
      %3380 = vst [vmem:[#allocation5 + $0x790] sm:$0xff] 0.0
      %3381 = vst [vmem:[#allocation5 + $0x798] sm:$0xff] 0.0
      %3382 = vst [vmem:[#allocation5 + $0x7a0] sm:$0xff] 0.0
      %3383 = vst [vmem:[#allocation5 + $0x7a8] sm:$0xff] 0.0
      %3384 = vst [vmem:[#allocation5 + $0x7b0] sm:$0xff] 0.0
      %3385 = vst [vmem:[#allocation5 + $0x7b8] sm:$0xff] 0.0
      %3386 = vst [vmem:[#allocation5 + $0x7c0] sm:$0xff] 0.0
      %3387 = vst [vmem:[#allocation5 + $0x7c8] sm:$0xff] 0.0
      %3388 = vst [vmem:[#allocation5 + $0x7d0] sm:$0xff] 0.0
      %3389 = vst [vmem:[#allocation5 + $0x7d8] sm:$0xff] 0.0
      %3390 = vst [vmem:[#allocation5 + $0x7e0] sm:$0xff] 0.0
      %3391 = vst [vmem:[#allocation5 + $0x7e8] sm:$0xff] 0.0
      %3392 = vst [vmem:[#allocation5 + $0x7f0] sm:$0xff] 0.0
      %3393 = vst [vmem:[#allocation5 + $0x7f8] sm:$0xff] 0.0
      %3394 = vst [vmem:[#allocation5 + $0x800] sm:$0xff] 0.0
      %3395 = vst [vmem:[#allocation5 + $0x808] sm:$0xff] 0.0
      %3396 = vst [vmem:[#allocation5 + $0x810] sm:$0xff] 0.0
      %3397 = vst [vmem:[#allocation5 + $0x818] sm:$0xff] 0.0
      %3398 = vst [vmem:[#allocation5 + $0x820] sm:$0xff] 0.0
      %3399 = vst [vmem:[#allocation5 + $0x828] sm:$0xff] 0.0
      %3400 = vst [vmem:[#allocation5 + $0x830] sm:$0xff] 0.0
      %3401 = vst [vmem:[#allocation5 + $0x838] sm:$0xff] 0.0
      %3402 = vst [vmem:[#allocation5 + $0x840] sm:$0xff] 0.0
      %3403 = vst [vmem:[#allocation5 + $0x848] sm:$0xff] 0.0
      %3404 = vst [vmem:[#allocation5 + $0x850] sm:$0xff] 0.0
      %3405 = vst [vmem:[#allocation5 + $0x858] sm:$0xff] 0.0
      %3406 = vst [vmem:[#allocation5 + $0x860] sm:$0xff] 0.0
      %3407 = vst [vmem:[#allocation5 + $0x868] sm:$0xff] 0.0
      %3408 = vst [vmem:[#allocation5 + $0x870] sm:$0xff] 0.0
      %3409 = vst [vmem:[#allocation5 + $0x878] sm:$0xff] 0.0
      %3410 = vst [vmem:[#allocation5 + $0x880] sm:$0xff] 0.0
      %3411 = vst [vmem:[#allocation5 + $0x888] sm:$0xff] 0.0
      %3412 = vst [vmem:[#allocation5 + $0x890] sm:$0xff] 0.0
      %3413 = vst [vmem:[#allocation5 + $0x898] sm:$0xff] 0.0
      %3414 = vst [vmem:[#allocation5 + $0x8a0] sm:$0xff] 0.0
      %3415 = vst [vmem:[#allocation5 + $0x8a8] sm:$0xff] 0.0
      %3416 = vst [vmem:[#allocation5 + $0x8b0] sm:$0xff] 0.0
      %3417 = vst [vmem:[#allocation5 + $0x8b8] sm:$0xff] 0.0
      %3418 = vst [vmem:[#allocation5 + $0x8c0] sm:$0xff] 0.0
      %3419 = vst [vmem:[#allocation5 + $0x8c8] sm:$0xff] 0.0
      %3420 = vst [vmem:[#allocation5 + $0x8d0] sm:$0xff] 0.0
      %3421 = vst [vmem:[#allocation5 + $0x8d8] sm:$0xff] 0.0
      %3422 = vst [vmem:[#allocation5 + $0x8e0] sm:$0xff] 0.0
      %3423 = vst [vmem:[#allocation5 + $0x8e8] sm:$0xff] 0.0
      %3424 = vst [vmem:[#allocation5 + $0x8f0] sm:$0xff] 0.0
      %3425 = vst [vmem:[#allocation5 + $0x8f8] sm:$0xff] 0.0
      %v3426 = vld [vmem:[#allocation3] sm:$0xff]
      %v3427 = vld [vmem:[#allocation3 + $0x8] sm:$0xff]
      %v3428 = vld [vmem:[#allocation3 + $0x18] sm:$0xff]
      %v3429 = vld [vmem:[#allocation3 + $0x20] sm:$0xff]
      %v3430 = vld [vmem:[#allocation3 + $0x30] sm:$0xff]
      %v3431 = vld [vmem:[#allocation3 + $0x38] sm:$0xff]
      %v3432 = vld [vmem:[#allocation3 + $0x48] sm:$0xff]
      %v3433 = vld [vmem:[#allocation3 + $0x50] sm:$0xff]
      %v3434 = vld [vmem:[#allocation3 + $0x60] sm:$0xff]
      %v3435 = vld [vmem:[#allocation3 + $0x68] sm:$0xff]
      %v3436 = vld [vmem:[#allocation3 + $0x78] sm:$0xff]
      %v3437 = vld [vmem:[#allocation3 + $0x80] sm:$0xff]
      %v3438 = vld [vmem:[#allocation3 + $0x90] sm:$0xff]
      %v3439 = vld [vmem:[#allocation3 + $0x98] sm:$0xff]
      %v3440 = vld [vmem:[#allocation3 + $0xa8] sm:$0xff]
      %v3441 = vld [vmem:[#allocation3 + $0xb0] sm:$0xff]
      %v3442 = vld [vmem:[#allocation3 + $0xc0] sm:$0xff]
      %v3443 = vld [vmem:[#allocation3 + $0xc8] sm:$0xff]
      %v3444 = vld [vmem:[#allocation3 + $0xd8] sm:$0xff]
      %v3445 = vld [vmem:[#allocation3 + $0xe0] sm:$0xff]
      %v3446 = vld [vmem:[#allocation3 + $0xf0] sm:$0xff]
      %v3447 = vld [vmem:[#allocation3 + $0xf8] sm:$0xff]
      %v3448 = vld [vmem:[#allocation3 + $0x108] sm:$0xff]
      %v3449 = vld [vmem:[#allocation3 + $0x110] sm:$0xff]
      %v3450 = vld [vmem:[#allocation3 + $0x120] sm:$0xff]
      %v3451 = vld [vmem:[#allocation3 + $0x128] sm:$0xff]
      %v3452 = vld [vmem:[#allocation3 + $0x138] sm:$0xff]
      %v3453 = vld [vmem:[#allocation3 + $0x140] sm:$0xff]
      %v3454 = vld [vmem:[#allocation3 + $0x150] sm:$0xff]
      %v3455 = vld [vmem:[#allocation3 + $0x158] sm:$0xff]
      %v3456 = vld [vmem:[#allocation3 + $0x168] sm:$0xff]
      %v3457 = vld [vmem:[#allocation3 + $0x170] sm:$0xff]
      %3458 = vst.msk [vmem:[#allocation5] sm:$0xff] %vm2714, %v3426
      %3459 = vst.msk [vmem:[#allocation5 + $0x48] sm:$0xff] %vm2714, %v3427
      %3460 = vst.msk [vmem:[#allocation5 + $0x90] sm:$0xff] %vm2714, %v3428
      %3461 = vst.msk [vmem:[#allocation5 + $0xd8] sm:$0xff] %vm2714, %v3429
      %3462 = vst.msk [vmem:[#allocation5 + $0x120] sm:$0xff] %vm2714, %v3430
      %3463 = vst.msk [vmem:[#allocation5 + $0x168] sm:$0xff] %vm2714, %v3431
      %3464 = vst.msk [vmem:[#allocation5 + $0x1b0] sm:$0xff] %vm2714, %v3432
      %3465 = vst.msk [vmem:[#allocation5 + $0x1f8] sm:$0xff] %vm2714, %v3433
      %3466 = vst.msk [vmem:[#allocation5 + $0x240] sm:$0xff] %vm2714, %v3434
      %3467 = vst.msk [vmem:[#allocation5 + $0x288] sm:$0xff] %vm2714, %v3435
      %3468 = vst.msk [vmem:[#allocation5 + $0x2d0] sm:$0xff] %vm2714, %v3436
      %3469 = vst.msk [vmem:[#allocation5 + $0x318] sm:$0xff] %vm2714, %v3437
      %3470 = vst.msk [vmem:[#allocation5 + $0x360] sm:$0xff] %vm2714, %v3438
      %3471 = vst.msk [vmem:[#allocation5 + $0x3a8] sm:$0xff] %vm2714, %v3439
      %3472 = vst.msk [vmem:[#allocation5 + $0x3f0] sm:$0xff] %vm2714, %v3440
      %3473 = vst.msk [vmem:[#allocation5 + $0x438] sm:$0xff] %vm2714, %v3441
      %3474 = vst.msk [vmem:[#allocation5 + $0x480] sm:$0xff] %vm2714, %v3442
      %3475 = vst.msk [vmem:[#allocation5 + $0x4c8] sm:$0xff] %vm2714, %v3443
      %3476 = vst.msk [vmem:[#allocation5 + $0x510] sm:$0xff] %vm2714, %v3444
      %3477 = vst.msk [vmem:[#allocation5 + $0x558] sm:$0xff] %vm2714, %v3445
      %3478 = vst.msk [vmem:[#allocation5 + $0x5a0] sm:$0xff] %vm2714, %v3446
      %3479 = vst.msk [vmem:[#allocation5 + $0x5e8] sm:$0xff] %vm2714, %v3447
      %3480 = vst.msk [vmem:[#allocation5 + $0x630] sm:$0xff] %vm2714, %v3448
      %3481 = vst.msk [vmem:[#allocation5 + $0x678] sm:$0xff] %vm2714, %v3449
      %3482 = vst.msk [vmem:[#allocation5 + $0x6c0] sm:$0xff] %vm2714, %v3450
      %3483 = vst.msk [vmem:[#allocation5 + $0x708] sm:$0xff] %vm2714, %v3451
      %3484 = vst.msk [vmem:[#allocation5 + $0x750] sm:$0xff] %vm2714, %v3452
      %3485 = vst.msk [vmem:[#allocation5 + $0x798] sm:$0xff] %vm2714, %v3453
      %3486 = vst.msk [vmem:[#allocation5 + $0x7e0] sm:$0xff] %vm2714, %v3454
      %3487 = vst.msk [vmem:[#allocation5 + $0x828] sm:$0xff] %vm2714, %v3455
      %3488 = vst.msk [vmem:[#allocation5 + $0x870] sm:$0xff] %vm2714, %v3456
      %3489 = vst.msk [vmem:[#allocation5 + $0x8b8] sm:$0xff] %vm2714, %v3457
      %v3490 = vld [vmem:[#allocation3 + $0x1] sm:$0xff]
      %v3491 = vld [vmem:[#allocation3 + $0x9] sm:$0xff]
      %v3492 = vld [vmem:[#allocation3 + $0x19] sm:$0xff]
      %v3493 = vld [vmem:[#allocation3 + $0x21] sm:$0xff]
      %v3494 = vld [vmem:[#allocation3 + $0x31] sm:$0xff]
      %v3495 = vld [vmem:[#allocation3 + $0x39] sm:$0xff]
      %v3496 = vld [vmem:[#allocation3 + $0x49] sm:$0xff]
      %v3497 = vld [vmem:[#allocation3 + $0x51] sm:$0xff]
      %v3498 = vld [vmem:[#allocation3 + $0x61] sm:$0xff]
      %v3499 = vld [vmem:[#allocation3 + $0x69] sm:$0xff]
      %v3500 = vld [vmem:[#allocation3 + $0x79] sm:$0xff]
      %v3501 = vld [vmem:[#allocation3 + $0x81] sm:$0xff]
      %v3502 = vld [vmem:[#allocation3 + $0x91] sm:$0xff]
      %v3503 = vld [vmem:[#allocation3 + $0x99] sm:$0xff]
      %v3504 = vld [vmem:[#allocation3 + $0xa9] sm:$0xff]
      %v3505 = vld [vmem:[#allocation3 + $0xb1] sm:$0xff]
      %v3506 = vld [vmem:[#allocation3 + $0xc1] sm:$0xff]
      %v3507 = vld [vmem:[#allocation3 + $0xc9] sm:$0xff]
      %v3508 = vld [vmem:[#allocation3 + $0xd9] sm:$0xff]
      %v3509 = vld [vmem:[#allocation3 + $0xe1] sm:$0xff]
      %v3510 = vld [vmem:[#allocation3 + $0xf1] sm:$0xff]
      %v3511 = vld [vmem:[#allocation3 + $0xf9] sm:$0xff]
      %v3512 = vld [vmem:[#allocation3 + $0x109] sm:$0xff]
      %v3513 = vld [vmem:[#allocation3 + $0x111] sm:$0xff]
      %v3514 = vld [vmem:[#allocation3 + $0x121] sm:$0xff]
      %v3515 = vld [vmem:[#allocation3 + $0x129] sm:$0xff]
      %v3516 = vld [vmem:[#allocation3 + $0x139] sm:$0xff]
      %v3517 = vld [vmem:[#allocation3 + $0x141] sm:$0xff]
      %v3518 = vld [vmem:[#allocation3 + $0x151] sm:$0xff]
      %v3519 = vld [vmem:[#allocation3 + $0x159] sm:$0xff]
      %v3520 = vld [vmem:[#allocation3 + $0x169] sm:$0xff]
      %v3521 = vld [vmem:[#allocation3 + $0x171] sm:$0xff]
      %3522 = vst.msk [vmem:[#allocation5 + $0x8] sm:$0xff] %vm2714, %v3490
      %3523 = vst.msk [vmem:[#allocation5 + $0x50] sm:$0xff] %vm2714, %v3491
      %3524 = vst.msk [vmem:[#allocation5 + $0x98] sm:$0xff] %vm2714, %v3492
      %3525 = vst.msk [vmem:[#allocation5 + $0xe0] sm:$0xff] %vm2714, %v3493
      %3526 = vst.msk [vmem:[#allocation5 + $0x128] sm:$0xff] %vm2714, %v3494
      %3527 = vst.msk [vmem:[#allocation5 + $0x170] sm:$0xff] %vm2714, %v3495
      %3528 = vst.msk [vmem:[#allocation5 + $0x1b8] sm:$0xff] %vm2714, %v3496
      %3529 = vst.msk [vmem:[#allocation5 + $0x200] sm:$0xff] %vm2714, %v3497
      %3530 = vst.msk [vmem:[#allocation5 + $0x248] sm:$0xff] %vm2714, %v3498
      %3531 = vst.msk [vmem:[#allocation5 + $0x290] sm:$0xff] %vm2714, %v3499
      %3532 = vst.msk [vmem:[#allocation5 + $0x2d8] sm:$0xff] %vm2714, %v3500
      %3533 = vst.msk [vmem:[#allocation5 + $0x320] sm:$0xff] %vm2714, %v3501
      %3534 = vst.msk [vmem:[#allocation5 + $0x368] sm:$0xff] %vm2714, %v3502
      %3535 = vst.msk [vmem:[#allocation5 + $0x3b0] sm:$0xff] %vm2714, %v3503
      %3536 = vst.msk [vmem:[#allocation5 + $0x3f8] sm:$0xff] %vm2714, %v3504
      %3537 = vst.msk [vmem:[#allocation5 + $0x440] sm:$0xff] %vm2714, %v3505
      %3538 = vst.msk [vmem:[#allocation5 + $0x488] sm:$0xff] %vm2714, %v3506
      %3539 = vst.msk [vmem:[#allocation5 + $0x4d0] sm:$0xff] %vm2714, %v3507
      %3540 = vst.msk [vmem:[#allocation5 + $0x518] sm:$0xff] %vm2714, %v3508
      %3541 = vst.msk [vmem:[#allocation5 + $0x560] sm:$0xff] %vm2714, %v3509
      %3542 = vst.msk [vmem:[#allocation5 + $0x5a8] sm:$0xff] %vm2714, %v3510
      %3543 = vst.msk [vmem:[#allocation5 + $0x5f0] sm:$0xff] %vm2714, %v3511
      %3544 = vst.msk [vmem:[#allocation5 + $0x638] sm:$0xff] %vm2714, %v3512
      %3545 = vst.msk [vmem:[#allocation5 + $0x680] sm:$0xff] %vm2714, %v3513
      %3546 = vst.msk [vmem:[#allocation5 + $0x6c8] sm:$0xff] %vm2714, %v3514
      %3547 = vst.msk [vmem:[#allocation5 + $0x710] sm:$0xff] %vm2714, %v3515
      %3548 = vst.msk [vmem:[#allocation5 + $0x758] sm:$0xff] %vm2714, %v3516
      %3549 = vst.msk [vmem:[#allocation5 + $0x7a0] sm:$0xff] %vm2714, %v3517
      %3550 = vst.msk [vmem:[#allocation5 + $0x7e8] sm:$0xff] %vm2714, %v3518
      %3551 = vst.msk [vmem:[#allocation5 + $0x830] sm:$0xff] %vm2714, %v3519
      %3552 = vst.msk [vmem:[#allocation5 + $0x878] sm:$0xff] %vm2714, %v3520
      %3553 = vst.msk [vmem:[#allocation5 + $0x8c0] sm:$0xff] %vm2714, %v3521
      %v3554 = vld [vmem:[#allocation3 + $0x2] sm:$0xff]
      %v3555 = vld [vmem:[#allocation3 + $0xa] sm:$0xff]
      %v3556 = vld [vmem:[#allocation3 + $0x1a] sm:$0xff]
      %v3557 = vld [vmem:[#allocation3 + $0x22] sm:$0xff]
      %v3558 = vld [vmem:[#allocation3 + $0x32] sm:$0xff]
      %v3559 = vld [vmem:[#allocation3 + $0x3a] sm:$0xff]
      %v3560 = vld [vmem:[#allocation3 + $0x4a] sm:$0xff]
      %v3561 = vld [vmem:[#allocation3 + $0x52] sm:$0xff]
      %v3562 = vld [vmem:[#allocation3 + $0x62] sm:$0xff]
      %v3563 = vld [vmem:[#allocation3 + $0x6a] sm:$0xff]
      %v3564 = vld [vmem:[#allocation3 + $0x7a] sm:$0xff]
      %v3565 = vld [vmem:[#allocation3 + $0x82] sm:$0xff]
      %v3566 = vld [vmem:[#allocation3 + $0x92] sm:$0xff]
      %v3567 = vld [vmem:[#allocation3 + $0x9a] sm:$0xff]
      %v3568 = vld [vmem:[#allocation3 + $0xaa] sm:$0xff]
      %v3569 = vld [vmem:[#allocation3 + $0xb2] sm:$0xff]
      %v3570 = vld [vmem:[#allocation3 + $0xc2] sm:$0xff]
      %v3571 = vld [vmem:[#allocation3 + $0xca] sm:$0xff]
      %v3572 = vld [vmem:[#allocation3 + $0xda] sm:$0xff]
      %v3573 = vld [vmem:[#allocation3 + $0xe2] sm:$0xff]
      %v3574 = vld [vmem:[#allocation3 + $0xf2] sm:$0xff]
      %v3575 = vld [vmem:[#allocation3 + $0xfa] sm:$0xff]
      %v3576 = vld [vmem:[#allocation3 + $0x10a] sm:$0xff]
      %v3577 = vld [vmem:[#allocation3 + $0x112] sm:$0xff]
      %v3578 = vld [vmem:[#allocation3 + $0x122] sm:$0xff]
      %v3579 = vld [vmem:[#allocation3 + $0x12a] sm:$0xff]
      %v3580 = vld [vmem:[#allocation3 + $0x13a] sm:$0xff]
      %v3581 = vld [vmem:[#allocation3 + $0x142] sm:$0xff]
      %v3582 = vld [vmem:[#allocation3 + $0x152] sm:$0xff]
      %v3583 = vld [vmem:[#allocation3 + $0x15a] sm:$0xff]
      %v3584 = vld [vmem:[#allocation3 + $0x16a] sm:$0xff]
      %v3585 = vld [vmem:[#allocation3 + $0x172] sm:$0xff]
      %3586 = vst.msk [vmem:[#allocation5 + $0x10] sm:$0xff] %vm2714, %v3554
      %3587 = vst.msk [vmem:[#allocation5 + $0x58] sm:$0xff] %vm2714, %v3555
      %3588 = vst.msk [vmem:[#allocation5 + $0xa0] sm:$0xff] %vm2714, %v3556
      %3589 = vst.msk [vmem:[#allocation5 + $0xe8] sm:$0xff] %vm2714, %v3557
      %3590 = vst.msk [vmem:[#allocation5 + $0x130] sm:$0xff] %vm2714, %v3558
      %3591 = vst.msk [vmem:[#allocation5 + $0x178] sm:$0xff] %vm2714, %v3559
      %3592 = vst.msk [vmem:[#allocation5 + $0x1c0] sm:$0xff] %vm2714, %v3560
      %3593 = vst.msk [vmem:[#allocation5 + $0x208] sm:$0xff] %vm2714, %v3561
      %3594 = vst.msk [vmem:[#allocation5 + $0x250] sm:$0xff] %vm2714, %v3562
      %3595 = vst.msk [vmem:[#allocation5 + $0x298] sm:$0xff] %vm2714, %v3563
      %3596 = vst.msk [vmem:[#allocation5 + $0x2e0] sm:$0xff] %vm2714, %v3564
      %3597 = vst.msk [vmem:[#allocation5 + $0x328] sm:$0xff] %vm2714, %v3565
      %3598 = vst.msk [vmem:[#allocation5 + $0x370] sm:$0xff] %vm2714, %v3566
      %3599 = vst.msk [vmem:[#allocation5 + $0x3b8] sm:$0xff] %vm2714, %v3567
      %3600 = vst.msk [vmem:[#allocation5 + $0x400] sm:$0xff] %vm2714, %v3568
      %3601 = vst.msk [vmem:[#allocation5 + $0x448] sm:$0xff] %vm2714, %v3569
      %3602 = vst.msk [vmem:[#allocation5 + $0x490] sm:$0xff] %vm2714, %v3570
      %3603 = vst.msk [vmem:[#allocation5 + $0x4d8] sm:$0xff] %vm2714, %v3571
      %3604 = vst.msk [vmem:[#allocation5 + $0x520] sm:$0xff] %vm2714, %v3572
      %3605 = vst.msk [vmem:[#allocation5 + $0x568] sm:$0xff] %vm2714, %v3573
      %3606 = vst.msk [vmem:[#allocation5 + $0x5b0] sm:$0xff] %vm2714, %v3574
      %3607 = vst.msk [vmem:[#allocation5 + $0x5f8] sm:$0xff] %vm2714, %v3575
      %3608 = vst.msk [vmem:[#allocation5 + $0x640] sm:$0xff] %vm2714, %v3576
      %3609 = vst.msk [vmem:[#allocation5 + $0x688] sm:$0xff] %vm2714, %v3577
      %3610 = vst.msk [vmem:[#allocation5 + $0x6d0] sm:$0xff] %vm2714, %v3578
      %3611 = vst.msk [vmem:[#allocation5 + $0x718] sm:$0xff] %vm2714, %v3579
      %3612 = vst.msk [vmem:[#allocation5 + $0x760] sm:$0xff] %vm2714, %v3580
      %3613 = vst.msk [vmem:[#allocation5 + $0x7a8] sm:$0xff] %vm2714, %v3581
      %3614 = vst.msk [vmem:[#allocation5 + $0x7f0] sm:$0xff] %vm2714, %v3582
      %3615 = vst.msk [vmem:[#allocation5 + $0x838] sm:$0xff] %vm2714, %v3583
      %3616 = vst.msk [vmem:[#allocation5 + $0x880] sm:$0xff] %vm2714, %v3584
      %3617 = vst.msk [vmem:[#allocation5 + $0x8c8] sm:$0xff] %vm2714, %v3585
      %v3618 = vld [vmem:[%s3105] sm:$0xff]
      %v3619 = vld [vmem:[%s3105 + $0x8] sm:$0xff]
      %v3620 = vld [vmem:[%s3105 + $0x18] sm:$0xff]
      %v3621 = vld [vmem:[%s3105 + $0x20] sm:$0xff]
      %v3622 = vld [vmem:[%s3105 + $0x30] sm:$0xff]
      %v3623 = vld [vmem:[%s3105 + $0x38] sm:$0xff]
      %v3624 = vld [vmem:[%s3105 + $0x48] sm:$0xff]
      %v3625 = vld [vmem:[%s3105 + $0x50] sm:$0xff]
      %v3626 = vld [vmem:[%s3105 + $0x60] sm:$0xff]
      %v3627 = vld [vmem:[%s3105 + $0x68] sm:$0xff]
      %v3628 = vld [vmem:[%s3105 + $0x78] sm:$0xff]
      %v3629 = vld [vmem:[%s3105 + $0x80] sm:$0xff]
      %v3630 = vld [vmem:[%s3105 + $0x90] sm:$0xff]
      %v3631 = vld [vmem:[%s3105 + $0x98] sm:$0xff]
      %v3632 = vld [vmem:[%s3105 + $0xa8] sm:$0xff]
      %v3633 = vld [vmem:[%s3105 + $0xb0] sm:$0xff]
      %v3634 = vld [vmem:[%s3105 + $0xc0] sm:$0xff]
      %v3635 = vld [vmem:[%s3105 + $0xc8] sm:$0xff]
      %v3636 = vld [vmem:[%s3105 + $0xd8] sm:$0xff]
      %v3637 = vld [vmem:[%s3105 + $0xe0] sm:$0xff]
      %v3638 = vld [vmem:[%s3105 + $0xf0] sm:$0xff]
      %v3639 = vld [vmem:[%s3105 + $0xf8] sm:$0xff]
      %v3640 = vld [vmem:[%s3105 + $0x108] sm:$0xff]
      %v3641 = vld [vmem:[%s3105 + $0x110] sm:$0xff]
      %v3642 = vld [vmem:[%s3105 + $0x120] sm:$0xff]
      %v3643 = vld [vmem:[%s3105 + $0x128] sm:$0xff]
      %v3644 = vld [vmem:[%s3105 + $0x138] sm:$0xff]
      %v3645 = vld [vmem:[%s3105 + $0x140] sm:$0xff]
      %v3646 = vld [vmem:[%s3105 + $0x150] sm:$0xff]
      %v3647 = vld [vmem:[%s3105 + $0x158] sm:$0xff]
      %v3648 = vld [vmem:[%s3105 + $0x168] sm:$0xff]
      %v3649 = vld [vmem:[%s3105 + $0x170] sm:$0xff]
      %3650 = vst.msk [vmem:[#allocation5 + $0x18] sm:$0xff] %vm2714, %v3618
      %3651 = vst.msk [vmem:[#allocation5 + $0x60] sm:$0xff] %vm2714, %v3619
      %3652 = vst.msk [vmem:[#allocation5 + $0xa8] sm:$0xff] %vm2714, %v3620
      %3653 = vst.msk [vmem:[#allocation5 + $0xf0] sm:$0xff] %vm2714, %v3621
      %3654 = vst.msk [vmem:[#allocation5 + $0x138] sm:$0xff] %vm2714, %v3622
      %3655 = vst.msk [vmem:[#allocation5 + $0x180] sm:$0xff] %vm2714, %v3623
      %3656 = vst.msk [vmem:[#allocation5 + $0x1c8] sm:$0xff] %vm2714, %v3624
      %3657 = vst.msk [vmem:[#allocation5 + $0x210] sm:$0xff] %vm2714, %v3625
      %3658 = vst.msk [vmem:[#allocation5 + $0x258] sm:$0xff] %vm2714, %v3626
      %3659 = vst.msk [vmem:[#allocation5 + $0x2a0] sm:$0xff] %vm2714, %v3627
      %3660 = vst.msk [vmem:[#allocation5 + $0x2e8] sm:$0xff] %vm2714, %v3628
      %3661 = vst.msk [vmem:[#allocation5 + $0x330] sm:$0xff] %vm2714, %v3629
      %3662 = vst.msk [vmem:[#allocation5 + $0x378] sm:$0xff] %vm2714, %v3630
      %3663 = vst.msk [vmem:[#allocation5 + $0x3c0] sm:$0xff] %vm2714, %v3631
      %3664 = vst.msk [vmem:[#allocation5 + $0x408] sm:$0xff] %vm2714, %v3632
      %3665 = vst.msk [vmem:[#allocation5 + $0x450] sm:$0xff] %vm2714, %v3633
      %3666 = vst.msk [vmem:[#allocation5 + $0x498] sm:$0xff] %vm2714, %v3634
      %3667 = vst.msk [vmem:[#allocation5 + $0x4e0] sm:$0xff] %vm2714, %v3635
      %3668 = vst.msk [vmem:[#allocation5 + $0x528] sm:$0xff] %vm2714, %v3636
      %3669 = vst.msk [vmem:[#allocation5 + $0x570] sm:$0xff] %vm2714, %v3637
      %3670 = vst.msk [vmem:[#allocation5 + $0x5b8] sm:$0xff] %vm2714, %v3638
      %3671 = vst.msk [vmem:[#allocation5 + $0x600] sm:$0xff] %vm2714, %v3639
      %3672 = vst.msk [vmem:[#allocation5 + $0x648] sm:$0xff] %vm2714, %v3640
      %3673 = vst.msk [vmem:[#allocation5 + $0x690] sm:$0xff] %vm2714, %v3641
      %3674 = vst.msk [vmem:[#allocation5 + $0x6d8] sm:$0xff] %vm2714, %v3642
      %3675 = vst.msk [vmem:[#allocation5 + $0x720] sm:$0xff] %vm2714, %v3643
      %3676 = vst.msk [vmem:[#allocation5 + $0x768] sm:$0xff] %vm2714, %v3644
      %3677 = vst.msk [vmem:[#allocation5 + $0x7b0] sm:$0xff] %vm2714, %v3645
      %3678 = vst.msk [vmem:[#allocation5 + $0x7f8] sm:$0xff] %vm2714, %v3646
      %3679 = vst.msk [vmem:[#allocation5 + $0x840] sm:$0xff] %vm2714, %v3647
      %3680 = vst.msk [vmem:[#allocation5 + $0x888] sm:$0xff] %vm2714, %v3648
      %3681 = vst.msk [vmem:[#allocation5 + $0x8d0] sm:$0xff] %vm2714, %v3649
      %v3682 = vld [vmem:[%s3105 + $0x1] sm:$0xff]
      %v3683 = vld [vmem:[%s3105 + $0x9] sm:$0xff]
      %v3684 = vld [vmem:[%s3105 + $0x19] sm:$0xff]
      %v3685 = vld [vmem:[%s3105 + $0x21] sm:$0xff]
      %v3686 = vld [vmem:[%s3105 + $0x31] sm:$0xff]
      %v3687 = vld [vmem:[%s3105 + $0x39] sm:$0xff]
      %v3688 = vld [vmem:[%s3105 + $0x49] sm:$0xff]
      %v3689 = vld [vmem:[%s3105 + $0x51] sm:$0xff]
      %v3690 = vld [vmem:[%s3105 + $0x61] sm:$0xff]
      %v3691 = vld [vmem:[%s3105 + $0x69] sm:$0xff]
      %v3692 = vld [vmem:[%s3105 + $0x79] sm:$0xff]
      %v3693 = vld [vmem:[%s3105 + $0x81] sm:$0xff]
      %v3694 = vld [vmem:[%s3105 + $0x91] sm:$0xff]
      %v3695 = vld [vmem:[%s3105 + $0x99] sm:$0xff]
      %v3696 = vld [vmem:[%s3105 + $0xa9] sm:$0xff]
      %v3697 = vld [vmem:[%s3105 + $0xb1] sm:$0xff]
      %v3698 = vld [vmem:[%s3105 + $0xc1] sm:$0xff]
      %v3699 = vld [vmem:[%s3105 + $0xc9] sm:$0xff]
      %v3700 = vld [vmem:[%s3105 + $0xd9] sm:$0xff]
      %v3701 = vld [vmem:[%s3105 + $0xe1] sm:$0xff]
      %v3702 = vld [vmem:[%s3105 + $0xf1] sm:$0xff]
      %v3703 = vld [vmem:[%s3105 + $0xf9] sm:$0xff]
      %v3704 = vld [vmem:[%s3105 + $0x109] sm:$0xff]
      %v3705 = vld [vmem:[%s3105 + $0x111] sm:$0xff]
      %v3706 = vld [vmem:[%s3105 + $0x121] sm:$0xff]
      %v3707 = vld [vmem:[%s3105 + $0x129] sm:$0xff]
      %v3708 = vld [vmem:[%s3105 + $0x139] sm:$0xff]
      %v3709 = vld [vmem:[%s3105 + $0x141] sm:$0xff]
      %v3710 = vld [vmem:[%s3105 + $0x151] sm:$0xff]
      %v3711 = vld [vmem:[%s3105 + $0x159] sm:$0xff]
      %v3712 = vld [vmem:[%s3105 + $0x169] sm:$0xff]
      %v3713 = vld [vmem:[%s3105 + $0x171] sm:$0xff]
      %3714 = vst.msk [vmem:[#allocation5 + $0x20] sm:$0xff] %vm2714, %v3682
      %3715 = vst.msk [vmem:[#allocation5 + $0x68] sm:$0xff] %vm2714, %v3683
      %3716 = vst.msk [vmem:[#allocation5 + $0xb0] sm:$0xff] %vm2714, %v3684
      %3717 = vst.msk [vmem:[#allocation5 + $0xf8] sm:$0xff] %vm2714, %v3685
      %3718 = vst.msk [vmem:[#allocation5 + $0x140] sm:$0xff] %vm2714, %v3686
      %3719 = vst.msk [vmem:[#allocation5 + $0x188] sm:$0xff] %vm2714, %v3687
      %3720 = vst.msk [vmem:[#allocation5 + $0x1d0] sm:$0xff] %vm2714, %v3688
      %3721 = vst.msk [vmem:[#allocation5 + $0x218] sm:$0xff] %vm2714, %v3689
      %3722 = vst.msk [vmem:[#allocation5 + $0x260] sm:$0xff] %vm2714, %v3690
      %3723 = vst.msk [vmem:[#allocation5 + $0x2a8] sm:$0xff] %vm2714, %v3691
      %3724 = vst.msk [vmem:[#allocation5 + $0x2f0] sm:$0xff] %vm2714, %v3692
      %3725 = vst.msk [vmem:[#allocation5 + $0x338] sm:$0xff] %vm2714, %v3693
      %3726 = vst.msk [vmem:[#allocation5 + $0x380] sm:$0xff] %vm2714, %v3694
      %3727 = vst.msk [vmem:[#allocation5 + $0x3c8] sm:$0xff] %vm2714, %v3695
      %3728 = vst.msk [vmem:[#allocation5 + $0x410] sm:$0xff] %vm2714, %v3696
      %3729 = vst.msk [vmem:[#allocation5 + $0x458] sm:$0xff] %vm2714, %v3697
      %3730 = vst.msk [vmem:[#allocation5 + $0x4a0] sm:$0xff] %vm2714, %v3698
      %3731 = vst.msk [vmem:[#allocation5 + $0x4e8] sm:$0xff] %vm2714, %v3699
      %3732 = vst.msk [vmem:[#allocation5 + $0x530] sm:$0xff] %vm2714, %v3700
      %3733 = vst.msk [vmem:[#allocation5 + $0x578] sm:$0xff] %vm2714, %v3701
      %3734 = vst.msk [vmem:[#allocation5 + $0x5c0] sm:$0xff] %vm2714, %v3702
      %3735 = vst.msk [vmem:[#allocation5 + $0x608] sm:$0xff] %vm2714, %v3703
      %3736 = vst.msk [vmem:[#allocation5 + $0x650] sm:$0xff] %vm2714, %v3704
      %3737 = vst.msk [vmem:[#allocation5 + $0x698] sm:$0xff] %vm2714, %v3705
      %3738 = vst.msk [vmem:[#allocation5 + $0x6e0] sm:$0xff] %vm2714, %v3706
      %3739 = vst.msk [vmem:[#allocation5 + $0x728] sm:$0xff] %vm2714, %v3707
      %3740 = vst.msk [vmem:[#allocation5 + $0x770] sm:$0xff] %vm2714, %v3708
      %3741 = vst.msk [vmem:[#allocation5 + $0x7b8] sm:$0xff] %vm2714, %v3709
      %3742 = vst.msk [vmem:[#allocation5 + $0x800] sm:$0xff] %vm2714, %v3710
      %3743 = vst.msk [vmem:[#allocation5 + $0x848] sm:$0xff] %vm2714, %v3711
      %3744 = vst.msk [vmem:[#allocation5 + $0x890] sm:$0xff] %vm2714, %v3712
      %3745 = vst.msk [vmem:[#allocation5 + $0x8d8] sm:$0xff] %vm2714, %v3713
      %v3746 = vld [vmem:[%s3105 + $0x2] sm:$0xff]
      %v3747 = vld [vmem:[%s3105 + $0xa] sm:$0xff]
      %v3748 = vld [vmem:[%s3105 + $0x1a] sm:$0xff]
      %v3749 = vld [vmem:[%s3105 + $0x22] sm:$0xff]
      %v3750 = vld [vmem:[%s3105 + $0x32] sm:$0xff]
      %v3751 = vld [vmem:[%s3105 + $0x3a] sm:$0xff]
      %v3752 = vld [vmem:[%s3105 + $0x4a] sm:$0xff]
      %v3753 = vld [vmem:[%s3105 + $0x52] sm:$0xff]
      %v3754 = vld [vmem:[%s3105 + $0x62] sm:$0xff]
      %v3755 = vld [vmem:[%s3105 + $0x6a] sm:$0xff]
      %v3756 = vld [vmem:[%s3105 + $0x7a] sm:$0xff]
      %v3757 = vld [vmem:[%s3105 + $0x82] sm:$0xff]
      %v3758 = vld [vmem:[%s3105 + $0x92] sm:$0xff]
      %v3759 = vld [vmem:[%s3105 + $0x9a] sm:$0xff]
      %v3760 = vld [vmem:[%s3105 + $0xaa] sm:$0xff]
      %v3761 = vld [vmem:[%s3105 + $0xb2] sm:$0xff]
      %v3762 = vld [vmem:[%s3105 + $0xc2] sm:$0xff]
      %v3763 = vld [vmem:[%s3105 + $0xca] sm:$0xff]
      %v3764 = vld [vmem:[%s3105 + $0xda] sm:$0xff]
      %v3765 = vld [vmem:[%s3105 + $0xe2] sm:$0xff]
      %v3766 = vld [vmem:[%s3105 + $0xf2] sm:$0xff]
      %v3767 = vld [vmem:[%s3105 + $0xfa] sm:$0xff]
      %v3768 = vld [vmem:[%s3105 + $0x10a] sm:$0xff]
      %v3769 = vld [vmem:[%s3105 + $0x112] sm:$0xff]
      %v3770 = vld [vmem:[%s3105 + $0x122] sm:$0xff]
      %v3771 = vld [vmem:[%s3105 + $0x12a] sm:$0xff]
      %v3772 = vld [vmem:[%s3105 + $0x13a] sm:$0xff]
      %v3773 = vld [vmem:[%s3105 + $0x142] sm:$0xff]
      %v3774 = vld [vmem:[%s3105 + $0x152] sm:$0xff]
      %v3775 = vld [vmem:[%s3105 + $0x15a] sm:$0xff]
      %v3776 = vld [vmem:[%s3105 + $0x16a] sm:$0xff]
      %v3777 = vld [vmem:[%s3105 + $0x172] sm:$0xff]
      %3778 = vst.msk [vmem:[#allocation5 + $0x28] sm:$0xff] %vm2714, %v3746
      %3779 = vst.msk [vmem:[#allocation5 + $0x70] sm:$0xff] %vm2714, %v3747
      %3780 = vst.msk [vmem:[#allocation5 + $0xb8] sm:$0xff] %vm2714, %v3748
      %3781 = vst.msk [vmem:[#allocation5 + $0x100] sm:$0xff] %vm2714, %v3749
      %3782 = vst.msk [vmem:[#allocation5 + $0x148] sm:$0xff] %vm2714, %v3750
      %3783 = vst.msk [vmem:[#allocation5 + $0x190] sm:$0xff] %vm2714, %v3751
      %3784 = vst.msk [vmem:[#allocation5 + $0x1d8] sm:$0xff] %vm2714, %v3752
      %3785 = vst.msk [vmem:[#allocation5 + $0x220] sm:$0xff] %vm2714, %v3753
      %3786 = vst.msk [vmem:[#allocation5 + $0x268] sm:$0xff] %vm2714, %v3754
      %3787 = vst.msk [vmem:[#allocation5 + $0x2b0] sm:$0xff] %vm2714, %v3755
      %3788 = vst.msk [vmem:[#allocation5 + $0x2f8] sm:$0xff] %vm2714, %v3756
      %3789 = vst.msk [vmem:[#allocation5 + $0x340] sm:$0xff] %vm2714, %v3757
      %3790 = vst.msk [vmem:[#allocation5 + $0x388] sm:$0xff] %vm2714, %v3758
      %3791 = vst.msk [vmem:[#allocation5 + $0x3d0] sm:$0xff] %vm2714, %v3759
      %3792 = vst.msk [vmem:[#allocation5 + $0x418] sm:$0xff] %vm2714, %v3760
      %3793 = vst.msk [vmem:[#allocation5 + $0x460] sm:$0xff] %vm2714, %v3761
      %3794 = vst.msk [vmem:[#allocation5 + $0x4a8] sm:$0xff] %vm2714, %v3762
      %3795 = vst.msk [vmem:[#allocation5 + $0x4f0] sm:$0xff] %vm2714, %v3763
      %3796 = vst.msk [vmem:[#allocation5 + $0x538] sm:$0xff] %vm2714, %v3764
      %3797 = vst.msk [vmem:[#allocation5 + $0x580] sm:$0xff] %vm2714, %v3765
      %3798 = vst.msk [vmem:[#allocation5 + $0x5c8] sm:$0xff] %vm2714, %v3766
      %3799 = vst.msk [vmem:[#allocation5 + $0x610] sm:$0xff] %vm2714, %v3767
      %3800 = vst.msk [vmem:[#allocation5 + $0x658] sm:$0xff] %vm2714, %v3768
      %3801 = vst.msk [vmem:[#allocation5 + $0x6a0] sm:$0xff] %vm2714, %v3769
      %3802 = vst.msk [vmem:[#allocation5 + $0x6e8] sm:$0xff] %vm2714, %v3770
      %3803 = vst.msk [vmem:[#allocation5 + $0x730] sm:$0xff] %vm2714, %v3771
      %3804 = vst.msk [vmem:[#allocation5 + $0x778] sm:$0xff] %vm2714, %v3772
      %3805 = vst.msk [vmem:[#allocation5 + $0x7c0] sm:$0xff] %vm2714, %v3773
      %3806 = vst.msk [vmem:[#allocation5 + $0x808] sm:$0xff] %vm2714, %v3774
      %3807 = vst.msk [vmem:[#allocation5 + $0x850] sm:$0xff] %vm2714, %v3775
      %3808 = vst.msk [vmem:[#allocation5 + $0x898] sm:$0xff] %vm2714, %v3776
      %3809 = vst.msk [vmem:[#allocation5 + $0x8e0] sm:$0xff] %vm2714, %v3777
      %s3810 = scalar_lea.vmem [#allocation3], 48
      %v3811 = vld [vmem:[%s3810] sm:$0xff]
      %v3812 = vld [vmem:[%s3810 + $0x8] sm:$0xff]
      %v3813 = vld [vmem:[%s3810 + $0x18] sm:$0xff]
      %v3814 = vld [vmem:[%s3810 + $0x20] sm:$0xff]
      %v3815 = vld [vmem:[%s3810 + $0x30] sm:$0xff]
      %v3816 = vld [vmem:[%s3810 + $0x38] sm:$0xff]
      %v3817 = vld [vmem:[%s3810 + $0x48] sm:$0xff]
      %v3818 = vld [vmem:[%s3810 + $0x50] sm:$0xff]
      %v3819 = vld [vmem:[%s3810 + $0x60] sm:$0xff]
      %v3820 = vld [vmem:[%s3810 + $0x68] sm:$0xff]
      %v3821 = vld [vmem:[%s3810 + $0x78] sm:$0xff]
      %v3822 = vld [vmem:[%s3810 + $0x80] sm:$0xff]
      %v3823 = vld [vmem:[%s3810 + $0x90] sm:$0xff]
      %v3824 = vld [vmem:[%s3810 + $0x98] sm:$0xff]
      %v3825 = vld [vmem:[%s3810 + $0xa8] sm:$0xff]
      %v3826 = vld [vmem:[%s3810 + $0xb0] sm:$0xff]
      %v3827 = vld [vmem:[%s3810 + $0xc0] sm:$0xff]
      %v3828 = vld [vmem:[%s3810 + $0xc8] sm:$0xff]
      %v3829 = vld [vmem:[%s3810 + $0xd8] sm:$0xff]
      %v3830 = vld [vmem:[%s3810 + $0xe0] sm:$0xff]
      %v3831 = vld [vmem:[%s3810 + $0xf0] sm:$0xff]
      %v3832 = vld [vmem:[%s3810 + $0xf8] sm:$0xff]
      %v3833 = vld [vmem:[%s3810 + $0x108] sm:$0xff]
      %v3834 = vld [vmem:[%s3810 + $0x110] sm:$0xff]
      %v3835 = vld [vmem:[%s3810 + $0x120] sm:$0xff]
      %v3836 = vld [vmem:[%s3810 + $0x128] sm:$0xff]
      %v3837 = vld [vmem:[%s3810 + $0x138] sm:$0xff]
      %v3838 = vld [vmem:[%s3810 + $0x140] sm:$0xff]
      %v3839 = vld [vmem:[%s3810 + $0x150] sm:$0xff]
      %v3840 = vld [vmem:[%s3810 + $0x158] sm:$0xff]
      %v3841 = vld [vmem:[%s3810 + $0x168] sm:$0xff]
      %v3842 = vld [vmem:[%s3810 + $0x170] sm:$0xff]
      %3843 = vst.msk [vmem:[#allocation5 + $0x30] sm:$0xff] %vm2714, %v3811
      %3844 = vst.msk [vmem:[#allocation5 + $0x78] sm:$0xff] %vm2714, %v3812
      %3845 = vst.msk [vmem:[#allocation5 + $0xc0] sm:$0xff] %vm2714, %v3813
      %3846 = vst.msk [vmem:[#allocation5 + $0x108] sm:$0xff] %vm2714, %v3814
      %3847 = vst.msk [vmem:[#allocation5 + $0x150] sm:$0xff] %vm2714, %v3815
      %3848 = vst.msk [vmem:[#allocation5 + $0x198] sm:$0xff] %vm2714, %v3816
      %3849 = vst.msk [vmem:[#allocation5 + $0x1e0] sm:$0xff] %vm2714, %v3817
      %3850 = vst.msk [vmem:[#allocation5 + $0x228] sm:$0xff] %vm2714, %v3818
      %3851 = vst.msk [vmem:[#allocation5 + $0x270] sm:$0xff] %vm2714, %v3819
      %3852 = vst.msk [vmem:[#allocation5 + $0x2b8] sm:$0xff] %vm2714, %v3820
      %3853 = vst.msk [vmem:[#allocation5 + $0x300] sm:$0xff] %vm2714, %v3821
      %3854 = vst.msk [vmem:[#allocation5 + $0x348] sm:$0xff] %vm2714, %v3822
      %3855 = vst.msk [vmem:[#allocation5 + $0x390] sm:$0xff] %vm2714, %v3823
      %3856 = vst.msk [vmem:[#allocation5 + $0x3d8] sm:$0xff] %vm2714, %v3824
      %3857 = vst.msk [vmem:[#allocation5 + $0x420] sm:$0xff] %vm2714, %v3825
      %3858 = vst.msk [vmem:[#allocation5 + $0x468] sm:$0xff] %vm2714, %v3826
      %3859 = vst.msk [vmem:[#allocation5 + $0x4b0] sm:$0xff] %vm2714, %v3827
      %3860 = vst.msk [vmem:[#allocation5 + $0x4f8] sm:$0xff] %vm2714, %v3828
      %3861 = vst.msk [vmem:[#allocation5 + $0x540] sm:$0xff] %vm2714, %v3829
      %3862 = vst.msk [vmem:[#allocation5 + $0x588] sm:$0xff] %vm2714, %v3830
      %3863 = vst.msk [vmem:[#allocation5 + $0x5d0] sm:$0xff] %vm2714, %v3831
      %3864 = vst.msk [vmem:[#allocation5 + $0x618] sm:$0xff] %vm2714, %v3832
      %3865 = vst.msk [vmem:[#allocation5 + $0x660] sm:$0xff] %vm2714, %v3833
      %3866 = vst.msk [vmem:[#allocation5 + $0x6a8] sm:$0xff] %vm2714, %v3834
      %3867 = vst.msk [vmem:[#allocation5 + $0x6f0] sm:$0xff] %vm2714, %v3835
      %3868 = vst.msk [vmem:[#allocation5 + $0x738] sm:$0xff] %vm2714, %v3836
      %3869 = vst.msk [vmem:[#allocation5 + $0x780] sm:$0xff] %vm2714, %v3837
      %3870 = vst.msk [vmem:[#allocation5 + $0x7c8] sm:$0xff] %vm2714, %v3838
      %3871 = vst.msk [vmem:[#allocation5 + $0x810] sm:$0xff] %vm2714, %v3839
      %3872 = vst.msk [vmem:[#allocation5 + $0x858] sm:$0xff] %vm2714, %v3840
      %3873 = vst.msk [vmem:[#allocation5 + $0x8a0] sm:$0xff] %vm2714, %v3841
      %3874 = vst.msk [vmem:[#allocation5 + $0x8e8] sm:$0xff] %vm2714, %v3842
      %v3875 = vld [vmem:[%s3810 + $0x1] sm:$0xff]
      %v3876 = vld [vmem:[%s3810 + $0x9] sm:$0xff]
      %v3877 = vld [vmem:[%s3810 + $0x19] sm:$0xff]
      %v3878 = vld [vmem:[%s3810 + $0x21] sm:$0xff]
      %v3879 = vld [vmem:[%s3810 + $0x31] sm:$0xff]
      %v3880 = vld [vmem:[%s3810 + $0x39] sm:$0xff]
      %v3881 = vld [vmem:[%s3810 + $0x49] sm:$0xff]
      %v3882 = vld [vmem:[%s3810 + $0x51] sm:$0xff]
      %v3883 = vld [vmem:[%s3810 + $0x61] sm:$0xff]
      %v3884 = vld [vmem:[%s3810 + $0x69] sm:$0xff]
      %v3885 = vld [vmem:[%s3810 + $0x79] sm:$0xff]
      %v3886 = vld [vmem:[%s3810 + $0x81] sm:$0xff]
      %v3887 = vld [vmem:[%s3810 + $0x91] sm:$0xff]
      %v3888 = vld [vmem:[%s3810 + $0x99] sm:$0xff]
      %v3889 = vld [vmem:[%s3810 + $0xa9] sm:$0xff]
      %v3890 = vld [vmem:[%s3810 + $0xb1] sm:$0xff]
      %v3891 = vld [vmem:[%s3810 + $0xc1] sm:$0xff]
      %v3892 = vld [vmem:[%s3810 + $0xc9] sm:$0xff]
      %v3893 = vld [vmem:[%s3810 + $0xd9] sm:$0xff]
      %v3894 = vld [vmem:[%s3810 + $0xe1] sm:$0xff]
      %v3895 = vld [vmem:[%s3810 + $0xf1] sm:$0xff]
      %v3896 = vld [vmem:[%s3810 + $0xf9] sm:$0xff]
      %v3897 = vld [vmem:[%s3810 + $0x109] sm:$0xff]
      %v3898 = vld [vmem:[%s3810 + $0x111] sm:$0xff]
      %v3899 = vld [vmem:[%s3810 + $0x121] sm:$0xff]
      %v3900 = vld [vmem:[%s3810 + $0x129] sm:$0xff]
      %v3901 = vld [vmem:[%s3810 + $0x139] sm:$0xff]
      %v3902 = vld [vmem:[%s3810 + $0x141] sm:$0xff]
      %v3903 = vld [vmem:[%s3810 + $0x151] sm:$0xff]
      %v3904 = vld [vmem:[%s3810 + $0x159] sm:$0xff]
      %v3905 = vld [vmem:[%s3810 + $0x169] sm:$0xff]
      %v3906 = vld [vmem:[%s3810 + $0x171] sm:$0xff]
      %3907 = vst.msk [vmem:[#allocation5 + $0x38] sm:$0xff] %vm2714, %v3875
      %3908 = vst.msk [vmem:[#allocation5 + $0x80] sm:$0xff] %vm2714, %v3876
      %3909 = vst.msk [vmem:[#allocation5 + $0xc8] sm:$0xff] %vm2714, %v3877
      %3910 = vst.msk [vmem:[#allocation5 + $0x110] sm:$0xff] %vm2714, %v3878
      %3911 = vst.msk [vmem:[#allocation5 + $0x158] sm:$0xff] %vm2714, %v3879
      %3912 = vst.msk [vmem:[#allocation5 + $0x1a0] sm:$0xff] %vm2714, %v3880
      %3913 = vst.msk [vmem:[#allocation5 + $0x1e8] sm:$0xff] %vm2714, %v3881
      %3914 = vst.msk [vmem:[#allocation5 + $0x230] sm:$0xff] %vm2714, %v3882
      %3915 = vst.msk [vmem:[#allocation5 + $0x278] sm:$0xff] %vm2714, %v3883
      %3916 = vst.msk [vmem:[#allocation5 + $0x2c0] sm:$0xff] %vm2714, %v3884
      %3917 = vst.msk [vmem:[#allocation5 + $0x308] sm:$0xff] %vm2714, %v3885
      %3918 = vst.msk [vmem:[#allocation5 + $0x350] sm:$0xff] %vm2714, %v3886
      %3919 = vst.msk [vmem:[#allocation5 + $0x398] sm:$0xff] %vm2714, %v3887
      %3920 = vst.msk [vmem:[#allocation5 + $0x3e0] sm:$0xff] %vm2714, %v3888
      %3921 = vst.msk [vmem:[#allocation5 + $0x428] sm:$0xff] %vm2714, %v3889
      %3922 = vst.msk [vmem:[#allocation5 + $0x470] sm:$0xff] %vm2714, %v3890
      %3923 = vst.msk [vmem:[#allocation5 + $0x4b8] sm:$0xff] %vm2714, %v3891
      %3924 = vst.msk [vmem:[#allocation5 + $0x500] sm:$0xff] %vm2714, %v3892
      %3925 = vst.msk [vmem:[#allocation5 + $0x548] sm:$0xff] %vm2714, %v3893
      %3926 = vst.msk [vmem:[#allocation5 + $0x590] sm:$0xff] %vm2714, %v3894
      %3927 = vst.msk [vmem:[#allocation5 + $0x5d8] sm:$0xff] %vm2714, %v3895
      %3928 = vst.msk [vmem:[#allocation5 + $0x620] sm:$0xff] %vm2714, %v3896
      %3929 = vst.msk [vmem:[#allocation5 + $0x668] sm:$0xff] %vm2714, %v3897
      %3930 = vst.msk [vmem:[#allocation5 + $0x6b0] sm:$0xff] %vm2714, %v3898
      %3931 = vst.msk [vmem:[#allocation5 + $0x6f8] sm:$0xff] %vm2714, %v3899
      %3932 = vst.msk [vmem:[#allocation5 + $0x740] sm:$0xff] %vm2714, %v3900
      %3933 = vst.msk [vmem:[#allocation5 + $0x788] sm:$0xff] %vm2714, %v3901
      %3934 = vst.msk [vmem:[#allocation5 + $0x7d0] sm:$0xff] %vm2714, %v3902
      %3935 = vst.msk [vmem:[#allocation5 + $0x818] sm:$0xff] %vm2714, %v3903
      %3936 = vst.msk [vmem:[#allocation5 + $0x860] sm:$0xff] %vm2714, %v3904
      %3937 = vst.msk [vmem:[#allocation5 + $0x8a8] sm:$0xff] %vm2714, %v3905
      %3938 = vst.msk [vmem:[#allocation5 + $0x8f0] sm:$0xff] %vm2714, %v3906
      %v3939 = vld [vmem:[%s3810 + $0x2] sm:$0xff]
      %v3940 = vld [vmem:[%s3810 + $0xa] sm:$0xff]
      %v3941 = vld [vmem:[%s3810 + $0x1a] sm:$0xff]
      %v3942 = vld [vmem:[%s3810 + $0x22] sm:$0xff]
      %v3943 = vld [vmem:[%s3810 + $0x32] sm:$0xff]
      %v3944 = vld [vmem:[%s3810 + $0x3a] sm:$0xff]
      %v3945 = vld [vmem:[%s3810 + $0x4a] sm:$0xff]
      %v3946 = vld [vmem:[%s3810 + $0x52] sm:$0xff]
      %v3947 = vld [vmem:[%s3810 + $0x62] sm:$0xff]
      %v3948 = vld [vmem:[%s3810 + $0x6a] sm:$0xff]
      %v3949 = vld [vmem:[%s3810 + $0x7a] sm:$0xff]
      %v3950 = vld [vmem:[%s3810 + $0x82] sm:$0xff]
      %v3951 = vld [vmem:[%s3810 + $0x92] sm:$0xff]
      %v3952 = vld [vmem:[%s3810 + $0x9a] sm:$0xff]
      %v3953 = vld [vmem:[%s3810 + $0xaa] sm:$0xff]
      %v3954 = vld [vmem:[%s3810 + $0xb2] sm:$0xff]
      %v3955 = vld [vmem:[%s3810 + $0xc2] sm:$0xff]
      %v3956 = vld [vmem:[%s3810 + $0xca] sm:$0xff]
      %v3957 = vld [vmem:[%s3810 + $0xda] sm:$0xff]
      %v3958 = vld [vmem:[%s3810 + $0xe2] sm:$0xff]
      %v3959 = vld [vmem:[%s3810 + $0xf2] sm:$0xff]
      %v3960 = vld [vmem:[%s3810 + $0xfa] sm:$0xff]
      %v3961 = vld [vmem:[%s3810 + $0x10a] sm:$0xff]
      %v3962 = vld [vmem:[%s3810 + $0x112] sm:$0xff]
      %v3963 = vld [vmem:[%s3810 + $0x122] sm:$0xff]
      %v3964 = vld [vmem:[%s3810 + $0x12a] sm:$0xff]
      %v3965 = vld [vmem:[%s3810 + $0x13a] sm:$0xff]
      %v3966 = vld [vmem:[%s3810 + $0x142] sm:$0xff]
      %v3967 = vld [vmem:[%s3810 + $0x152] sm:$0xff]
      %v3968 = vld [vmem:[%s3810 + $0x15a] sm:$0xff]
      %v3969 = vld [vmem:[%s3810 + $0x16a] sm:$0xff]
      %v3970 = vld [vmem:[%s3810 + $0x172] sm:$0xff]
      %3971 = vst.msk [vmem:[#allocation5 + $0x40] sm:$0xff] %vm2714, %v3939
      %3972 = vst.msk [vmem:[#allocation5 + $0x88] sm:$0xff] %vm2714, %v3940
      %3973 = vst.msk [vmem:[#allocation5 + $0xd0] sm:$0xff] %vm2714, %v3941
      %3974 = vst.msk [vmem:[#allocation5 + $0x118] sm:$0xff] %vm2714, %v3942
      %3975 = vst.msk [vmem:[#allocation5 + $0x160] sm:$0xff] %vm2714, %v3943
      %3976 = vst.msk [vmem:[#allocation5 + $0x1a8] sm:$0xff] %vm2714, %v3944
      %3977 = vst.msk [vmem:[#allocation5 + $0x1f0] sm:$0xff] %vm2714, %v3945
      %3978 = vst.msk [vmem:[#allocation5 + $0x238] sm:$0xff] %vm2714, %v3946
      %3979 = vst.msk [vmem:[#allocation5 + $0x280] sm:$0xff] %vm2714, %v3947
      %3980 = vst.msk [vmem:[#allocation5 + $0x2c8] sm:$0xff] %vm2714, %v3948
      %3981 = vst.msk [vmem:[#allocation5 + $0x310] sm:$0xff] %vm2714, %v3949
      %3982 = vst.msk [vmem:[#allocation5 + $0x358] sm:$0xff] %vm2714, %v3950
      %3983 = vst.msk [vmem:[#allocation5 + $0x3a0] sm:$0xff] %vm2714, %v3951
      %3984 = vst.msk [vmem:[#allocation5 + $0x3e8] sm:$0xff] %vm2714, %v3952
      %3985 = vst.msk [vmem:[#allocation5 + $0x430] sm:$0xff] %vm2714, %v3953
      %3986 = vst.msk [vmem:[#allocation5 + $0x478] sm:$0xff] %vm2714, %v3954
      %3987 = vst.msk [vmem:[#allocation5 + $0x4c0] sm:$0xff] %vm2714, %v3955
      %3988 = vst.msk [vmem:[#allocation5 + $0x508] sm:$0xff] %vm2714, %v3956
      %3989 = vst.msk [vmem:[#allocation5 + $0x550] sm:$0xff] %vm2714, %v3957
      %3990 = vst.msk [vmem:[#allocation5 + $0x598] sm:$0xff] %vm2714, %v3958
      %3991 = vst.msk [vmem:[#allocation5 + $0x5e0] sm:$0xff] %vm2714, %v3959
      %3992 = vst.msk [vmem:[#allocation5 + $0x628] sm:$0xff] %vm2714, %v3960
      %3993 = vst.msk [vmem:[#allocation5 + $0x670] sm:$0xff] %vm2714, %v3961
      %3994 = vst.msk [vmem:[#allocation5 + $0x6b8] sm:$0xff] %vm2714, %v3962
      %3995 = vst.msk [vmem:[#allocation5 + $0x700] sm:$0xff] %vm2714, %v3963
      %3996 = vst.msk [vmem:[#allocation5 + $0x748] sm:$0xff] %vm2714, %v3964
      %3997 = vst.msk [vmem:[#allocation5 + $0x790] sm:$0xff] %vm2714, %v3965
      %3998 = vst.msk [vmem:[#allocation5 + $0x7d8] sm:$0xff] %vm2714, %v3966
      %3999 = vst.msk [vmem:[#allocation5 + $0x820] sm:$0xff] %vm2714, %v3967
      %4000 = vst.msk [vmem:[#allocation5 + $0x868] sm:$0xff] %vm2714, %v3968
      %4001 = vst.msk [vmem:[#allocation5 + $0x8b0] sm:$0xff] %vm2714, %v3969
      %4002 = vst.msk [vmem:[#allocation5 + $0x8f8] sm:$0xff] %vm2714, %v3970
      %v4003 = vld [vmem:[#allocation5] sm:$0xff]
      %v4004 = vld [vmem:[#allocation5 + $0x8] sm:$0xff]
      %v4005 = vld [vmem:[#allocation5 + $0x10] sm:$0xff]
      %v4006 = vld [vmem:[#allocation5 + $0x18] sm:$0xff]
      %v4007 = vld [vmem:[#allocation5 + $0x20] sm:$0xff]
      %v4008 = vld [vmem:[#allocation5 + $0x28] sm:$0xff]
      %v4009 = vld [vmem:[#allocation5 + $0x30] sm:$0xff]
      %v4010 = vld [vmem:[#allocation5 + $0x38] sm:$0xff]
      %v4011 = vld [vmem:[#allocation5 + $0x40] sm:$0xff]
      %v4012 = vld [vmem:[#allocation5 + $0x48] sm:$0xff]
      %v4013 = vld [vmem:[#allocation5 + $0x50] sm:$0xff]
      %v4014 = vld [vmem:[#allocation5 + $0x58] sm:$0xff]
      %v4015 = vld [vmem:[#allocation5 + $0x60] sm:$0xff]
      %v4016 = vld [vmem:[#allocation5 + $0x68] sm:$0xff]
      %v4017 = vld [vmem:[#allocation5 + $0x70] sm:$0xff]
      %v4018 = vld [vmem:[#allocation5 + $0x78] sm:$0xff]
      %v4019 = vld [vmem:[#allocation5 + $0x80] sm:$0xff]
      %v4020 = vld [vmem:[#allocation5 + $0x88] sm:$0xff]
      %v4021 = vld [vmem:[#allocation5 + $0x90] sm:$0xff]
      %v4022 = vld [vmem:[#allocation5 + $0x98] sm:$0xff]
      %v4023 = vld [vmem:[#allocation5 + $0xa0] sm:$0xff]
      %v4024 = vld [vmem:[#allocation5 + $0xa8] sm:$0xff]
      %v4025 = vld [vmem:[#allocation5 + $0xb0] sm:$0xff]
      %v4026 = vld [vmem:[#allocation5 + $0xb8] sm:$0xff]
      %v4027 = vld [vmem:[#allocation5 + $0xc0] sm:$0xff]
      %v4028 = vld [vmem:[#allocation5 + $0xc8] sm:$0xff]
      %v4029 = vld [vmem:[#allocation5 + $0xd0] sm:$0xff]
      %v4030 = vld [vmem:[#allocation5 + $0xd8] sm:$0xff]
      %v4031 = vld [vmem:[#allocation5 + $0xe0] sm:$0xff]
      %v4032 = vld [vmem:[#allocation5 + $0xe8] sm:$0xff]
      %v4033 = vld [vmem:[#allocation5 + $0xf0] sm:$0xff]
      %v4034 = vld [vmem:[#allocation5 + $0xf8] sm:$0xff]
      %v4035 = vld [vmem:[#allocation5 + $0x100] sm:$0xff]
      %v4036 = vld [vmem:[#allocation5 + $0x108] sm:$0xff]
      %v4037 = vld [vmem:[#allocation5 + $0x110] sm:$0xff]
      %v4038 = vld [vmem:[#allocation5 + $0x118] sm:$0xff]
      %v4039 = vld [vmem:[#allocation5 + $0x120] sm:$0xff]
      %v4040 = vld [vmem:[#allocation5 + $0x128] sm:$0xff]
      %v4041 = vld [vmem:[#allocation5 + $0x130] sm:$0xff]
      %v4042 = vld [vmem:[#allocation5 + $0x138] sm:$0xff]
      %v4043 = vld [vmem:[#allocation5 + $0x140] sm:$0xff]
      %v4044 = vld [vmem:[#allocation5 + $0x148] sm:$0xff]
      %v4045 = vld [vmem:[#allocation5 + $0x150] sm:$0xff]
      %v4046 = vld [vmem:[#allocation5 + $0x158] sm:$0xff]
      %v4047 = vld [vmem:[#allocation5 + $0x160] sm:$0xff]
      %v4048 = vld [vmem:[#allocation5 + $0x168] sm:$0xff]
      %v4049 = vld [vmem:[#allocation5 + $0x170] sm:$0xff]
      %v4050 = vld [vmem:[#allocation5 + $0x178] sm:$0xff]
      %v4051 = vld [vmem:[#allocation5 + $0x180] sm:$0xff]
      %v4052 = vld [vmem:[#allocation5 + $0x188] sm:$0xff]
      %v4053 = vld [vmem:[#allocation5 + $0x190] sm:$0xff]
      %v4054 = vld [vmem:[#allocation5 + $0x198] sm:$0xff]
      %v4055 = vld [vmem:[#allocation5 + $0x1a0] sm:$0xff]
      %v4056 = vld [vmem:[#allocation5 + $0x1a8] sm:$0xff]
      %v4057 = vld [vmem:[#allocation5 + $0x1b0] sm:$0xff]
      %v4058 = vld [vmem:[#allocation5 + $0x1b8] sm:$0xff]
      %v4059 = vld [vmem:[#allocation5 + $0x1c0] sm:$0xff]
      %v4060 = vld [vmem:[#allocation5 + $0x1c8] sm:$0xff]
      %v4061 = vld [vmem:[#allocation5 + $0x1d0] sm:$0xff]
      %v4062 = vld [vmem:[#allocation5 + $0x1d8] sm:$0xff]
      %v4063 = vld [vmem:[#allocation5 + $0x1e0] sm:$0xff]
      %v4064 = vld [vmem:[#allocation5 + $0x1e8] sm:$0xff]
      %v4065 = vld [vmem:[#allocation5 + $0x1f0] sm:$0xff]
      %v4066 = vld [vmem:[#allocation5 + $0x1f8] sm:$0xff]
      %v4067 = vld [vmem:[#allocation5 + $0x200] sm:$0xff]
      %v4068 = vld [vmem:[#allocation5 + $0x208] sm:$0xff]
      %v4069 = vld [vmem:[#allocation5 + $0x210] sm:$0xff]
      %v4070 = vld [vmem:[#allocation5 + $0x218] sm:$0xff]
      %v4071 = vld [vmem:[#allocation5 + $0x220] sm:$0xff]
      %v4072 = vld [vmem:[#allocation5 + $0x228] sm:$0xff]
      %v4073 = vld [vmem:[#allocation5 + $0x230] sm:$0xff]
      %v4074 = vld [vmem:[#allocation5 + $0x238] sm:$0xff]
      %v4075 = vld [vmem:[#allocation5 + $0x240] sm:$0xff]
      %v4076 = vld [vmem:[#allocation5 + $0x248] sm:$0xff]
      %v4077 = vld [vmem:[#allocation5 + $0x250] sm:$0xff]
      %v4078 = vld [vmem:[#allocation5 + $0x258] sm:$0xff]
      %v4079 = vld [vmem:[#allocation5 + $0x260] sm:$0xff]
      %v4080 = vld [vmem:[#allocation5 + $0x268] sm:$0xff]
      %v4081 = vld [vmem:[#allocation5 + $0x270] sm:$0xff]
      %v4082 = vld [vmem:[#allocation5 + $0x278] sm:$0xff]
      %v4083 = vld [vmem:[#allocation5 + $0x280] sm:$0xff]
      %v4084 = vld [vmem:[#allocation5 + $0x288] sm:$0xff]
      %v4085 = vld [vmem:[#allocation5 + $0x290] sm:$0xff]
      %v4086 = vld [vmem:[#allocation5 + $0x298] sm:$0xff]
      %v4087 = vld [vmem:[#allocation5 + $0x2a0] sm:$0xff]
      %v4088 = vld [vmem:[#allocation5 + $0x2a8] sm:$0xff]
      %v4089 = vld [vmem:[#allocation5 + $0x2b0] sm:$0xff]
      %v4090 = vld [vmem:[#allocation5 + $0x2b8] sm:$0xff]
      %v4091 = vld [vmem:[#allocation5 + $0x2c0] sm:$0xff]
      %v4092 = vld [vmem:[#allocation5 + $0x2c8] sm:$0xff]
      %v4093 = vld [vmem:[#allocation5 + $0x2d0] sm:$0xff]
      %v4094 = vld [vmem:[#allocation5 + $0x2d8] sm:$0xff]
      %v4095 = vld [vmem:[#allocation5 + $0x2e0] sm:$0xff]
      %v4096 = vld [vmem:[#allocation5 + $0x2e8] sm:$0xff]
      %v4097 = vld [vmem:[#allocation5 + $0x2f0] sm:$0xff]
      %v4098 = vld [vmem:[#allocation5 + $0x2f8] sm:$0xff]
      %v4099 = vld [vmem:[#allocation5 + $0x300] sm:$0xff]
      %v4100 = vld [vmem:[#allocation5 + $0x308] sm:$0xff]
      %v4101 = vld [vmem:[#allocation5 + $0x310] sm:$0xff]
      %v4102 = vld [vmem:[#allocation5 + $0x318] sm:$0xff]
      %v4103 = vld [vmem:[#allocation5 + $0x320] sm:$0xff]
      %v4104 = vld [vmem:[#allocation5 + $0x328] sm:$0xff]
      %v4105 = vld [vmem:[#allocation5 + $0x330] sm:$0xff]
      %v4106 = vld [vmem:[#allocation5 + $0x338] sm:$0xff]
      %v4107 = vld [vmem:[#allocation5 + $0x340] sm:$0xff]
      %v4108 = vld [vmem:[#allocation5 + $0x348] sm:$0xff]
      %v4109 = vld [vmem:[#allocation5 + $0x350] sm:$0xff]
      %v4110 = vld [vmem:[#allocation5 + $0x358] sm:$0xff]
      %v4111 = vld [vmem:[#allocation5 + $0x360] sm:$0xff]
      %v4112 = vld [vmem:[#allocation5 + $0x368] sm:$0xff]
      %v4113 = vld [vmem:[#allocation5 + $0x370] sm:$0xff]
      %v4114 = vld [vmem:[#allocation5 + $0x378] sm:$0xff]
      %v4115 = vld [vmem:[#allocation5 + $0x380] sm:$0xff]
      %v4116 = vld [vmem:[#allocation5 + $0x388] sm:$0xff]
      %v4117 = vld [vmem:[#allocation5 + $0x390] sm:$0xff]
      %v4118 = vld [vmem:[#allocation5 + $0x398] sm:$0xff]
      %v4119 = vld [vmem:[#allocation5 + $0x3a0] sm:$0xff]
      %v4120 = vld [vmem:[#allocation5 + $0x3a8] sm:$0xff]
      %v4121 = vld [vmem:[#allocation5 + $0x3b0] sm:$0xff]
      %v4122 = vld [vmem:[#allocation5 + $0x3b8] sm:$0xff]
      %v4123 = vld [vmem:[#allocation5 + $0x3c0] sm:$0xff]
      %v4124 = vld [vmem:[#allocation5 + $0x3c8] sm:$0xff]
      %v4125 = vld [vmem:[#allocation5 + $0x3d0] sm:$0xff]
      %v4126 = vld [vmem:[#allocation5 + $0x3d8] sm:$0xff]
      %v4127 = vld [vmem:[#allocation5 + $0x3e0] sm:$0xff]
      %v4128 = vld [vmem:[#allocation5 + $0x3e8] sm:$0xff]
      %v4129 = vld [vmem:[#allocation5 + $0x3f0] sm:$0xff]
      %v4130 = vld [vmem:[#allocation5 + $0x3f8] sm:$0xff]
      %v4131 = vld [vmem:[#allocation5 + $0x400] sm:$0xff]
      %v4132 = vld [vmem:[#allocation5 + $0x408] sm:$0xff]
      %v4133 = vld [vmem:[#allocation5 + $0x410] sm:$0xff]
      %v4134 = vld [vmem:[#allocation5 + $0x418] sm:$0xff]
      %v4135 = vld [vmem:[#allocation5 + $0x420] sm:$0xff]
      %v4136 = vld [vmem:[#allocation5 + $0x428] sm:$0xff]
      %v4137 = vld [vmem:[#allocation5 + $0x430] sm:$0xff]
      %v4138 = vld [vmem:[#allocation5 + $0x438] sm:$0xff]
      %v4139 = vld [vmem:[#allocation5 + $0x440] sm:$0xff]
      %v4140 = vld [vmem:[#allocation5 + $0x448] sm:$0xff]
      %v4141 = vld [vmem:[#allocation5 + $0x450] sm:$0xff]
      %v4142 = vld [vmem:[#allocation5 + $0x458] sm:$0xff]
      %v4143 = vld [vmem:[#allocation5 + $0x460] sm:$0xff]
      %v4144 = vld [vmem:[#allocation5 + $0x468] sm:$0xff]
      %v4145 = vld [vmem:[#allocation5 + $0x470] sm:$0xff]
      %v4146 = vld [vmem:[#allocation5 + $0x478] sm:$0xff]
      %v4147 = vld [vmem:[#allocation5 + $0x480] sm:$0xff]
      %v4148 = vld [vmem:[#allocation5 + $0x488] sm:$0xff]
      %v4149 = vld [vmem:[#allocation5 + $0x490] sm:$0xff]
      %v4150 = vld [vmem:[#allocation5 + $0x498] sm:$0xff]
      %v4151 = vld [vmem:[#allocation5 + $0x4a0] sm:$0xff]
      %v4152 = vld [vmem:[#allocation5 + $0x4a8] sm:$0xff]
      %v4153 = vld [vmem:[#allocation5 + $0x4b0] sm:$0xff]
      %v4154 = vld [vmem:[#allocation5 + $0x4b8] sm:$0xff]
      %v4155 = vld [vmem:[#allocation5 + $0x4c0] sm:$0xff]
      %v4156 = vld [vmem:[#allocation5 + $0x4c8] sm:$0xff]
      %v4157 = vld [vmem:[#allocation5 + $0x4d0] sm:$0xff]
      %v4158 = vld [vmem:[#allocation5 + $0x4d8] sm:$0xff]
      %v4159 = vld [vmem:[#allocation5 + $0x4e0] sm:$0xff]
      %v4160 = vld [vmem:[#allocation5 + $0x4e8] sm:$0xff]
      %v4161 = vld [vmem:[#allocation5 + $0x4f0] sm:$0xff]
      %v4162 = vld [vmem:[#allocation5 + $0x4f8] sm:$0xff]
      %v4163 = vld [vmem:[#allocation5 + $0x500] sm:$0xff]
      %v4164 = vld [vmem:[#allocation5 + $0x508] sm:$0xff]
      %v4165 = vld [vmem:[#allocation5 + $0x510] sm:$0xff]
      %v4166 = vld [vmem:[#allocation5 + $0x518] sm:$0xff]
      %v4167 = vld [vmem:[#allocation5 + $0x520] sm:$0xff]
      %v4168 = vld [vmem:[#allocation5 + $0x528] sm:$0xff]
      %v4169 = vld [vmem:[#allocation5 + $0x530] sm:$0xff]
      %v4170 = vld [vmem:[#allocation5 + $0x538] sm:$0xff]
      %v4171 = vld [vmem:[#allocation5 + $0x540] sm:$0xff]
      %v4172 = vld [vmem:[#allocation5 + $0x548] sm:$0xff]
      %v4173 = vld [vmem:[#allocation5 + $0x550] sm:$0xff]
      %v4174 = vld [vmem:[#allocation5 + $0x558] sm:$0xff]
      %v4175 = vld [vmem:[#allocation5 + $0x560] sm:$0xff]
      %v4176 = vld [vmem:[#allocation5 + $0x568] sm:$0xff]
      %v4177 = vld [vmem:[#allocation5 + $0x570] sm:$0xff]
      %v4178 = vld [vmem:[#allocation5 + $0x578] sm:$0xff]
      %v4179 = vld [vmem:[#allocation5 + $0x580] sm:$0xff]
      %v4180 = vld [vmem:[#allocation5 + $0x588] sm:$0xff]
      %v4181 = vld [vmem:[#allocation5 + $0x590] sm:$0xff]
      %v4182 = vld [vmem:[#allocation5 + $0x598] sm:$0xff]
      %v4183 = vld [vmem:[#allocation5 + $0x5a0] sm:$0xff]
      %v4184 = vld [vmem:[#allocation5 + $0x5a8] sm:$0xff]
      %v4185 = vld [vmem:[#allocation5 + $0x5b0] sm:$0xff]
      %v4186 = vld [vmem:[#allocation5 + $0x5b8] sm:$0xff]
      %v4187 = vld [vmem:[#allocation5 + $0x5c0] sm:$0xff]
      %v4188 = vld [vmem:[#allocation5 + $0x5c8] sm:$0xff]
      %v4189 = vld [vmem:[#allocation5 + $0x5d0] sm:$0xff]
      %v4190 = vld [vmem:[#allocation5 + $0x5d8] sm:$0xff]
      %v4191 = vld [vmem:[#allocation5 + $0x5e0] sm:$0xff]
      %v4192 = vld [vmem:[#allocation5 + $0x5e8] sm:$0xff]
      %v4193 = vld [vmem:[#allocation5 + $0x5f0] sm:$0xff]
      %v4194 = vld [vmem:[#allocation5 + $0x5f8] sm:$0xff]
      %v4195 = vld [vmem:[#allocation5 + $0x600] sm:$0xff]
      %v4196 = vld [vmem:[#allocation5 + $0x608] sm:$0xff]
      %v4197 = vld [vmem:[#allocation5 + $0x610] sm:$0xff]
      %v4198 = vld [vmem:[#allocation5 + $0x618] sm:$0xff]
      %v4199 = vld [vmem:[#allocation5 + $0x620] sm:$0xff]
      %v4200 = vld [vmem:[#allocation5 + $0x628] sm:$0xff]
      %v4201 = vld [vmem:[#allocation5 + $0x630] sm:$0xff]
      %v4202 = vld [vmem:[#allocation5 + $0x638] sm:$0xff]
      %v4203 = vld [vmem:[#allocation5 + $0x640] sm:$0xff]
      %v4204 = vld [vmem:[#allocation5 + $0x648] sm:$0xff]
      %v4205 = vld [vmem:[#allocation5 + $0x650] sm:$0xff]
      %v4206 = vld [vmem:[#allocation5 + $0x658] sm:$0xff]
      %v4207 = vld [vmem:[#allocation5 + $0x660] sm:$0xff]
      %v4208 = vld [vmem:[#allocation5 + $0x668] sm:$0xff]
      %v4209 = vld [vmem:[#allocation5 + $0x670] sm:$0xff]
      %v4210 = vld [vmem:[#allocation5 + $0x678] sm:$0xff]
      %v4211 = vld [vmem:[#allocation5 + $0x680] sm:$0xff]
      %v4212 = vld [vmem:[#allocation5 + $0x688] sm:$0xff]
      %v4213 = vld [vmem:[#allocation5 + $0x690] sm:$0xff]
      %v4214 = vld [vmem:[#allocation5 + $0x698] sm:$0xff]
      %v4215 = vld [vmem:[#allocation5 + $0x6a0] sm:$0xff]
      %v4216 = vld [vmem:[#allocation5 + $0x6a8] sm:$0xff]
      %v4217 = vld [vmem:[#allocation5 + $0x6b0] sm:$0xff]
      %v4218 = vld [vmem:[#allocation5 + $0x6b8] sm:$0xff]
      %v4219 = vld [vmem:[#allocation5 + $0x6c0] sm:$0xff]
      %v4220 = vld [vmem:[#allocation5 + $0x6c8] sm:$0xff]
      %v4221 = vld [vmem:[#allocation5 + $0x6d0] sm:$0xff]
      %v4222 = vld [vmem:[#allocation5 + $0x6d8] sm:$0xff]
      %v4223 = vld [vmem:[#allocation5 + $0x6e0] sm:$0xff]
      %v4224 = vld [vmem:[#allocation5 + $0x6e8] sm:$0xff]
      %v4225 = vld [vmem:[#allocation5 + $0x6f0] sm:$0xff]
      %v4226 = vld [vmem:[#allocation5 + $0x6f8] sm:$0xff]
      %v4227 = vld [vmem:[#allocation5 + $0x700] sm:$0xff]
      %v4228 = vld [vmem:[#allocation5 + $0x708] sm:$0xff]
      %v4229 = vld [vmem:[#allocation5 + $0x710] sm:$0xff]
      %v4230 = vld [vmem:[#allocation5 + $0x718] sm:$0xff]
      %v4231 = vld [vmem:[#allocation5 + $0x720] sm:$0xff]
      %v4232 = vld [vmem:[#allocation5 + $0x728] sm:$0xff]
      %v4233 = vld [vmem:[#allocation5 + $0x730] sm:$0xff]
      %v4234 = vld [vmem:[#allocation5 + $0x738] sm:$0xff]
      %v4235 = vld [vmem:[#allocation5 + $0x740] sm:$0xff]
      %v4236 = vld [vmem:[#allocation5 + $0x748] sm:$0xff]
      %v4237 = vld [vmem:[#allocation5 + $0x750] sm:$0xff]
      %v4238 = vld [vmem:[#allocation5 + $0x758] sm:$0xff]
      %v4239 = vld [vmem:[#allocation5 + $0x760] sm:$0xff]
      %v4240 = vld [vmem:[#allocation5 + $0x768] sm:$0xff]
      %v4241 = vld [vmem:[#allocation5 + $0x770] sm:$0xff]
      %v4242 = vld [vmem:[#allocation5 + $0x778] sm:$0xff]
      %v4243 = vld [vmem:[#allocation5 + $0x780] sm:$0xff]
      %v4244 = vld [vmem:[#allocation5 + $0x788] sm:$0xff]
      %v4245 = vld [vmem:[#allocation5 + $0x790] sm:$0xff]
      %v4246 = vld [vmem:[#allocation5 + $0x798] sm:$0xff]
      %v4247 = vld [vmem:[#allocation5 + $0x7a0] sm:$0xff]
      %v4248 = vld [vmem:[#allocation5 + $0x7a8] sm:$0xff]
      %v4249 = vld [vmem:[#allocation5 + $0x7b0] sm:$0xff]
      %v4250 = vld [vmem:[#allocation5 + $0x7b8] sm:$0xff]
      %v4251 = vld [vmem:[#allocation5 + $0x7c0] sm:$0xff]
      %v4252 = vld [vmem:[#allocation5 + $0x7c8] sm:$0xff]
      %v4253 = vld [vmem:[#allocation5 + $0x7d0] sm:$0xff]
      %v4254 = vld [vmem:[#allocation5 + $0x7d8] sm:$0xff]
      %v4255 = vld [vmem:[#allocation5 + $0x7e0] sm:$0xff]
      %v4256 = vld [vmem:[#allocation5 + $0x7e8] sm:$0xff]
      %v4257 = vld [vmem:[#allocation5 + $0x7f0] sm:$0xff]
      %v4258 = vld [vmem:[#allocation5 + $0x7f8] sm:$0xff]
      %v4259 = vld [vmem:[#allocation5 + $0x800] sm:$0xff]
      %v4260 = vld [vmem:[#allocation5 + $0x808] sm:$0xff]
      %v4261 = vld [vmem:[#allocation5 + $0x810] sm:$0xff]
      %v4262 = vld [vmem:[#allocation5 + $0x818] sm:$0xff]
      %v4263 = vld [vmem:[#allocation5 + $0x820] sm:$0xff]
      %v4264 = vld [vmem:[#allocation5 + $0x828] sm:$0xff]
      %v4265 = vld [vmem:[#allocation5 + $0x830] sm:$0xff]
      %v4266 = vld [vmem:[#allocation5 + $0x838] sm:$0xff]
      %v4267 = vld [vmem:[#allocation5 + $0x840] sm:$0xff]
      %v4268 = vld [vmem:[#allocation5 + $0x848] sm:$0xff]
      %v4269 = vld [vmem:[#allocation5 + $0x850] sm:$0xff]
      %v4270 = vld [vmem:[#allocation5 + $0x858] sm:$0xff]
      %v4271 = vld [vmem:[#allocation5 + $0x860] sm:$0xff]
      %v4272 = vld [vmem:[#allocation5 + $0x868] sm:$0xff]
      %v4273 = vld [vmem:[#allocation5 + $0x870] sm:$0xff]
      %v4274 = vld [vmem:[#allocation5 + $0x878] sm:$0xff]
      %v4275 = vld [vmem:[#allocation5 + $0x880] sm:$0xff]
      %v4276 = vld [vmem:[#allocation5 + $0x888] sm:$0xff]
      %v4277 = vld [vmem:[#allocation5 + $0x890] sm:$0xff]
      %v4278 = vld [vmem:[#allocation5 + $0x898] sm:$0xff]
      %v4279 = vld [vmem:[#allocation5 + $0x8a0] sm:$0xff]
      %v4280 = vld [vmem:[#allocation5 + $0x8a8] sm:$0xff]
      %v4281 = vld [vmem:[#allocation5 + $0x8b0] sm:$0xff]
      %v4282 = vld [vmem:[#allocation5 + $0x8b8] sm:$0xff]
      %v4283 = vld [vmem:[#allocation5 + $0x8c0] sm:$0xff]
      %v4284 = vld [vmem:[#allocation5 + $0x8c8] sm:$0xff]
      %v4285 = vld [vmem:[#allocation5 + $0x8d0] sm:$0xff]
      %v4286 = vld [vmem:[#allocation5 + $0x8d8] sm:$0xff]
      %v4287 = vld [vmem:[#allocation5 + $0x8e0] sm:$0xff]
      %v4288 = vld [vmem:[#allocation5 + $0x8e8] sm:$0xff]
      %v4289 = vld [vmem:[#allocation5 + $0x8f0] sm:$0xff]
      %v4290 = vld [vmem:[#allocation5 + $0x8f8] sm:$0xff]
      %v4291 = vld [vmem:[%s2] sm:$0xff]
      %v4292 = vld [vmem:[%s2 + $0x8] sm:$0xff]
      %v4293 = vld [vmem:[%s2 + $0x10] sm:$0xff]
      %v4294 = vld [vmem:[%s2 + $0x18] sm:$0xff]
      %v4295 = vld [vmem:[%s2 + $0x20] sm:$0xff]
      %v4296 = vld [vmem:[%s2 + $0x28] sm:$0xff]
      %v4297 = vld [vmem:[%s2 + $0x30] sm:$0xff]
      %v4298 = vld [vmem:[%s2 + $0x38] sm:$0xff]
      %v4299 = vld [vmem:[%s2 + $0x40] sm:$0xff]
      %v4300 = vld [vmem:[%s2 + $0x48] sm:$0xff]
      %v4301 = vld [vmem:[%s2 + $0x50] sm:$0xff]
      %v4302 = vld [vmem:[%s2 + $0x58] sm:$0xff]
      %v4303 = vld [vmem:[%s2 + $0x60] sm:$0xff]
      %v4304 = vld [vmem:[%s2 + $0x68] sm:$0xff]
      %v4305 = vld [vmem:[%s2 + $0x70] sm:$0xff]
      %v4306 = vld [vmem:[%s2 + $0x78] sm:$0xff]
      %v4307 = vld [vmem:[%s2 + $0x80] sm:$0xff]
      %v4308 = vld [vmem:[%s2 + $0x88] sm:$0xff]
      %v4309 = vld [vmem:[%s2 + $0x90] sm:$0xff]
      %v4310 = vld [vmem:[%s2 + $0x98] sm:$0xff]
      %v4311 = vld [vmem:[%s2 + $0xa0] sm:$0xff]
      %v4312 = vld [vmem:[%s2 + $0xa8] sm:$0xff]
      %v4313 = vld [vmem:[%s2 + $0xb0] sm:$0xff]
      %v4314 = vld [vmem:[%s2 + $0xb8] sm:$0xff]
      %v4315 = vld [vmem:[%s2 + $0xc0] sm:$0xff]
      %v4316 = vld [vmem:[%s2 + $0xc8] sm:$0xff]
      %v4317 = vld [vmem:[%s2 + $0xd0] sm:$0xff]
      %v4318 = vld [vmem:[%s2 + $0xd8] sm:$0xff]
      %v4319 = vld [vmem:[%s2 + $0xe0] sm:$0xff]
      %v4320 = vld [vmem:[%s2 + $0xe8] sm:$0xff]
      %v4321 = vld [vmem:[%s2 + $0xf0] sm:$0xff]
      %v4322 = vld [vmem:[%s2 + $0xf8] sm:$0xff]
      %v4323 = vld [vmem:[%s2 + $0x100] sm:$0xff]
      %v4324 = vld [vmem:[%s2 + $0x108] sm:$0xff]
      %v4325 = vld [vmem:[%s2 + $0x110] sm:$0xff]
      %v4326 = vld [vmem:[%s2 + $0x118] sm:$0xff]
      %v4327 = vld [vmem:[%s2 + $0x120] sm:$0xff]
      %v4328 = vld [vmem:[%s2 + $0x128] sm:$0xff]
      %v4329 = vld [vmem:[%s2 + $0x130] sm:$0xff]
      %v4330 = vld [vmem:[%s2 + $0x138] sm:$0xff]
      %v4331 = vld [vmem:[%s2 + $0x140] sm:$0xff]
      %v4332 = vld [vmem:[%s2 + $0x148] sm:$0xff]
      %v4333 = vld [vmem:[%s2 + $0x150] sm:$0xff]
      %v4334 = vld [vmem:[%s2 + $0x158] sm:$0xff]
      %v4335 = vld [vmem:[%s2 + $0x160] sm:$0xff]
      %v4336 = vld [vmem:[%s2 + $0x168] sm:$0xff]
      %v4337 = vld [vmem:[%s2 + $0x170] sm:$0xff]
      %v4338 = vld [vmem:[%s2 + $0x178] sm:$0xff]
      %v4339 = vld [vmem:[%s2 + $0x180] sm:$0xff]
      %v4340 = vld [vmem:[%s2 + $0x188] sm:$0xff]
      %v4341 = vld [vmem:[%s2 + $0x190] sm:$0xff]
      %v4342 = vld [vmem:[%s2 + $0x198] sm:$0xff]
      %v4343 = vld [vmem:[%s2 + $0x1a0] sm:$0xff]
      %v4344 = vld [vmem:[%s2 + $0x1a8] sm:$0xff]
      %v4345 = vld [vmem:[%s2 + $0x1b0] sm:$0xff]
      %v4346 = vld [vmem:[%s2 + $0x1b8] sm:$0xff]
      %v4347 = vld [vmem:[%s2 + $0x1c0] sm:$0xff]
      %v4348 = vld [vmem:[%s2 + $0x1c8] sm:$0xff]
      %v4349 = vld [vmem:[%s2 + $0x1d0] sm:$0xff]
      %v4350 = vld [vmem:[%s2 + $0x1d8] sm:$0xff]
      %v4351 = vld [vmem:[%s2 + $0x1e0] sm:$0xff]
      %v4352 = vld [vmem:[%s2 + $0x1e8] sm:$0xff]
      %v4353 = vld [vmem:[%s2 + $0x1f0] sm:$0xff]
      %v4354 = vld [vmem:[%s2 + $0x1f8] sm:$0xff]
      %v4355 = vld [vmem:[%s2 + $0x200] sm:$0xff]
      %v4356 = vld [vmem:[%s2 + $0x208] sm:$0xff]
      %v4357 = vld [vmem:[%s2 + $0x210] sm:$0xff]
      %v4358 = vld [vmem:[%s2 + $0x218] sm:$0xff]
      %v4359 = vld [vmem:[%s2 + $0x220] sm:$0xff]
      %v4360 = vld [vmem:[%s2 + $0x228] sm:$0xff]
      %v4361 = vld [vmem:[%s2 + $0x230] sm:$0xff]
      %v4362 = vld [vmem:[%s2 + $0x238] sm:$0xff]
      %v4363 = vld [vmem:[%s2 + $0x240] sm:$0xff]
      %v4364 = vld [vmem:[%s2 + $0x248] sm:$0xff]
      %v4365 = vld [vmem:[%s2 + $0x250] sm:$0xff]
      %v4366 = vld [vmem:[%s2 + $0x258] sm:$0xff]
      %v4367 = vld [vmem:[%s2 + $0x260] sm:$0xff]
      %v4368 = vld [vmem:[%s2 + $0x268] sm:$0xff]
      %v4369 = vld [vmem:[%s2 + $0x270] sm:$0xff]
      %v4370 = vld [vmem:[%s2 + $0x278] sm:$0xff]
      %v4371 = vld [vmem:[%s2 + $0x280] sm:$0xff]
      %v4372 = vld [vmem:[%s2 + $0x288] sm:$0xff]
      %v4373 = vld [vmem:[%s2 + $0x290] sm:$0xff]
      %v4374 = vld [vmem:[%s2 + $0x298] sm:$0xff]
      %v4375 = vld [vmem:[%s2 + $0x2a0] sm:$0xff]
      %v4376 = vld [vmem:[%s2 + $0x2a8] sm:$0xff]
      %v4377 = vld [vmem:[%s2 + $0x2b0] sm:$0xff]
      %v4378 = vld [vmem:[%s2 + $0x2b8] sm:$0xff]
      %v4379 = vld [vmem:[%s2 + $0x2c0] sm:$0xff]
      %v4380 = vld [vmem:[%s2 + $0x2c8] sm:$0xff]
      %v4381 = vld [vmem:[%s2 + $0x2d0] sm:$0xff]
      %v4382 = vld [vmem:[%s2 + $0x2d8] sm:$0xff]
      %v4383 = vld [vmem:[%s2 + $0x2e0] sm:$0xff]
      %v4384 = vld [vmem:[%s2 + $0x2e8] sm:$0xff]
      %v4385 = vld [vmem:[%s2 + $0x2f0] sm:$0xff]
      %v4386 = vld [vmem:[%s2 + $0x2f8] sm:$0xff]
      %v4387 = vld [vmem:[%s2 + $0x300] sm:$0xff]
      %v4388 = vld [vmem:[%s2 + $0x308] sm:$0xff]
      %v4389 = vld [vmem:[%s2 + $0x310] sm:$0xff]
      %v4390 = vld [vmem:[%s2 + $0x318] sm:$0xff]
      %v4391 = vld [vmem:[%s2 + $0x320] sm:$0xff]
      %v4392 = vld [vmem:[%s2 + $0x328] sm:$0xff]
      %v4393 = vld [vmem:[%s2 + $0x330] sm:$0xff]
      %v4394 = vld [vmem:[%s2 + $0x338] sm:$0xff]
      %v4395 = vld [vmem:[%s2 + $0x340] sm:$0xff]
      %v4396 = vld [vmem:[%s2 + $0x348] sm:$0xff]
      %v4397 = vld [vmem:[%s2 + $0x350] sm:$0xff]
      %v4398 = vld [vmem:[%s2 + $0x358] sm:$0xff]
      %v4399 = vld [vmem:[%s2 + $0x360] sm:$0xff]
      %v4400 = vld [vmem:[%s2 + $0x368] sm:$0xff]
      %v4401 = vld [vmem:[%s2 + $0x370] sm:$0xff]
      %v4402 = vld [vmem:[%s2 + $0x378] sm:$0xff]
      %v4403 = vld [vmem:[%s2 + $0x380] sm:$0xff]
      %v4404 = vld [vmem:[%s2 + $0x388] sm:$0xff]
      %v4405 = vld [vmem:[%s2 + $0x390] sm:$0xff]
      %v4406 = vld [vmem:[%s2 + $0x398] sm:$0xff]
      %v4407 = vld [vmem:[%s2 + $0x3a0] sm:$0xff]
      %v4408 = vld [vmem:[%s2 + $0x3a8] sm:$0xff]
      %v4409 = vld [vmem:[%s2 + $0x3b0] sm:$0xff]
      %v4410 = vld [vmem:[%s2 + $0x3b8] sm:$0xff]
      %v4411 = vld [vmem:[%s2 + $0x3c0] sm:$0xff]
      %v4412 = vld [vmem:[%s2 + $0x3c8] sm:$0xff]
      %v4413 = vld [vmem:[%s2 + $0x3d0] sm:$0xff]
      %v4414 = vld [vmem:[%s2 + $0x3d8] sm:$0xff]
      %v4415 = vld [vmem:[%s2 + $0x3e0] sm:$0xff]
      %v4416 = vld [vmem:[%s2 + $0x3e8] sm:$0xff]
      %v4417 = vld [vmem:[%s2 + $0x3f0] sm:$0xff]
      %v4418 = vld [vmem:[%s2 + $0x3f8] sm:$0xff]
      %v4419 = vld [vmem:[%s2 + $0x400] sm:$0xff]
      %v4420 = vld [vmem:[%s2 + $0x408] sm:$0xff]
      %v4421 = vld [vmem:[%s2 + $0x410] sm:$0xff]
      %v4422 = vld [vmem:[%s2 + $0x418] sm:$0xff]
      %v4423 = vld [vmem:[%s2 + $0x420] sm:$0xff]
      %v4424 = vld [vmem:[%s2 + $0x428] sm:$0xff]
      %v4425 = vld [vmem:[%s2 + $0x430] sm:$0xff]
      %v4426 = vld [vmem:[%s2 + $0x438] sm:$0xff]
      %v4427 = vld [vmem:[%s2 + $0x440] sm:$0xff]
      %v4428 = vld [vmem:[%s2 + $0x448] sm:$0xff]
      %v4429 = vld [vmem:[%s2 + $0x450] sm:$0xff]
      %v4430 = vld [vmem:[%s2 + $0x458] sm:$0xff]
      %v4431 = vld [vmem:[%s2 + $0x460] sm:$0xff]
      %v4432 = vld [vmem:[%s2 + $0x468] sm:$0xff]
      %v4433 = vld [vmem:[%s2 + $0x470] sm:$0xff]
      %v4434 = vld [vmem:[%s2 + $0x478] sm:$0xff]
      %4435 = vmatprep.subr.mxu0 0.0
      %4436 = vmatpush1.msra.mxu0 %v4291
      %4437 = vmatprep.subr.mxu0 0.0
      %4438 = vmatpush1.msra.mxu0 %v4292
      %4439 = vmatprep.subr.mxu0 0.0
      %4440 = vmatpush1.msra.mxu0 %v4293
      %4441 = vmatprep.subr.mxu0 0.0
      %4442 = vmatpush1.msra.mxu0 %v4294
      %4443 = vmatprep.subr.mxu0 0.0
      %4444 = vmatpush1.msra.mxu0 %v4295
      %4445 = vmatprep.subr.mxu0 0.0
      %4446 = vmatpush1.msra.mxu0 %v4296
      %4447 = vmatprep.subr.mxu0 0.0
      %4448 = vmatpush1.msra.mxu0 %v4297
      %4449 = vmatprep.subr.mxu0 0.0
      %4450 = vmatpush1.msra.mxu0 %v4298
      %4451 = vmatprep.subr.mxu0 0.0
      %4452 = vmatpush1.msra.mxu0 %v4299
      %4453 = vmatprep.subr.mxu0 0.0
      %4454 = vmatpush1.msra.mxu0 %v4300
      %4455 = vmatprep.subr.mxu0 0.0
      %4456 = vmatpush1.msra.mxu0 %v4301
      %4457 = vmatprep.subr.mxu0 0.0
      %4458 = vmatpush1.msra.mxu0 %v4302
      %4459 = vmatprep.subr.mxu0 0.0
      %4460 = vmatpush1.msra.mxu0 %v4303
      %4461 = vmatprep.subr.mxu0 0.0
      %4462 = vmatpush1.msra.mxu0 %v4304
      %4463 = vmatprep.subr.mxu0 0.0
      %4464 = vmatpush1.msra.mxu0 %v4305
      %4465 = vmatprep.subr.mxu0 0.0
      %4466 = vmatpush1.msra.mxu0 %v4306
      %4467 = vmatprep.subr.mxu0 0.0
      %4468 = vmatpush1.msra.mxu0 %v4307
      %4469 = vmatprep.subr.mxu0 0.0
      %4470 = vmatpush1.msra.mxu0 %v4308
      %4471 = vmatprep.subr.mxu0 0.0
      %4472 = vmatpush1.msra.mxu0 %v4309
      %4473 = vmatprep.subr.mxu0 0.0
      %4474 = vmatpush1.msra.mxu0 %v4310
      %4475 = vmatprep.subr.mxu0 0.0
      %4476 = vmatpush1.msra.mxu0 %v4311
      %4477 = vmatprep.subr.mxu0 0.0
      %4478 = vmatpush1.msra.mxu0 %v4312
      %4479 = vmatprep.subr.mxu0 0.0
      %4480 = vmatpush1.msra.mxu0 %v4313
      %4481 = vmatprep.subr.mxu0 0.0
      %4482 = vmatpush1.msra.mxu0 %v4314
      %4483 = vmatprep.subr.mxu0 0.0
      %4484 = vmatpush1.msra.mxu0 %v4315
      %4485 = vmatprep.subr.mxu0 0.0
      %4486 = vmatpush1.msra.mxu0 %v4316
      %4487 = vmatprep.subr.mxu0 0.0
      %4488 = vmatpush1.msra.mxu0 %v4317
      %4489 = vmatprep.subr.mxu0 0.0
      %4490 = vmatpush1.msra.mxu0 %v4318
      %4491 = vmatprep.subr.mxu0 0.0
      %4492 = vmatpush1.msra.mxu0 %v4319
      %4493 = vmatprep.subr.mxu0 0.0
      %4494 = vmatpush1.msra.mxu0 %v4320
      %4495 = vmatprep.subr.mxu0 0.0
      %4496 = vmatpush1.msra.mxu0 %v4321
      %4497 = vmatprep.subr.mxu0 0.0
      %4498 = vmatpush1.msra.mxu0 %v4322
      %4499 = vmatprep.mubr.f32.mxu0 %v4004
      %4500 = vmatmul.mubr.f32.gmra.mrb[0].mxu0 %v4003
      %v4501 = vpop.f32.mrb[0].mxu0
      %v4502 = vadd.f32 0.0, %v4501
      %v4503 = vpop.f32.mrb[0].mxu0
      %4504 = vmatprep.mubr.f32.mxu0 %v4013
      %4505 = vmatmul.mubr.f32.gmra.mrb[0].mxu0 %v4012
      %v4506 = vpop.f32.mrb[0].mxu0
      %v4507 = vadd.f32 0.0, %v4506
      %v4508 = vpop.f32.mrb[0].mxu0
      %4509 = vmatprep.mubr.f32.mxu0 %v4022
      %4510 = vmatmul.mubr.f32.gmra.mrb[0].mxu0 %v4021
      %v4511 = vpop.f32.mrb[0].mxu0
      %v4512 = vadd.f32 0.0, %v4511
      %v4513 = vpop.f32.mrb[0].mxu0
      %4514 = vmatprep.mubr.f32.mxu0 %v4031
      %4515 = vmatmul.mubr.f32.gmra.mrb[0].mxu0 %v4030
      %v4516 = vpop.f32.mrb[0].mxu0
      %v4517 = vadd.f32 0.0, %v4516
      %v4518 = vpop.f32.mrb[0].mxu0
      %4519 = vmatprep.mubr.f32.mxu0 %v4040
      %4520 = vmatmul.mubr.f32.gmra.mrb[0].mxu0 %v4039
      %v4521 = vpop.f32.mrb[0].mxu0
      %v4522 = vadd.f32 0.0, %v4521
      %v4523 = vpop.f32.mrb[0].mxu0
      %4524 = vmatprep.mubr.f32.mxu0 %v4049
      %4525 = vmatmul.mubr.f32.gmra.mrb[0].mxu0 %v4048
      %v4526 = vpop.f32.mrb[0].mxu0
      %v4527 = vadd.f32 0.0, %v4526
      %v4528 = vpop.f32.mrb[0].mxu0
      %4529 = vmatprep.mubr.f32.mxu0 %v4058
      %4530 = vmatmul.mubr.f32.gmra.mrb[0].mxu0 %v4057
      %v4531 = vpop.f32.mrb[0].mxu0
      %v4532 = vadd.f32 0.0, %v4531
      %v4533 = vpop.f32.mrb[0].mxu0
      %4534 = vmatprep.mubr.f32.mxu0 %v4067
      %4535 = vmatmul.mubr.f32.gmra.mrb[0].mxu0 %v4066
      %v4536 = vpop.f32.mrb[0].mxu0
      %v4537 = vadd.f32 0.0, %v4536
      %v4538 = vpop.f32.mrb[0].mxu0
      %4539 = vmatprep.mubr.f32.mxu0 %v4076
      %4540 = vmatmul.mubr.f32.gmra.mrb[0].mxu0 %v4075
      %v4541 = vpop.f32.mrb[0].mxu0
      %v4542 = vadd.f32 0.0, %v4541
      %v4543 = vpop.f32.mrb[0].mxu0
      %4544 = vmatprep.mubr.f32.mxu0 %v4085
      %4545 = vmatmul.mubr.f32.gmra.mrb[0].mxu0 %v4084
      %v4546 = vpop.f32.mrb[0].mxu0
      %v4547 = vadd.f32 0.0, %v4546
      %v4548 = vpop.f32.mrb[0].mxu0
      %4549 = vmatprep.mubr.f32.mxu0 %v4094
      %4550 = vmatmul.mubr.f32.gmra.mrb[0].mxu0 %v4093
      %v4551 = vpop.f32.mrb[0].mxu0
      %v4552 = vadd.f32 0.0, %v4551
      %v4553 = vpop.f32.mrb[0].mxu0
      %4554 = vmatprep.mubr.f32.mxu0 %v4103
      %4555 = vmatmul.mubr.f32.gmra.mrb[0].mxu0 %v4102
      %v4556 = vpop.f32.mrb[0].mxu0
      %v4557 = vadd.f32 0.0, %v4556
      %v4558 = vpop.f32.mrb[0].mxu0
      %4559 = vmatprep.mubr.f32.mxu0 %v4112
      %4560 = vmatmul.mubr.f32.gmra.mrb[0].mxu0 %v4111
      %v4561 = vpop.f32.mrb[0].mxu0
      %v4562 = vadd.f32 0.0, %v4561
      %v4563 = vpop.f32.mrb[0].mxu0
      %4564 = vmatprep.mubr.f32.mxu0 %v4121
      %4565 = vmatmul.mubr.f32.gmra.mrb[0].mxu0 %v4120
      %v4566 = vpop.f32.mrb[0].mxu0
      %v4567 = vadd.f32 0.0, %v4566
      %v4568 = vpop.f32.mrb[0].mxu0
      %4569 = vmatprep.mubr.f32.mxu0 %v4130
      %4570 = vmatmul.mubr.f32.gmra.mrb[0].mxu0 %v4129
      %v4571 = vpop.f32.mrb[0].mxu0
      %v4572 = vadd.f32 0.0, %v4571
      %v4573 = vpop.f32.mrb[0].mxu0
      %4574 = vmatprep.mubr.f32.mxu0 %v4139
      %4575 = vmatmul.mubr.f32.gmra.mrb[0].mxu0 %v4138
      %v4576 = vpop.f32.mrb[0].mxu0
      %v4577 = vadd.f32 0.0, %v4576
      %v4578 = vpop.f32.mrb[0].mxu0
      %4579 = vmatprep.mubr.f32.mxu0 %v4148
      %4580 = vmatmul.mubr.f32.gmra.mrb[0].mxu0 %v4147
      %v4581 = vpop.f32.mrb[0].mxu0
      %v4582 = vadd.f32 0.0, %v4581
      %v4583 = vpop.f32.mrb[0].mxu0
      %4584 = vmatprep.mubr.f32.mxu0 %v4157
      %4585 = vmatmul.mubr.f32.gmra.mrb[0].mxu0 %v4156
      %v4586 = vpop.f32.mrb[0].mxu0
      %v4587 = vadd.f32 0.0, %v4586
      %v4588 = vpop.f32.mrb[0].mxu0
      %4589 = vmatprep.mubr.f32.mxu0 %v4166
      %4590 = vmatmul.mubr.f32.gmra.mrb[0].mxu0 %v4165
      %v4591 = vpop.f32.mrb[0].mxu0
      %v4592 = vadd.f32 0.0, %v4591
      %v4593 = vpop.f32.mrb[0].mxu0
      %4594 = vmatprep.mubr.f32.mxu0 %v4175
      %4595 = vmatmul.mubr.f32.gmra.mrb[0].mxu0 %v4174
      %v4596 = vpop.f32.mrb[0].mxu0
      %v4597 = vadd.f32 0.0, %v4596
      %v4598 = vpop.f32.mrb[0].mxu0
      %4599 = vmatprep.mubr.f32.mxu0 %v4184
      %4600 = vmatmul.mubr.f32.gmra.mrb[0].mxu0 %v4183
      %v4601 = vpop.f32.mrb[0].mxu0
      %v4602 = vadd.f32 0.0, %v4601
      %v4603 = vpop.f32.mrb[0].mxu0
      %4604 = vmatprep.mubr.f32.mxu0 %v4193
      %4605 = vmatmul.mubr.f32.gmra.mrb[0].mxu0 %v4192
      %v4606 = vpop.f32.mrb[0].mxu0
      %v4607 = vadd.f32 0.0, %v4606
      %v4608 = vpop.f32.mrb[0].mxu0
      %4609 = vmatprep.mubr.f32.mxu0 %v4202
      %4610 = vmatmul.mubr.f32.gmra.mrb[0].mxu0 %v4201
      %v4611 = vpop.f32.mrb[0].mxu0
      %v4612 = vadd.f32 0.0, %v4611
      %v4613 = vpop.f32.mrb[0].mxu0
      %4614 = vmatprep.mubr.f32.mxu0 %v4211
      %4615 = vmatmul.mubr.f32.gmra.mrb[0].mxu0 %v4210
      %v4616 = vpop.f32.mrb[0].mxu0
      %v4617 = vadd.f32 0.0, %v4616
      %v4618 = vpop.f32.mrb[0].mxu0
      %4619 = vmatprep.mubr.f32.mxu0 %v4220
      %4620 = vmatmul.mubr.f32.gmra.mrb[0].mxu0 %v4219
      %v4621 = vpop.f32.mrb[0].mxu0
      %v4622 = vadd.f32 0.0, %v4621
      %v4623 = vpop.f32.mrb[0].mxu0
      %4624 = vmatprep.mubr.f32.mxu0 %v4229
      %4625 = vmatmul.mubr.f32.gmra.mrb[0].mxu0 %v4228
      %v4626 = vpop.f32.mrb[0].mxu0
      %v4627 = vadd.f32 0.0, %v4626
      %v4628 = vpop.f32.mrb[0].mxu0
      %4629 = vmatprep.mubr.f32.mxu0 %v4238
      %4630 = vmatmul.mubr.f32.gmra.mrb[0].mxu0 %v4237
      %v4631 = vpop.f32.mrb[0].mxu0
      %v4632 = vadd.f32 0.0, %v4631
      %v4633 = vpop.f32.mrb[0].mxu0
      %4634 = vmatprep.mubr.f32.mxu0 %v4247
      %4635 = vmatmul.mubr.f32.gmra.mrb[0].mxu0 %v4246
      %v4636 = vpop.f32.mrb[0].mxu0
      %v4637 = vadd.f32 0.0, %v4636
      %v4638 = vpop.f32.mrb[0].mxu0
      %4639 = vmatprep.mubr.f32.mxu0 %v4256
      %4640 = vmatmul.mubr.f32.gmra.mrb[0].mxu0 %v4255
      %v4641 = vpop.f32.mrb[0].mxu0
      %v4642 = vadd.f32 0.0, %v4641
      %v4643 = vpop.f32.mrb[0].mxu0
      %4644 = vmatprep.mubr.f32.mxu0 %v4265
      %4645 = vmatmul.mubr.f32.gmra.mrb[0].mxu0 %v4264
      %v4646 = vpop.f32.mrb[0].mxu0
      %v4647 = vadd.f32 0.0, %v4646
      %v4648 = vpop.f32.mrb[0].mxu0
      %4649 = vmatprep.mubr.f32.mxu0 %v4274
      %4650 = vmatmul.mubr.f32.gmra.mrb[0].mxu0 %v4273
      %v4651 = vpop.f32.mrb[0].mxu0
      %v4652 = vadd.f32 0.0, %v4651
      %v4653 = vpop.f32.mrb[0].mxu0
      %4654 = vmatprep.mubr.f32.mxu0 %v4283
      %4655 = vmatmul.mubr.f32.gmra.mrb[0].mxu0 %v4282
      %v4656 = vpop.f32.mrb[0].mxu0
      %v4657 = vadd.f32 0.0, %v4656
      %v4658 = vpop.f32.mrb[0].mxu0
      %4659 = vdwg.mxu0
      %4660 = vmatprep.subr.mxu0 0.0
      %4661 = vmatpush1.msra.mxu0 %v4323
      %4662 = vmatprep.subr.mxu0 0.0
      %4663 = vmatpush1.msra.mxu0 %v4324
      %4664 = vmatprep.subr.mxu0 0.0
      %4665 = vmatpush1.msra.mxu0 %v4325
      %4666 = vmatprep.subr.mxu0 0.0
      %4667 = vmatpush1.msra.mxu0 %v4326
      %4668 = vmatprep.subr.mxu0 0.0
      %4669 = vmatpush1.msra.mxu0 %v4327
      %4670 = vmatprep.subr.mxu0 0.0
      %4671 = vmatpush1.msra.mxu0 %v4328
      %4672 = vmatprep.subr.mxu0 0.0
      %4673 = vmatpush1.msra.mxu0 %v4329
      %4674 = vmatprep.subr.mxu0 0.0
      %4675 = vmatpush1.msra.mxu0 %v4330
      %4676 = vmatprep.subr.mxu0 0.0
      %4677 = vmatpush1.msra.mxu0 %v4331
      %4678 = vmatprep.subr.mxu0 0.0
      %4679 = vmatpush1.msra.mxu0 %v4332
      %4680 = vmatprep.subr.mxu0 0.0
      %4681 = vmatpush1.msra.mxu0 %v4333
      %4682 = vmatprep.subr.mxu0 0.0
      %4683 = vmatpush1.msra.mxu0 %v4334
      %4684 = vmatprep.subr.mxu0 0.0
      %4685 = vmatpush1.msra.mxu0 %v4335
      %4686 = vmatprep.subr.mxu0 0.0
      %4687 = vmatpush1.msra.mxu0 %v4336
      %4688 = vmatprep.subr.mxu0 0.0
      %4689 = vmatpush1.msra.mxu0 %v4337
      %4690 = vmatprep.subr.mxu0 0.0
      %4691 = vmatpush1.msra.mxu0 %v4338
      %4692 = vmatprep.subr.mxu0 0.0
      %4693 = vmatpush1.msra.mxu0 %v4339
      %4694 = vmatprep.subr.mxu0 0.0
      %4695 = vmatpush1.msra.mxu0 %v4340
      %4696 = vmatprep.subr.mxu0 0.0
      %4697 = vmatpush1.msra.mxu0 %v4341
      %4698 = vmatprep.subr.mxu0 0.0
      %4699 = vmatpush1.msra.mxu0 %v4342
      %4700 = vmatprep.subr.mxu0 0.0
      %4701 = vmatpush1.msra.mxu0 %v4343
      %4702 = vmatprep.subr.mxu0 0.0
      %4703 = vmatpush1.msra.mxu0 %v4344
      %4704 = vmatprep.subr.mxu0 0.0
      %4705 = vmatpush1.msra.mxu0 %v4345
      %4706 = vmatprep.subr.mxu0 0.0
      %4707 = vmatpush1.msra.mxu0 %v4346
      %4708 = vmatprep.subr.mxu0 0.0
      %4709 = vmatpush1.msra.mxu0 %v4347
      %4710 = vmatprep.subr.mxu0 0.0
      %4711 = vmatpush1.msra.mxu0 %v4348
      %4712 = vmatprep.subr.mxu0 0.0
      %4713 = vmatpush1.msra.mxu0 %v4349
      %4714 = vmatprep.subr.mxu0 0.0
      %4715 = vmatpush1.msra.mxu0 %v4350
      %4716 = vmatprep.subr.mxu0 0.0
      %4717 = vmatpush1.msra.mxu0 %v4351
      %4718 = vmatprep.subr.mxu0 0.0
      %4719 = vmatpush1.msra.mxu0 %v4352
      %4720 = vmatprep.subr.mxu0 0.0
      %4721 = vmatpush1.msra.mxu0 %v4353
      %4722 = vmatprep.subr.mxu0 0.0
      %4723 = vmatpush1.msra.mxu0 %v4354
      %4724 = vmatprep.mubr.f32.mxu0 %v4006
      %4725 = vmatmul.mubr.f32.gmra.mrb[0].mxu0 %v4005
      %v4726 = vpop.f32.mrb[0].mxu0
      %v4727 = vadd.f32 %v4502, %v4726
      %v4728 = vpop.f32.mrb[0].mxu0
      %4729 = vmatprep.mubr.f32.mxu0 %v4015
      %4730 = vmatmul.mubr.f32.gmra.mrb[0].mxu0 %v4014
      %v4731 = vpop.f32.mrb[0].mxu0
      %v4732 = vadd.f32 %v4507, %v4731
      %v4733 = vpop.f32.mrb[0].mxu0
      %4734 = vmatprep.mubr.f32.mxu0 %v4024
      %4735 = vmatmul.mubr.f32.gmra.mrb[0].mxu0 %v4023
      %v4736 = vpop.f32.mrb[0].mxu0
      %v4737 = vadd.f32 %v4512, %v4736
      %v4738 = vpop.f32.mrb[0].mxu0
      %4739 = vmatprep.mubr.f32.mxu0 %v4033
      %4740 = vmatmul.mubr.f32.gmra.mrb[0].mxu0 %v4032
      %v4741 = vpop.f32.mrb[0].mxu0
      %v4742 = vadd.f32 %v4517, %v4741
      %v4743 = vpop.f32.mrb[0].mxu0
      %4744 = vmatprep.mubr.f32.mxu0 %v4042
      %4745 = vmatmul.mubr.f32.gmra.mrb[0].mxu0 %v4041
      %v4746 = vpop.f32.mrb[0].mxu0
      %v4747 = vadd.f32 %v4522, %v4746
      %v4748 = vpop.f32.mrb[0].mxu0
      %4749 = vmatprep.mubr.f32.mxu0 %v4051
      %4750 = vmatmul.mubr.f32.gmra.mrb[0].mxu0 %v4050
      %v4751 = vpop.f32.mrb[0].mxu0
      %v4752 = vadd.f32 %v4527, %v4751
      %v4753 = vpop.f32.mrb[0].mxu0
      %4754 = vmatprep.mubr.f32.mxu0 %v4060
      %4755 = vmatmul.mubr.f32.gmra.mrb[0].mxu0 %v4059
      %v4756 = vpop.f32.mrb[0].mxu0
      %v4757 = vadd.f32 %v4532, %v4756
      %v4758 = vpop.f32.mrb[0].mxu0
      %4759 = vmatprep.mubr.f32.mxu0 %v4069
      %4760 = vmatmul.mubr.f32.gmra.mrb[0].mxu0 %v4068
      %v4761 = vpop.f32.mrb[0].mxu0
      %v4762 = vadd.f32 %v4537, %v4761
      %v4763 = vpop.f32.mrb[0].mxu0
      %4764 = vmatprep.mubr.f32.mxu0 %v4078
      %4765 = vmatmul.mubr.f32.gmra.mrb[0].mxu0 %v4077
      %v4766 = vpop.f32.mrb[0].mxu0
      %v4767 = vadd.f32 %v4542, %v4766
      %v4768 = vpop.f32.mrb[0].mxu0
      %4769 = vmatprep.mubr.f32.mxu0 %v4087
      %4770 = vmatmul.mubr.f32.gmra.mrb[0].mxu0 %v4086
      %v4771 = vpop.f32.mrb[0].mxu0
      %v4772 = vadd.f32 %v4547, %v4771
      %v4773 = vpop.f32.mrb[0].mxu0
      %4774 = vmatprep.mubr.f32.mxu0 %v4096
      %4775 = vmatmul.mubr.f32.gmra.mrb[0].mxu0 %v4095
      %v4776 = vpop.f32.mrb[0].mxu0
      %v4777 = vadd.f32 %v4552, %v4776
      %v4778 = vpop.f32.mrb[0].mxu0
      %4779 = vmatprep.mubr.f32.mxu0 %v4105
      %4780 = vmatmul.mubr.f32.gmra.mrb[0].mxu0 %v4104
      %v4781 = vpop.f32.mrb[0].mxu0
      %v4782 = vadd.f32 %v4557, %v4781
      %v4783 = vpop.f32.mrb[0].mxu0
      %4784 = vmatprep.mubr.f32.mxu0 %v4114
      %4785 = vmatmul.mubr.f32.gmra.mrb[0].mxu0 %v4113
      %v4786 = vpop.f32.mrb[0].mxu0
      %v4787 = vadd.f32 %v4562, %v4786
      %v4788 = vpop.f32.mrb[0].mxu0
      %4789 = vmatprep.mubr.f32.mxu0 %v4123
      %4790 = vmatmul.mubr.f32.gmra.mrb[0].mxu0 %v4122
      %v4791 = vpop.f32.mrb[0].mxu0
      %v4792 = vadd.f32 %v4567, %v4791
      %v4793 = vpop.f32.mrb[0].mxu0
      %4794 = vmatprep.mubr.f32.mxu0 %v4132
      %4795 = vmatmul.mubr.f32.gmra.mrb[0].mxu0 %v4131
      %v4796 = vpop.f32.mrb[0].mxu0
      %v4797 = vadd.f32 %v4572, %v4796
      %v4798 = vpop.f32.mrb[0].mxu0
      %4799 = vmatprep.mubr.f32.mxu0 %v4141
      %4800 = vmatmul.mubr.f32.gmra.mrb[0].mxu0 %v4140
      %v4801 = vpop.f32.mrb[0].mxu0
      %v4802 = vadd.f32 %v4577, %v4801
      %v4803 = vpop.f32.mrb[0].mxu0
      %4804 = vmatprep.mubr.f32.mxu0 %v4150
      %4805 = vmatmul.mubr.f32.gmra.mrb[0].mxu0 %v4149
      %v4806 = vpop.f32.mrb[0].mxu0
      %v4807 = vadd.f32 %v4582, %v4806
      %v4808 = vpop.f32.mrb[0].mxu0
      %4809 = vmatprep.mubr.f32.mxu0 %v4159
      %4810 = vmatmul.mubr.f32.gmra.mrb[0].mxu0 %v4158
      %v4811 = vpop.f32.mrb[0].mxu0
      %v4812 = vadd.f32 %v4587, %v4811
      %v4813 = vpop.f32.mrb[0].mxu0
      %4814 = vmatprep.mubr.f32.mxu0 %v4168
      %4815 = vmatmul.mubr.f32.gmra.mrb[0].mxu0 %v4167
      %v4816 = vpop.f32.mrb[0].mxu0
      %v4817 = vadd.f32 %v4592, %v4816
      %v4818 = vpop.f32.mrb[0].mxu0
      %4819 = vmatprep.mubr.f32.mxu0 %v4177
      %4820 = vmatmul.mubr.f32.gmra.mrb[0].mxu0 %v4176
      %v4821 = vpop.f32.mrb[0].mxu0
      %v4822 = vadd.f32 %v4597, %v4821
      %v4823 = vpop.f32.mrb[0].mxu0
      %4824 = vmatprep.mubr.f32.mxu0 %v4186
      %4825 = vmatmul.mubr.f32.gmra.mrb[0].mxu0 %v4185
      %v4826 = vpop.f32.mrb[0].mxu0
      %v4827 = vadd.f32 %v4602, %v4826
      %v4828 = vpop.f32.mrb[0].mxu0
      %4829 = vmatprep.mubr.f32.mxu0 %v4195
      %4830 = vmatmul.mubr.f32.gmra.mrb[0].mxu0 %v4194
      %v4831 = vpop.f32.mrb[0].mxu0
      %v4832 = vadd.f32 %v4607, %v4831
      %v4833 = vpop.f32.mrb[0].mxu0
      %4834 = vmatprep.mubr.f32.mxu0 %v4204
      %4835 = vmatmul.mubr.f32.gmra.mrb[0].mxu0 %v4203
      %v4836 = vpop.f32.mrb[0].mxu0
      %v4837 = vadd.f32 %v4612, %v4836
      %v4838 = vpop.f32.mrb[0].mxu0
      %4839 = vmatprep.mubr.f32.mxu0 %v4213
      %4840 = vmatmul.mubr.f32.gmra.mrb[0].mxu0 %v4212
      %v4841 = vpop.f32.mrb[0].mxu0
      %v4842 = vadd.f32 %v4617, %v4841
      %v4843 = vpop.f32.mrb[0].mxu0
      %4844 = vmatprep.mubr.f32.mxu0 %v4222
      %4845 = vmatmul.mubr.f32.gmra.mrb[0].mxu0 %v4221
      %v4846 = vpop.f32.mrb[0].mxu0
      %v4847 = vadd.f32 %v4622, %v4846
      %v4848 = vpop.f32.mrb[0].mxu0
      %4849 = vmatprep.mubr.f32.mxu0 %v4231
      %4850 = vmatmul.mubr.f32.gmra.mrb[0].mxu0 %v4230
      %v4851 = vpop.f32.mrb[0].mxu0
      %v4852 = vadd.f32 %v4627, %v4851
      %v4853 = vpop.f32.mrb[0].mxu0
      %4854 = vmatprep.mubr.f32.mxu0 %v4240
      %4855 = vmatmul.mubr.f32.gmra.mrb[0].mxu0 %v4239
      %v4856 = vpop.f32.mrb[0].mxu0
      %v4857 = vadd.f32 %v4632, %v4856
      %v4858 = vpop.f32.mrb[0].mxu0
      %4859 = vmatprep.mubr.f32.mxu0 %v4249
      %4860 = vmatmul.mubr.f32.gmra.mrb[0].mxu0 %v4248
      %v4861 = vpop.f32.mrb[0].mxu0
      %v4862 = vadd.f32 %v4637, %v4861
      %v4863 = vpop.f32.mrb[0].mxu0
      %4864 = vmatprep.mubr.f32.mxu0 %v4258
      %4865 = vmatmul.mubr.f32.gmra.mrb[0].mxu0 %v4257
      %v4866 = vpop.f32.mrb[0].mxu0
      %v4867 = vadd.f32 %v4642, %v4866
      %v4868 = vpop.f32.mrb[0].mxu0
      %4869 = vmatprep.mubr.f32.mxu0 %v4267
      %4870 = vmatmul.mubr.f32.gmra.mrb[0].mxu0 %v4266
      %v4871 = vpop.f32.mrb[0].mxu0
      %v4872 = vadd.f32 %v4647, %v4871
      %v4873 = vpop.f32.mrb[0].mxu0
      %4874 = vmatprep.mubr.f32.mxu0 %v4276
      %4875 = vmatmul.mubr.f32.gmra.mrb[0].mxu0 %v4275
      %v4876 = vpop.f32.mrb[0].mxu0
      %v4877 = vadd.f32 %v4652, %v4876
      %v4878 = vpop.f32.mrb[0].mxu0
      %4879 = vmatprep.mubr.f32.mxu0 %v4285
      %4880 = vmatmul.mubr.f32.gmra.mrb[0].mxu0 %v4284
      %v4881 = vpop.f32.mrb[0].mxu0
      %v4882 = vadd.f32 %v4657, %v4881
      %v4883 = vpop.f32.mrb[0].mxu0
      %4884 = vdwg.mxu0
      %4885 = vmatprep.subr.mxu0 0.0
      %4886 = vmatpush1.msra.mxu0 %v4355
      %4887 = vmatprep.subr.mxu0 0.0
      %4888 = vmatpush1.msra.mxu0 %v4356
      %4889 = vmatprep.subr.mxu0 0.0
      %4890 = vmatpush1.msra.mxu0 %v4357
      %4891 = vmatprep.subr.mxu0 0.0
      %4892 = vmatpush1.msra.mxu0 %v4358
      %4893 = vmatprep.subr.mxu0 0.0
      %4894 = vmatpush1.msra.mxu0 %v4359
      %4895 = vmatprep.subr.mxu0 0.0
      %4896 = vmatpush1.msra.mxu0 %v4360
      %4897 = vmatprep.subr.mxu0 0.0
      %4898 = vmatpush1.msra.mxu0 %v4361
      %4899 = vmatprep.subr.mxu0 0.0
      %4900 = vmatpush1.msra.mxu0 %v4362
      %4901 = vmatprep.subr.mxu0 0.0
      %4902 = vmatpush1.msra.mxu0 %v4363
      %4903 = vmatprep.subr.mxu0 0.0
      %4904 = vmatpush1.msra.mxu0 %v4364
      %4905 = vmatprep.subr.mxu0 0.0
      %4906 = vmatpush1.msra.mxu0 %v4365
      %4907 = vmatprep.subr.mxu0 0.0
      %4908 = vmatpush1.msra.mxu0 %v4366
      %4909 = vmatprep.subr.mxu0 0.0
      %4910 = vmatpush1.msra.mxu0 %v4367
      %4911 = vmatprep.subr.mxu0 0.0
      %4912 = vmatpush1.msra.mxu0 %v4368
      %4913 = vmatprep.subr.mxu0 0.0
      %4914 = vmatpush1.msra.mxu0 %v4369
      %4915 = vmatprep.subr.mxu0 0.0
      %4916 = vmatpush1.msra.mxu0 %v4370
      %4917 = vmatprep.subr.mxu0 0.0
      %4918 = vmatpush1.msra.mxu0 %v4371
      %4919 = vmatprep.subr.mxu0 0.0
      %4920 = vmatpush1.msra.mxu0 %v4372
      %4921 = vmatprep.subr.mxu0 0.0
      %4922 = vmatpush1.msra.mxu0 %v4373
      %4923 = vmatprep.subr.mxu0 0.0
      %4924 = vmatpush1.msra.mxu0 %v4374
      %4925 = vmatprep.subr.mxu0 0.0
      %4926 = vmatpush1.msra.mxu0 %v4375
      %4927 = vmatprep.subr.mxu0 0.0
      %4928 = vmatpush1.msra.mxu0 %v4376
      %4929 = vmatprep.subr.mxu0 0.0
      %4930 = vmatpush1.msra.mxu0 %v4377
      %4931 = vmatprep.subr.mxu0 0.0
      %4932 = vmatpush1.msra.mxu0 %v4378
      %4933 = vmatprep.subr.mxu0 0.0
      %4934 = vmatpush1.msra.mxu0 %v4379
      %4935 = vmatprep.subr.mxu0 0.0
      %4936 = vmatpush1.msra.mxu0 %v4380
      %4937 = vmatprep.subr.mxu0 0.0
      %4938 = vmatpush1.msra.mxu0 %v4381
      %4939 = vmatprep.subr.mxu0 0.0
      %4940 = vmatpush1.msra.mxu0 %v4382
      %4941 = vmatprep.subr.mxu0 0.0
      %4942 = vmatpush1.msra.mxu0 %v4383
      %4943 = vmatprep.subr.mxu0 0.0
      %4944 = vmatpush1.msra.mxu0 %v4384
      %4945 = vmatprep.subr.mxu0 0.0
      %4946 = vmatpush1.msra.mxu0 %v4385
      %4947 = vmatprep.subr.mxu0 0.0
      %4948 = vmatpush1.msra.mxu0 %v4386
      %4949 = vmatprep.mubr.f32.mxu0 %v4008
      %4950 = vmatmul.mubr.f32.gmra.mrb[0].mxu0 %v4007
      %v4951 = vpop.f32.mrb[0].mxu0
      %v4952 = vadd.f32 %v4727, %v4951
      %v4953 = vpop.f32.mrb[0].mxu0
      %4954 = vmatprep.mubr.f32.mxu0 %v4017
      %4955 = vmatmul.mubr.f32.gmra.mrb[0].mxu0 %v4016
      %v4956 = vpop.f32.mrb[0].mxu0
      %v4957 = vadd.f32 %v4732, %v4956
      %v4958 = vpop.f32.mrb[0].mxu0
      %4959 = vmatprep.mubr.f32.mxu0 %v4026
      %4960 = vmatmul.mubr.f32.gmra.mrb[0].mxu0 %v4025
      %v4961 = vpop.f32.mrb[0].mxu0
      %v4962 = vadd.f32 %v4737, %v4961
      %v4963 = vpop.f32.mrb[0].mxu0
      %4964 = vmatprep.mubr.f32.mxu0 %v4035
      %4965 = vmatmul.mubr.f32.gmra.mrb[0].mxu0 %v4034
      %v4966 = vpop.f32.mrb[0].mxu0
      %v4967 = vadd.f32 %v4742, %v4966
      %v4968 = vpop.f32.mrb[0].mxu0
      %4969 = vmatprep.mubr.f32.mxu0 %v4044
      %4970 = vmatmul.mubr.f32.gmra.mrb[0].mxu0 %v4043
      %v4971 = vpop.f32.mrb[0].mxu0
      %v4972 = vadd.f32 %v4747, %v4971
      %v4973 = vpop.f32.mrb[0].mxu0
      %4974 = vmatprep.mubr.f32.mxu0 %v4053
      %4975 = vmatmul.mubr.f32.gmra.mrb[0].mxu0 %v4052
      %v4976 = vpop.f32.mrb[0].mxu0
      %v4977 = vadd.f32 %v4752, %v4976
      %v4978 = vpop.f32.mrb[0].mxu0
      %4979 = vmatprep.mubr.f32.mxu0 %v4062
      %4980 = vmatmul.mubr.f32.gmra.mrb[0].mxu0 %v4061
      %v4981 = vpop.f32.mrb[0].mxu0
      %v4982 = vadd.f32 %v4757, %v4981
      %v4983 = vpop.f32.mrb[0].mxu0
      %4984 = vmatprep.mubr.f32.mxu0 %v4071
      %4985 = vmatmul.mubr.f32.gmra.mrb[0].mxu0 %v4070
      %v4986 = vpop.f32.mrb[0].mxu0
      %v4987 = vadd.f32 %v4762, %v4986
      %v4988 = vpop.f32.mrb[0].mxu0
      %4989 = vmatprep.mubr.f32.mxu0 %v4080
      %4990 = vmatmul.mubr.f32.gmra.mrb[0].mxu0 %v4079
      %v4991 = vpop.f32.mrb[0].mxu0
      %v4992 = vadd.f32 %v4767, %v4991
      %v4993 = vpop.f32.mrb[0].mxu0
      %4994 = vmatprep.mubr.f32.mxu0 %v4089
      %4995 = vmatmul.mubr.f32.gmra.mrb[0].mxu0 %v4088
      %v4996 = vpop.f32.mrb[0].mxu0
      %v4997 = vadd.f32 %v4772, %v4996
      %v4998 = vpop.f32.mrb[0].mxu0
      %4999 = vmatprep.mubr.f32.mxu0 %v4098
      %5000 = vmatmul.mubr.f32.gmra.mrb[0].mxu0 %v4097
      %v5001 = vpop.f32.mrb[0].mxu0
      %v5002 = vadd.f32 %v4777, %v5001
      %v5003 = vpop.f32.mrb[0].mxu0
      %5004 = vmatprep.mubr.f32.mxu0 %v4107
      %5005 = vmatmul.mubr.f32.gmra.mrb[0].mxu0 %v4106
      %v5006 = vpop.f32.mrb[0].mxu0
      %v5007 = vadd.f32 %v4782, %v5006
      %v5008 = vpop.f32.mrb[0].mxu0
      %5009 = vmatprep.mubr.f32.mxu0 %v4116
      %5010 = vmatmul.mubr.f32.gmra.mrb[0].mxu0 %v4115
      %v5011 = vpop.f32.mrb[0].mxu0
      %v5012 = vadd.f32 %v4787, %v5011
      %v5013 = vpop.f32.mrb[0].mxu0
      %5014 = vmatprep.mubr.f32.mxu0 %v4125
      %5015 = vmatmul.mubr.f32.gmra.mrb[0].mxu0 %v4124
      %v5016 = vpop.f32.mrb[0].mxu0
      %v5017 = vadd.f32 %v4792, %v5016
      %v5018 = vpop.f32.mrb[0].mxu0
      %5019 = vmatprep.mubr.f32.mxu0 %v4134
      %5020 = vmatmul.mubr.f32.gmra.mrb[0].mxu0 %v4133
      %v5021 = vpop.f32.mrb[0].mxu0
      %v5022 = vadd.f32 %v4797, %v5021
      %v5023 = vpop.f32.mrb[0].mxu0
      %5024 = vmatprep.mubr.f32.mxu0 %v4143
      %5025 = vmatmul.mubr.f32.gmra.mrb[0].mxu0 %v4142
      %v5026 = vpop.f32.mrb[0].mxu0
      %v5027 = vadd.f32 %v4802, %v5026
      %v5028 = vpop.f32.mrb[0].mxu0
      %5029 = vmatprep.mubr.f32.mxu0 %v4152
      %5030 = vmatmul.mubr.f32.gmra.mrb[0].mxu0 %v4151
      %v5031 = vpop.f32.mrb[0].mxu0
      %v5032 = vadd.f32 %v4807, %v5031
      %v5033 = vpop.f32.mrb[0].mxu0
      %5034 = vmatprep.mubr.f32.mxu0 %v4161
      %5035 = vmatmul.mubr.f32.gmra.mrb[0].mxu0 %v4160
      %v5036 = vpop.f32.mrb[0].mxu0
      %v5037 = vadd.f32 %v4812, %v5036
      %v5038 = vpop.f32.mrb[0].mxu0
      %5039 = vmatprep.mubr.f32.mxu0 %v4170
      %5040 = vmatmul.mubr.f32.gmra.mrb[0].mxu0 %v4169
      %v5041 = vpop.f32.mrb[0].mxu0
      %v5042 = vadd.f32 %v4817, %v5041
      %v5043 = vpop.f32.mrb[0].mxu0
      %5044 = vmatprep.mubr.f32.mxu0 %v4179
      %5045 = vmatmul.mubr.f32.gmra.mrb[0].mxu0 %v4178
      %v5046 = vpop.f32.mrb[0].mxu0
      %v5047 = vadd.f32 %v4822, %v5046
      %v5048 = vpop.f32.mrb[0].mxu0
      %5049 = vmatprep.mubr.f32.mxu0 %v4188
      %5050 = vmatmul.mubr.f32.gmra.mrb[0].mxu0 %v4187
      %v5051 = vpop.f32.mrb[0].mxu0
      %v5052 = vadd.f32 %v4827, %v5051
      %v5053 = vpop.f32.mrb[0].mxu0
      %5054 = vmatprep.mubr.f32.mxu0 %v4197
      %5055 = vmatmul.mubr.f32.gmra.mrb[0].mxu0 %v4196
      %v5056 = vpop.f32.mrb[0].mxu0
      %v5057 = vadd.f32 %v4832, %v5056
      %v5058 = vpop.f32.mrb[0].mxu0
      %5059 = vmatprep.mubr.f32.mxu0 %v4206
      %5060 = vmatmul.mubr.f32.gmra.mrb[0].mxu0 %v4205
      %v5061 = vpop.f32.mrb[0].mxu0
      %v5062 = vadd.f32 %v4837, %v5061
      %v5063 = vpop.f32.mrb[0].mxu0
      %5064 = vmatprep.mubr.f32.mxu0 %v4215
      %5065 = vmatmul.mubr.f32.gmra.mrb[0].mxu0 %v4214
      %v5066 = vpop.f32.mrb[0].mxu0
      %v5067 = vadd.f32 %v4842, %v5066
      %v5068 = vpop.f32.mrb[0].mxu0
      %5069 = vmatprep.mubr.f32.mxu0 %v4224
      %5070 = vmatmul.mubr.f32.gmra.mrb[0].mxu0 %v4223
      %v5071 = vpop.f32.mrb[0].mxu0
      %v5072 = vadd.f32 %v4847, %v5071
      %v5073 = vpop.f32.mrb[0].mxu0
      %5074 = vmatprep.mubr.f32.mxu0 %v4233
      %5075 = vmatmul.mubr.f32.gmra.mrb[0].mxu0 %v4232
      %v5076 = vpop.f32.mrb[0].mxu0
      %v5077 = vadd.f32 %v4852, %v5076
      %v5078 = vpop.f32.mrb[0].mxu0
      %5079 = vmatprep.mubr.f32.mxu0 %v4242
      %5080 = vmatmul.mubr.f32.gmra.mrb[0].mxu0 %v4241
      %v5081 = vpop.f32.mrb[0].mxu0
      %v5082 = vadd.f32 %v4857, %v5081
      %v5083 = vpop.f32.mrb[0].mxu0
      %5084 = vmatprep.mubr.f32.mxu0 %v4251
      %5085 = vmatmul.mubr.f32.gmra.mrb[0].mxu0 %v4250
      %v5086 = vpop.f32.mrb[0].mxu0
      %v5087 = vadd.f32 %v4862, %v5086
      %v5088 = vpop.f32.mrb[0].mxu0
      %5089 = vmatprep.mubr.f32.mxu0 %v4260
      %5090 = vmatmul.mubr.f32.gmra.mrb[0].mxu0 %v4259
      %v5091 = vpop.f32.mrb[0].mxu0
      %v5092 = vadd.f32 %v4867, %v5091
      %v5093 = vpop.f32.mrb[0].mxu0
      %5094 = vmatprep.mubr.f32.mxu0 %v4269
      %5095 = vmatmul.mubr.f32.gmra.mrb[0].mxu0 %v4268
      %v5096 = vpop.f32.mrb[0].mxu0
      %v5097 = vadd.f32 %v4872, %v5096
      %v5098 = vpop.f32.mrb[0].mxu0
      %5099 = vmatprep.mubr.f32.mxu0 %v4278
      %5100 = vmatmul.mubr.f32.gmra.mrb[0].mxu0 %v4277
      %v5101 = vpop.f32.mrb[0].mxu0
      %v5102 = vadd.f32 %v4877, %v5101
      %v5103 = vpop.f32.mrb[0].mxu0
      %5104 = vmatprep.mubr.f32.mxu0 %v4287
      %5105 = vmatmul.mubr.f32.gmra.mrb[0].mxu0 %v4286
      %v5106 = vpop.f32.mrb[0].mxu0
      %v5107 = vadd.f32 %v4882, %v5106
      %v5108 = vpop.f32.mrb[0].mxu0
      %5109 = vdwg.mxu0
      %5110 = vmatprep.subr.mxu0 0.0
      %5111 = vmatpush1.msra.mxu0 %v4387
      %5112 = vmatprep.subr.mxu0 0.0
      %5113 = vmatpush1.msra.mxu0 %v4388
      %5114 = vmatprep.subr.mxu0 0.0
      %5115 = vmatpush1.msra.mxu0 %v4389
      %5116 = vmatprep.subr.mxu0 0.0
      %5117 = vmatpush1.msra.mxu0 %v4390
      %5118 = vmatprep.subr.mxu0 0.0
      %5119 = vmatpush1.msra.mxu0 %v4391
      %5120 = vmatprep.subr.mxu0 0.0
      %5121 = vmatpush1.msra.mxu0 %v4392
      %5122 = vmatprep.subr.mxu0 0.0
      %5123 = vmatpush1.msra.mxu0 %v4393
      %5124 = vmatprep.subr.mxu0 0.0
      %5125 = vmatpush1.msra.mxu0 %v4394
      %5126 = vmatprep.subr.mxu0 0.0
      %5127 = vmatpush1.msra.mxu0 %v4395
      %5128 = vmatprep.subr.mxu0 0.0
      %5129 = vmatpush1.msra.mxu0 %v4396
      %5130 = vmatprep.subr.mxu0 0.0
      %5131 = vmatpush1.msra.mxu0 %v4397
      %5132 = vmatprep.subr.mxu0 0.0
      %5133 = vmatpush1.msra.mxu0 %v4398
      %5134 = vmatprep.subr.mxu0 0.0
      %5135 = vmatpush1.msra.mxu0 %v4399
      %5136 = vmatprep.subr.mxu0 0.0
      %5137 = vmatpush1.msra.mxu0 %v4400
      %5138 = vmatprep.subr.mxu0 0.0
      %5139 = vmatpush1.msra.mxu0 %v4401
      %5140 = vmatprep.subr.mxu0 0.0
      %5141 = vmatpush1.msra.mxu0 %v4402
      %5142 = vmatprep.subr.mxu0 0.0
      %5143 = vmatpush1.msra.mxu0 %v4403
      %5144 = vmatprep.subr.mxu0 0.0
      %5145 = vmatpush1.msra.mxu0 %v4404
      %5146 = vmatprep.subr.mxu0 0.0
      %5147 = vmatpush1.msra.mxu0 %v4405
      %5148 = vmatprep.subr.mxu0 0.0
      %5149 = vmatpush1.msra.mxu0 %v4406
      %5150 = vmatprep.subr.mxu0 0.0
      %5151 = vmatpush1.msra.mxu0 %v4407
      %5152 = vmatprep.subr.mxu0 0.0
      %5153 = vmatpush1.msra.mxu0 %v4408
      %5154 = vmatprep.subr.mxu0 0.0
      %5155 = vmatpush1.msra.mxu0 %v4409
      %5156 = vmatprep.subr.mxu0 0.0
      %5157 = vmatpush1.msra.mxu0 %v4410
      %5158 = vmatprep.subr.mxu0 0.0
      %5159 = vmatpush1.msra.mxu0 %v4411
      %5160 = vmatprep.subr.mxu0 0.0
      %5161 = vmatpush1.msra.mxu0 %v4412
      %5162 = vmatprep.subr.mxu0 0.0
      %5163 = vmatpush1.msra.mxu0 %v4413
      %5164 = vmatprep.subr.mxu0 0.0
      %5165 = vmatpush1.msra.mxu0 %v4414
      %5166 = vmatprep.subr.mxu0 0.0
      %5167 = vmatpush1.msra.mxu0 %v4415
      %5168 = vmatprep.subr.mxu0 0.0
      %5169 = vmatpush1.msra.mxu0 %v4416
      %5170 = vmatprep.subr.mxu0 0.0
      %5171 = vmatpush1.msra.mxu0 %v4417
      %5172 = vmatprep.subr.mxu0 0.0
      %5173 = vmatpush1.msra.mxu0 %v4418
      %5174 = vmatprep.mubr.f32.mxu0 %v4010
      %5175 = vmatmul.mubr.f32.gmra.mrb[0].mxu0 %v4009
      %v5176 = vpop.f32.mrb[0].mxu0
      %v5177 = vadd.f32 %v4952, %v5176
      %v5178 = vpop.f32.mrb[0].mxu0
      %5179 = vmatprep.mubr.f32.mxu0 %v4019
      %5180 = vmatmul.mubr.f32.gmra.mrb[0].mxu0 %v4018
      %v5181 = vpop.f32.mrb[0].mxu0
      %v5182 = vadd.f32 %v4957, %v5181
      %v5183 = vpop.f32.mrb[0].mxu0
      %5184 = vmatprep.mubr.f32.mxu0 %v4028
      %5185 = vmatmul.mubr.f32.gmra.mrb[0].mxu0 %v4027
      %v5186 = vpop.f32.mrb[0].mxu0
      %v5187 = vadd.f32 %v4962, %v5186
      %v5188 = vpop.f32.mrb[0].mxu0
      %5189 = vmatprep.mubr.f32.mxu0 %v4037
      %5190 = vmatmul.mubr.f32.gmra.mrb[0].mxu0 %v4036
      %v5191 = vpop.f32.mrb[0].mxu0
      %v5192 = vadd.f32 %v4967, %v5191
      %v5193 = vpop.f32.mrb[0].mxu0
      %5194 = vmatprep.mubr.f32.mxu0 %v4046
      %5195 = vmatmul.mubr.f32.gmra.mrb[0].mxu0 %v4045
      %v5196 = vpop.f32.mrb[0].mxu0
      %v5197 = vadd.f32 %v4972, %v5196
      %v5198 = vpop.f32.mrb[0].mxu0
      %5199 = vmatprep.mubr.f32.mxu0 %v4055
      %5200 = vmatmul.mubr.f32.gmra.mrb[0].mxu0 %v4054
      %v5201 = vpop.f32.mrb[0].mxu0
      %v5202 = vadd.f32 %v4977, %v5201
      %v5203 = vpop.f32.mrb[0].mxu0
      %5204 = vmatprep.mubr.f32.mxu0 %v4064
      %5205 = vmatmul.mubr.f32.gmra.mrb[0].mxu0 %v4063
      %v5206 = vpop.f32.mrb[0].mxu0
      %v5207 = vadd.f32 %v4982, %v5206
      %v5208 = vpop.f32.mrb[0].mxu0
      %5209 = vmatprep.mubr.f32.mxu0 %v4073
      %5210 = vmatmul.mubr.f32.gmra.mrb[0].mxu0 %v4072
      %v5211 = vpop.f32.mrb[0].mxu0
      %v5212 = vadd.f32 %v4987, %v5211
      %v5213 = vpop.f32.mrb[0].mxu0
      %5214 = vmatprep.mubr.f32.mxu0 %v4082
      %5215 = vmatmul.mubr.f32.gmra.mrb[0].mxu0 %v4081
      %v5216 = vpop.f32.mrb[0].mxu0
      %v5217 = vadd.f32 %v4992, %v5216
      %v5218 = vpop.f32.mrb[0].mxu0
      %5219 = vmatprep.mubr.f32.mxu0 %v4091
      %5220 = vmatmul.mubr.f32.gmra.mrb[0].mxu0 %v4090
      %v5221 = vpop.f32.mrb[0].mxu0
      %v5222 = vadd.f32 %v4997, %v5221
      %v5223 = vpop.f32.mrb[0].mxu0
      %5224 = vmatprep.mubr.f32.mxu0 %v4100
      %5225 = vmatmul.mubr.f32.gmra.mrb[0].mxu0 %v4099
      %v5226 = vpop.f32.mrb[0].mxu0
      %v5227 = vadd.f32 %v5002, %v5226
      %v5228 = vpop.f32.mrb[0].mxu0
      %5229 = vmatprep.mubr.f32.mxu0 %v4109
      %5230 = vmatmul.mubr.f32.gmra.mrb[0].mxu0 %v4108
      %v5231 = vpop.f32.mrb[0].mxu0
      %v5232 = vadd.f32 %v5007, %v5231
      %v5233 = vpop.f32.mrb[0].mxu0
      %5234 = vmatprep.mubr.f32.mxu0 %v4118
      %5235 = vmatmul.mubr.f32.gmra.mrb[0].mxu0 %v4117
      %v5236 = vpop.f32.mrb[0].mxu0
      %v5237 = vadd.f32 %v5012, %v5236
      %v5238 = vpop.f32.mrb[0].mxu0
      %5239 = vmatprep.mubr.f32.mxu0 %v4127
      %5240 = vmatmul.mubr.f32.gmra.mrb[0].mxu0 %v4126
      %v5241 = vpop.f32.mrb[0].mxu0
      %v5242 = vadd.f32 %v5017, %v5241
      %v5243 = vpop.f32.mrb[0].mxu0
      %5244 = vmatprep.mubr.f32.mxu0 %v4136
      %5245 = vmatmul.mubr.f32.gmra.mrb[0].mxu0 %v4135
      %v5246 = vpop.f32.mrb[0].mxu0
      %v5247 = vadd.f32 %v5022, %v5246
      %v5248 = vpop.f32.mrb[0].mxu0
      %5249 = vmatprep.mubr.f32.mxu0 %v4145
      %5250 = vmatmul.mubr.f32.gmra.mrb[0].mxu0 %v4144
      %v5251 = vpop.f32.mrb[0].mxu0
      %v5252 = vadd.f32 %v5027, %v5251
      %v5253 = vpop.f32.mrb[0].mxu0
      %5254 = vmatprep.mubr.f32.mxu0 %v4154
      %5255 = vmatmul.mubr.f32.gmra.mrb[0].mxu0 %v4153
      %v5256 = vpop.f32.mrb[0].mxu0
      %v5257 = vadd.f32 %v5032, %v5256
      %v5258 = vpop.f32.mrb[0].mxu0
      %5259 = vmatprep.mubr.f32.mxu0 %v4163
      %5260 = vmatmul.mubr.f32.gmra.mrb[0].mxu0 %v4162
      %v5261 = vpop.f32.mrb[0].mxu0
      %v5262 = vadd.f32 %v5037, %v5261
      %v5263 = vpop.f32.mrb[0].mxu0
      %5264 = vmatprep.mubr.f32.mxu0 %v4172
      %5265 = vmatmul.mubr.f32.gmra.mrb[0].mxu0 %v4171
      %v5266 = vpop.f32.mrb[0].mxu0
      %v5267 = vadd.f32 %v5042, %v5266
      %v5268 = vpop.f32.mrb[0].mxu0
      %5269 = vmatprep.mubr.f32.mxu0 %v4181
      %5270 = vmatmul.mubr.f32.gmra.mrb[0].mxu0 %v4180
      %v5271 = vpop.f32.mrb[0].mxu0
      %v5272 = vadd.f32 %v5047, %v5271
      %v5273 = vpop.f32.mrb[0].mxu0
      %5274 = vmatprep.mubr.f32.mxu0 %v4190
      %5275 = vmatmul.mubr.f32.gmra.mrb[0].mxu0 %v4189
      %v5276 = vpop.f32.mrb[0].mxu0
      %v5277 = vadd.f32 %v5052, %v5276
      %v5278 = vpop.f32.mrb[0].mxu0
      %5279 = vmatprep.mubr.f32.mxu0 %v4199
      %5280 = vmatmul.mubr.f32.gmra.mrb[0].mxu0 %v4198
      %v5281 = vpop.f32.mrb[0].mxu0
      %v5282 = vadd.f32 %v5057, %v5281
      %v5283 = vpop.f32.mrb[0].mxu0
      %5284 = vmatprep.mubr.f32.mxu0 %v4208
      %5285 = vmatmul.mubr.f32.gmra.mrb[0].mxu0 %v4207
      %v5286 = vpop.f32.mrb[0].mxu0
      %v5287 = vadd.f32 %v5062, %v5286
      %v5288 = vpop.f32.mrb[0].mxu0
      %5289 = vmatprep.mubr.f32.mxu0 %v4217
      %5290 = vmatmul.mubr.f32.gmra.mrb[0].mxu0 %v4216
      %v5291 = vpop.f32.mrb[0].mxu0
      %v5292 = vadd.f32 %v5067, %v5291
      %v5293 = vpop.f32.mrb[0].mxu0
      %5294 = vmatprep.mubr.f32.mxu0 %v4226
      %5295 = vmatmul.mubr.f32.gmra.mrb[0].mxu0 %v4225
      %v5296 = vpop.f32.mrb[0].mxu0
      %v5297 = vadd.f32 %v5072, %v5296
      %v5298 = vpop.f32.mrb[0].mxu0
      %5299 = vmatprep.mubr.f32.mxu0 %v4235
      %5300 = vmatmul.mubr.f32.gmra.mrb[0].mxu0 %v4234
      %v5301 = vpop.f32.mrb[0].mxu0
      %v5302 = vadd.f32 %v5077, %v5301
      %v5303 = vpop.f32.mrb[0].mxu0
      %5304 = vmatprep.mubr.f32.mxu0 %v4244
      %5305 = vmatmul.mubr.f32.gmra.mrb[0].mxu0 %v4243
      %v5306 = vpop.f32.mrb[0].mxu0
      %v5307 = vadd.f32 %v5082, %v5306
      %v5308 = vpop.f32.mrb[0].mxu0
      %5309 = vmatprep.mubr.f32.mxu0 %v4253
      %5310 = vmatmul.mubr.f32.gmra.mrb[0].mxu0 %v4252
      %v5311 = vpop.f32.mrb[0].mxu0
      %v5312 = vadd.f32 %v5087, %v5311
      %v5313 = vpop.f32.mrb[0].mxu0
      %5314 = vmatprep.mubr.f32.mxu0 %v4262
      %5315 = vmatmul.mubr.f32.gmra.mrb[0].mxu0 %v4261
      %v5316 = vpop.f32.mrb[0].mxu0
      %v5317 = vadd.f32 %v5092, %v5316
      %v5318 = vpop.f32.mrb[0].mxu0
      %5319 = vmatprep.mubr.f32.mxu0 %v4271
      %5320 = vmatmul.mubr.f32.gmra.mrb[0].mxu0 %v4270
      %v5321 = vpop.f32.mrb[0].mxu0
      %v5322 = vadd.f32 %v5097, %v5321
      %v5323 = vpop.f32.mrb[0].mxu0
      %5324 = vmatprep.mubr.f32.mxu0 %v4280
      %5325 = vmatmul.mubr.f32.gmra.mrb[0].mxu0 %v4279
      %v5326 = vpop.f32.mrb[0].mxu0
      %v5327 = vadd.f32 %v5102, %v5326
      %v5328 = vpop.f32.mrb[0].mxu0
      %5329 = vmatprep.mubr.f32.mxu0 %v4289
      %5330 = vmatmul.mubr.f32.gmra.mrb[0].mxu0 %v4288
      %v5331 = vpop.f32.mrb[0].mxu0
      %v5332 = vadd.f32 %v5107, %v5331
      %v5333 = vpop.f32.mrb[0].mxu0
      %5334 = vdwg.mxu0
      %5335 = vmatprep.subr.mxu0 0.0
      %5336 = vmatpush1.msra.mxu0 %v4419
      %5337 = vmatprep.subr.mxu0 0.0
      %5338 = vmatpush1.msra.mxu0 %v4420
      %5339 = vmatprep.subr.mxu0 0.0
      %5340 = vmatpush1.msra.mxu0 %v4421
      %5341 = vmatprep.subr.mxu0 0.0
      %5342 = vmatpush1.msra.mxu0 %v4422
      %5343 = vmatprep.subr.mxu0 0.0
      %5344 = vmatpush1.msra.mxu0 %v4423
      %5345 = vmatprep.subr.mxu0 0.0
      %5346 = vmatpush1.msra.mxu0 %v4424
      %5347 = vmatprep.subr.mxu0 0.0
      %5348 = vmatpush1.msra.mxu0 %v4425
      %5349 = vmatprep.subr.mxu0 0.0
      %5350 = vmatpush1.msra.mxu0 %v4426
      %5351 = vmatprep.subr.mxu0 0.0
      %5352 = vmatpush1.msra.mxu0 %v4427
      %5353 = vmatprep.subr.mxu0 0.0
      %5354 = vmatpush1.msra.mxu0 %v4428
      %5355 = vmatprep.subr.mxu0 0.0
      %5356 = vmatpush1.msra.mxu0 %v4429
      %5357 = vmatprep.subr.mxu0 0.0
      %5358 = vmatpush1.msra.mxu0 %v4430
      %5359 = vmatprep.subr.mxu0 0.0
      %5360 = vmatpush1.msra.mxu0 %v4431
      %5361 = vmatprep.subr.mxu0 0.0
      %5362 = vmatpush1.msra.mxu0 %v4432
      %5363 = vmatprep.subr.mxu0 0.0
      %5364 = vmatpush1.msra.mxu0 %v4433
      %5365 = vmatprep.subr.mxu0 0.0
      %5366 = vmatpush1.msra.mxu0 %v4434
      %5367 = vmatprep.subr.mxu0 0.0
      %5368 = vmatpush1.msra.mxu0 0.0
      %5369 = vmatprep.subr.mxu0 0.0
      %5370 = vmatpush1.msra.mxu0 0.0
      %5371 = vmatprep.subr.mxu0 0.0
      %5372 = vmatpush1.msra.mxu0 0.0
      %5373 = vmatprep.subr.mxu0 0.0
      %5374 = vmatpush1.msra.mxu0 0.0
      %5375 = vmatprep.subr.mxu0 0.0
      %5376 = vmatpush1.msra.mxu0 0.0
      %5377 = vmatprep.subr.mxu0 0.0
      %5378 = vmatpush1.msra.mxu0 0.0
      %5379 = vmatprep.subr.mxu0 0.0
      %5380 = vmatpush1.msra.mxu0 0.0
      %5381 = vmatprep.subr.mxu0 0.0
      %5382 = vmatpush1.msra.mxu0 0.0
      %5383 = vmatprep.subr.mxu0 0.0
      %5384 = vmatpush1.msra.mxu0 0.0
      %5385 = vmatprep.subr.mxu0 0.0
      %5386 = vmatpush1.msra.mxu0 0.0
      %5387 = vmatprep.subr.mxu0 0.0
      %5388 = vmatpush1.msra.mxu0 0.0
      %5389 = vmatprep.subr.mxu0 0.0
      %5390 = vmatpush1.msra.mxu0 0.0
      %5391 = vmatprep.subr.mxu0 0.0
      %5392 = vmatpush1.msra.mxu0 0.0
      %5393 = vmatprep.subr.mxu0 0.0
      %5394 = vmatpush1.msra.mxu0 0.0
      %5395 = vmatprep.subr.mxu0 0.0
      %5396 = vmatpush1.msra.mxu0 0.0
      %5397 = vmatprep.subr.mxu0 0.0
      %5398 = vmatpush1.msra.mxu0 0.0
      %5399 = vmatprep.mubr.f32.mxu0 0.0
      %5400 = vmatmul.mubr.f32.gmra.mrb[0].mxu0 %v4011
      %v5401 = vpop.f32.mrb[0].mxu0
      %v5402 = vadd.f32 %v5177, %v5401
      %v5403 = vpop.f32.mrb[0].mxu0
      %5404 = vmatprep.mubr.f32.mxu0 0.0
      %5405 = vmatmul.mubr.f32.gmra.mrb[0].mxu0 %v4020
      %v5406 = vpop.f32.mrb[0].mxu0
      %v5407 = vadd.f32 %v5182, %v5406
      %v5408 = vpop.f32.mrb[0].mxu0
      %5409 = vmatprep.mubr.f32.mxu0 0.0
      %5410 = vmatmul.mubr.f32.gmra.mrb[0].mxu0 %v4029
      %v5411 = vpop.f32.mrb[0].mxu0
      %v5412 = vadd.f32 %v5187, %v5411
      %v5413 = vpop.f32.mrb[0].mxu0
      %5414 = vmatprep.mubr.f32.mxu0 0.0
      %5415 = vmatmul.mubr.f32.gmra.mrb[0].mxu0 %v4038
      %v5416 = vpop.f32.mrb[0].mxu0
      %v5417 = vadd.f32 %v5192, %v5416
      %v5418 = vpop.f32.mrb[0].mxu0
      %5419 = vmatprep.mubr.f32.mxu0 0.0
      %5420 = vmatmul.mubr.f32.gmra.mrb[0].mxu0 %v4047
      %v5421 = vpop.f32.mrb[0].mxu0
      %v5422 = vadd.f32 %v5197, %v5421
      %v5423 = vpop.f32.mrb[0].mxu0
      %5424 = vmatprep.mubr.f32.mxu0 0.0
      %5425 = vmatmul.mubr.f32.gmra.mrb[0].mxu0 %v4056
      %v5426 = vpop.f32.mrb[0].mxu0
      %v5427 = vadd.f32 %v5202, %v5426
      %v5428 = vpop.f32.mrb[0].mxu0
      %5429 = vmatprep.mubr.f32.mxu0 0.0
      %5430 = vmatmul.mubr.f32.gmra.mrb[0].mxu0 %v4065
      %v5431 = vpop.f32.mrb[0].mxu0
      %v5432 = vadd.f32 %v5207, %v5431
      %v5433 = vpop.f32.mrb[0].mxu0
      %5434 = vmatprep.mubr.f32.mxu0 0.0
      %5435 = vmatmul.mubr.f32.gmra.mrb[0].mxu0 %v4074
      %v5436 = vpop.f32.mrb[0].mxu0
      %v5437 = vadd.f32 %v5212, %v5436
      %v5438 = vpop.f32.mrb[0].mxu0
      %5439 = vmatprep.mubr.f32.mxu0 0.0
      %5440 = vmatmul.mubr.f32.gmra.mrb[0].mxu0 %v4083
      %v5441 = vpop.f32.mrb[0].mxu0
      %v5442 = vadd.f32 %v5217, %v5441
      %v5443 = vpop.f32.mrb[0].mxu0
      %5444 = vmatprep.mubr.f32.mxu0 0.0
      %5445 = vmatmul.mubr.f32.gmra.mrb[0].mxu0 %v4092
      %v5446 = vpop.f32.mrb[0].mxu0
      %v5447 = vadd.f32 %v5222, %v5446
      %v5448 = vpop.f32.mrb[0].mxu0
      %5449 = vmatprep.mubr.f32.mxu0 0.0
      %5450 = vmatmul.mubr.f32.gmra.mrb[0].mxu0 %v4101
      %v5451 = vpop.f32.mrb[0].mxu0
      %v5452 = vadd.f32 %v5227, %v5451
      %v5453 = vpop.f32.mrb[0].mxu0
      %5454 = vmatprep.mubr.f32.mxu0 0.0
      %5455 = vmatmul.mubr.f32.gmra.mrb[0].mxu0 %v4110
      %v5456 = vpop.f32.mrb[0].mxu0
      %v5457 = vadd.f32 %v5232, %v5456
      %v5458 = vpop.f32.mrb[0].mxu0
      %5459 = vmatprep.mubr.f32.mxu0 0.0
      %5460 = vmatmul.mubr.f32.gmra.mrb[0].mxu0 %v4119
      %v5461 = vpop.f32.mrb[0].mxu0
      %v5462 = vadd.f32 %v5237, %v5461
      %v5463 = vpop.f32.mrb[0].mxu0
      %5464 = vmatprep.mubr.f32.mxu0 0.0
      %5465 = vmatmul.mubr.f32.gmra.mrb[0].mxu0 %v4128
      %v5466 = vpop.f32.mrb[0].mxu0
      %v5467 = vadd.f32 %v5242, %v5466
      %v5468 = vpop.f32.mrb[0].mxu0
      %5469 = vmatprep.mubr.f32.mxu0 0.0
      %5470 = vmatmul.mubr.f32.gmra.mrb[0].mxu0 %v4137
      %v5471 = vpop.f32.mrb[0].mxu0
      %v5472 = vadd.f32 %v5247, %v5471
      %v5473 = vpop.f32.mrb[0].mxu0
      %5474 = vmatprep.mubr.f32.mxu0 0.0
      %5475 = vmatmul.mubr.f32.gmra.mrb[0].mxu0 %v4146
      %v5476 = vpop.f32.mrb[0].mxu0
      %v5477 = vadd.f32 %v5252, %v5476
      %v5478 = vpop.f32.mrb[0].mxu0
      %5479 = vmatprep.mubr.f32.mxu0 0.0
      %5480 = vmatmul.mubr.f32.gmra.mrb[0].mxu0 %v4155
      %v5481 = vpop.f32.mrb[0].mxu0
      %v5482 = vadd.f32 %v5257, %v5481
      %v5483 = vpop.f32.mrb[0].mxu0
      %5484 = vmatprep.mubr.f32.mxu0 0.0
      %5485 = vmatmul.mubr.f32.gmra.mrb[0].mxu0 %v4164
      %v5486 = vpop.f32.mrb[0].mxu0
      %v5487 = vadd.f32 %v5262, %v5486
      %v5488 = vpop.f32.mrb[0].mxu0
      %5489 = vmatprep.mubr.f32.mxu0 0.0
      %5490 = vmatmul.mubr.f32.gmra.mrb[0].mxu0 %v4173
      %v5491 = vpop.f32.mrb[0].mxu0
      %v5492 = vadd.f32 %v5267, %v5491
      %v5493 = vpop.f32.mrb[0].mxu0
      %5494 = vmatprep.mubr.f32.mxu0 0.0
      %5495 = vmatmul.mubr.f32.gmra.mrb[0].mxu0 %v4182
      %v5496 = vpop.f32.mrb[0].mxu0
      %v5497 = vadd.f32 %v5272, %v5496
      %v5498 = vpop.f32.mrb[0].mxu0
      %5499 = vmatprep.mubr.f32.mxu0 0.0
      %5500 = vmatmul.mubr.f32.gmra.mrb[0].mxu0 %v4191
      %v5501 = vpop.f32.mrb[0].mxu0
      %v5502 = vadd.f32 %v5277, %v5501
      %v5503 = vpop.f32.mrb[0].mxu0
      %5504 = vmatprep.mubr.f32.mxu0 0.0
      %5505 = vmatmul.mubr.f32.gmra.mrb[0].mxu0 %v4200
      %v5506 = vpop.f32.mrb[0].mxu0
      %v5507 = vadd.f32 %v5282, %v5506
      %v5508 = vpop.f32.mrb[0].mxu0
      %5509 = vmatprep.mubr.f32.mxu0 0.0
      %5510 = vmatmul.mubr.f32.gmra.mrb[0].mxu0 %v4209
      %v5511 = vpop.f32.mrb[0].mxu0
      %v5512 = vadd.f32 %v5287, %v5511
      %v5513 = vpop.f32.mrb[0].mxu0
      %5514 = vmatprep.mubr.f32.mxu0 0.0
      %5515 = vmatmul.mubr.f32.gmra.mrb[0].mxu0 %v4218
      %v5516 = vpop.f32.mrb[0].mxu0
      %v5517 = vadd.f32 %v5292, %v5516
      %v5518 = vpop.f32.mrb[0].mxu0
      %5519 = vmatprep.mubr.f32.mxu0 0.0
      %5520 = vmatmul.mubr.f32.gmra.mrb[0].mxu0 %v4227
      %v5521 = vpop.f32.mrb[0].mxu0
      %v5522 = vadd.f32 %v5297, %v5521
      %v5523 = vpop.f32.mrb[0].mxu0
      %5524 = vmatprep.mubr.f32.mxu0 0.0
      %5525 = vmatmul.mubr.f32.gmra.mrb[0].mxu0 %v4236
      %v5526 = vpop.f32.mrb[0].mxu0
      %v5527 = vadd.f32 %v5302, %v5526
      %v5528 = vpop.f32.mrb[0].mxu0
      %5529 = vmatprep.mubr.f32.mxu0 0.0
      %5530 = vmatmul.mubr.f32.gmra.mrb[0].mxu0 %v4245
      %v5531 = vpop.f32.mrb[0].mxu0
      %v5532 = vadd.f32 %v5307, %v5531
      %v5533 = vpop.f32.mrb[0].mxu0
      %5534 = vmatprep.mubr.f32.mxu0 0.0
      %5535 = vmatmul.mubr.f32.gmra.mrb[0].mxu0 %v4254
      %v5536 = vpop.f32.mrb[0].mxu0
      %v5537 = vadd.f32 %v5312, %v5536
      %v5538 = vpop.f32.mrb[0].mxu0
      %5539 = vmatprep.mubr.f32.mxu0 0.0
      %5540 = vmatmul.mubr.f32.gmra.mrb[0].mxu0 %v4263
      %v5541 = vpop.f32.mrb[0].mxu0
      %v5542 = vadd.f32 %v5317, %v5541
      %v5543 = vpop.f32.mrb[0].mxu0
      %5544 = vmatprep.mubr.f32.mxu0 0.0
      %5545 = vmatmul.mubr.f32.gmra.mrb[0].mxu0 %v4272
      %v5546 = vpop.f32.mrb[0].mxu0
      %v5547 = vadd.f32 %v5322, %v5546
      %v5548 = vpop.f32.mrb[0].mxu0
      %5549 = vmatprep.mubr.f32.mxu0 0.0
      %5550 = vmatmul.mubr.f32.gmra.mrb[0].mxu0 %v4281
      %v5551 = vpop.f32.mrb[0].mxu0
      %v5552 = vadd.f32 %v5327, %v5551
      %v5553 = vpop.f32.mrb[0].mxu0
      %5554 = vmatprep.mubr.f32.mxu0 0.0
      %5555 = vmatmul.mubr.f32.gmra.mrb[0].mxu0 %v4290
      %v5556 = vpop.f32.mrb[0].mxu0
      %v5557 = vadd.f32 %v5332, %v5556
      %v5558 = vpop.f32.mrb[0].mxu0
      %5559 = vdwg.mxu0
      %v5560 = vsel %vm2714, %v5402, 0.0
      %v5561 = vsel %vm2714, %v5407, 0.0
      %v5562 = vadd.f32 %v5560, %v5561
      %v5563 = vsel %vm2714, %v5412, 0.0
      %v5564 = vadd.f32 %v5562, %v5563
      %v5565 = vsel %vm2714, %v5417, 0.0
      %v5566 = vadd.f32 %v5564, %v5565
      %v5567 = vsel %vm2714, %v5422, 0.0
      %v5568 = vadd.f32 %v5566, %v5567
      %v5569 = vsel %vm2714, %v5427, 0.0
      %v5570 = vadd.f32 %v5568, %v5569
      %v5571 = vsel %vm2714, %v5432, 0.0
      %v5572 = vadd.f32 %v5570, %v5571
      %v5573 = vsel %vm2714, %v5437, 0.0
      %v5574 = vadd.f32 %v5572, %v5573
      %v5575 = vsel %vm2714, %v5442, 0.0
      %v5576 = vadd.f32 %v5574, %v5575
      %v5577 = vsel %vm2714, %v5447, 0.0
      %v5578 = vadd.f32 %v5576, %v5577
      %v5579 = vsel %vm2714, %v5452, 0.0
      %v5580 = vadd.f32 %v5578, %v5579
      %v5581 = vsel %vm2714, %v5457, 0.0
      %v5582 = vadd.f32 %v5580, %v5581
      %v5583 = vsel %vm2714, %v5462, 0.0
      %v5584 = vadd.f32 %v5582, %v5583
      %v5585 = vsel %vm2714, %v5467, 0.0
      %v5586 = vadd.f32 %v5584, %v5585
      %v5587 = vsel %vm2714, %v5472, 0.0
      %v5588 = vadd.f32 %v5586, %v5587
      %v5589 = vsel %vm2714, %v5477, 0.0
      %v5590 = vadd.f32 %v5588, %v5589
      %v5591 = vsel %vm2714, %v5482, 0.0
      %v5592 = vadd.f32 %v5590, %v5591
      %v5593 = vsel %vm2714, %v5487, 0.0
      %v5594 = vadd.f32 %v5592, %v5593
      %v5595 = vsel %vm2714, %v5492, 0.0
      %v5596 = vadd.f32 %v5594, %v5595
      %v5597 = vsel %vm2714, %v5497, 0.0
      %v5598 = vadd.f32 %v5596, %v5597
      %v5599 = vsel %vm2714, %v5502, 0.0
      %v5600 = vadd.f32 %v5598, %v5599
      %v5601 = vsel %vm2714, %v5507, 0.0
      %v5602 = vadd.f32 %v5600, %v5601
      %v5603 = vsel %vm2714, %v5512, 0.0
      %v5604 = vadd.f32 %v5602, %v5603
      %v5605 = vsel %vm2714, %v5517, 0.0
      %v5606 = vadd.f32 %v5604, %v5605
      %v5607 = vsel %vm2714, %v5522, 0.0
      %v5608 = vadd.f32 %v5606, %v5607
      %v5609 = vsel %vm2714, %v5527, 0.0
      %v5610 = vadd.f32 %v5608, %v5609
      %v5611 = vsel %vm2714, %v5532, 0.0
      %v5612 = vadd.f32 %v5610, %v5611
      %v5613 = vsel %vm2714, %v5537, 0.0
      %v5614 = vadd.f32 %v5612, %v5613
      %v5615 = vsel %vm2714, %v5542, 0.0
      %v5616 = vadd.f32 %v5614, %v5615
      %v5617 = vsel %vm2714, %v5547, 0.0
      %v5618 = vadd.f32 %v5616, %v5617
      %v5619 = vsel %vm2714, %v5552, 0.0
      %v5620 = vadd.f32 %v5618, %v5619
      %v5621 = vsel %vm2714, %v5557, 0.0
      %v5622 = vadd.f32 %v5620, %v5621
      %v5623 = vrot.slane %v5622, 4
      %v5624 = vadd.f32 %v5622, %v5623
      %v5625 = vrot.slane %v5624, 2
      %v5626 = vadd.f32 %v5624, %v5625
      %v5627 = vrot.slane %v5626, 1
      %v5628 = vadd.f32 %v5626, %v5627
      %v5629 = vmul.f32 %v5628, %v2784
      %v5630 = vsub.f32 %v5402, %v5629
      %v5631 = vsub.f32 %v5407, %v5629
      %v5632 = vsub.f32 %v5412, %v5629
      %v5633 = vsub.f32 %v5417, %v5629
      %v5634 = vsub.f32 %v5422, %v5629
      %v5635 = vsub.f32 %v5427, %v5629
      %v5636 = vsub.f32 %v5432, %v5629
      %v5637 = vsub.f32 %v5437, %v5629
      %v5638 = vsub.f32 %v5442, %v5629
      %v5639 = vsub.f32 %v5447, %v5629
      %v5640 = vsub.f32 %v5452, %v5629
      %v5641 = vsub.f32 %v5457, %v5629
      %v5642 = vsub.f32 %v5462, %v5629
      %v5643 = vsub.f32 %v5467, %v5629
      %v5644 = vsub.f32 %v5472, %v5629
      %v5645 = vsub.f32 %v5477, %v5629
      %v5646 = vsub.f32 %v5482, %v5629
      %v5647 = vsub.f32 %v5487, %v5629
      %v5648 = vsub.f32 %v5492, %v5629
      %v5649 = vsub.f32 %v5497, %v5629
      %v5650 = vsub.f32 %v5502, %v5629
      %v5651 = vsub.f32 %v5507, %v5629
      %v5652 = vsub.f32 %v5512, %v5629
      %v5653 = vsub.f32 %v5517, %v5629
      %v5654 = vsub.f32 %v5522, %v5629
      %v5655 = vsub.f32 %v5527, %v5629
      %v5656 = vsub.f32 %v5532, %v5629
      %v5657 = vsub.f32 %v5537, %v5629
      %v5658 = vsub.f32 %v5542, %v5629
      %v5659 = vsub.f32 %v5547, %v5629
      %v5660 = vsub.f32 %v5552, %v5629
      %v5661 = vsub.f32 %v5557, %v5629
      %v5662 = vmul.f32 %v5630, %v5630
      %v5663 = vmul.f32 %v5631, %v5631
      %v5664 = vmul.f32 %v5632, %v5632
      %v5665 = vmul.f32 %v5633, %v5633
      %v5666 = vmul.f32 %v5634, %v5634
      %v5667 = vmul.f32 %v5635, %v5635
      %v5668 = vmul.f32 %v5636, %v5636
      %v5669 = vmul.f32 %v5637, %v5637
      %v5670 = vmul.f32 %v5638, %v5638
      %v5671 = vmul.f32 %v5639, %v5639
      %v5672 = vmul.f32 %v5640, %v5640
      %v5673 = vmul.f32 %v5641, %v5641
      %v5674 = vmul.f32 %v5642, %v5642
      %v5675 = vmul.f32 %v5643, %v5643
      %v5676 = vmul.f32 %v5644, %v5644
      %v5677 = vmul.f32 %v5645, %v5645
      %v5678 = vmul.f32 %v5646, %v5646
      %v5679 = vmul.f32 %v5647, %v5647
      %v5680 = vmul.f32 %v5648, %v5648
      %v5681 = vmul.f32 %v5649, %v5649
      %v5682 = vmul.f32 %v5650, %v5650
      %v5683 = vmul.f32 %v5651, %v5651
      %v5684 = vmul.f32 %v5652, %v5652
      %v5685 = vmul.f32 %v5653, %v5653
      %v5686 = vmul.f32 %v5654, %v5654
      %v5687 = vmul.f32 %v5655, %v5655
      %v5688 = vmul.f32 %v5656, %v5656
      %v5689 = vmul.f32 %v5657, %v5657
      %v5690 = vmul.f32 %v5658, %v5658
      %v5691 = vmul.f32 %v5659, %v5659
      %v5692 = vmul.f32 %v5660, %v5660
      %v5693 = vmul.f32 %v5661, %v5661
      %v5694 = vsel %vm2714, %v5662, 0.0
      %v5695 = vsel %vm2714, %v5663, 0.0
      %v5696 = vadd.f32 %v5694, %v5695
      %v5697 = vsel %vm2714, %v5664, 0.0
      %v5698 = vadd.f32 %v5696, %v5697
      %v5699 = vsel %vm2714, %v5665, 0.0
      %v5700 = vadd.f32 %v5698, %v5699
      %v5701 = vsel %vm2714, %v5666, 0.0
      %v5702 = vadd.f32 %v5700, %v5701
      %v5703 = vsel %vm2714, %v5667, 0.0
      %v5704 = vadd.f32 %v5702, %v5703
      %v5705 = vsel %vm2714, %v5668, 0.0
      %v5706 = vadd.f32 %v5704, %v5705
      %v5707 = vsel %vm2714, %v5669, 0.0
      %v5708 = vadd.f32 %v5706, %v5707
      %v5709 = vsel %vm2714, %v5670, 0.0
      %v5710 = vadd.f32 %v5708, %v5709
      %v5711 = vsel %vm2714, %v5671, 0.0
      %v5712 = vadd.f32 %v5710, %v5711
      %v5713 = vsel %vm2714, %v5672, 0.0
      %v5714 = vadd.f32 %v5712, %v5713
      %v5715 = vsel %vm2714, %v5673, 0.0
      %v5716 = vadd.f32 %v5714, %v5715
      %v5717 = vsel %vm2714, %v5674, 0.0
      %v5718 = vadd.f32 %v5716, %v5717
      %v5719 = vsel %vm2714, %v5675, 0.0
      %v5720 = vadd.f32 %v5718, %v5719
      %v5721 = vsel %vm2714, %v5676, 0.0
      %v5722 = vadd.f32 %v5720, %v5721
      %v5723 = vsel %vm2714, %v5677, 0.0
      %v5724 = vadd.f32 %v5722, %v5723
      %v5725 = vsel %vm2714, %v5678, 0.0
      %v5726 = vadd.f32 %v5724, %v5725
      %v5727 = vsel %vm2714, %v5679, 0.0
      %v5728 = vadd.f32 %v5726, %v5727
      %v5729 = vsel %vm2714, %v5680, 0.0
      %v5730 = vadd.f32 %v5728, %v5729
      %v5731 = vsel %vm2714, %v5681, 0.0
      %v5732 = vadd.f32 %v5730, %v5731
      %v5733 = vsel %vm2714, %v5682, 0.0
      %v5734 = vadd.f32 %v5732, %v5733
      %v5735 = vsel %vm2714, %v5683, 0.0
      %v5736 = vadd.f32 %v5734, %v5735
      %v5737 = vsel %vm2714, %v5684, 0.0
      %v5738 = vadd.f32 %v5736, %v5737
      %v5739 = vsel %vm2714, %v5685, 0.0
      %v5740 = vadd.f32 %v5738, %v5739
      %v5741 = vsel %vm2714, %v5686, 0.0
      %v5742 = vadd.f32 %v5740, %v5741
      %v5743 = vsel %vm2714, %v5687, 0.0
      %v5744 = vadd.f32 %v5742, %v5743
      %v5745 = vsel %vm2714, %v5688, 0.0
      %v5746 = vadd.f32 %v5744, %v5745
      %v5747 = vsel %vm2714, %v5689, 0.0
      %v5748 = vadd.f32 %v5746, %v5747
      %v5749 = vsel %vm2714, %v5690, 0.0
      %v5750 = vadd.f32 %v5748, %v5749
      %v5751 = vsel %vm2714, %v5691, 0.0
      %v5752 = vadd.f32 %v5750, %v5751
      %v5753 = vsel %vm2714, %v5692, 0.0
      %v5754 = vadd.f32 %v5752, %v5753
      %v5755 = vsel %vm2714, %v5693, 0.0
      %v5756 = vadd.f32 %v5754, %v5755
      %v5757 = vrot.slane %v5756, 4
      %v5758 = vadd.f32 %v5756, %v5757
      %v5759 = vrot.slane %v5758, 2
      %v5760 = vadd.f32 %v5758, %v5759
      %v5761 = vrot.slane %v5760, 1
      %v5762 = vadd.f32 %v5760, %v5761
      %v5763 = vmul.f32 %v5762, %v2784
      %v5764 = vadd.f32 %v5763, 1e-05
      %v5765 = vrsqrt.pop %v5764
      %v5766 = vmul.f32 %v5630, %v5765
      %v5767 = vmul.f32 %v5631, %v5765
      %v5768 = vmul.f32 %v5632, %v5765
      %v5769 = vmul.f32 %v5633, %v5765
      %v5770 = vmul.f32 %v5634, %v5765
      %v5771 = vmul.f32 %v5635, %v5765
      %v5772 = vmul.f32 %v5636, %v5765
      %v5773 = vmul.f32 %v5637, %v5765
      %v5774 = vmul.f32 %v5638, %v5765
      %v5775 = vmul.f32 %v5639, %v5765
      %v5776 = vmul.f32 %v5640, %v5765
      %v5777 = vmul.f32 %v5641, %v5765
      %v5778 = vmul.f32 %v5642, %v5765
      %v5779 = vmul.f32 %v5643, %v5765
      %v5780 = vmul.f32 %v5644, %v5765
      %v5781 = vmul.f32 %v5645, %v5765
      %v5782 = vmul.f32 %v5646, %v5765
      %v5783 = vmul.f32 %v5647, %v5765
      %v5784 = vmul.f32 %v5648, %v5765
      %v5785 = vmul.f32 %v5649, %v5765
      %v5786 = vmul.f32 %v5650, %v5765
      %v5787 = vmul.f32 %v5651, %v5765
      %v5788 = vmul.f32 %v5652, %v5765
      %v5789 = vmul.f32 %v5653, %v5765
      %v5790 = vmul.f32 %v5654, %v5765
      %v5791 = vmul.f32 %v5655, %v5765
      %v5792 = vmul.f32 %v5656, %v5765
      %v5793 = vmul.f32 %v5657, %v5765
      %v5794 = vmul.f32 %v5658, %v5765
      %v5795 = vmul.f32 %v5659, %v5765
      %v5796 = vmul.f32 %v5660, %v5765
      %v5797 = vmul.f32 %v5661, %v5765
      %vm5798 = vcmp.ge.f32.partialorder %v5766, 0.0
      %vm5799 = vcmp.ge.f32.partialorder %v5767, 0.0
      %vm5800 = vcmp.ge.f32.partialorder %v5768, 0.0
      %vm5801 = vcmp.ge.f32.partialorder %v5769, 0.0
      %vm5802 = vcmp.ge.f32.partialorder %v5770, 0.0
      %vm5803 = vcmp.ge.f32.partialorder %v5771, 0.0
      %vm5804 = vcmp.ge.f32.partialorder %v5772, 0.0
      %vm5805 = vcmp.ge.f32.partialorder %v5773, 0.0
      %vm5806 = vcmp.ge.f32.partialorder %v5774, 0.0
      %vm5807 = vcmp.ge.f32.partialorder %v5775, 0.0
      %vm5808 = vcmp.ge.f32.partialorder %v5776, 0.0
      %vm5809 = vcmp.ge.f32.partialorder %v5777, 0.0
      %vm5810 = vcmp.ge.f32.partialorder %v5778, 0.0
      %vm5811 = vcmp.ge.f32.partialorder %v5779, 0.0
      %vm5812 = vcmp.ge.f32.partialorder %v5780, 0.0
      %vm5813 = vcmp.ge.f32.partialorder %v5781, 0.0
      %vm5814 = vcmp.ge.f32.partialorder %v5782, 0.0
      %vm5815 = vcmp.ge.f32.partialorder %v5783, 0.0
      %vm5816 = vcmp.ge.f32.partialorder %v5784, 0.0
      %vm5817 = vcmp.ge.f32.partialorder %v5785, 0.0
      %vm5818 = vcmp.ge.f32.partialorder %v5786, 0.0
      %vm5819 = vcmp.ge.f32.partialorder %v5787, 0.0
      %vm5820 = vcmp.ge.f32.partialorder %v5788, 0.0
      %vm5821 = vcmp.ge.f32.partialorder %v5789, 0.0
      %vm5822 = vcmp.ge.f32.partialorder %v5790, 0.0
      %vm5823 = vcmp.ge.f32.partialorder %v5791, 0.0
      %vm5824 = vcmp.ge.f32.partialorder %v5792, 0.0
      %vm5825 = vcmp.ge.f32.partialorder %v5793, 0.0
      %vm5826 = vcmp.ge.f32.partialorder %v5794, 0.0
      %vm5827 = vcmp.ge.f32.partialorder %v5795, 0.0
      %vm5828 = vcmp.ge.f32.partialorder %v5796, 0.0
      %vm5829 = vcmp.ge.f32.partialorder %v5797, 0.0
      %v5830 = vmul.f32 %v5766, 0.2
      %v5831 = vmul.f32 %v5767, 0.2
      %v5832 = vmul.f32 %v5768, 0.2
      %v5833 = vmul.f32 %v5769, 0.2
      %v5834 = vmul.f32 %v5770, 0.2
      %v5835 = vmul.f32 %v5771, 0.2
      %v5836 = vmul.f32 %v5772, 0.2
      %v5837 = vmul.f32 %v5773, 0.2
      %v5838 = vmul.f32 %v5774, 0.2
      %v5839 = vmul.f32 %v5775, 0.2
      %v5840 = vmul.f32 %v5776, 0.2
      %v5841 = vmul.f32 %v5777, 0.2
      %v5842 = vmul.f32 %v5778, 0.2
      %v5843 = vmul.f32 %v5779, 0.2
      %v5844 = vmul.f32 %v5780, 0.2
      %v5845 = vmul.f32 %v5781, 0.2
      %v5846 = vmul.f32 %v5782, 0.2
      %v5847 = vmul.f32 %v5783, 0.2
      %v5848 = vmul.f32 %v5784, 0.2
      %v5849 = vmul.f32 %v5785, 0.2
      %v5850 = vmul.f32 %v5786, 0.2
      %v5851 = vmul.f32 %v5787, 0.2
      %v5852 = vmul.f32 %v5788, 0.2
      %v5853 = vmul.f32 %v5789, 0.2
      %v5854 = vmul.f32 %v5790, 0.2
      %v5855 = vmul.f32 %v5791, 0.2
      %v5856 = vmul.f32 %v5792, 0.2
      %v5857 = vmul.f32 %v5793, 0.2
      %v5858 = vmul.f32 %v5794, 0.2
      %v5859 = vmul.f32 %v5795, 0.2
      %v5860 = vmul.f32 %v5796, 0.2
      %v5861 = vmul.f32 %v5797, 0.2
      %v5862 = vsel %vm5798, %v5766, %v5830
      %v5863 = vsel %vm5799, %v5767, %v5831
      %v5864 = vsel %vm5800, %v5768, %v5832
      %v5865 = vsel %vm5801, %v5769, %v5833
      %v5866 = vsel %vm5802, %v5770, %v5834
      %v5867 = vsel %vm5803, %v5771, %v5835
      %v5868 = vsel %vm5804, %v5772, %v5836
      %v5869 = vsel %vm5805, %v5773, %v5837
      %v5870 = vsel %vm5806, %v5774, %v5838
      %v5871 = vsel %vm5807, %v5775, %v5839
      %v5872 = vsel %vm5808, %v5776, %v5840
      %v5873 = vsel %vm5809, %v5777, %v5841
      %v5874 = vsel %vm5810, %v5778, %v5842
      %v5875 = vsel %vm5811, %v5779, %v5843
      %v5876 = vsel %vm5812, %v5780, %v5844
      %v5877 = vsel %vm5813, %v5781, %v5845
      %v5878 = vsel %vm5814, %v5782, %v5846
      %v5879 = vsel %vm5815, %v5783, %v5847
      %v5880 = vsel %vm5816, %v5784, %v5848
      %v5881 = vsel %vm5817, %v5785, %v5849
      %v5882 = vsel %vm5818, %v5786, %v5850
      %v5883 = vsel %vm5819, %v5787, %v5851
      %v5884 = vsel %vm5820, %v5788, %v5852
      %v5885 = vsel %vm5821, %v5789, %v5853
      %v5886 = vsel %vm5822, %v5790, %v5854
      %v5887 = vsel %vm5823, %v5791, %v5855
      %v5888 = vsel %vm5824, %v5792, %v5856
      %v5889 = vsel %vm5825, %v5793, %v5857
      %v5890 = vsel %vm5826, %v5794, %v5858
      %v5891 = vsel %vm5827, %v5795, %v5859
      %v5892 = vsel %vm5828, %v5796, %v5860
      %v5893 = vsel %vm5829, %v5797, %v5861
      %5894 = vst.msk [vmem:[%s170] sm:$0xff] %vm2714, %v5862
      %5895 = vst.msk [vmem:[%s170 + $0x8] sm:$0xff] %vm2714, %v5863
      %5896 = vst.msk [vmem:[%s170 + $0x10] sm:$0xff] %vm2714, %v5864
      %5897 = vst.msk [vmem:[%s170 + $0x18] sm:$0xff] %vm2714, %v5865
      %5898 = vst.msk [vmem:[%s170 + $0x20] sm:$0xff] %vm2714, %v5866
      %5899 = vst.msk [vmem:[%s170 + $0x28] sm:$0xff] %vm2714, %v5867
      %5900 = vst.msk [vmem:[%s170 + $0x30] sm:$0xff] %vm2714, %v5868
      %5901 = vst.msk [vmem:[%s170 + $0x38] sm:$0xff] %vm2714, %v5869
      %5902 = vst.msk [vmem:[%s170 + $0x40] sm:$0xff] %vm2714, %v5870
      %5903 = vst.msk [vmem:[%s170 + $0x48] sm:$0xff] %vm2714, %v5871
      %5904 = vst.msk [vmem:[%s170 + $0x50] sm:$0xff] %vm2714, %v5872
      %5905 = vst.msk [vmem:[%s170 + $0x58] sm:$0xff] %vm2714, %v5873
      %5906 = vst.msk [vmem:[%s170 + $0x60] sm:$0xff] %vm2714, %v5874
      %5907 = vst.msk [vmem:[%s170 + $0x68] sm:$0xff] %vm2714, %v5875
      %5908 = vst.msk [vmem:[%s170 + $0x70] sm:$0xff] %vm2714, %v5876
      %5909 = vst.msk [vmem:[%s170 + $0x78] sm:$0xff] %vm2714, %v5877
      %5910 = vst.msk [vmem:[%s170 + $0x80] sm:$0xff] %vm2714, %v5878
      %5911 = vst.msk [vmem:[%s170 + $0x88] sm:$0xff] %vm2714, %v5879
      %5912 = vst.msk [vmem:[%s170 + $0x90] sm:$0xff] %vm2714, %v5880
      %5913 = vst.msk [vmem:[%s170 + $0x98] sm:$0xff] %vm2714, %v5881
      %5914 = vst.msk [vmem:[%s170 + $0xa0] sm:$0xff] %vm2714, %v5882
      %5915 = vst.msk [vmem:[%s170 + $0xa8] sm:$0xff] %vm2714, %v5883
      %5916 = vst.msk [vmem:[%s170 + $0xb0] sm:$0xff] %vm2714, %v5884
      %5917 = vst.msk [vmem:[%s170 + $0xb8] sm:$0xff] %vm2714, %v5885
      %5918 = vst.msk [vmem:[%s170 + $0xc0] sm:$0xff] %vm2714, %v5886
      %5919 = vst.msk [vmem:[%s170 + $0xc8] sm:$0xff] %vm2714, %v5887
      %5920 = vst.msk [vmem:[%s170 + $0xd0] sm:$0xff] %vm2714, %v5888
      %5921 = vst.msk [vmem:[%s170 + $0xd8] sm:$0xff] %vm2714, %v5889
      %5922 = vst.msk [vmem:[%s170 + $0xe0] sm:$0xff] %vm2714, %v5890
      %5923 = vst.msk [vmem:[%s170 + $0xe8] sm:$0xff] %vm2714, %v5891
      %5924 = vst.msk [vmem:[%s170 + $0xf0] sm:$0xff] %vm2714, %v5892
      %5925 = vst.msk [vmem:[%s170 + $0xf8] sm:$0xff] %vm2714, %v5893
      %p5926 = scmp.lt.s32.totalorder %s14, 1
      %s5927 = scalar_select %p5926, %s14, 1
      %s5928 = smul.addr %s5927, 32
      %s5929 = smul.addr %s5928, 8
      %s5930 = scalar_lea.vmem %s3, %s5929
      // Predicated region
      $region33: #{tpu_custom_call.1} parent=31 // pred_check
        %p5931 = pneg %p100
      $region34: #{tpu_custom_call.1} parent=31 // pred_check_branch
        %5933 = sbr.rel (%p5931) target = $region36
      $region35: #{tpu_custom_call.1} parent=31 // pred_region
        _
      $region36: #{tpu_custom_call.1} parent=31 // pred_fallthru
        _
    $region32: #{tpu_custom_call.1} parent=5 // pred_fallthru
      _
    %p5934 = scmp.le.s32.totalorder 2, %s9
    // Predicated region
    $region37: #{tpu_custom_call.1} parent=5 // pred_check
      %p5935 = pneg %p5934
    $region38: #{tpu_custom_call.1} parent=5 // pred_check_branch
      %5937 = sbr.rel (%p5935) target = $region40
    $region39: #{tpu_custom_call.1} parent=5 // pred_region
      %s5938 = ssub.s32 %s9, 2
      // Predicated region
      $region41: #{tpu_custom_call.1} parent=39 // pred_check
        %p5939 = pneg %p106
      $region42: #{tpu_custom_call.1} parent=39 // pred_check_branch
        %5941 = sbr.rel (%p5939) target = $region44
      $region43: #{tpu_custom_call.1} parent=39 // pred_region
        %p5942 = scmp.lt.s32.totalorder %s15, 1
        %s5943 = scalar_select %p5942, %s15, 1
        %s5944 = smul.addr %s5943, 32
        %s5945 = smul.addr %s5944, 8
        %s5946 = scalar_lea.vmem %s3, %s5945
      $region44: #{tpu_custom_call.1} parent=39 // pred_fallthru
        _
    $region40: #{tpu_custom_call.1} parent=5 // pred_fallthru
      _
  $region6: #{tpu_custom_call.1} parent=0 // loop_footer
    %s13 = sadd.s32 1, %s9
  $region7: #{tpu_custom_call.1} parent=0 // loop_footer_branch
    %8 = sbr.rel target = $region3
  $region8: #{tpu_custom_call.1} parent=0 // loop_exit
    _

</llo_original>
